<compile_context>
chip_gen: v7x
topology: tpu7x:2x2x1
jax: 0.10.0
libtpu: 0.0.40
codegen_flags: <defaults>
</compile_context>

<pallas_src>
import numpy as np
import jax
import jax.numpy as jnp
from jax.experimental import pallas as pl
from jax.experimental.pallas import tpu as pltpu


# --------------------------- model configuration ----------------------------
DIM_U1 = 128 * 4                  # 512 (as in the reference script)
Z_H, Z_W = 8, 8                   # latent grid -> dim_z = 128
DIM_Z = Z_H * Z_W * 2             # 128
NUM_FREQ = 6
IN_DIM = 2
F1_COLS = IN_DIM * 2                        # 4   f1 columns per sequence point
G1_COLS = F1_COLS * DIM_Z                   # 512 g1-logit columns per point
OUT_DIM = F1_COLS + G1_COLS                 # 516 last Linear output width
OUT_PAD = 640                               # 516 -> 5*128 lane-aligned columns
ENC_DIM = IN_DIM + 2 * IN_DIM * NUM_FREQ    # 26  positional-encoding width
HIDDEN = 64
LN_EPS = 1e-5
K_PAD = 128                                 # layer-1 contraction padded 26 -> 128


def _layernorm(h, gamma, beta):
    mu = jnp.mean(h, axis=-1, keepdims=True)
    d = h - mu
    var = jnp.mean(d * d, axis=-1, keepdims=True)
    return d * jax.lax.rsqrt(var + LN_EPS) * gamma + beta


# ------------------------------ Pallas kernel --------------------------------
def _cgn_kernel(x_ref, freqs_ref,
                w1_ref, b1_ref, ln1g_ref, ln1b_ref,
                w2_ref, b2_ref, ln2g_ref, ln2b_ref,
                w3_ref, b3_ref,
                f1_ref, g1_ref):
    x = x_ref[...]                                   # (TM, 2)  f32
    freqs = freqs_ref[...]                           # (1, NUM_FREQ) f32

    def silu(h):
        # sigmoid denominator reciprocal on the EUP (separate VLIW slot)
        return h * pl.reciprocal(1.0 + jnp.exp(-h), approx=True)

    # ---- positional encoding built in registers, zero-padded to K_PAD lanes
    x1 = x[:, 0:1] * freqs                           # (TM, NUM_FREQ)
    x2 = x[:, 1:2] * freqs
    enc = jnp.concatenate(
        [x, jnp.sin(x1), jnp.cos(x1), jnp.sin(x2), jnp.cos(x2),
         jnp.zeros((x.shape[0], K_PAD - ENC_DIM), jnp.float32)],
        axis=-1).astype(jnp.bfloat16)                # (TM, 128) bf16 MXU operand

    # ---- Linear(26 -> 64) (K padded to 128) + LayerNorm + SiLU
    h = jnp.dot(enc, w1_ref[...], preferred_element_type=jnp.float32) + b1_ref[...]
    h = silu(_layernorm(h, ln1g_ref[...], ln1b_ref[...]))

    # ---- Linear(64 -> 64) + LayerNorm + SiLU
    h = jnp.dot(h.astype(jnp.bfloat16), w2_ref[...],
                preferred_element_type=jnp.float32) + b2_ref[...]
    h = silu(_layernorm(h, ln2g_ref[...], ln2b_ref[...]))

    # ---- Linear(64 -> 640); columns pre-permuted/padded to
    #      [g1 logits (512) | f1 (4) | zeros (124)]
    out = jnp.dot(h.astype(jnp.bfloat16), w3_ref[...],
                  preferred_element_type=jnp.float32) + b3_ref[...]

    # f1: columns 512:516
    f1_ref[...] = out[:, G1_COLS:G1_COLS + F1_COLS]

    # g1: softmax over each lane-aligned DIM_Z(=128)-wide chunk
    for j in range(F1_COLS):
        seg = out[:, j * DIM_Z:(j + 1) * DIM_Z]
        m = jnp.max(seg, axis=-1, keepdims=True)
        e = jnp.exp(seg - m)
        inv = pl.reciprocal(jnp.sum(e, axis=-1, keepdims=True), approx=False)
        g1_ref[:, j * DIM_Z:(j + 1) * DIM_Z] = e * inv


# ------------------------------ pallas_call wrapper ---------------------------
def _choose_tm(m_rows):
    # Largest tile in {1024, 512, 256, 128} that still leaves >= 2 grid steps
    # (keeps both v7x TensorCores busy); bigger tiles amortize the ~0.35 us
    # per-grid-step pipeline overhead for large M.
    for tm in (1024, 512, 256, 128):
        if m_rows >= 2 * tm:
            return tm
    return 128


def _cgn_mlp_pallas(x2d, freqs, w1p, b1, ln1g, ln1b, w2, b2, ln2g, ln2b,
                    w3p, b3p, tm):
    mpad = x2d.shape[0]
    grid = (mpad // tm,)

    flops = 2 * mpad * (K_PAD * HIDDEN + HIDDEN * HIDDEN + HIDDEN * OUT_PAD)
    trans = mpad * (4 * NUM_FREQ + 2 * HIDDEN + G1_COLS)
    bytes_accessed = (4 * mpad * IN_DIM
                      + 2 * (K_PAD * HIDDEN + HIDDEN * HIDDEN + HIDDEN * OUT_PAD)
                      + 4 * (6 * HIDDEN + OUT_PAD + NUM_FREQ)
                      + 4 * mpad * (F1_COLS + G1_COLS))

    return pl.pallas_call(
        _cgn_kernel,
        out_shape=(
            jax.ShapeDtypeStruct((mpad, F1_COLS), jnp.float32),
            jax.ShapeDtypeStruct((mpad, G1_COLS), jnp.float32),
        ),
        grid_spec=pltpu.PrefetchScalarGridSpec(
            num_scalar_prefetch=0,
            grid=grid,
            in_specs=[
                pl.BlockSpec((tm, IN_DIM), lambda i: (i, 0)),       # x rows (tiled)
                pl.BlockSpec((1, NUM_FREQ), lambda i: (0, 0)),      # freqs
                pl.BlockSpec((K_PAD, HIDDEN), lambda i: (0, 0)),    # W1 (K-padded, bf16)
                pl.BlockSpec((1, HIDDEN), lambda i: (0, 0)),        # b1
                pl.BlockSpec((1, HIDDEN), lambda i: (0, 0)),        # ln1 gamma
                pl.BlockSpec((1, HIDDEN), lambda i: (0, 0)),        # ln1 beta
                pl.BlockSpec((HIDDEN, HIDDEN), lambda i: (0, 0)),   # W2 (bf16)
                pl.BlockSpec((1, HIDDEN), lambda i: (0, 0)),        # b2
                pl.BlockSpec((1, HIDDEN), lambda i: (0, 0)),        # ln2 gamma
                pl.BlockSpec((1, HIDDEN), lambda i: (0, 0)),        # ln2 beta
                pl.BlockSpec((HIDDEN, OUT_PAD), lambda i: (0, 0)),  # W3 (perm+pad, bf16)
                pl.BlockSpec((1, OUT_PAD), lambda i: (0, 0)),       # b3 (perm+pad)
            ],
            out_specs=[
                pl.BlockSpec((tm, F1_COLS), lambda i: (i, 0)),
                pl.BlockSpec((tm, G1_COLS), lambda i: (i, 0)),
            ],
        ),
        compiler_params=pltpu.CompilerParams(
            dimension_semantics=("parallel",),
            vmem_limit_bytes=48 * 1024 * 1024),
        cost_estimate=pl.CostEstimate(
            flops=flops, transcendentals=trans, bytes_accessed=bytes_accessed),
    )(x2d, freqs, w1p, b1, ln1g, ln1b, w2, b2, ln2g, ln2b, w3p, b3p)


# ------------------------------- CGN forward ---------------------------------
def cgn_forward(x, params):
    """x: (Nt, L, 2) with L * IN_DIM * 2 == DIM_U1.  Returns [f1, g1, f2, g2]."""
    Nt, L, _ = x.shape
    assert L * F1_COLS == DIM_U1, "forward requires L * in_dim * 2 == dim_u1"
    (w1, b1, ln1g, ln1b, w2, b2, ln2g, ln2b, w3, b3, f2_param, g2_param) = params

    M = Nt * L
    tm = _choose_tm(M)
    Mpad = ((M + tm - 1) // tm) * tm
    x2d = x.reshape(M, IN_DIM).astype(jnp.float32)
    if Mpad != M:
        x2d = jnp.pad(x2d, ((0, Mpad - M), (0, 0)))

    freqs = (2.0 ** jnp.arange(NUM_FREQ, dtype=jnp.float32) * np.pi).reshape(1, NUM_FREQ)

    # Linear weights are PyTorch-style (out, in): transpose -> (in, out),
    # zero-pad layer-1 K to 128 and cast matmul operands to bf16.
    w1p = jnp.zeros((K_PAD, HIDDEN), jnp.float32).at[:ENC_DIM].set(w1.T).astype(jnp.bfloat16)
    w2_bf = w2.T.astype(jnp.bfloat16)
    # Permute layer-3 columns to [g1 logits (512) | f1 (4)] and zero-pad to 640
    # so every softmax chunk is a lane-aligned 128-wide slab.
    w3_t = w3.T
    w3_perm = jnp.concatenate([w3_t[:, F1_COLS:], w3_t[:, :F1_COLS]], axis=1)
    w3p = (jnp.zeros((HIDDEN, OUT_PAD), jnp.float32)
           .at[:, :OUT_DIM].set(w3_perm).astype(jnp.bfloat16))
    b3_perm = jnp.concatenate([b3[F1_COLS:], b3[:F1_COLS]])
    b3p = jnp.zeros((1, OUT_PAD), jnp.float32).at[0, :OUT_DIM].set(b3_perm)

    f1_2d, g1_2d = _cgn_mlp_pallas(
        x2d, freqs,
        w1p, b1.reshape(1, HIDDEN), ln1g.reshape(1, HIDDEN), ln1b.reshape(1, HIDDEN),
        w2_bf, b2.reshape(1, HIDDEN), ln2g.reshape(1, HIDDEN), ln2b.reshape(1, HIDDEN),
        w3p, b3p, tm)

    f1 = f1_2d[:M].reshape(Nt, DIM_U1, 1)
    g1 = g1_2d[:M].reshape(Nt, DIM_U1, DIM_Z)
    # f2/g2 are plain parameter broadcasts (torch .repeat) -> wrapper-side
    f2 = jnp.broadcast_to(f2_param[None], (Nt, DIM_Z, 1))
    g2 = jnp.broadcast_to(g2_param[None], (Nt, DIM_Z, DIM_Z))
    return [f1, g1, f2, g2]


cgn_forward_jit = jax.jit(cgn_forward)


# ----------------------- pure-JAX reference (same precision) -----------------
def _silu_ref(h):
    return h * (1.0 / (1.0 + jnp.exp(-h)))


def cgn_reference(x, params):
    (w1, b1, ln1g, ln1b, w2, b2, ln2g, ln2b, w3, b3, f2_param, g2_param) = params
    Nt, L, _ = x.shape
    xf = x.reshape(-1, IN_DIM)
    freqs = 2.0 ** jnp.arange(NUM_FREQ, dtype=jnp.float32) * np.pi
    x1 = xf[:, 0:1] * freqs
    x2 = xf[:, 1:2] * freqs
    enc = jnp.concatenate([xf, jnp.sin(x1), jnp.cos(x1), jnp.sin(x2), jnp.cos(x2)], axis=1)

    def dense(a, w, b):   # same bf16-operand / f32-accumulate scheme as the kernel
        return jnp.dot(a.astype(jnp.bfloat16), w.T.astype(jnp.bfloat16),
                       preferred_element_type=jnp.float32) + b

    h = _silu_ref(_layernorm(dense(enc, w1, b1), ln1g, ln1b))
    h = _silu_ref(_layernorm(dense(h, w2, b2), ln2g, ln2b))
    out = dense(h, w3, b3).reshape(Nt, L, OUT_DIM)

    f1 = out[:, :, :F1_COLS].reshape(Nt, DIM_U1, 1)
    g1 = out[:, :, F1_COLS:].reshape(Nt, DIM_U1, DIM_Z)
    m = jnp.max(g1, axis=-1, keepdims=True)
    e = jnp.exp(g1 - m)
    g1 = e / jnp.sum(e, axis=-1, keepdims=True)
    f2 = jnp.broadcast_to(f2_param[None], (Nt, DIM_Z, 1))
    g2 = jnp.broadcast_to(g2_param[None], (Nt, DIM_Z, DIM_Z))
    return [f1, g1, f2, g2]


# --------------------------------- params ------------------------------------
def init_cgn_params(key):
    def linear(k, fan_in, fan_out):
        kw, kb = jax.random.split(k)
        bound = 1.0 / float(fan_in) ** 0.5
        w = jax.random.uniform(kw, (fan_out, fan_in), jnp.float32, -bound, bound)
        b = jax.random.uniform(kb, (fan_out,), jnp.float32, -bound, bound)
        return w, b

    k1, k2, k3, k4, k5 = jax.random.split(key, 5)
    w1, b1 = linear(k1, ENC_DIM, HIDDEN)
    w2, b2 = linear(k2, HIDDEN, HIDDEN)
    w3, b3 = linear(k3, HIDDEN, OUT_DIM)
    ln1g = jnp.ones((HIDDEN,), jnp.float32)
    ln1b = jnp.zeros((HIDDEN,), jnp.float32)
    ln2g = jnp.ones((HIDDEN,), jnp.float32)
    ln2b = jnp.zeros((HIDDEN,), jnp.float32)
    f2_param = (1.0 / DIM_Z ** 0.5) * jax.random.uniform(k4, (DIM_Z, 1), jnp.float32)
    g2_param = (1.0 / DIM_Z) * jax.random.uniform(k5, (DIM_Z, DIM_Z), jnp.float32)
    return (w1, b1, ln1g, ln1b, w2, b2, ln2g, ln2b, w3, b3, f2_param, g2_param)


if __name__ == "__main__":
    key = jax.random.PRNGKey(0)
    key, xk = jax.random.split(key)
    Nt = 2
    L = DIM_U1 // F1_COLS           # 128 (implied by the reshape in forward)
    x = jax.random.normal(xk, (Nt, L, IN_DIM), jnp.float32)
    params = init_cgn_params(key)

    f1, g1, f2, g2 = cgn_forward_jit(x, params)
    (f1, g1, f2, g2) = jax.block_until_ready((f1, g1, f2, g2))

    assert f1.shape == (Nt, DIM_U1, 1) and f1.dtype == jnp.float32
    assert g1.shape == (Nt, DIM_U1, DIM_Z) and g1.dtype == jnp.float32
    assert f2.shape == (Nt, DIM_Z, 1)
    assert g2.shape == (Nt, DIM_Z, DIM_Z)

    # correctness check vs. a pure-JAX reference using the same precision scheme
    rf1, rg1, rf2, rg2 = cgn_reference(x, params)
    assert float(jnp.max(jnp.abs(f1 - rf1))) < 2e-2
    assert float(jnp.max(jnp.abs(g1 - rg1))) < 2e-2
    assert float(jnp.max(jnp.abs(jnp.sum(g1, axis=-1) - 1.0))) < 1e-4
    assert bool(jnp.allclose(f2, rf2)) and bool(jnp.allclose(g2, rg2))

    print("KERNEL_OK")
</pallas_src>

<mosaic_0001>
module attributes {stable_mosaic.version = 11 : i64} {
  func.func @_cgn_kernel(%arg0: i32, %arg1: memref<128x2xf32, #tpu.memory_space<vmem>>, %arg2: memref<1x6xf32, #tpu.memory_space<vmem>>, %arg3: memref<128x64xbf16, #tpu.memory_space<vmem>>, %arg4: memref<1x64xf32, #tpu.memory_space<vmem>>, %arg5: memref<1x64xf32, #tpu.memory_space<vmem>>, %arg6: memref<1x64xf32, #tpu.memory_space<vmem>>, %arg7: memref<64x64xbf16, #tpu.memory_space<vmem>>, %arg8: memref<1x64xf32, #tpu.memory_space<vmem>>, %arg9: memref<1x64xf32, #tpu.memory_space<vmem>>, %arg10: memref<1x64xf32, #tpu.memory_space<vmem>>, %arg11: memref<64x640xbf16, #tpu.memory_space<vmem>>, %arg12: memref<1x640xf32, #tpu.memory_space<vmem>>, %arg13: memref<128x4xf32, #tpu.memory_space<vmem>>, %arg14: memref<128x512xf32, #tpu.memory_space<vmem>>) attributes {dimension_semantics = [#tpu.dimension_semantics<parallel>], iteration_bounds = array<i64: 2>, scalar_prefetch = 0 : i64, scratch_operands = 0 : i64, tpu.core_type = #tpu.core_type<tc>, window_params = [{transform_indices = @transform_0, window_bounds = array<i64: 128, 2>}, {pipeline_mode = #tpu.pipeline_mode<synchronous>, transform_indices = @transform_1, window_bounds = array<i64: 1, 6>}, {pipeline_mode = #tpu.pipeline_mode<synchronous>, transform_indices = @transform_2, window_bounds = array<i64: 128, 64>}, {pipeline_mode = #tpu.pipeline_mode<synchronous>, transform_indices = @transform_3, window_bounds = array<i64: 1, 64>}, {pipeline_mode = #tpu.pipeline_mode<synchronous>, transform_indices = @transform_4, window_bounds = array<i64: 1, 64>}, {pipeline_mode = #tpu.pipeline_mode<synchronous>, transform_indices = @transform_5, window_bounds = array<i64: 1, 64>}, {pipeline_mode = #tpu.pipeline_mode<synchronous>, transform_indices = @transform_6, window_bounds = array<i64: 64, 64>}, {pipeline_mode = #tpu.pipeline_mode<synchronous>, transform_indices = @transform_7, window_bounds = array<i64: 1, 64>}, {pipeline_mode = #tpu.pipeline_mode<synchronous>, transform_indices = @transform_8, window_bounds = array<i64: 1, 64>}, {pipeline_mode = #tpu.pipeline_mode<synchronous>, transform_indices = @transform_9, window_bounds = array<i64: 1, 64>}, {pipeline_mode = #tpu.pipeline_mode<synchronous>, transform_indices = @transform_10, window_bounds = array<i64: 64, 640>}, {pipeline_mode = #tpu.pipeline_mode<synchronous>, transform_indices = @transform_11, window_bounds = array<i64: 1, 640>}, {transform_indices = @transform_12, window_bounds = array<i64: 128, 4>}, {transform_indices = @transform_13, window_bounds = array<i64: 128, 512>}]} {
    %c0 = arith.constant 0 : index
    %c0_0 = arith.constant 0 : index
    %0 = vector.load %arg1[%c0, %c0_0] : memref<128x2xf32, #tpu.memory_space<vmem>>, vector<128x2xf32>
    %c0_1 = arith.constant 0 : index
    %c0_2 = arith.constant 0 : index
    %1 = vector.load %arg2[%c0_1, %c0_2] : memref<1x6xf32, #tpu.memory_space<vmem>>, vector<1x6xf32>
    %2 = vector.extract_strided_slice %0 {offsets = [0, 0], sizes = [128, 1], strides = [1, 1]} : vector<128x2xf32> to vector<128x1xf32>
    %3 = vector.broadcast %2 : vector<128x1xf32> to vector<128x6xf32>
    %4 = vector.broadcast %1 : vector<1x6xf32> to vector<128x6xf32>
    %5 = arith.mulf %3, %4 : vector<128x6xf32>
    %6 = vector.extract_strided_slice %0 {offsets = [0, 1], sizes = [128, 1], strides = [1, 1]} : vector<128x2xf32> to vector<128x1xf32>
    %7 = vector.broadcast %6 : vector<128x1xf32> to vector<128x6xf32>
    %8 = vector.broadcast %1 : vector<1x6xf32> to vector<128x6xf32>
    %9 = arith.mulf %7, %8 : vector<128x6xf32>
    %10 = math.sin %5 : vector<128x6xf32>
    %11 = math.cos %5 : vector<128x6xf32>
    %12 = math.sin %9 : vector<128x6xf32>
    %13 = math.cos %9 : vector<128x6xf32>
    %cst = arith.constant 0.000000e+00 : f32
    %14 = vector.broadcast %cst : f32 to vector<128x102xf32>
    %15 = tpu.concatenate %0, %10, %11, %12, %13, %14 in 1 : vector<128x2xf32>, vector<128x6xf32>, vector<128x6xf32>, vector<128x6xf32>, vector<128x6xf32>, vector<128x102xf32> -> vector<128x128xf32>
    %16 = arith.truncf %15 : vector<128x128xf32> to vector<128x128xbf16>
    %c0_3 = arith.constant 0 : index
    %c0_4 = arith.constant 0 : index
    %17 = vector.load %arg3[%c0_3, %c0_4] : memref<128x64xbf16, #tpu.memory_space<vmem>>, vector<128x64xbf16>
    %cst_5 = arith.constant dense<0.000000e+00> : vector<128x64xf32>
    %18 = tpu.matmul %16, %17, %cst_5 {dimension_numbers = #tpu.dot_dimension_numbers<[1], [0], [0], [1], [0, 0, 1, 1], [], []>} : vector<128x128xbf16>, vector<128x64xbf16>, vector<128x64xf32> -> vector<128x64xf32>
    %c0_6 = arith.constant 0 : index
    %c0_7 = arith.constant 0 : index
    %19 = vector.load %arg4[%c0_6, %c0_7] : memref<1x64xf32, #tpu.memory_space<vmem>>, vector<1x64xf32>
    %20 = vector.broadcast %19 : vector<1x64xf32> to vector<128x64xf32>
    %21 = arith.addf %18, %20 : vector<128x64xf32>
    %c0_8 = arith.constant 0 : index
    %c0_9 = arith.constant 0 : index
    %22 = vector.load %arg5[%c0_8, %c0_9] : memref<1x64xf32, #tpu.memory_space<vmem>>, vector<1x64xf32>
    %c0_10 = arith.constant 0 : index
    %c0_11 = arith.constant 0 : index
    %23 = vector.load %arg6[%c0_10, %c0_11] : memref<1x64xf32, #tpu.memory_space<vmem>>, vector<1x64xf32>
    %cst_12 = arith.constant dense<0.000000e+00> : vector<128xf32>
    %24 = vector.multi_reduction <add>, %21, %cst_12 [1] : vector<128x64xf32> to vector<128xf32>
    %25 = vector.shape_cast %24 : vector<128xf32> to vector<128x1xf32>
    %cst_13 = arith.constant 6.400000e+01 : f32
    %26 = vector.broadcast %cst_13 : f32 to vector<128x1xf32>
    %27 = arith.divf %25, %26 : vector<128x1xf32>
    %28 = vector.broadcast %27 : vector<128x1xf32> to vector<128x64xf32>
    %29 = arith.subf %21, %28 : vector<128x64xf32>
    %30 = arith.mulf %29, %29 : vector<128x64xf32>
    %cst_14 = arith.constant dense<0.000000e+00> : vector<128xf32>
    %31 = vector.multi_reduction <add>, %30, %cst_14 [1] : vector<128x64xf32> to vector<128xf32>
    %32 = vector.shape_cast %31 : vector<128xf32> to vector<128x1xf32>
    %cst_15 = arith.constant 6.400000e+01 : f32
    %33 = vector.broadcast %cst_15 : f32 to vector<128x1xf32>
    %34 = arith.divf %32, %33 : vector<128x1xf32>
    %cst_16 = arith.constant 9.99999974E-6 : f32
    %35 = vector.broadcast %cst_16 : f32 to vector<128x1xf32>
    %36 = arith.addf %34, %35 : vector<128x1xf32>
    %37 = math.rsqrt %36 : vector<128x1xf32>
    %38 = vector.broadcast %37 : vector<128x1xf32> to vector<128x64xf32>
    %39 = arith.mulf %29, %38 : vector<128x64xf32>
    %40 = vector.broadcast %22 : vector<1x64xf32> to vector<128x64xf32>
    %41 = arith.mulf %39, %40 : vector<128x64xf32>
    %42 = vector.broadcast %23 : vector<1x64xf32> to vector<128x64xf32>
    %43 = arith.addf %41, %42 : vector<128x64xf32>
    %cst_17 = arith.constant 0.000000e+00 : f32
    %44 = vector.broadcast %cst_17 : f32 to vector<128x64xf32>
    %45 = arith.subf %44, %43 : vector<128x64xf32>
    %46 = math.exp %45 : vector<128x64xf32>
    %cst_18 = arith.constant 1.000000e+00 : f32
    %47 = vector.broadcast %cst_18 : f32 to vector<128x64xf32>
    %48 = arith.addf %47, %46 : vector<128x64xf32>
    %49 = tpu.reciprocal %48 {approx = true} : vector<128x64xf32> -> vector<128x64xf32>
    %50 = arith.mulf %43, %49 : vector<128x64xf32>
    %51 = arith.truncf %50 : vector<128x64xf32> to vector<128x64xbf16>
    %c0_19 = arith.constant 0 : index
    %c0_20 = arith.constant 0 : index
    %52 = vector.load %arg7[%c0_19, %c0_20] : memref<64x64xbf16, #tpu.memory_space<vmem>>, vector<64x64xbf16>
    %cst_21 = arith.constant dense<0.000000e+00> : vector<128x64xf32>
    %53 = tpu.matmul %51, %52, %cst_21 {dimension_numbers = #tpu.dot_dimension_numbers<[1], [0], [0], [1], [0, 0, 1, 1], [], []>} : vector<128x64xbf16>, vector<64x64xbf16>, vector<128x64xf32> -> vector<128x64xf32>
    %c0_22 = arith.constant 0 : index
    %c0_23 = arith.constant 0 : index
    %54 = vector.load %arg8[%c0_22, %c0_23] : memref<1x64xf32, #tpu.memory_space<vmem>>, vector<1x64xf32>
    %55 = vector.broadcast %54 : vector<1x64xf32> to vector<128x64xf32>
    %56 = arith.addf %53, %55 : vector<128x64xf32>
    %c0_24 = arith.constant 0 : index
    %c0_25 = arith.constant 0 : index
    %57 = vector.load %arg9[%c0_24, %c0_25] : memref<1x64xf32, #tpu.memory_space<vmem>>, vector<1x64xf32>
    %c0_26 = arith.constant 0 : index
    %c0_27 = arith.constant 0 : index
    %58 = vector.load %arg10[%c0_26, %c0_27] : memref<1x64xf32, #tpu.memory_space<vmem>>, vector<1x64xf32>
    %cst_28 = arith.constant dense<0.000000e+00> : vector<128xf32>
    %59 = vector.multi_reduction <add>, %56, %cst_28 [1] : vector<128x64xf32> to vector<128xf32>
    %60 = vector.shape_cast %59 : vector<128xf32> to vector<128x1xf32>
    %cst_29 = arith.constant 6.400000e+01 : f32
    %61 = vector.broadcast %cst_29 : f32 to vector<128x1xf32>
    %62 = arith.divf %60, %61 : vector<128x1xf32>
    %63 = vector.broadcast %62 : vector<128x1xf32> to vector<128x64xf32>
    %64 = arith.subf %56, %63 : vector<128x64xf32>
    %65 = arith.mulf %64, %64 : vector<128x64xf32>
    %cst_30 = arith.constant dense<0.000000e+00> : vector<128xf32>
    %66 = vector.multi_reduction <add>, %65, %cst_30 [1] : vector<128x64xf32> to vector<128xf32>
    %67 = vector.shape_cast %66 : vector<128xf32> to vector<128x1xf32>
    %cst_31 = arith.constant 6.400000e+01 : f32
    %68 = vector.broadcast %cst_31 : f32 to vector<128x1xf32>
    %69 = arith.divf %67, %68 : vector<128x1xf32>
    %cst_32 = arith.constant 9.99999974E-6 : f32
    %70 = vector.broadcast %cst_32 : f32 to vector<128x1xf32>
    %71 = arith.addf %69, %70 : vector<128x1xf32>
    %72 = math.rsqrt %71 : vector<128x1xf32>
    %73 = vector.broadcast %72 : vector<128x1xf32> to vector<128x64xf32>
    %74 = arith.mulf %64, %73 : vector<128x64xf32>
    %75 = vector.broadcast %57 : vector<1x64xf32> to vector<128x64xf32>
    %76 = arith.mulf %74, %75 : vector<128x64xf32>
    %77 = vector.broadcast %58 : vector<1x64xf32> to vector<128x64xf32>
    %78 = arith.addf %76, %77 : vector<128x64xf32>
    %cst_33 = arith.constant 0.000000e+00 : f32
    %79 = vector.broadcast %cst_33 : f32 to vector<128x64xf32>
    %80 = arith.subf %79, %78 : vector<128x64xf32>
    %81 = math.exp %80 : vector<128x64xf32>
    %cst_34 = arith.constant 1.000000e+00 : f32
    %82 = vector.broadcast %cst_34 : f32 to vector<128x64xf32>
    %83 = arith.addf %82, %81 : vector<128x64xf32>
    %84 = tpu.reciprocal %83 {approx = true} : vector<128x64xf32> -> vector<128x64xf32>
    %85 = arith.mulf %78, %84 : vector<128x64xf32>
    %86 = arith.truncf %85 : vector<128x64xf32> to vector<128x64xbf16>
    %c0_35 = arith.constant 0 : index
    %c0_36 = arith.constant 0 : index
    %87 = vector.load %arg11[%c0_35, %c0_36] : memref<64x640xbf16, #tpu.memory_space<vmem>>, vector<64x640xbf16>
    %cst_37 = arith.constant dense<0.000000e+00> : vector<128x640xf32>
    %88 = tpu.matmul %86, %87, %cst_37 {dimension_numbers = #tpu.dot_dimension_numbers<[1], [0], [0], [1], [0, 0, 1, 1], [], []>} : vector<128x64xbf16>, vector<64x640xbf16>, vector<128x640xf32> -> vector<128x640xf32>
    %c0_38 = arith.constant 0 : index
    %c0_39 = arith.constant 0 : index
    %89 = vector.load %arg12[%c0_38, %c0_39] : memref<1x640xf32, #tpu.memory_space<vmem>>, vector<1x640xf32>
    %90 = vector.broadcast %89 : vector<1x640xf32> to vector<128x640xf32>
    %91 = arith.addf %88, %90 : vector<128x640xf32>
    %92 = vector.extract_strided_slice %91 {offsets = [0, 512], sizes = [128, 4], strides = [1, 1]} : vector<128x640xf32> to vector<128x4xf32>
    %c0_40 = arith.constant 0 : index
    %c0_41 = arith.constant 0 : index
    %93 = vector.load %arg13[%c0_40, %c0_41] : memref<128x4xf32, #tpu.memory_space<vmem>>, vector<128x4xf32>
    tpu.vector_store %arg13[%c0_40, %c0_41], %92 {strides = array<i32>} : memref<128x4xf32, #tpu.memory_space<vmem>>, vector<128x4xf32>,
    %94 = vector.extract_strided_slice %91 {offsets = [0, 0], sizes = [128, 128], strides = [1, 1]} : vector<128x640xf32> to vector<128x128xf32>
    %cst_42 = arith.constant dense<0xFF800000> : vector<128xf32>
    %95 = vector.multi_reduction <maximumf>, %94, %cst_42 [1] : vector<128x128xf32> to vector<128xf32>
    %96 = vector.shape_cast %95 : vector<128xf32> to vector<128x1xf32>
    %97 = vector.broadcast %96 : vector<128x1xf32> to vector<128x128xf32>
    %98 = arith.subf %94, %97 : vector<128x128xf32>
    %99 = math.exp %98 : vector<128x128xf32>
    %cst_43 = arith.constant dense<0.000000e+00> : vector<128xf32>
    %100 = vector.multi_reduction <add>, %99, %cst_43 [1] : vector<128x128xf32> to vector<128xf32>
    %101 = vector.shape_cast %100 : vector<128xf32> to vector<128x1xf32>
    %102 = tpu.reciprocal %101 : vector<128x1xf32> -> vector<128x1xf32>
    %103 = vector.broadcast %102 : vector<128x1xf32> to vector<128x128xf32>
    %104 = arith.mulf %99, %103 : vector<128x128xf32>
    %c0_44 = arith.constant 0 : index
    %c0_45 = arith.constant 0 : index
    %105 = vector.load %arg14[%c0_44, %c0_45] : memref<128x512xf32, #tpu.memory_space<vmem>>, vector<128x128xf32>
    tpu.vector_store %arg14[%c0_44, %c0_45], %104 {strides = array<i32>} : memref<128x512xf32, #tpu.memory_space<vmem>>, vector<128x128xf32>,
    %106 = vector.extract_strided_slice %91 {offsets = [0, 128], sizes = [128, 128], strides = [1, 1]} : vector<128x640xf32> to vector<128x128xf32>
    %cst_46 = arith.constant dense<0xFF800000> : vector<128xf32>
    %107 = vector.multi_reduction <maximumf>, %106, %cst_46 [1] : vector<128x128xf32> to vector<128xf32>
    %108 = vector.shape_cast %107 : vector<128xf32> to vector<128x1xf32>
    %109 = vector.broadcast %108 : vector<128x1xf32> to vector<128x128xf32>
    %110 = arith.subf %106, %109 : vector<128x128xf32>
    %111 = math.exp %110 : vector<128x128xf32>
    %cst_47 = arith.constant dense<0.000000e+00> : vector<128xf32>
    %112 = vector.multi_reduction <add>, %111, %cst_47 [1] : vector<128x128xf32> to vector<128xf32>
    %113 = vector.shape_cast %112 : vector<128xf32> to vector<128x1xf32>
    %114 = tpu.reciprocal %113 : vector<128x1xf32> -> vector<128x1xf32>
    %115 = vector.broadcast %114 : vector<128x1xf32> to vector<128x128xf32>
    %116 = arith.mulf %111, %115 : vector<128x128xf32>
    %c0_48 = arith.constant 0 : index
    %c128 = arith.constant 128 : index
    %117 = vector.load %arg14[%c0_48, %c128] : memref<128x512xf32, #tpu.memory_space<vmem>>, vector<128x128xf32>
    tpu.vector_store %arg14[%c0_48, %c128], %116 {strides = array<i32>} : memref<128x512xf32, #tpu.memory_space<vmem>>, vector<128x128xf32>,
    %118 = vector.extract_strided_slice %91 {offsets = [0, 256], sizes = [128, 128], strides = [1, 1]} : vector<128x640xf32> to vector<128x128xf32>
    %cst_49 = arith.constant dense<0xFF800000> : vector<128xf32>
    %119 = vector.multi_reduction <maximumf>, %118, %cst_49 [1] : vector<128x128xf32> to vector<128xf32>
    %120 = vector.shape_cast %119 : vector<128xf32> to vector<128x1xf32>
    %121 = vector.broadcast %120 : vector<128x1xf32> to vector<128x128xf32>
    %122 = arith.subf %118, %121 : vector<128x128xf32>
    %123 = math.exp %122 : vector<128x128xf32>
    %cst_50 = arith.constant dense<0.000000e+00> : vector<128xf32>
    %124 = vector.multi_reduction <add>, %123, %cst_50 [1] : vector<128x128xf32> to vector<128xf32>
    %125 = vector.shape_cast %124 : vector<128xf32> to vector<128x1xf32>
    %126 = tpu.reciprocal %125 : vector<128x1xf32> -> vector<128x1xf32>
    %127 = vector.broadcast %126 : vector<128x1xf32> to vector<128x128xf32>
    %128 = arith.mulf %123, %127 : vector<128x128xf32>
    %c0_51 = arith.constant 0 : index
    %c256 = arith.constant 256 : index
    %129 = vector.load %arg14[%c0_51, %c256] : memref<128x512xf32, #tpu.memory_space<vmem>>, vector<128x128xf32>
    tpu.vector_store %arg14[%c0_51, %c256], %128 {strides = array<i32>} : memref<128x512xf32, #tpu.memory_space<vmem>>, vector<128x128xf32>,
    %130 = vector.extract_strided_slice %91 {offsets = [0, 384], sizes = [128, 128], strides = [1, 1]} : vector<128x640xf32> to vector<128x128xf32>
    %cst_52 = arith.constant dense<0xFF800000> : vector<128xf32>
    %131 = vector.multi_reduction <maximumf>, %130, %cst_52 [1] : vector<128x128xf32> to vector<128xf32>
    %132 = vector.shape_cast %131 : vector<128xf32> to vector<128x1xf32>
    %133 = vector.broadcast %132 : vector<128x1xf32> to vector<128x128xf32>
    %134 = arith.subf %130, %133 : vector<128x128xf32>
    %135 = math.exp %134 : vector<128x128xf32>
    %cst_53 = arith.constant dense<0.000000e+00> : vector<128xf32>
    %136 = vector.multi_reduction <add>, %135, %cst_53 [1] : vector<128x128xf32> to vector<128xf32>
    %137 = vector.shape_cast %136 : vector<128xf32> to vector<128x1xf32>
    %138 = tpu.reciprocal %137 : vector<128x1xf32> -> vector<128x1xf32>
    %139 = vector.broadcast %138 : vector<128x1xf32> to vector<128x128xf32>
    %140 = arith.mulf %135, %139 : vector<128x128xf32>
    %c0_54 = arith.constant 0 : index
    %c384 = arith.constant 384 : index
    %141 = vector.load %arg14[%c0_54, %c384] : memref<128x512xf32, #tpu.memory_space<vmem>>, vector<128x128xf32>
    tpu.vector_store %arg14[%c0_54, %c384], %140 {strides = array<i32>} : memref<128x512xf32, #tpu.memory_space<vmem>>, vector<128x128xf32>,
    return
  }
  func.func @transform_0(%arg0: i32) -> (i32, i32) {
    %c0_i32 = arith.constant 0 : i32
    %c0_i32_0 = arith.constant 0 : i32
    return %arg0, %c0_i32 : i32, i32
  }
  func.func @transform_1(%arg0: i32) -> (i32, i32) {
    %c0_i32 = arith.constant 0 : i32
    %c0_i32_0 = arith.constant 0 : i32
    %c0_i32_1 = arith.constant 0 : i32
    return %c0_i32, %c0_i32_0 : i32, i32
  }
  func.func @transform_2(%arg0: i32) -> (i32, i32) {
    %c0_i32 = arith.constant 0 : i32
    %c0_i32_0 = arith.constant 0 : i32
    %c0_i32_1 = arith.constant 0 : i32
    return %c0_i32, %c0_i32_0 : i32, i32
  }
  func.func @transform_3(%arg0: i32) -> (i32, i32) {
    %c0_i32 = arith.constant 0 : i32
    %c0_i32_0 = arith.constant 0 : i32
    %c0_i32_1 = arith.constant 0 : i32
    return %c0_i32, %c0_i32_0 : i32, i32
  }
  func.func @transform_4(%arg0: i32) -> (i32, i32) {
    %c0_i32 = arith.constant 0 : i32
    %c0_i32_0 = arith.constant 0 : i32
    %c0_i32_1 = arith.constant 0 : i32
    return %c0_i32, %c0_i32_0 : i32, i32
  }
  func.func @transform_5(%arg0: i32) -> (i32, i32) {
    %c0_i32 = arith.constant 0 : i32
    %c0_i32_0 = arith.constant 0 : i32
    %c0_i32_1 = arith.constant 0 : i32
    return %c0_i32, %c0_i32_0 : i32, i32
  }
  func.func @transform_6(%arg0: i32) -> (i32, i32) {
    %c0_i32 = arith.constant 0 : i32
    %c0_i32_0 = arith.constant 0 : i32
    %c0_i32_1 = arith.constant 0 : i32
    return %c0_i32, %c0_i32_0 : i32, i32
  }
  func.func @transform_7(%arg0: i32) -> (i32, i32) {
    %c0_i32 = arith.constant 0 : i32
    %c0_i32_0 = arith.constant 0 : i32
    %c0_i32_1 = arith.constant 0 : i32
    return %c0_i32, %c0_i32_0 : i32, i32
  }
  func.func @transform_8(%arg0: i32) -> (i32, i32) {
    %c0_i32 = arith.constant 0 : i32
    %c0_i32_0 = arith.constant 0 : i32
    %c0_i32_1 = arith.constant 0 : i32
    return %c0_i32, %c0_i32_0 : i32, i32
  }
  func.func @transform_9(%arg0: i32) -> (i32, i32) {
    %c0_i32 = arith.constant 0 : i32
    %c0_i32_0 = arith.constant 0 : i32
    %c0_i32_1 = arith.constant 0 : i32
    return %c0_i32, %c0_i32_0 : i32, i32
  }
  func.func @transform_10(%arg0: i32) -> (i32, i32) {
    %c0_i32 = arith.constant 0 : i32
    %c0_i32_0 = arith.constant 0 : i32
    %c0_i32_1 = arith.constant 0 : i32
    return %c0_i32, %c0_i32_0 : i32, i32
  }
  func.func @transform_11(%arg0: i32) -> (i32, i32) {
    %c0_i32 = arith.constant 0 : i32
    %c0_i32_0 = arith.constant 0 : i32
    %c0_i32_1 = arith.constant 0 : i32
    return %c0_i32, %c0_i32_0 : i32, i32
  }
  func.func @transform_12(%arg0: i32) -> (i32, i32) {
    %c0_i32 = arith.constant 0 : i32
    %c0_i32_0 = arith.constant 0 : i32
    return %arg0, %c0_i32 : i32, i32
  }
  func.func @transform_13(%arg0: i32) -> (i32, i32) {
    %c0_i32 = arith.constant 0 : i32
    %c0_i32_0 = arith.constant 0 : i32
    return %arg0, %c0_i32 : i32, i32
  }
}

</mosaic_0001>

<llo_original>
// kernel: cgn_forward.1
$region0: #{cgn_forward.1}
  #allocation0 [shape = 'u32[]', space=smem, size = 0x4, offset = 0x4, fixed_abs, tag = 'smem constant byte address 0x4 - core index']
  #allocation1 [shape = 'u32[144,128]{1,0:T(1,128)}', space=vmem, size = 0x12000, scoped, tag = 'internal scratch']
  %s0 = inlined_call_operand.vmem [shape: f32[256,2], index: 0, kind: input, shape index: {}]
  %s1 = inlined_call_operand.vmem [shape: f32[1,6], index: 1, kind: input, shape index: {}]
  %s2 = inlined_call_operand.vmem [shape: bf16[128,64], index: 2, kind: input, shape index: {}]
  %s3 = inlined_call_operand.vmem [shape: f32[1,64], index: 3, kind: input, shape index: {}]
  %s4 = inlined_call_operand.vmem [shape: f32[1,64], index: 4, kind: input, shape index: {}]
  %s5 = inlined_call_operand.vmem [shape: f32[1,64], index: 5, kind: input, shape index: {}]
  %s6 = inlined_call_operand.vmem [shape: bf16[64,64], index: 6, kind: input, shape index: {}]
  %s7 = inlined_call_operand.vmem [shape: f32[1,64], index: 7, kind: input, shape index: {}]
  %s8 = inlined_call_operand.vmem [shape: f32[1,64], index: 8, kind: input, shape index: {}]
  %s9 = inlined_call_operand.vmem [shape: f32[1,64], index: 9, kind: input, shape index: {}]
  %s10 = inlined_call_operand.vmem [shape: bf16[64,640], index: 10, kind: input, shape index: {}]
  %s11 = inlined_call_operand.vmem [shape: f32[1,640], index: 11, kind: input, shape index: {}]
  %s12 = inlined_call_operand.vmem [shape: f32[256,4], index: 12, kind: output, shape index: {0}]
  %s13 = inlined_call_operand.vmem [shape: f32[256,512], index: 13, kind: output, shape index: {1}]
  %14 = xla_tuple %s12, %s13
  %s15 = sld [smem:[#allocation0]]
  $region89: #{cgn_forward.1} parent=0
    _
  %s17 = ssub.s32 1, %s15
  %s18 = scalar_select 0, %s17, %s15
  loop: start=0, step=1, limit=4
  $region2: #{cgn_forward.1} parent=0 // loop_pre_header
    _
  $region3: #{cgn_forward.1} parent=0 // loop_header
    %s20 = sphi 0, %s24
    %p21 = scmp.ge.s32.totalorder %s20, 4
    %s30 = sphi 0, %s32
    %s33 = sphi 0, %s30
    %s34 = sphi 0, %s33
    %s50 = sphi 0, %s34
    %s54 = sphi 0, %s54
    %s56 = sphi 0, %s54
    %s57 = sphi 0, %s56
    %s71 = sphi 0, %s57
    %s75 = sphi 0, %s75
    %s77 = sphi 0, %s75
    %s78 = sphi 0, %s77
    %s92 = sphi 0, %s78
    %s96 = sphi 0, %s96
    %s98 = sphi 0, %s96
    %s99 = sphi 0, %s98
    %s113 = sphi 0, %s99
    %s117 = sphi 0, %s117
    %s119 = sphi 0, %s117
    %s120 = sphi 0, %s119
    %s134 = sphi 0, %s120
    %s138 = sphi 0, %s138
    %s140 = sphi 0, %s138
    %s141 = sphi 0, %s140
    %s155 = sphi 0, %s141
    %s159 = sphi 0, %s159
    %s161 = sphi 0, %s159
    %s162 = sphi 0, %s161
    %s176 = sphi 0, %s162
    %s180 = sphi 0, %s180
    %s182 = sphi 0, %s180
    %s183 = sphi 0, %s182
    %s197 = sphi 0, %s183
    %s201 = sphi 0, %s201
    %s203 = sphi 0, %s201
    %s204 = sphi 0, %s203
    %s218 = sphi 0, %s204
    %s222 = sphi 0, %s222
    %s224 = sphi 0, %s222
    %s225 = sphi 0, %s224
    %s239 = sphi 0, %s225
    %s243 = sphi 0, %s243
    %s245 = sphi 0, %s243
    %s246 = sphi 0, %s245
    %s260 = sphi 0, %s246
    %s264 = sphi 0, %s264
    %s266 = sphi 0, %s264
    %s267 = sphi 0, %s266
    %s281 = sphi 0, %s267
    %s287 = sphi 0, %s289
    %s290 = sphi 0, %s287
    %s291 = sphi 0, %s290
    %s307 = sphi 0, %s291
    %s313 = sphi 0, %s315
    %s316 = sphi 0, %s313
    %s317 = sphi 0, %s316
    %s333 = sphi 0, %s317
  $region4: #{cgn_forward.1} parent=0 // loop_header_branch
    %23 = sbr.rel (%p21) target = $region8
  $region5: #{cgn_forward.1} parent=0 // loop_body
    %s25 = ssub.s32 %s20, 1
    %s26 = ssub.s32 %s20, 2
    %s27 = sadd.s32 %s20, 1
    %s28 = ssub.s32 %s20, %s27
    %p29 = scmp.eq.s32.totalorder %s28, 0
    %s31 = sadd.s32 %s30, 1
    %s32 = scalar_select %p29, %s30, %s31
    %p35 = pneg %p29
    %p36 = scmp.eq.s32.totalorder %s20, 1
    %p37 = por %p35, %p36
    %p38 = scmp.ne.s32.totalorder %s30, %s33
    %p39 = scmp.eq.s32.totalorder %s20, 0
    %p40 = por %p38, %p39
    %p41 = scmp.ne.s32.totalorder %s30, %s33
    %p42 = scmp.eq.s32.totalorder %s25, 1
    %p43 = por %p41, %p42
    %p44 = scmp.ne.s32.totalorder %s33, %s34
    %p45 = scmp.eq.s32.totalorder %s25, 0
    %p46 = por %p44, %p45
    %p47 = scmp.ne.s32.totalorder %s33, %s34
    %p48 = scmp.eq.s32.totalorder %s26, 1
    %p49 = por %p47, %p48
    %p51 = scmp.ne.s32.totalorder %s34, %s50
    %p52 = scmp.eq.s32.totalorder %s26, 0
    %p53 = por %p51, %p52
    %s55 = sadd.s32 %s54, 1
    %p58 = scmp.eq.s32.totalorder %s20, 1
    %p59 = scmp.ne.s32.totalorder %s54, %s56
    %p60 = scmp.eq.s32.totalorder %s20, 0
    %p61 = por %p59, %p60
    %p62 = scmp.ne.s32.totalorder %s54, %s56
    %p63 = scmp.eq.s32.totalorder %s25, 1
    %p64 = por %p62, %p63
    %p65 = scmp.ne.s32.totalorder %s56, %s57
    %p66 = scmp.eq.s32.totalorder %s25, 0
    %p67 = por %p65, %p66
    %p68 = scmp.ne.s32.totalorder %s56, %s57
    %p69 = scmp.eq.s32.totalorder %s26, 1
    %p70 = por %p68, %p69
    %p72 = scmp.ne.s32.totalorder %s57, %s71
    %p73 = scmp.eq.s32.totalorder %s26, 0
    %p74 = por %p72, %p73
    %s76 = sadd.s32 %s75, 1
    %p79 = scmp.eq.s32.totalorder %s20, 1
    %p80 = scmp.ne.s32.totalorder %s75, %s77
    %p81 = scmp.eq.s32.totalorder %s20, 0
    %p82 = por %p80, %p81
    %p83 = scmp.ne.s32.totalorder %s75, %s77
    %p84 = scmp.eq.s32.totalorder %s25, 1
    %p85 = por %p83, %p84
    %p86 = scmp.ne.s32.totalorder %s77, %s78
    %p87 = scmp.eq.s32.totalorder %s25, 0
    %p88 = por %p86, %p87
    %p89 = scmp.ne.s32.totalorder %s77, %s78
    %p90 = scmp.eq.s32.totalorder %s26, 1
    %p91 = por %p89, %p90
    %p93 = scmp.ne.s32.totalorder %s78, %s92
    %p94 = scmp.eq.s32.totalorder %s26, 0
    %p95 = por %p93, %p94
    %s97 = sadd.s32 %s96, 1
    %p100 = scmp.eq.s32.totalorder %s20, 1
    %p101 = scmp.ne.s32.totalorder %s96, %s98
    %p102 = scmp.eq.s32.totalorder %s20, 0
    %p103 = por %p101, %p102
    %p104 = scmp.ne.s32.totalorder %s96, %s98
    %p105 = scmp.eq.s32.totalorder %s25, 1
    %p106 = por %p104, %p105
    %p107 = scmp.ne.s32.totalorder %s98, %s99
    %p108 = scmp.eq.s32.totalorder %s25, 0
    %p109 = por %p107, %p108
    %p110 = scmp.ne.s32.totalorder %s98, %s99
    %p111 = scmp.eq.s32.totalorder %s26, 1
    %p112 = por %p110, %p111
    %p114 = scmp.ne.s32.totalorder %s99, %s113
    %p115 = scmp.eq.s32.totalorder %s26, 0
    %p116 = por %p114, %p115
    %s118 = sadd.s32 %s117, 1
    %p121 = scmp.eq.s32.totalorder %s20, 1
    %p122 = scmp.ne.s32.totalorder %s117, %s119
    %p123 = scmp.eq.s32.totalorder %s20, 0
    %p124 = por %p122, %p123
    %p125 = scmp.ne.s32.totalorder %s117, %s119
    %p126 = scmp.eq.s32.totalorder %s25, 1
    %p127 = por %p125, %p126
    %p128 = scmp.ne.s32.totalorder %s119, %s120
    %p129 = scmp.eq.s32.totalorder %s25, 0
    %p130 = por %p128, %p129
    %p131 = scmp.ne.s32.totalorder %s119, %s120
    %p132 = scmp.eq.s32.totalorder %s26, 1
    %p133 = por %p131, %p132
    %p135 = scmp.ne.s32.totalorder %s120, %s134
    %p136 = scmp.eq.s32.totalorder %s26, 0
    %p137 = por %p135, %p136
    %s139 = sadd.s32 %s138, 1
    %p142 = scmp.eq.s32.totalorder %s20, 1
    %p143 = scmp.ne.s32.totalorder %s138, %s140
    %p144 = scmp.eq.s32.totalorder %s20, 0
    %p145 = por %p143, %p144
    %p146 = scmp.ne.s32.totalorder %s138, %s140
    %p147 = scmp.eq.s32.totalorder %s25, 1
    %p148 = por %p146, %p147
    %p149 = scmp.ne.s32.totalorder %s140, %s141
    %p150 = scmp.eq.s32.totalorder %s25, 0
    %p151 = por %p149, %p150
    %p152 = scmp.ne.s32.totalorder %s140, %s141
    %p153 = scmp.eq.s32.totalorder %s26, 1
    %p154 = por %p152, %p153
    %p156 = scmp.ne.s32.totalorder %s141, %s155
    %p157 = scmp.eq.s32.totalorder %s26, 0
    %p158 = por %p156, %p157
    %s160 = sadd.s32 %s159, 1
    %p163 = scmp.eq.s32.totalorder %s20, 1
    %p164 = scmp.ne.s32.totalorder %s159, %s161
    %p165 = scmp.eq.s32.totalorder %s20, 0
    %p166 = por %p164, %p165
    %p167 = scmp.ne.s32.totalorder %s159, %s161
    %p168 = scmp.eq.s32.totalorder %s25, 1
    %p169 = por %p167, %p168
    %p170 = scmp.ne.s32.totalorder %s161, %s162
    %p171 = scmp.eq.s32.totalorder %s25, 0
    %p172 = por %p170, %p171
    %p173 = scmp.ne.s32.totalorder %s161, %s162
    %p174 = scmp.eq.s32.totalorder %s26, 1
    %p175 = por %p173, %p174
    %p177 = scmp.ne.s32.totalorder %s162, %s176
    %p178 = scmp.eq.s32.totalorder %s26, 0
    %p179 = por %p177, %p178
    %s181 = sadd.s32 %s180, 1
    %p184 = scmp.eq.s32.totalorder %s20, 1
    %p185 = scmp.ne.s32.totalorder %s180, %s182
    %p186 = scmp.eq.s32.totalorder %s20, 0
    %p187 = por %p185, %p186
    %p188 = scmp.ne.s32.totalorder %s180, %s182
    %p189 = scmp.eq.s32.totalorder %s25, 1
    %p190 = por %p188, %p189
    %p191 = scmp.ne.s32.totalorder %s182, %s183
    %p192 = scmp.eq.s32.totalorder %s25, 0
    %p193 = por %p191, %p192
    %p194 = scmp.ne.s32.totalorder %s182, %s183
    %p195 = scmp.eq.s32.totalorder %s26, 1
    %p196 = por %p194, %p195
    %p198 = scmp.ne.s32.totalorder %s183, %s197
    %p199 = scmp.eq.s32.totalorder %s26, 0
    %p200 = por %p198, %p199
    %s202 = sadd.s32 %s201, 1
    %p205 = scmp.eq.s32.totalorder %s20, 1
    %p206 = scmp.ne.s32.totalorder %s201, %s203
    %p207 = scmp.eq.s32.totalorder %s20, 0
    %p208 = por %p206, %p207
    %p209 = scmp.ne.s32.totalorder %s201, %s203
    %p210 = scmp.eq.s32.totalorder %s25, 1
    %p211 = por %p209, %p210
    %p212 = scmp.ne.s32.totalorder %s203, %s204
    %p213 = scmp.eq.s32.totalorder %s25, 0
    %p214 = por %p212, %p213
    %p215 = scmp.ne.s32.totalorder %s203, %s204
    %p216 = scmp.eq.s32.totalorder %s26, 1
    %p217 = por %p215, %p216
    %p219 = scmp.ne.s32.totalorder %s204, %s218
    %p220 = scmp.eq.s32.totalorder %s26, 0
    %p221 = por %p219, %p220
    %s223 = sadd.s32 %s222, 1
    %p226 = scmp.eq.s32.totalorder %s20, 1
    %p227 = scmp.ne.s32.totalorder %s222, %s224
    %p228 = scmp.eq.s32.totalorder %s20, 0
    %p229 = por %p227, %p228
    %p230 = scmp.ne.s32.totalorder %s222, %s224
    %p231 = scmp.eq.s32.totalorder %s25, 1
    %p232 = por %p230, %p231
    %p233 = scmp.ne.s32.totalorder %s224, %s225
    %p234 = scmp.eq.s32.totalorder %s25, 0
    %p235 = por %p233, %p234
    %p236 = scmp.ne.s32.totalorder %s224, %s225
    %p237 = scmp.eq.s32.totalorder %s26, 1
    %p238 = por %p236, %p237
    %p240 = scmp.ne.s32.totalorder %s225, %s239
    %p241 = scmp.eq.s32.totalorder %s26, 0
    %p242 = por %p240, %p241
    %s244 = sadd.s32 %s243, 1
    %p247 = scmp.eq.s32.totalorder %s20, 1
    %p248 = scmp.ne.s32.totalorder %s243, %s245
    %p249 = scmp.eq.s32.totalorder %s20, 0
    %p250 = por %p248, %p249
    %p251 = scmp.ne.s32.totalorder %s243, %s245
    %p252 = scmp.eq.s32.totalorder %s25, 1
    %p253 = por %p251, %p252
    %p254 = scmp.ne.s32.totalorder %s245, %s246
    %p255 = scmp.eq.s32.totalorder %s25, 0
    %p256 = por %p254, %p255
    %p257 = scmp.ne.s32.totalorder %s245, %s246
    %p258 = scmp.eq.s32.totalorder %s26, 1
    %p259 = por %p257, %p258
    %p261 = scmp.ne.s32.totalorder %s246, %s260
    %p262 = scmp.eq.s32.totalorder %s26, 0
    %p263 = por %p261, %p262
    %s265 = sadd.s32 %s264, 1
    %p268 = scmp.eq.s32.totalorder %s20, 1
    %p269 = scmp.ne.s32.totalorder %s264, %s266
    %p270 = scmp.eq.s32.totalorder %s20, 0
    %p271 = por %p269, %p270
    %p272 = scmp.ne.s32.totalorder %s264, %s266
    %p273 = scmp.eq.s32.totalorder %s25, 1
    %p274 = por %p272, %p273
    %p275 = scmp.ne.s32.totalorder %s266, %s267
    %p276 = scmp.eq.s32.totalorder %s25, 0
    %p277 = por %p275, %p276
    %p278 = scmp.ne.s32.totalorder %s266, %s267
    %p279 = scmp.eq.s32.totalorder %s26, 1
    %p280 = por %p278, %p279
    %p282 = scmp.ne.s32.totalorder %s267, %s281
    %p283 = scmp.eq.s32.totalorder %s26, 0
    %p284 = por %p282, %p283
    %s285 = ssub.s32 %s20, %s27
    %p286 = scmp.eq.s32.totalorder %s285, 0
    %s288 = sadd.s32 %s287, 1
    %s289 = scalar_select %p286, %s287, %s288
    %p292 = pneg %p286
    %p293 = scmp.eq.s32.totalorder %s20, 1
    %p294 = por %p292, %p293
    %p295 = scmp.ne.s32.totalorder %s287, %s290
    %p296 = scmp.eq.s32.totalorder %s20, 0
    %p297 = por %p295, %p296
    %p298 = scmp.ne.s32.totalorder %s287, %s290
    %p299 = scmp.eq.s32.totalorder %s25, 1
    %p300 = por %p298, %p299
    %p301 = scmp.ne.s32.totalorder %s290, %s291
    %p302 = scmp.eq.s32.totalorder %s25, 0
    %p303 = por %p301, %p302
    %p304 = scmp.ne.s32.totalorder %s290, %s291
    %p305 = scmp.eq.s32.totalorder %s26, 1
    %p306 = por %p304, %p305
    %p308 = scmp.ne.s32.totalorder %s291, %s307
    %p309 = scmp.eq.s32.totalorder %s26, 0
    %p310 = por %p308, %p309
    %s311 = ssub.s32 %s20, %s27
    %p312 = scmp.eq.s32.totalorder %s311, 0
    %s314 = sadd.s32 %s313, 1
    %s315 = scalar_select %p312, %s313, %s314
    %p318 = pneg %p312
    %p319 = scmp.eq.s32.totalorder %s20, 1
    %p320 = por %p318, %p319
    %p321 = scmp.ne.s32.totalorder %s313, %s316
    %p322 = scmp.eq.s32.totalorder %s20, 0
    %p323 = por %p321, %p322
    %p324 = scmp.ne.s32.totalorder %s313, %s316
    %p325 = scmp.eq.s32.totalorder %s25, 1
    %p326 = por %p324, %p325
    %p327 = scmp.ne.s32.totalorder %s316, %s317
    %p328 = scmp.eq.s32.totalorder %s25, 0
    %p329 = por %p327, %p328
    %p330 = scmp.ne.s32.totalorder %s316, %s317
    %p331 = scmp.eq.s32.totalorder %s26, 1
    %p332 = por %p330, %p331
    %p334 = scmp.ne.s32.totalorder %s317, %s333
    %p335 = scmp.eq.s32.totalorder %s26, 0
    %p336 = por %p334, %p335
    %p337 = scmp.le.s32.totalorder 1, %s20
    %p338 = scmp.lt.s32.totalorder %s20, 3
    %p339 = pnand %p337, %p338
    %p340 = pneg %p339
    // Predicated region
    $region9: #{cgn_forward.1} parent=5 // pred_check
      _
    $region10: #{cgn_forward.1} parent=5 // pred_check_branch
      %342 = sbr.rel (%p339) target = $region12
    $region11: #{cgn_forward.1} parent=5 // pred_region
      %s343 = ssub.s32 %s20, 1
      // Predicated region
      $region13: #{cgn_forward.1} parent=11 // pred_check
        %p344 = pneg %p67
      $region14: #{cgn_forward.1} parent=11 // pred_check_branch
        %346 = sbr.rel (%p344) target = $region16
      $region15: #{cgn_forward.1} parent=11 // pred_region
        _
      $region16: #{cgn_forward.1} parent=11 // pred_fallthru
        _
      // Predicated region
      $region17: #{cgn_forward.1} parent=11 // pred_check
        %p347 = pneg %p88
      $region18: #{cgn_forward.1} parent=11 // pred_check_branch
        %349 = sbr.rel (%p347) target = $region20
      $region19: #{cgn_forward.1} parent=11 // pred_region
        _
      $region20: #{cgn_forward.1} parent=11 // pred_fallthru
        _
      // Predicated region
      $region21: #{cgn_forward.1} parent=11 // pred_check
        %p350 = pneg %p109
      $region22: #{cgn_forward.1} parent=11 // pred_check_branch
        %352 = sbr.rel (%p350) target = $region24
      $region23: #{cgn_forward.1} parent=11 // pred_region
        _
      $region24: #{cgn_forward.1} parent=11 // pred_fallthru
        _
      // Predicated region
      $region25: #{cgn_forward.1} parent=11 // pred_check
        %p353 = pneg %p130
      $region26: #{cgn_forward.1} parent=11 // pred_check_branch
        %355 = sbr.rel (%p353) target = $region28
      $region27: #{cgn_forward.1} parent=11 // pred_region
        _
      $region28: #{cgn_forward.1} parent=11 // pred_fallthru
        _
      // Predicated region
      $region29: #{cgn_forward.1} parent=11 // pred_check
        %p356 = pneg %p151
      $region30: #{cgn_forward.1} parent=11 // pred_check_branch
        %358 = sbr.rel (%p356) target = $region32
      $region31: #{cgn_forward.1} parent=11 // pred_region
        _
      $region32: #{cgn_forward.1} parent=11 // pred_fallthru
        _
      // Predicated region
      $region33: #{cgn_forward.1} parent=11 // pred_check
        %p359 = pneg %p172
      $region34: #{cgn_forward.1} parent=11 // pred_check_branch
        %361 = sbr.rel (%p359) target = $region36
      $region35: #{cgn_forward.1} parent=11 // pred_region
        _
      $region36: #{cgn_forward.1} parent=11 // pred_fallthru
        _
      // Predicated region
      $region37: #{cgn_forward.1} parent=11 // pred_check
        %p362 = pneg %p193
      $region38: #{cgn_forward.1} parent=11 // pred_check_branch
        %364 = sbr.rel (%p362) target = $region40
      $region39: #{cgn_forward.1} parent=11 // pred_region
        _
      $region40: #{cgn_forward.1} parent=11 // pred_fallthru
        _
      // Predicated region
      $region41: #{cgn_forward.1} parent=11 // pred_check
        %p365 = pneg %p214
      $region42: #{cgn_forward.1} parent=11 // pred_check_branch
        %367 = sbr.rel (%p365) target = $region44
      $region43: #{cgn_forward.1} parent=11 // pred_region
        _
      $region44: #{cgn_forward.1} parent=11 // pred_fallthru
        _
      // Predicated region
      $region45: #{cgn_forward.1} parent=11 // pred_check
        %p368 = pneg %p235
      $region46: #{cgn_forward.1} parent=11 // pred_check_branch
        %370 = sbr.rel (%p368) target = $region48
      $region47: #{cgn_forward.1} parent=11 // pred_region
        _
      $region48: #{cgn_forward.1} parent=11 // pred_fallthru
        _
      // Predicated region
      $region49: #{cgn_forward.1} parent=11 // pred_check
        %p371 = pneg %p256
      $region50: #{cgn_forward.1} parent=11 // pred_check_branch
        %373 = sbr.rel (%p371) target = $region52
      $region51: #{cgn_forward.1} parent=11 // pred_region
        _
      $region52: #{cgn_forward.1} parent=11 // pred_fallthru
        _
      // Predicated region
      $region53: #{cgn_forward.1} parent=11 // pred_check
        %p374 = pneg %p277
      $region54: #{cgn_forward.1} parent=11 // pred_check_branch
        %376 = sbr.rel (%p374) target = $region56
      $region55: #{cgn_forward.1} parent=11 // pred_region
        _
      $region56: #{cgn_forward.1} parent=11 // pred_fallthru
        _
    $region12: #{cgn_forward.1} parent=5 // pred_fallthru
      _
    %p377 = scmp.lt.s32.totalorder %s20, 2
    // Predicated region
    $region57: #{cgn_forward.1} parent=5 // pred_check
      %p378 = pneg %p377
    $region58: #{cgn_forward.1} parent=5 // pred_check_branch
      %380 = sbr.rel (%p378) target = $region60
    $region59: #{cgn_forward.1} parent=5 // pred_region
      // Predicated region
      $region61: #{cgn_forward.1} parent=59 // pred_check
        %p381 = pneg %p40
      $region62: #{cgn_forward.1} parent=59 // pred_check_branch
        %383 = sbr.rel (%p381) target = $region64
      $region63: #{cgn_forward.1} parent=59 // pred_region
        %s384 = smul.u32 16, %s20
        %p385 = scmp.lt.s32.totalorder %s384, 31
        %s386 = scalar_select %p385, %s384, 31
        %s387 = smul.addr %s386, 8
        %s388 = scalar_lea.vmem %s0, %s387
        %s389 = smul.u32 16, %s20
      $region64: #{cgn_forward.1} parent=59 // pred_fallthru
        _
    $region60: #{cgn_forward.1} parent=5 // pred_fallthru
      _
    %p390 = scmp.le.s32.totalorder 1, %s20
    %p391 = scmp.lt.s32.totalorder %s20, 3
    %p392 = pnand %p390, %p391
    %p393 = pneg %p392
    // Predicated region
    $region65: #{cgn_forward.1} parent=5 // pred_check
      _
    $region66: #{cgn_forward.1} parent=5 // pred_check_branch
      %395 = sbr.rel (%p392) target = $region68
    $region67: #{cgn_forward.1} parent=5 // pred_region
      %s396 = ssub.s32 %s20, 1
      %s397 = smul.u32 16, %s25
      %p398 = scmp.lt.s32.totalorder %s397, 31
      %s399 = scalar_select %p398, %s397, 31
      %s400 = smul.addr %s399, 8
      %s401 = scalar_lea.vmem %s0, %s400
      %p402 = pneg %p46
      %p403 = pneg %p43
      %p404 = pneg %p67
      %p405 = pneg %p64
      %p406 = pneg %p88
      %p407 = pneg %p85
      %p408 = pneg %p109
      %p409 = pneg %p106
      %p410 = pneg %p130
      %p411 = pneg %p127
      %p412 = pneg %p151
      %p413 = pneg %p148
      %p414 = pneg %p172
      %p415 = pneg %p169
      %p416 = pneg %p193
      %p417 = pneg %p190
      %p418 = pneg %p214
      %p419 = pneg %p211
      %p420 = pneg %p235
      %p421 = pneg %p232
      %p422 = pneg %p256
      %p423 = pneg %p253
      %p424 = pneg %p277
      %p425 = pneg %p274
      %p426 = pneg %p303
      %p427 = pneg %p300
      %s428 = smul.u32 16, %s25
      %p429 = scmp.lt.s32.totalorder %s428, 31
      %s430 = scalar_select %p429, %s428, 31
      %s431 = smul.addr %s430, 8
      %s432 = scalar_lea.vmem %s12, %s431
      %p433 = pneg %p329
      %p434 = pneg %p326
      %s435 = smul.u32 16, %s25
      %p436 = scmp.lt.s32.totalorder %s435, 31
      %s437 = scalar_select %p436, %s435, 31
      %s438 = smul.addr %s437, 4
      %s439 = smul.addr %s438, 8
      %s440 = scalar_lea.vmem %s13, %s439
      %s441 = smul.u32 16, %s25
      %p442 = scmp.lt.s32.totalorder %s441, 31
      %s443 = scalar_select %p442, %s441, 31
      %s444 = smul.addr %s443, 8
      %s445 = scalar_lea.vmem %s0, %s444
      %s446 = smul.u32 16, %s25
      %s447 = smul.u32 16, %s25
      %p448 = scmp.lt.s32.totalorder %s447, 31
      %s449 = scalar_select %p448, %s447, 31
      %s450 = smul.addr %s449, 8
      %s451 = scalar_lea.vmem %s12, %s450
      %s452 = smul.u32 16, %s25
      %s453 = smul.u32 16, %s25
      %p454 = scmp.lt.s32.totalorder %s453, 31
      %s455 = scalar_select %p454, %s453, 31
      %s456 = smul.addr %s455, 4
      %s457 = smul.addr %s456, 8
      %s458 = scalar_lea.vmem %s13, %s457
      %s459 = smul.u32 16, %s25
      %v461 = vld [vmem:[%s445] sm:$0xff]
      %v462 = vld [vmem:[%s445 + $0x8] sm:$0xff]
      %v463 = vld [vmem:[%s445 + $0x10] sm:$0xff]
      %v464 = vld [vmem:[%s445 + $0x18] sm:$0xff]
      %v465 = vld [vmem:[%s445 + $0x20] sm:$0xff]
      %v466 = vld [vmem:[%s445 + $0x28] sm:$0xff]
      %v467 = vld [vmem:[%s445 + $0x30] sm:$0xff]
      %v468 = vld [vmem:[%s445 + $0x38] sm:$0xff]
      %v469 = vld [vmem:[%s445 + $0x40] sm:$0xff]
      %v470 = vld [vmem:[%s445 + $0x48] sm:$0xff]
      %v471 = vld [vmem:[%s445 + $0x50] sm:$0xff]
      %v472 = vld [vmem:[%s445 + $0x58] sm:$0xff]
      %v473 = vld [vmem:[%s445 + $0x60] sm:$0xff]
      %v474 = vld [vmem:[%s445 + $0x68] sm:$0xff]
      %v475 = vld [vmem:[%s445 + $0x70] sm:$0xff]
      %v476 = vld [vmem:[%s445 + $0x78] sm:$0xff]
      %v477 = vld [vmem:[%s1] sm:$0x1]
      %479 = vset.pattern.permute.xlu0 0
      %480 = vperm.xlu0 %479, %v461
      %v481 = vpop.permute.xlu0 %480
      %484 = vset.pattern.permute.xlu0 0
      %485 = vperm.xlu0 %484, %v462
      %v486 = vpop.permute.xlu0 %485
      %489 = vset.pattern.permute.xlu0 0
      %490 = vperm.xlu0 %489, %v463
      %v491 = vpop.permute.xlu0 %490
      %494 = vset.pattern.permute.xlu0 0
      %495 = vperm.xlu0 %494, %v464
      %v496 = vpop.permute.xlu0 %495
      %499 = vset.pattern.permute.xlu0 0
      %500 = vperm.xlu0 %499, %v465
      %v501 = vpop.permute.xlu0 %500
      %504 = vset.pattern.permute.xlu0 0
      %505 = vperm.xlu0 %504, %v466
      %v506 = vpop.permute.xlu0 %505
      %509 = vset.pattern.permute.xlu0 0
      %510 = vperm.xlu0 %509, %v467
      %v511 = vpop.permute.xlu0 %510
      %514 = vset.pattern.permute.xlu0 0
      %515 = vperm.xlu0 %514, %v468
      %v516 = vpop.permute.xlu0 %515
      %519 = vset.pattern.permute.xlu0 0
      %520 = vperm.xlu0 %519, %v469
      %v521 = vpop.permute.xlu0 %520
      %524 = vset.pattern.permute.xlu0 0
      %525 = vperm.xlu0 %524, %v470
      %v526 = vpop.permute.xlu0 %525
      %529 = vset.pattern.permute.xlu0 0
      %530 = vperm.xlu0 %529, %v471
      %v531 = vpop.permute.xlu0 %530
      %534 = vset.pattern.permute.xlu0 0
      %535 = vperm.xlu0 %534, %v472
      %v536 = vpop.permute.xlu0 %535
      %539 = vset.pattern.permute.xlu0 0
      %540 = vperm.xlu0 %539, %v473
      %v541 = vpop.permute.xlu0 %540
      %544 = vset.pattern.permute.xlu0 0
      %545 = vperm.xlu0 %544, %v474
      %v546 = vpop.permute.xlu0 %545
      %549 = vset.pattern.permute.xlu0 0
      %550 = vperm.xlu0 %549, %v475
      %v551 = vpop.permute.xlu0 %550
      %554 = vset.pattern.permute.xlu0 0
      %555 = vperm.xlu0 %554, %v476
      %v556 = vpop.permute.xlu0 %555
      %v559 = vlaneseq
      %v560 = vshrl.u32 %v559, 7
      %v561 = vsub.s32 0, %v560
      %v562 = vrot.slane %v477, %v561
      %v564 = vmul.f32 %v481, %v562
      %v565 = vmul.f32 %v486, %v562
      %v566 = vmul.f32 %v491, %v562
      %v567 = vmul.f32 %v496, %v562
      %v568 = vmul.f32 %v501, %v562
      %v569 = vmul.f32 %v506, %v562
      %v570 = vmul.f32 %v511, %v562
      %v571 = vmul.f32 %v516, %v562
      %v572 = vmul.f32 %v521, %v562
      %v573 = vmul.f32 %v526, %v562
      %v574 = vmul.f32 %v531, %v562
      %v575 = vmul.f32 %v536, %v562
      %v576 = vmul.f32 %v541, %v562
      %v577 = vmul.f32 %v546, %v562
      %v578 = vmul.f32 %v551, %v562
      %v579 = vmul.f32 %v556, %v562
      %580 = vset.pattern.permute.xlu0 1
      %581 = vperm.xlu0 %580, %v461
      %v582 = vpop.permute.xlu0 %581
      %584 = vset.pattern.permute.xlu0 1
      %585 = vperm.xlu0 %584, %v462
      %v586 = vpop.permute.xlu0 %585
      %588 = vset.pattern.permute.xlu0 1
      %589 = vperm.xlu0 %588, %v463
      %v590 = vpop.permute.xlu0 %589
      %592 = vset.pattern.permute.xlu0 1
      %593 = vperm.xlu0 %592, %v464
      %v594 = vpop.permute.xlu0 %593
      %596 = vset.pattern.permute.xlu0 1
      %597 = vperm.xlu0 %596, %v465
      %v598 = vpop.permute.xlu0 %597
      %600 = vset.pattern.permute.xlu0 1
      %601 = vperm.xlu0 %600, %v466
      %v602 = vpop.permute.xlu0 %601
      %604 = vset.pattern.permute.xlu0 1
      %605 = vperm.xlu0 %604, %v467
      %v606 = vpop.permute.xlu0 %605
      %608 = vset.pattern.permute.xlu0 1
      %609 = vperm.xlu0 %608, %v468
      %v610 = vpop.permute.xlu0 %609
      %612 = vset.pattern.permute.xlu0 1
      %613 = vperm.xlu0 %612, %v469
      %v614 = vpop.permute.xlu0 %613
      %616 = vset.pattern.permute.xlu0 1
      %617 = vperm.xlu0 %616, %v470
      %v618 = vpop.permute.xlu0 %617
      %620 = vset.pattern.permute.xlu0 1
      %621 = vperm.xlu0 %620, %v471
      %v622 = vpop.permute.xlu0 %621
      %624 = vset.pattern.permute.xlu0 1
      %625 = vperm.xlu0 %624, %v472
      %v626 = vpop.permute.xlu0 %625
      %628 = vset.pattern.permute.xlu0 1
      %629 = vperm.xlu0 %628, %v473
      %v630 = vpop.permute.xlu0 %629
      %632 = vset.pattern.permute.xlu0 1
      %633 = vperm.xlu0 %632, %v474
      %v634 = vpop.permute.xlu0 %633
      %636 = vset.pattern.permute.xlu0 1
      %637 = vperm.xlu0 %636, %v475
      %v638 = vpop.permute.xlu0 %637
      %640 = vset.pattern.permute.xlu0 1
      %641 = vperm.xlu0 %640, %v476
      %v642 = vpop.permute.xlu0 %641
      %v644 = vmul.f32 %v582, %v562
      %v645 = vmul.f32 %v586, %v562
      %v646 = vmul.f32 %v590, %v562
      %v647 = vmul.f32 %v594, %v562
      %v648 = vmul.f32 %v598, %v562
      %v649 = vmul.f32 %v602, %v562
      %v650 = vmul.f32 %v606, %v562
      %v651 = vmul.f32 %v610, %v562
      %v652 = vmul.f32 %v614, %v562
      %v653 = vmul.f32 %v618, %v562
      %v654 = vmul.f32 %v622, %v562
      %v655 = vmul.f32 %v626, %v562
      %v656 = vmul.f32 %v630, %v562
      %v657 = vmul.f32 %v634, %v562
      %v658 = vmul.f32 %v638, %v562
      %v659 = vmul.f32 %v642, %v562
      %v660 = vand.u32 2147483647, %v564
      %vm661 = vcmp.le.f32.partialorder %v660, 0.7853982
      %vm662 = vcmp.lt.s32.totalorder %v564, 0
      %v663 = vand.u32 %v564, 2139095040
      %v664 = vshrl.u32 %v663, 23
      %v665 = vsub.s32 %v664, 127
      %v666 = vand.u32 2147483647, %v564
      %v667 = vand.u32 %v666, 8388607
      %v668 = vor.u32 %v667, 8388608
      %v669 = vsub.s32 0, %v668
      %v670 = vadd.s32 %v665, 1
      %vm671 = vcmp.gt.s32.totalorder %v670, 0
      %v672 = vsel %vm671, %v670, 0
      %v673 = vshrl.u32 %v672, 5
      %v674 = vand.u32 %v672, 31
      %v675 = vsub.s32 32, %v674
      %v676 = vshrl.u32 683565275, %v675
      %v677 = vshll.u32 683565275, %v674
      %v678 = vshrl.u32 2475754826, %v675
      %v679 = vor.u32 %v677, %v678
      %v680 = vshll.u32 2475754826, %v674
      %v681 = vshrl.u32 2131351028, %v675
      %v682 = vor.u32 %v680, %v681
      %v683 = vshll.u32 2131351028, %v674
      %v684 = vshrl.u32 2102212464, %v675
      %v685 = vor.u32 %v683, %v684
      %v686 = vshll.u32 2102212464, %v674
      %v687 = vshrl.u32 920167782, %v675
      %v688 = vor.u32 %v686, %v687
      %v689 = vshll.u32 920167782, %v674
      %v690 = vshrl.u32 1326507024, %v675
      %v691 = vor.u32 %v689, %v690
      %vm692 = vcmp.lt.s32.totalorder %v673, 1
      %vm693 = vcmp.lt.s32.totalorder %v673, 2
      %vm694 = vcmp.lt.s32.totalorder %v673, 3
      %vm695 = vcmp.lt.s32.totalorder %v673, 4
      %v696 = vsel %vm692, %v676, %v679
      %v697 = vsel %vm695, %v685, 2102212464
      %v698 = vsel %vm694, %v682, %v697
      %v699 = vsel %vm693, %v696, %v698
      %v700 = vsel %vm692, %v679, %v682
      %v701 = vsel %vm695, %v688, 920167782
      %v702 = vsel %vm694, %v685, %v701
      %v703 = vsel %vm693, %v700, %v702
      %v704 = vsel %vm692, %v682, %v685
      %v705 = vsel %vm695, %v691, 1326507024
      %v706 = vsel %vm694, %v688, %v705
      %v707 = vsel %vm693, %v704, %v706
      %v708 = vshll.u32 %v668, 8
      %v709 = vmul.u32.u64.compose %v708, %v707
      %v710 = vextract.low.u32 %v709
      %v711 = vextract.high.u32 %v709
      %v712 = vmul.u32.u64.compose %v708, %v703
      %v713 = vextract.low.u32 %v712
      %v714 = vextract.high.u32 %v712
      %v715 = vmul.u32 %v708, %v699
      %v716 = vadd.s32 %v711, %v713
      %vm717 = vc.u32 %v711, %v713
      %v718 = vadd.s32 %v714, 1
      %v719 = vsel %vm717, %v718, %v714
      %v720 = vadd.s32 %v715, %v719
      %v721 = vadd.s32 %v720, 536870912
      %v722 = vshrl.u32 %v721, 30
      %v723 = vshll.u32 %v722, 30
      %v724 = vsub.s32 %v720, %v723
      %vm725 = vcmp.lt.s32.totalorder %v724, 0
      %v726 = vsub.s32 0, %v724
      %v727 = vsel %vm725, %v726, %v724
      %v728 = vclz %v727
      %v729 = vsub.s32 %v728, 2
      %vm730 = vcmp.gt.s32.totalorder 0, %v729
      %v731 = vsel %vm730, 0, %v729
      %v732 = vsub.s32 32, %v731
      %v733 = vshll.u32 %v724, %v731
      %v734 = vshrl.u32 %v716, %v732
      %v735 = vor.u32 %v733, %v734
      %v736 = vsub.s32 4294967266, %v731
      %v737 = vadd.s32 %v736, 127
      %v738 = vshll.u32 %v737, 23
      %v739 = vor.u32 4788187, %v738
      %v740 = vand.u32 2147483647, %v739
      %v742 = vcvt.s32.f32 %v735
      %v743 = vmul.f32 %v742, %v740
      %v744 = vxor.u32 %v743, 2147483648
      %v745 = vsel %vm662, %v744, %v743
      %v746 = vsub.s32 4, %v722
      %v747 = vsel %vm662, %v746, %v722
      %v748 = vsel %vm661, %v564, %v745
      %v749 = vsel %vm661, 0, %v747
      %v750 = vcosq.f32.pop %v748
      %v751 = vsinq.f32.pop %v748
      %vm752 = vweird.f32 %v564
      %v753 = vadd.s32 %v749, 3
      %v754 = vand.u32 %v753, 3
      %vm755 = vcmp.lt.s32.totalorder %v754, 2
      %vm756 = vcmp.eq.s32.totalorder %v754, 0
      %v757 = vxor.u32 %v751, 2147483648
      %v758 = vsel %vm756, %v750, %v757
      %vm759 = vcmp.eq.s32.totalorder %v754, 2
      %v760 = vxor.u32 %v750, 2147483648
      %v761 = vsel %vm759, %v760, %v751
      %v762 = vsel %vm755, %v758, %v761
      %v763 = vsel %vm752, nan, %v762
      %v764 = vand.u32 2147483647, %v565
      %vm765 = vcmp.le.f32.partialorder %v764, 0.7853982
      %vm766 = vcmp.lt.s32.totalorder %v565, 0
      %v767 = vand.u32 %v565, 2139095040
      %v768 = vshrl.u32 %v767, 23
      %v769 = vsub.s32 %v768, 127
      %v770 = vand.u32 2147483647, %v565
      %v771 = vand.u32 %v770, 8388607
      %v772 = vor.u32 %v771, 8388608
      %v773 = vsub.s32 0, %v772
      %v774 = vadd.s32 %v769, 1
      %vm775 = vcmp.gt.s32.totalorder %v774, 0
      %v776 = vsel %vm775, %v774, 0
      %v777 = vshrl.u32 %v776, 5
      %v778 = vand.u32 %v776, 31
      %v779 = vsub.s32 32, %v778
      %v780 = vshrl.u32 683565275, %v779
      %v781 = vshll.u32 683565275, %v778
      %v782 = vshrl.u32 2475754826, %v779
      %v783 = vor.u32 %v781, %v782
      %v784 = vshll.u32 2475754826, %v778
      %v785 = vshrl.u32 2131351028, %v779
      %v786 = vor.u32 %v784, %v785
      %v787 = vshll.u32 2131351028, %v778
      %v788 = vshrl.u32 2102212464, %v779
      %v789 = vor.u32 %v787, %v788
      %v790 = vshll.u32 2102212464, %v778
      %v791 = vshrl.u32 920167782, %v779
      %v792 = vor.u32 %v790, %v791
      %v793 = vshll.u32 920167782, %v778
      %v794 = vshrl.u32 1326507024, %v779
      %v795 = vor.u32 %v793, %v794
      %vm796 = vcmp.lt.s32.totalorder %v777, 1
      %vm797 = vcmp.lt.s32.totalorder %v777, 2
      %vm798 = vcmp.lt.s32.totalorder %v777, 3
      %vm799 = vcmp.lt.s32.totalorder %v777, 4
      %v800 = vsel %vm796, %v780, %v783
      %v801 = vsel %vm799, %v789, 2102212464
      %v802 = vsel %vm798, %v786, %v801
      %v803 = vsel %vm797, %v800, %v802
      %v804 = vsel %vm796, %v783, %v786
      %v805 = vsel %vm799, %v792, 920167782
      %v806 = vsel %vm798, %v789, %v805
      %v807 = vsel %vm797, %v804, %v806
      %v808 = vsel %vm796, %v786, %v789
      %v809 = vsel %vm799, %v795, 1326507024
      %v810 = vsel %vm798, %v792, %v809
      %v811 = vsel %vm797, %v808, %v810
      %v812 = vshll.u32 %v772, 8
      %v813 = vmul.u32.u64.compose %v812, %v811
      %v814 = vextract.low.u32 %v813
      %v815 = vextract.high.u32 %v813
      %v816 = vmul.u32.u64.compose %v812, %v807
      %v817 = vextract.low.u32 %v816
      %v818 = vextract.high.u32 %v816
      %v819 = vmul.u32 %v812, %v803
      %v820 = vadd.s32 %v815, %v817
      %vm821 = vc.u32 %v815, %v817
      %v822 = vadd.s32 %v818, 1
      %v823 = vsel %vm821, %v822, %v818
      %v824 = vadd.s32 %v819, %v823
      %v825 = vadd.s32 %v824, 536870912
      %v826 = vshrl.u32 %v825, 30
      %v827 = vshll.u32 %v826, 30
      %v828 = vsub.s32 %v824, %v827
      %vm829 = vcmp.lt.s32.totalorder %v828, 0
      %v830 = vsub.s32 0, %v828
      %v831 = vsel %vm829, %v830, %v828
      %v832 = vclz %v831
      %v833 = vsub.s32 %v832, 2
      %vm834 = vcmp.gt.s32.totalorder 0, %v833
      %v835 = vsel %vm834, 0, %v833
      %v836 = vsub.s32 32, %v835
      %v837 = vshll.u32 %v828, %v835
      %v838 = vshrl.u32 %v820, %v836
      %v839 = vor.u32 %v837, %v838
      %v840 = vsub.s32 4294967266, %v835
      %v841 = vadd.s32 %v840, 127
      %v842 = vshll.u32 %v841, 23
      %v843 = vor.u32 4788187, %v842
      %v844 = vand.u32 2147483647, %v843
      %v846 = vcvt.s32.f32 %v839
      %v847 = vmul.f32 %v846, %v844
      %v848 = vxor.u32 %v847, 2147483648
      %v849 = vsel %vm766, %v848, %v847
      %v850 = vsub.s32 4, %v826
      %v851 = vsel %vm766, %v850, %v826
      %v852 = vsel %vm765, %v565, %v849
      %v853 = vsel %vm765, 0, %v851
      %v854 = vcosq.f32.pop %v852
      %v855 = vsinq.f32.pop %v852
      %vm856 = vweird.f32 %v565
      %v857 = vadd.s32 %v853, 3
      %v858 = vand.u32 %v857, 3
      %vm859 = vcmp.lt.s32.totalorder %v858, 2
      %vm860 = vcmp.eq.s32.totalorder %v858, 0
      %v861 = vxor.u32 %v855, 2147483648
      %v862 = vsel %vm860, %v854, %v861
      %vm863 = vcmp.eq.s32.totalorder %v858, 2
      %v864 = vxor.u32 %v854, 2147483648
      %v865 = vsel %vm863, %v864, %v855
      %v866 = vsel %vm859, %v862, %v865
      %v867 = vsel %vm856, nan, %v866
      %v868 = vand.u32 2147483647, %v566
      %vm869 = vcmp.le.f32.partialorder %v868, 0.7853982
      %vm870 = vcmp.lt.s32.totalorder %v566, 0
      %v871 = vand.u32 %v566, 2139095040
      %v872 = vshrl.u32 %v871, 23
      %v873 = vsub.s32 %v872, 127
      %v874 = vand.u32 2147483647, %v566
      %v875 = vand.u32 %v874, 8388607
      %v876 = vor.u32 %v875, 8388608
      %v877 = vsub.s32 0, %v876
      %v878 = vadd.s32 %v873, 1
      %vm879 = vcmp.gt.s32.totalorder %v878, 0
      %v880 = vsel %vm879, %v878, 0
      %v881 = vshrl.u32 %v880, 5
      %v882 = vand.u32 %v880, 31
      %v883 = vsub.s32 32, %v882
      %v884 = vshrl.u32 683565275, %v883
      %v885 = vshll.u32 683565275, %v882
      %v886 = vshrl.u32 2475754826, %v883
      %v887 = vor.u32 %v885, %v886
      %v888 = vshll.u32 2475754826, %v882
      %v889 = vshrl.u32 2131351028, %v883
      %v890 = vor.u32 %v888, %v889
      %v891 = vshll.u32 2131351028, %v882
      %v892 = vshrl.u32 2102212464, %v883
      %v893 = vor.u32 %v891, %v892
      %v894 = vshll.u32 2102212464, %v882
      %v895 = vshrl.u32 920167782, %v883
      %v896 = vor.u32 %v894, %v895
      %v897 = vshll.u32 920167782, %v882
      %v898 = vshrl.u32 1326507024, %v883
      %v899 = vor.u32 %v897, %v898
      %vm900 = vcmp.lt.s32.totalorder %v881, 1
      %vm901 = vcmp.lt.s32.totalorder %v881, 2
      %vm902 = vcmp.lt.s32.totalorder %v881, 3
      %vm903 = vcmp.lt.s32.totalorder %v881, 4
      %v904 = vsel %vm900, %v884, %v887
      %v905 = vsel %vm903, %v893, 2102212464
      %v906 = vsel %vm902, %v890, %v905
      %v907 = vsel %vm901, %v904, %v906
      %v908 = vsel %vm900, %v887, %v890
      %v909 = vsel %vm903, %v896, 920167782
      %v910 = vsel %vm902, %v893, %v909
      %v911 = vsel %vm901, %v908, %v910
      %v912 = vsel %vm900, %v890, %v893
      %v913 = vsel %vm903, %v899, 1326507024
      %v914 = vsel %vm902, %v896, %v913
      %v915 = vsel %vm901, %v912, %v914
      %v916 = vshll.u32 %v876, 8
      %v917 = vmul.u32.u64.compose %v916, %v915
      %v918 = vextract.low.u32 %v917
      %v919 = vextract.high.u32 %v917
      %v920 = vmul.u32.u64.compose %v916, %v911
      %v921 = vextract.low.u32 %v920
      %v922 = vextract.high.u32 %v920
      %v923 = vmul.u32 %v916, %v907
      %v924 = vadd.s32 %v919, %v921
      %vm925 = vc.u32 %v919, %v921
      %v926 = vadd.s32 %v922, 1
      %v927 = vsel %vm925, %v926, %v922
      %v928 = vadd.s32 %v923, %v927
      %v929 = vadd.s32 %v928, 536870912
      %v930 = vshrl.u32 %v929, 30
      %v931 = vshll.u32 %v930, 30
      %v932 = vsub.s32 %v928, %v931
      %vm933 = vcmp.lt.s32.totalorder %v932, 0
      %v934 = vsub.s32 0, %v932
      %v935 = vsel %vm933, %v934, %v932
      %v936 = vclz %v935
      %v937 = vsub.s32 %v936, 2
      %vm938 = vcmp.gt.s32.totalorder 0, %v937
      %v939 = vsel %vm938, 0, %v937
      %v940 = vsub.s32 32, %v939
      %v941 = vshll.u32 %v932, %v939
      %v942 = vshrl.u32 %v924, %v940
      %v943 = vor.u32 %v941, %v942
      %v944 = vsub.s32 4294967266, %v939
      %v945 = vadd.s32 %v944, 127
      %v946 = vshll.u32 %v945, 23
      %v947 = vor.u32 4788187, %v946
      %v948 = vand.u32 2147483647, %v947
      %v950 = vcvt.s32.f32 %v943
      %v951 = vmul.f32 %v950, %v948
      %v952 = vxor.u32 %v951, 2147483648
      %v953 = vsel %vm870, %v952, %v951
      %v954 = vsub.s32 4, %v930
      %v955 = vsel %vm870, %v954, %v930
      %v956 = vsel %vm869, %v566, %v953
      %v957 = vsel %vm869, 0, %v955
      %v958 = vcosq.f32.pop %v956
      %v959 = vsinq.f32.pop %v956
      %vm960 = vweird.f32 %v566
      %v961 = vadd.s32 %v957, 3
      %v962 = vand.u32 %v961, 3
      %vm963 = vcmp.lt.s32.totalorder %v962, 2
      %vm964 = vcmp.eq.s32.totalorder %v962, 0
      %v965 = vxor.u32 %v959, 2147483648
      %v966 = vsel %vm964, %v958, %v965
      %vm967 = vcmp.eq.s32.totalorder %v962, 2
      %v968 = vxor.u32 %v958, 2147483648
      %v969 = vsel %vm967, %v968, %v959
      %v970 = vsel %vm963, %v966, %v969
      %v971 = vsel %vm960, nan, %v970
      %v972 = vand.u32 2147483647, %v567
      %vm973 = vcmp.le.f32.partialorder %v972, 0.7853982
      %vm974 = vcmp.lt.s32.totalorder %v567, 0
      %v975 = vand.u32 %v567, 2139095040
      %v976 = vshrl.u32 %v975, 23
      %v977 = vsub.s32 %v976, 127
      %v978 = vand.u32 2147483647, %v567
      %v979 = vand.u32 %v978, 8388607
      %v980 = vor.u32 %v979, 8388608
      %v981 = vsub.s32 0, %v980
      %v982 = vadd.s32 %v977, 1
      %vm983 = vcmp.gt.s32.totalorder %v982, 0
      %v984 = vsel %vm983, %v982, 0
      %v985 = vshrl.u32 %v984, 5
      %v986 = vand.u32 %v984, 31
      %v987 = vsub.s32 32, %v986
      %v988 = vshrl.u32 683565275, %v987
      %v989 = vshll.u32 683565275, %v986
      %v990 = vshrl.u32 2475754826, %v987
      %v991 = vor.u32 %v989, %v990
      %v992 = vshll.u32 2475754826, %v986
      %v993 = vshrl.u32 2131351028, %v987
      %v994 = vor.u32 %v992, %v993
      %v995 = vshll.u32 2131351028, %v986
      %v996 = vshrl.u32 2102212464, %v987
      %v997 = vor.u32 %v995, %v996
      %v998 = vshll.u32 2102212464, %v986
      %v999 = vshrl.u32 920167782, %v987
      %v1000 = vor.u32 %v998, %v999
      %v1001 = vshll.u32 920167782, %v986
      %v1002 = vshrl.u32 1326507024, %v987
      %v1003 = vor.u32 %v1001, %v1002
      %vm1004 = vcmp.lt.s32.totalorder %v985, 1
      %vm1005 = vcmp.lt.s32.totalorder %v985, 2
      %vm1006 = vcmp.lt.s32.totalorder %v985, 3
      %vm1007 = vcmp.lt.s32.totalorder %v985, 4
      %v1008 = vsel %vm1004, %v988, %v991
      %v1009 = vsel %vm1007, %v997, 2102212464
      %v1010 = vsel %vm1006, %v994, %v1009
      %v1011 = vsel %vm1005, %v1008, %v1010
      %v1012 = vsel %vm1004, %v991, %v994
      %v1013 = vsel %vm1007, %v1000, 920167782
      %v1014 = vsel %vm1006, %v997, %v1013
      %v1015 = vsel %vm1005, %v1012, %v1014
      %v1016 = vsel %vm1004, %v994, %v997
      %v1017 = vsel %vm1007, %v1003, 1326507024
      %v1018 = vsel %vm1006, %v1000, %v1017
      %v1019 = vsel %vm1005, %v1016, %v1018
      %v1020 = vshll.u32 %v980, 8
      %v1021 = vmul.u32.u64.compose %v1020, %v1019
      %v1022 = vextract.low.u32 %v1021
      %v1023 = vextract.high.u32 %v1021
      %v1024 = vmul.u32.u64.compose %v1020, %v1015
      %v1025 = vextract.low.u32 %v1024
      %v1026 = vextract.high.u32 %v1024
      %v1027 = vmul.u32 %v1020, %v1011
      %v1028 = vadd.s32 %v1023, %v1025
      %vm1029 = vc.u32 %v1023, %v1025
      %v1030 = vadd.s32 %v1026, 1
      %v1031 = vsel %vm1029, %v1030, %v1026
      %v1032 = vadd.s32 %v1027, %v1031
      %v1033 = vadd.s32 %v1032, 536870912
      %v1034 = vshrl.u32 %v1033, 30
      %v1035 = vshll.u32 %v1034, 30
      %v1036 = vsub.s32 %v1032, %v1035
      %vm1037 = vcmp.lt.s32.totalorder %v1036, 0
      %v1038 = vsub.s32 0, %v1036
      %v1039 = vsel %vm1037, %v1038, %v1036
      %v1040 = vclz %v1039
      %v1041 = vsub.s32 %v1040, 2
      %vm1042 = vcmp.gt.s32.totalorder 0, %v1041
      %v1043 = vsel %vm1042, 0, %v1041
      %v1044 = vsub.s32 32, %v1043
      %v1045 = vshll.u32 %v1036, %v1043
      %v1046 = vshrl.u32 %v1028, %v1044
      %v1047 = vor.u32 %v1045, %v1046
      %v1048 = vsub.s32 4294967266, %v1043
      %v1049 = vadd.s32 %v1048, 127
      %v1050 = vshll.u32 %v1049, 23
      %v1051 = vor.u32 4788187, %v1050
      %v1052 = vand.u32 2147483647, %v1051
      %v1054 = vcvt.s32.f32 %v1047
      %v1055 = vmul.f32 %v1054, %v1052
      %v1056 = vxor.u32 %v1055, 2147483648
      %v1057 = vsel %vm974, %v1056, %v1055
      %v1058 = vsub.s32 4, %v1034
      %v1059 = vsel %vm974, %v1058, %v1034
      %v1060 = vsel %vm973, %v567, %v1057
      %v1061 = vsel %vm973, 0, %v1059
      %v1062 = vcosq.f32.pop %v1060
      %v1063 = vsinq.f32.pop %v1060
      %vm1064 = vweird.f32 %v567
      %v1065 = vadd.s32 %v1061, 3
      %v1066 = vand.u32 %v1065, 3
      %vm1067 = vcmp.lt.s32.totalorder %v1066, 2
      %vm1068 = vcmp.eq.s32.totalorder %v1066, 0
      %v1069 = vxor.u32 %v1063, 2147483648
      %v1070 = vsel %vm1068, %v1062, %v1069
      %vm1071 = vcmp.eq.s32.totalorder %v1066, 2
      %v1072 = vxor.u32 %v1062, 2147483648
      %v1073 = vsel %vm1071, %v1072, %v1063
      %v1074 = vsel %vm1067, %v1070, %v1073
      %v1075 = vsel %vm1064, nan, %v1074
      %v1076 = vand.u32 2147483647, %v568
      %vm1077 = vcmp.le.f32.partialorder %v1076, 0.7853982
      %vm1078 = vcmp.lt.s32.totalorder %v568, 0
      %v1079 = vand.u32 %v568, 2139095040
      %v1080 = vshrl.u32 %v1079, 23
      %v1081 = vsub.s32 %v1080, 127
      %v1082 = vand.u32 2147483647, %v568
      %v1083 = vand.u32 %v1082, 8388607
      %v1084 = vor.u32 %v1083, 8388608
      %v1085 = vsub.s32 0, %v1084
      %v1086 = vadd.s32 %v1081, 1
      %vm1087 = vcmp.gt.s32.totalorder %v1086, 0
      %v1088 = vsel %vm1087, %v1086, 0
      %v1089 = vshrl.u32 %v1088, 5
      %v1090 = vand.u32 %v1088, 31
      %v1091 = vsub.s32 32, %v1090
      %v1092 = vshrl.u32 683565275, %v1091
      %v1093 = vshll.u32 683565275, %v1090
      %v1094 = vshrl.u32 2475754826, %v1091
      %v1095 = vor.u32 %v1093, %v1094
      %v1096 = vshll.u32 2475754826, %v1090
      %v1097 = vshrl.u32 2131351028, %v1091
      %v1098 = vor.u32 %v1096, %v1097
      %v1099 = vshll.u32 2131351028, %v1090
      %v1100 = vshrl.u32 2102212464, %v1091
      %v1101 = vor.u32 %v1099, %v1100
      %v1102 = vshll.u32 2102212464, %v1090
      %v1103 = vshrl.u32 920167782, %v1091
      %v1104 = vor.u32 %v1102, %v1103
      %v1105 = vshll.u32 920167782, %v1090
      %v1106 = vshrl.u32 1326507024, %v1091
      %v1107 = vor.u32 %v1105, %v1106
      %vm1108 = vcmp.lt.s32.totalorder %v1089, 1
      %vm1109 = vcmp.lt.s32.totalorder %v1089, 2
      %vm1110 = vcmp.lt.s32.totalorder %v1089, 3
      %vm1111 = vcmp.lt.s32.totalorder %v1089, 4
      %v1112 = vsel %vm1108, %v1092, %v1095
      %v1113 = vsel %vm1111, %v1101, 2102212464
      %v1114 = vsel %vm1110, %v1098, %v1113
      %v1115 = vsel %vm1109, %v1112, %v1114
      %v1116 = vsel %vm1108, %v1095, %v1098
      %v1117 = vsel %vm1111, %v1104, 920167782
      %v1118 = vsel %vm1110, %v1101, %v1117
      %v1119 = vsel %vm1109, %v1116, %v1118
      %v1120 = vsel %vm1108, %v1098, %v1101
      %v1121 = vsel %vm1111, %v1107, 1326507024
      %v1122 = vsel %vm1110, %v1104, %v1121
      %v1123 = vsel %vm1109, %v1120, %v1122
      %v1124 = vshll.u32 %v1084, 8
      %v1125 = vmul.u32.u64.compose %v1124, %v1123
      %v1126 = vextract.low.u32 %v1125
      %v1127 = vextract.high.u32 %v1125
      %v1128 = vmul.u32.u64.compose %v1124, %v1119
      %v1129 = vextract.low.u32 %v1128
      %v1130 = vextract.high.u32 %v1128
      %v1131 = vmul.u32 %v1124, %v1115
      %v1132 = vadd.s32 %v1127, %v1129
      %vm1133 = vc.u32 %v1127, %v1129
      %v1134 = vadd.s32 %v1130, 1
      %v1135 = vsel %vm1133, %v1134, %v1130
      %v1136 = vadd.s32 %v1131, %v1135
      %v1137 = vadd.s32 %v1136, 536870912
      %v1138 = vshrl.u32 %v1137, 30
      %v1139 = vshll.u32 %v1138, 30
      %v1140 = vsub.s32 %v1136, %v1139
      %vm1141 = vcmp.lt.s32.totalorder %v1140, 0
      %v1142 = vsub.s32 0, %v1140
      %v1143 = vsel %vm1141, %v1142, %v1140
      %v1144 = vclz %v1143
      %v1145 = vsub.s32 %v1144, 2
      %vm1146 = vcmp.gt.s32.totalorder 0, %v1145
      %v1147 = vsel %vm1146, 0, %v1145
      %v1148 = vsub.s32 32, %v1147
      %v1149 = vshll.u32 %v1140, %v1147
      %v1150 = vshrl.u32 %v1132, %v1148
      %v1151 = vor.u32 %v1149, %v1150
      %v1152 = vsub.s32 4294967266, %v1147
      %v1153 = vadd.s32 %v1152, 127
      %v1154 = vshll.u32 %v1153, 23
      %v1155 = vor.u32 4788187, %v1154
      %v1156 = vand.u32 2147483647, %v1155
      %v1158 = vcvt.s32.f32 %v1151
      %v1159 = vmul.f32 %v1158, %v1156
      %v1160 = vxor.u32 %v1159, 2147483648
      %v1161 = vsel %vm1078, %v1160, %v1159
      %v1162 = vsub.s32 4, %v1138
      %v1163 = vsel %vm1078, %v1162, %v1138
      %v1164 = vsel %vm1077, %v568, %v1161
      %v1165 = vsel %vm1077, 0, %v1163
      %v1166 = vcosq.f32.pop %v1164
      %v1167 = vsinq.f32.pop %v1164
      %vm1168 = vweird.f32 %v568
      %v1169 = vadd.s32 %v1165, 3
      %v1170 = vand.u32 %v1169, 3
      %vm1171 = vcmp.lt.s32.totalorder %v1170, 2
      %vm1172 = vcmp.eq.s32.totalorder %v1170, 0
      %v1173 = vxor.u32 %v1167, 2147483648
      %v1174 = vsel %vm1172, %v1166, %v1173
      %vm1175 = vcmp.eq.s32.totalorder %v1170, 2
      %v1176 = vxor.u32 %v1166, 2147483648
      %v1177 = vsel %vm1175, %v1176, %v1167
      %v1178 = vsel %vm1171, %v1174, %v1177
      %v1179 = vsel %vm1168, nan, %v1178
      %v1180 = vand.u32 2147483647, %v569
      %vm1181 = vcmp.le.f32.partialorder %v1180, 0.7853982
      %vm1182 = vcmp.lt.s32.totalorder %v569, 0
      %v1183 = vand.u32 %v569, 2139095040
      %v1184 = vshrl.u32 %v1183, 23
      %v1185 = vsub.s32 %v1184, 127
      %v1186 = vand.u32 2147483647, %v569
      %v1187 = vand.u32 %v1186, 8388607
      %v1188 = vor.u32 %v1187, 8388608
      %v1189 = vsub.s32 0, %v1188
      %v1190 = vadd.s32 %v1185, 1
      %vm1191 = vcmp.gt.s32.totalorder %v1190, 0
      %v1192 = vsel %vm1191, %v1190, 0
      %v1193 = vshrl.u32 %v1192, 5
      %v1194 = vand.u32 %v1192, 31
      %v1195 = vsub.s32 32, %v1194
      %v1196 = vshrl.u32 683565275, %v1195
      %v1197 = vshll.u32 683565275, %v1194
      %v1198 = vshrl.u32 2475754826, %v1195
      %v1199 = vor.u32 %v1197, %v1198
      %v1200 = vshll.u32 2475754826, %v1194
      %v1201 = vshrl.u32 2131351028, %v1195
      %v1202 = vor.u32 %v1200, %v1201
      %v1203 = vshll.u32 2131351028, %v1194
      %v1204 = vshrl.u32 2102212464, %v1195
      %v1205 = vor.u32 %v1203, %v1204
      %v1206 = vshll.u32 2102212464, %v1194
      %v1207 = vshrl.u32 920167782, %v1195
      %v1208 = vor.u32 %v1206, %v1207
      %v1209 = vshll.u32 920167782, %v1194
      %v1210 = vshrl.u32 1326507024, %v1195
      %v1211 = vor.u32 %v1209, %v1210
      %vm1212 = vcmp.lt.s32.totalorder %v1193, 1
      %vm1213 = vcmp.lt.s32.totalorder %v1193, 2
      %vm1214 = vcmp.lt.s32.totalorder %v1193, 3
      %vm1215 = vcmp.lt.s32.totalorder %v1193, 4
      %v1216 = vsel %vm1212, %v1196, %v1199
      %v1217 = vsel %vm1215, %v1205, 2102212464
      %v1218 = vsel %vm1214, %v1202, %v1217
      %v1219 = vsel %vm1213, %v1216, %v1218
      %v1220 = vsel %vm1212, %v1199, %v1202
      %v1221 = vsel %vm1215, %v1208, 920167782
      %v1222 = vsel %vm1214, %v1205, %v1221
      %v1223 = vsel %vm1213, %v1220, %v1222
      %v1224 = vsel %vm1212, %v1202, %v1205
      %v1225 = vsel %vm1215, %v1211, 1326507024
      %v1226 = vsel %vm1214, %v1208, %v1225
      %v1227 = vsel %vm1213, %v1224, %v1226
      %v1228 = vshll.u32 %v1188, 8
      %v1229 = vmul.u32.u64.compose %v1228, %v1227
      %v1230 = vextract.low.u32 %v1229
      %v1231 = vextract.high.u32 %v1229
      %v1232 = vmul.u32.u64.compose %v1228, %v1223
      %v1233 = vextract.low.u32 %v1232
      %v1234 = vextract.high.u32 %v1232
      %v1235 = vmul.u32 %v1228, %v1219
      %v1236 = vadd.s32 %v1231, %v1233
      %vm1237 = vc.u32 %v1231, %v1233
      %v1238 = vadd.s32 %v1234, 1
      %v1239 = vsel %vm1237, %v1238, %v1234
      %v1240 = vadd.s32 %v1235, %v1239
      %v1241 = vadd.s32 %v1240, 536870912
      %v1242 = vshrl.u32 %v1241, 30
      %v1243 = vshll.u32 %v1242, 30
      %v1244 = vsub.s32 %v1240, %v1243
      %vm1245 = vcmp.lt.s32.totalorder %v1244, 0
      %v1246 = vsub.s32 0, %v1244
      %v1247 = vsel %vm1245, %v1246, %v1244
      %v1248 = vclz %v1247
      %v1249 = vsub.s32 %v1248, 2
      %vm1250 = vcmp.gt.s32.totalorder 0, %v1249
      %v1251 = vsel %vm1250, 0, %v1249
      %v1252 = vsub.s32 32, %v1251
      %v1253 = vshll.u32 %v1244, %v1251
      %v1254 = vshrl.u32 %v1236, %v1252
      %v1255 = vor.u32 %v1253, %v1254
      %v1256 = vsub.s32 4294967266, %v1251
      %v1257 = vadd.s32 %v1256, 127
      %v1258 = vshll.u32 %v1257, 23
      %v1259 = vor.u32 4788187, %v1258
      %v1260 = vand.u32 2147483647, %v1259
      %v1262 = vcvt.s32.f32 %v1255
      %v1263 = vmul.f32 %v1262, %v1260
      %v1264 = vxor.u32 %v1263, 2147483648
      %v1265 = vsel %vm1182, %v1264, %v1263
      %v1266 = vsub.s32 4, %v1242
      %v1267 = vsel %vm1182, %v1266, %v1242
      %v1268 = vsel %vm1181, %v569, %v1265
      %v1269 = vsel %vm1181, 0, %v1267
      %v1270 = vcosq.f32.pop %v1268
      %v1271 = vsinq.f32.pop %v1268
      %vm1272 = vweird.f32 %v569
      %v1273 = vadd.s32 %v1269, 3
      %v1274 = vand.u32 %v1273, 3
      %vm1275 = vcmp.lt.s32.totalorder %v1274, 2
      %vm1276 = vcmp.eq.s32.totalorder %v1274, 0
      %v1277 = vxor.u32 %v1271, 2147483648
      %v1278 = vsel %vm1276, %v1270, %v1277
      %vm1279 = vcmp.eq.s32.totalorder %v1274, 2
      %v1280 = vxor.u32 %v1270, 2147483648
      %v1281 = vsel %vm1279, %v1280, %v1271
      %v1282 = vsel %vm1275, %v1278, %v1281
      %v1283 = vsel %vm1272, nan, %v1282
      %v1284 = vand.u32 2147483647, %v570
      %vm1285 = vcmp.le.f32.partialorder %v1284, 0.7853982
      %vm1286 = vcmp.lt.s32.totalorder %v570, 0
      %v1287 = vand.u32 %v570, 2139095040
      %v1288 = vshrl.u32 %v1287, 23
      %v1289 = vsub.s32 %v1288, 127
      %v1290 = vand.u32 2147483647, %v570
      %v1291 = vand.u32 %v1290, 8388607
      %v1292 = vor.u32 %v1291, 8388608
      %v1293 = vsub.s32 0, %v1292
      %v1294 = vadd.s32 %v1289, 1
      %vm1295 = vcmp.gt.s32.totalorder %v1294, 0
      %v1296 = vsel %vm1295, %v1294, 0
      %v1297 = vshrl.u32 %v1296, 5
      %v1298 = vand.u32 %v1296, 31
      %v1299 = vsub.s32 32, %v1298
      %v1300 = vshrl.u32 683565275, %v1299
      %v1301 = vshll.u32 683565275, %v1298
      %v1302 = vshrl.u32 2475754826, %v1299
      %v1303 = vor.u32 %v1301, %v1302
      %v1304 = vshll.u32 2475754826, %v1298
      %v1305 = vshrl.u32 2131351028, %v1299
      %v1306 = vor.u32 %v1304, %v1305
      %v1307 = vshll.u32 2131351028, %v1298
      %v1308 = vshrl.u32 2102212464, %v1299
      %v1309 = vor.u32 %v1307, %v1308
      %v1310 = vshll.u32 2102212464, %v1298
      %v1311 = vshrl.u32 920167782, %v1299
      %v1312 = vor.u32 %v1310, %v1311
      %v1313 = vshll.u32 920167782, %v1298
      %v1314 = vshrl.u32 1326507024, %v1299
      %v1315 = vor.u32 %v1313, %v1314
      %vm1316 = vcmp.lt.s32.totalorder %v1297, 1
      %vm1317 = vcmp.lt.s32.totalorder %v1297, 2
      %vm1318 = vcmp.lt.s32.totalorder %v1297, 3
      %vm1319 = vcmp.lt.s32.totalorder %v1297, 4
      %v1320 = vsel %vm1316, %v1300, %v1303
      %v1321 = vsel %vm1319, %v1309, 2102212464
      %v1322 = vsel %vm1318, %v1306, %v1321
      %v1323 = vsel %vm1317, %v1320, %v1322
      %v1324 = vsel %vm1316, %v1303, %v1306
      %v1325 = vsel %vm1319, %v1312, 920167782
      %v1326 = vsel %vm1318, %v1309, %v1325
      %v1327 = vsel %vm1317, %v1324, %v1326
      %v1328 = vsel %vm1316, %v1306, %v1309
      %v1329 = vsel %vm1319, %v1315, 1326507024
      %v1330 = vsel %vm1318, %v1312, %v1329
      %v1331 = vsel %vm1317, %v1328, %v1330
      %v1332 = vshll.u32 %v1292, 8
      %v1333 = vmul.u32.u64.compose %v1332, %v1331
      %v1334 = vextract.low.u32 %v1333
      %v1335 = vextract.high.u32 %v1333
      %v1336 = vmul.u32.u64.compose %v1332, %v1327
      %v1337 = vextract.low.u32 %v1336
      %v1338 = vextract.high.u32 %v1336
      %v1339 = vmul.u32 %v1332, %v1323
      %v1340 = vadd.s32 %v1335, %v1337
      %vm1341 = vc.u32 %v1335, %v1337
      %v1342 = vadd.s32 %v1338, 1
      %v1343 = vsel %vm1341, %v1342, %v1338
      %v1344 = vadd.s32 %v1339, %v1343
      %v1345 = vadd.s32 %v1344, 536870912
      %v1346 = vshrl.u32 %v1345, 30
      %v1347 = vshll.u32 %v1346, 30
      %v1348 = vsub.s32 %v1344, %v1347
      %vm1349 = vcmp.lt.s32.totalorder %v1348, 0
      %v1350 = vsub.s32 0, %v1348
      %v1351 = vsel %vm1349, %v1350, %v1348
      %v1352 = vclz %v1351
      %v1353 = vsub.s32 %v1352, 2
      %vm1354 = vcmp.gt.s32.totalorder 0, %v1353
      %v1355 = vsel %vm1354, 0, %v1353
      %v1356 = vsub.s32 32, %v1355
      %v1357 = vshll.u32 %v1348, %v1355
      %v1358 = vshrl.u32 %v1340, %v1356
      %v1359 = vor.u32 %v1357, %v1358
      %v1360 = vsub.s32 4294967266, %v1355
      %v1361 = vadd.s32 %v1360, 127
      %v1362 = vshll.u32 %v1361, 23
      %v1363 = vor.u32 4788187, %v1362
      %v1364 = vand.u32 2147483647, %v1363
      %v1366 = vcvt.s32.f32 %v1359
      %v1367 = vmul.f32 %v1366, %v1364
      %v1368 = vxor.u32 %v1367, 2147483648
      %v1369 = vsel %vm1286, %v1368, %v1367
      %v1370 = vsub.s32 4, %v1346
      %v1371 = vsel %vm1286, %v1370, %v1346
      %v1372 = vsel %vm1285, %v570, %v1369
      %v1373 = vsel %vm1285, 0, %v1371
      %v1374 = vcosq.f32.pop %v1372
      %v1375 = vsinq.f32.pop %v1372
      %vm1376 = vweird.f32 %v570
      %v1377 = vadd.s32 %v1373, 3
      %v1378 = vand.u32 %v1377, 3
      %vm1379 = vcmp.lt.s32.totalorder %v1378, 2
      %vm1380 = vcmp.eq.s32.totalorder %v1378, 0
      %v1381 = vxor.u32 %v1375, 2147483648
      %v1382 = vsel %vm1380, %v1374, %v1381
      %vm1383 = vcmp.eq.s32.totalorder %v1378, 2
      %v1384 = vxor.u32 %v1374, 2147483648
      %v1385 = vsel %vm1383, %v1384, %v1375
      %v1386 = vsel %vm1379, %v1382, %v1385
      %v1387 = vsel %vm1376, nan, %v1386
      %v1388 = vand.u32 2147483647, %v571
      %vm1389 = vcmp.le.f32.partialorder %v1388, 0.7853982
      %vm1390 = vcmp.lt.s32.totalorder %v571, 0
      %v1391 = vand.u32 %v571, 2139095040
      %v1392 = vshrl.u32 %v1391, 23
      %v1393 = vsub.s32 %v1392, 127
      %v1394 = vand.u32 2147483647, %v571
      %v1395 = vand.u32 %v1394, 8388607
      %v1396 = vor.u32 %v1395, 8388608
      %v1397 = vsub.s32 0, %v1396
      %v1398 = vadd.s32 %v1393, 1
      %vm1399 = vcmp.gt.s32.totalorder %v1398, 0
      %v1400 = vsel %vm1399, %v1398, 0
      %v1401 = vshrl.u32 %v1400, 5
      %v1402 = vand.u32 %v1400, 31
      %v1403 = vsub.s32 32, %v1402
      %v1404 = vshrl.u32 683565275, %v1403
      %v1405 = vshll.u32 683565275, %v1402
      %v1406 = vshrl.u32 2475754826, %v1403
      %v1407 = vor.u32 %v1405, %v1406
      %v1408 = vshll.u32 2475754826, %v1402
      %v1409 = vshrl.u32 2131351028, %v1403
      %v1410 = vor.u32 %v1408, %v1409
      %v1411 = vshll.u32 2131351028, %v1402
      %v1412 = vshrl.u32 2102212464, %v1403
      %v1413 = vor.u32 %v1411, %v1412
      %v1414 = vshll.u32 2102212464, %v1402
      %v1415 = vshrl.u32 920167782, %v1403
      %v1416 = vor.u32 %v1414, %v1415
      %v1417 = vshll.u32 920167782, %v1402
      %v1418 = vshrl.u32 1326507024, %v1403
      %v1419 = vor.u32 %v1417, %v1418
      %vm1420 = vcmp.lt.s32.totalorder %v1401, 1
      %vm1421 = vcmp.lt.s32.totalorder %v1401, 2
      %vm1422 = vcmp.lt.s32.totalorder %v1401, 3
      %vm1423 = vcmp.lt.s32.totalorder %v1401, 4
      %v1424 = vsel %vm1420, %v1404, %v1407
      %v1425 = vsel %vm1423, %v1413, 2102212464
      %v1426 = vsel %vm1422, %v1410, %v1425
      %v1427 = vsel %vm1421, %v1424, %v1426
      %v1428 = vsel %vm1420, %v1407, %v1410
      %v1429 = vsel %vm1423, %v1416, 920167782
      %v1430 = vsel %vm1422, %v1413, %v1429
      %v1431 = vsel %vm1421, %v1428, %v1430
      %v1432 = vsel %vm1420, %v1410, %v1413
      %v1433 = vsel %vm1423, %v1419, 1326507024
      %v1434 = vsel %vm1422, %v1416, %v1433
      %v1435 = vsel %vm1421, %v1432, %v1434
      %v1436 = vshll.u32 %v1396, 8
      %v1437 = vmul.u32.u64.compose %v1436, %v1435
      %v1438 = vextract.low.u32 %v1437
      %v1439 = vextract.high.u32 %v1437
      %v1440 = vmul.u32.u64.compose %v1436, %v1431
      %v1441 = vextract.low.u32 %v1440
      %v1442 = vextract.high.u32 %v1440
      %v1443 = vmul.u32 %v1436, %v1427
      %v1444 = vadd.s32 %v1439, %v1441
      %vm1445 = vc.u32 %v1439, %v1441
      %v1446 = vadd.s32 %v1442, 1
      %v1447 = vsel %vm1445, %v1446, %v1442
      %v1448 = vadd.s32 %v1443, %v1447
      %v1449 = vadd.s32 %v1448, 536870912
      %v1450 = vshrl.u32 %v1449, 30
      %v1451 = vshll.u32 %v1450, 30
      %v1452 = vsub.s32 %v1448, %v1451
      %vm1453 = vcmp.lt.s32.totalorder %v1452, 0
      %v1454 = vsub.s32 0, %v1452
      %v1455 = vsel %vm1453, %v1454, %v1452
      %v1456 = vclz %v1455
      %v1457 = vsub.s32 %v1456, 2
      %vm1458 = vcmp.gt.s32.totalorder 0, %v1457
      %v1459 = vsel %vm1458, 0, %v1457
      %v1460 = vsub.s32 32, %v1459
      %v1461 = vshll.u32 %v1452, %v1459
      %v1462 = vshrl.u32 %v1444, %v1460
      %v1463 = vor.u32 %v1461, %v1462
      %v1464 = vsub.s32 4294967266, %v1459
      %v1465 = vadd.s32 %v1464, 127
      %v1466 = vshll.u32 %v1465, 23
      %v1467 = vor.u32 4788187, %v1466
      %v1468 = vand.u32 2147483647, %v1467
      %v1470 = vcvt.s32.f32 %v1463
      %v1471 = vmul.f32 %v1470, %v1468
      %v1472 = vxor.u32 %v1471, 2147483648
      %v1473 = vsel %vm1390, %v1472, %v1471
      %v1474 = vsub.s32 4, %v1450
      %v1475 = vsel %vm1390, %v1474, %v1450
      %v1476 = vsel %vm1389, %v571, %v1473
      %v1477 = vsel %vm1389, 0, %v1475
      %v1478 = vcosq.f32.pop %v1476
      %v1479 = vsinq.f32.pop %v1476
      %vm1480 = vweird.f32 %v571
      %v1481 = vadd.s32 %v1477, 3
      %v1482 = vand.u32 %v1481, 3
      %vm1483 = vcmp.lt.s32.totalorder %v1482, 2
      %vm1484 = vcmp.eq.s32.totalorder %v1482, 0
      %v1485 = vxor.u32 %v1479, 2147483648
      %v1486 = vsel %vm1484, %v1478, %v1485
      %vm1487 = vcmp.eq.s32.totalorder %v1482, 2
      %v1488 = vxor.u32 %v1478, 2147483648
      %v1489 = vsel %vm1487, %v1488, %v1479
      %v1490 = vsel %vm1483, %v1486, %v1489
      %v1491 = vsel %vm1480, nan, %v1490
      %v1492 = vand.u32 2147483647, %v572
      %vm1493 = vcmp.le.f32.partialorder %v1492, 0.7853982
      %vm1494 = vcmp.lt.s32.totalorder %v572, 0
      %v1495 = vand.u32 %v572, 2139095040
      %v1496 = vshrl.u32 %v1495, 23
      %v1497 = vsub.s32 %v1496, 127
      %v1498 = vand.u32 2147483647, %v572
      %v1499 = vand.u32 %v1498, 8388607
      %v1500 = vor.u32 %v1499, 8388608
      %v1501 = vsub.s32 0, %v1500
      %v1502 = vadd.s32 %v1497, 1
      %vm1503 = vcmp.gt.s32.totalorder %v1502, 0
      %v1504 = vsel %vm1503, %v1502, 0
      %v1505 = vshrl.u32 %v1504, 5
      %v1506 = vand.u32 %v1504, 31
      %v1507 = vsub.s32 32, %v1506
      %v1508 = vshrl.u32 683565275, %v1507
      %v1509 = vshll.u32 683565275, %v1506
      %v1510 = vshrl.u32 2475754826, %v1507
      %v1511 = vor.u32 %v1509, %v1510
      %v1512 = vshll.u32 2475754826, %v1506
      %v1513 = vshrl.u32 2131351028, %v1507
      %v1514 = vor.u32 %v1512, %v1513
      %v1515 = vshll.u32 2131351028, %v1506
      %v1516 = vshrl.u32 2102212464, %v1507
      %v1517 = vor.u32 %v1515, %v1516
      %v1518 = vshll.u32 2102212464, %v1506
      %v1519 = vshrl.u32 920167782, %v1507
      %v1520 = vor.u32 %v1518, %v1519
      %v1521 = vshll.u32 920167782, %v1506
      %v1522 = vshrl.u32 1326507024, %v1507
      %v1523 = vor.u32 %v1521, %v1522
      %vm1524 = vcmp.lt.s32.totalorder %v1505, 1
      %vm1525 = vcmp.lt.s32.totalorder %v1505, 2
      %vm1526 = vcmp.lt.s32.totalorder %v1505, 3
      %vm1527 = vcmp.lt.s32.totalorder %v1505, 4
      %v1528 = vsel %vm1524, %v1508, %v1511
      %v1529 = vsel %vm1527, %v1517, 2102212464
      %v1530 = vsel %vm1526, %v1514, %v1529
      %v1531 = vsel %vm1525, %v1528, %v1530
      %v1532 = vsel %vm1524, %v1511, %v1514
      %v1533 = vsel %vm1527, %v1520, 920167782
      %v1534 = vsel %vm1526, %v1517, %v1533
      %v1535 = vsel %vm1525, %v1532, %v1534
      %v1536 = vsel %vm1524, %v1514, %v1517
      %v1537 = vsel %vm1527, %v1523, 1326507024
      %v1538 = vsel %vm1526, %v1520, %v1537
      %v1539 = vsel %vm1525, %v1536, %v1538
      %v1540 = vshll.u32 %v1500, 8
      %v1541 = vmul.u32.u64.compose %v1540, %v1539
      %v1542 = vextract.low.u32 %v1541
      %v1543 = vextract.high.u32 %v1541
      %v1544 = vmul.u32.u64.compose %v1540, %v1535
      %v1545 = vextract.low.u32 %v1544
      %v1546 = vextract.high.u32 %v1544
      %v1547 = vmul.u32 %v1540, %v1531
      %v1548 = vadd.s32 %v1543, %v1545
      %vm1549 = vc.u32 %v1543, %v1545
      %v1550 = vadd.s32 %v1546, 1
      %v1551 = vsel %vm1549, %v1550, %v1546
      %v1552 = vadd.s32 %v1547, %v1551
      %v1553 = vadd.s32 %v1552, 536870912
      %v1554 = vshrl.u32 %v1553, 30
      %v1555 = vshll.u32 %v1554, 30
      %v1556 = vsub.s32 %v1552, %v1555
      %vm1557 = vcmp.lt.s32.totalorder %v1556, 0
      %v1558 = vsub.s32 0, %v1556
      %v1559 = vsel %vm1557, %v1558, %v1556
      %v1560 = vclz %v1559
      %v1561 = vsub.s32 %v1560, 2
      %vm1562 = vcmp.gt.s32.totalorder 0, %v1561
      %v1563 = vsel %vm1562, 0, %v1561
      %v1564 = vsub.s32 32, %v1563
      %v1565 = vshll.u32 %v1556, %v1563
      %v1566 = vshrl.u32 %v1548, %v1564
      %v1567 = vor.u32 %v1565, %v1566
      %v1568 = vsub.s32 4294967266, %v1563
      %v1569 = vadd.s32 %v1568, 127
      %v1570 = vshll.u32 %v1569, 23
      %v1571 = vor.u32 4788187, %v1570
      %v1572 = vand.u32 2147483647, %v1571
      %v1574 = vcvt.s32.f32 %v1567
      %v1575 = vmul.f32 %v1574, %v1572
      %v1576 = vxor.u32 %v1575, 2147483648
      %v1577 = vsel %vm1494, %v1576, %v1575
      %v1578 = vsub.s32 4, %v1554
      %v1579 = vsel %vm1494, %v1578, %v1554
      %v1580 = vsel %vm1493, %v572, %v1577
      %v1581 = vsel %vm1493, 0, %v1579
      %v1582 = vcosq.f32.pop %v1580
      %v1583 = vsinq.f32.pop %v1580
      %vm1584 = vweird.f32 %v572
      %v1585 = vadd.s32 %v1581, 3
      %v1586 = vand.u32 %v1585, 3
      %vm1587 = vcmp.lt.s32.totalorder %v1586, 2
      %vm1588 = vcmp.eq.s32.totalorder %v1586, 0
      %v1589 = vxor.u32 %v1583, 2147483648
      %v1590 = vsel %vm1588, %v1582, %v1589
      %vm1591 = vcmp.eq.s32.totalorder %v1586, 2
      %v1592 = vxor.u32 %v1582, 2147483648
      %v1593 = vsel %vm1591, %v1592, %v1583
      %v1594 = vsel %vm1587, %v1590, %v1593
      %v1595 = vsel %vm1584, nan, %v1594
      %v1596 = vand.u32 2147483647, %v573
      %vm1597 = vcmp.le.f32.partialorder %v1596, 0.7853982
      %vm1598 = vcmp.lt.s32.totalorder %v573, 0
      %v1599 = vand.u32 %v573, 2139095040
      %v1600 = vshrl.u32 %v1599, 23
      %v1601 = vsub.s32 %v1600, 127
      %v1602 = vand.u32 2147483647, %v573
      %v1603 = vand.u32 %v1602, 8388607
      %v1604 = vor.u32 %v1603, 8388608
      %v1605 = vsub.s32 0, %v1604
      %v1606 = vadd.s32 %v1601, 1
      %vm1607 = vcmp.gt.s32.totalorder %v1606, 0
      %v1608 = vsel %vm1607, %v1606, 0
      %v1609 = vshrl.u32 %v1608, 5
      %v1610 = vand.u32 %v1608, 31
      %v1611 = vsub.s32 32, %v1610
      %v1612 = vshrl.u32 683565275, %v1611
      %v1613 = vshll.u32 683565275, %v1610
      %v1614 = vshrl.u32 2475754826, %v1611
      %v1615 = vor.u32 %v1613, %v1614
      %v1616 = vshll.u32 2475754826, %v1610
      %v1617 = vshrl.u32 2131351028, %v1611
      %v1618 = vor.u32 %v1616, %v1617
      %v1619 = vshll.u32 2131351028, %v1610
      %v1620 = vshrl.u32 2102212464, %v1611
      %v1621 = vor.u32 %v1619, %v1620
      %v1622 = vshll.u32 2102212464, %v1610
      %v1623 = vshrl.u32 920167782, %v1611
      %v1624 = vor.u32 %v1622, %v1623
      %v1625 = vshll.u32 920167782, %v1610
      %v1626 = vshrl.u32 1326507024, %v1611
      %v1627 = vor.u32 %v1625, %v1626
      %vm1628 = vcmp.lt.s32.totalorder %v1609, 1
      %vm1629 = vcmp.lt.s32.totalorder %v1609, 2
      %vm1630 = vcmp.lt.s32.totalorder %v1609, 3
      %vm1631 = vcmp.lt.s32.totalorder %v1609, 4
      %v1632 = vsel %vm1628, %v1612, %v1615
      %v1633 = vsel %vm1631, %v1621, 2102212464
      %v1634 = vsel %vm1630, %v1618, %v1633
      %v1635 = vsel %vm1629, %v1632, %v1634
      %v1636 = vsel %vm1628, %v1615, %v1618
      %v1637 = vsel %vm1631, %v1624, 920167782
      %v1638 = vsel %vm1630, %v1621, %v1637
      %v1639 = vsel %vm1629, %v1636, %v1638
      %v1640 = vsel %vm1628, %v1618, %v1621
      %v1641 = vsel %vm1631, %v1627, 1326507024
      %v1642 = vsel %vm1630, %v1624, %v1641
      %v1643 = vsel %vm1629, %v1640, %v1642
      %v1644 = vshll.u32 %v1604, 8
      %v1645 = vmul.u32.u64.compose %v1644, %v1643
      %v1646 = vextract.low.u32 %v1645
      %v1647 = vextract.high.u32 %v1645
      %v1648 = vmul.u32.u64.compose %v1644, %v1639
      %v1649 = vextract.low.u32 %v1648
      %v1650 = vextract.high.u32 %v1648
      %v1651 = vmul.u32 %v1644, %v1635
      %v1652 = vadd.s32 %v1647, %v1649
      %vm1653 = vc.u32 %v1647, %v1649
      %v1654 = vadd.s32 %v1650, 1
      %v1655 = vsel %vm1653, %v1654, %v1650
      %v1656 = vadd.s32 %v1651, %v1655
      %v1657 = vadd.s32 %v1656, 536870912
      %v1658 = vshrl.u32 %v1657, 30
      %v1659 = vshll.u32 %v1658, 30
      %v1660 = vsub.s32 %v1656, %v1659
      %vm1661 = vcmp.lt.s32.totalorder %v1660, 0
      %v1662 = vsub.s32 0, %v1660
      %v1663 = vsel %vm1661, %v1662, %v1660
      %v1664 = vclz %v1663
      %v1665 = vsub.s32 %v1664, 2
      %vm1666 = vcmp.gt.s32.totalorder 0, %v1665
      %v1667 = vsel %vm1666, 0, %v1665
      %v1668 = vsub.s32 32, %v1667
      %v1669 = vshll.u32 %v1660, %v1667
      %v1670 = vshrl.u32 %v1652, %v1668
      %v1671 = vor.u32 %v1669, %v1670
      %v1672 = vsub.s32 4294967266, %v1667
      %v1673 = vadd.s32 %v1672, 127
      %v1674 = vshll.u32 %v1673, 23
      %v1675 = vor.u32 4788187, %v1674
      %v1676 = vand.u32 2147483647, %v1675
      %v1678 = vcvt.s32.f32 %v1671
      %v1679 = vmul.f32 %v1678, %v1676
      %v1680 = vxor.u32 %v1679, 2147483648
      %v1681 = vsel %vm1598, %v1680, %v1679
      %v1682 = vsub.s32 4, %v1658
      %v1683 = vsel %vm1598, %v1682, %v1658
      %v1684 = vsel %vm1597, %v573, %v1681
      %v1685 = vsel %vm1597, 0, %v1683
      %v1686 = vcosq.f32.pop %v1684
      %v1687 = vsinq.f32.pop %v1684
      %vm1688 = vweird.f32 %v573
      %v1689 = vadd.s32 %v1685, 3
      %v1690 = vand.u32 %v1689, 3
      %vm1691 = vcmp.lt.s32.totalorder %v1690, 2
      %vm1692 = vcmp.eq.s32.totalorder %v1690, 0
      %v1693 = vxor.u32 %v1687, 2147483648
      %v1694 = vsel %vm1692, %v1686, %v1693
      %vm1695 = vcmp.eq.s32.totalorder %v1690, 2
      %v1696 = vxor.u32 %v1686, 2147483648
      %v1697 = vsel %vm1695, %v1696, %v1687
      %v1698 = vsel %vm1691, %v1694, %v1697
      %v1699 = vsel %vm1688, nan, %v1698
      %v1700 = vand.u32 2147483647, %v574
      %vm1701 = vcmp.le.f32.partialorder %v1700, 0.7853982
      %vm1702 = vcmp.lt.s32.totalorder %v574, 0
      %v1703 = vand.u32 %v574, 2139095040
      %v1704 = vshrl.u32 %v1703, 23
      %v1705 = vsub.s32 %v1704, 127
      %v1706 = vand.u32 2147483647, %v574
      %v1707 = vand.u32 %v1706, 8388607
      %v1708 = vor.u32 %v1707, 8388608
      %v1709 = vsub.s32 0, %v1708
      %v1710 = vadd.s32 %v1705, 1
      %vm1711 = vcmp.gt.s32.totalorder %v1710, 0
      %v1712 = vsel %vm1711, %v1710, 0
      %v1713 = vshrl.u32 %v1712, 5
      %v1714 = vand.u32 %v1712, 31
      %v1715 = vsub.s32 32, %v1714
      %v1716 = vshrl.u32 683565275, %v1715
      %v1717 = vshll.u32 683565275, %v1714
      %v1718 = vshrl.u32 2475754826, %v1715
      %v1719 = vor.u32 %v1717, %v1718
      %v1720 = vshll.u32 2475754826, %v1714
      %v1721 = vshrl.u32 2131351028, %v1715
      %v1722 = vor.u32 %v1720, %v1721
      %v1723 = vshll.u32 2131351028, %v1714
      %v1724 = vshrl.u32 2102212464, %v1715
      %v1725 = vor.u32 %v1723, %v1724
      %v1726 = vshll.u32 2102212464, %v1714
      %v1727 = vshrl.u32 920167782, %v1715
      %v1728 = vor.u32 %v1726, %v1727
      %v1729 = vshll.u32 920167782, %v1714
      %v1730 = vshrl.u32 1326507024, %v1715
      %v1731 = vor.u32 %v1729, %v1730
      %vm1732 = vcmp.lt.s32.totalorder %v1713, 1
      %vm1733 = vcmp.lt.s32.totalorder %v1713, 2
      %vm1734 = vcmp.lt.s32.totalorder %v1713, 3
      %vm1735 = vcmp.lt.s32.totalorder %v1713, 4
      %v1736 = vsel %vm1732, %v1716, %v1719
      %v1737 = vsel %vm1735, %v1725, 2102212464
      %v1738 = vsel %vm1734, %v1722, %v1737
      %v1739 = vsel %vm1733, %v1736, %v1738
      %v1740 = vsel %vm1732, %v1719, %v1722
      %v1741 = vsel %vm1735, %v1728, 920167782
      %v1742 = vsel %vm1734, %v1725, %v1741
      %v1743 = vsel %vm1733, %v1740, %v1742
      %v1744 = vsel %vm1732, %v1722, %v1725
      %v1745 = vsel %vm1735, %v1731, 1326507024
      %v1746 = vsel %vm1734, %v1728, %v1745
      %v1747 = vsel %vm1733, %v1744, %v1746
      %v1748 = vshll.u32 %v1708, 8
      %v1749 = vmul.u32.u64.compose %v1748, %v1747
      %v1750 = vextract.low.u32 %v1749
      %v1751 = vextract.high.u32 %v1749
      %v1752 = vmul.u32.u64.compose %v1748, %v1743
      %v1753 = vextract.low.u32 %v1752
      %v1754 = vextract.high.u32 %v1752
      %v1755 = vmul.u32 %v1748, %v1739
      %v1756 = vadd.s32 %v1751, %v1753
      %vm1757 = vc.u32 %v1751, %v1753
      %v1758 = vadd.s32 %v1754, 1
      %v1759 = vsel %vm1757, %v1758, %v1754
      %v1760 = vadd.s32 %v1755, %v1759
      %v1761 = vadd.s32 %v1760, 536870912
      %v1762 = vshrl.u32 %v1761, 30
      %v1763 = vshll.u32 %v1762, 30
      %v1764 = vsub.s32 %v1760, %v1763
      %vm1765 = vcmp.lt.s32.totalorder %v1764, 0
      %v1766 = vsub.s32 0, %v1764
      %v1767 = vsel %vm1765, %v1766, %v1764
      %v1768 = vclz %v1767
      %v1769 = vsub.s32 %v1768, 2
      %vm1770 = vcmp.gt.s32.totalorder 0, %v1769
      %v1771 = vsel %vm1770, 0, %v1769
      %v1772 = vsub.s32 32, %v1771
      %v1773 = vshll.u32 %v1764, %v1771
      %v1774 = vshrl.u32 %v1756, %v1772
      %v1775 = vor.u32 %v1773, %v1774
      %v1776 = vsub.s32 4294967266, %v1771
      %v1777 = vadd.s32 %v1776, 127
      %v1778 = vshll.u32 %v1777, 23
      %v1779 = vor.u32 4788187, %v1778
      %v1780 = vand.u32 2147483647, %v1779
      %v1782 = vcvt.s32.f32 %v1775
      %v1783 = vmul.f32 %v1782, %v1780
      %v1784 = vxor.u32 %v1783, 2147483648
      %v1785 = vsel %vm1702, %v1784, %v1783
      %v1786 = vsub.s32 4, %v1762
      %v1787 = vsel %vm1702, %v1786, %v1762
      %v1788 = vsel %vm1701, %v574, %v1785
      %v1789 = vsel %vm1701, 0, %v1787
      %v1790 = vcosq.f32.pop %v1788
      %v1791 = vsinq.f32.pop %v1788
      %vm1792 = vweird.f32 %v574
      %v1793 = vadd.s32 %v1789, 3
      %v1794 = vand.u32 %v1793, 3
      %vm1795 = vcmp.lt.s32.totalorder %v1794, 2
      %vm1796 = vcmp.eq.s32.totalorder %v1794, 0
      %v1797 = vxor.u32 %v1791, 2147483648
      %v1798 = vsel %vm1796, %v1790, %v1797
      %vm1799 = vcmp.eq.s32.totalorder %v1794, 2
      %v1800 = vxor.u32 %v1790, 2147483648
      %v1801 = vsel %vm1799, %v1800, %v1791
      %v1802 = vsel %vm1795, %v1798, %v1801
      %v1803 = vsel %vm1792, nan, %v1802
      %v1804 = vand.u32 2147483647, %v575
      %vm1805 = vcmp.le.f32.partialorder %v1804, 0.7853982
      %vm1806 = vcmp.lt.s32.totalorder %v575, 0
      %v1807 = vand.u32 %v575, 2139095040
      %v1808 = vshrl.u32 %v1807, 23
      %v1809 = vsub.s32 %v1808, 127
      %v1810 = vand.u32 2147483647, %v575
      %v1811 = vand.u32 %v1810, 8388607
      %v1812 = vor.u32 %v1811, 8388608
      %v1813 = vsub.s32 0, %v1812
      %v1814 = vadd.s32 %v1809, 1
      %vm1815 = vcmp.gt.s32.totalorder %v1814, 0
      %v1816 = vsel %vm1815, %v1814, 0
      %v1817 = vshrl.u32 %v1816, 5
      %v1818 = vand.u32 %v1816, 31
      %v1819 = vsub.s32 32, %v1818
      %v1820 = vshrl.u32 683565275, %v1819
      %v1821 = vshll.u32 683565275, %v1818
      %v1822 = vshrl.u32 2475754826, %v1819
      %v1823 = vor.u32 %v1821, %v1822
      %v1824 = vshll.u32 2475754826, %v1818
      %v1825 = vshrl.u32 2131351028, %v1819
      %v1826 = vor.u32 %v1824, %v1825
      %v1827 = vshll.u32 2131351028, %v1818
      %v1828 = vshrl.u32 2102212464, %v1819
      %v1829 = vor.u32 %v1827, %v1828
      %v1830 = vshll.u32 2102212464, %v1818
      %v1831 = vshrl.u32 920167782, %v1819
      %v1832 = vor.u32 %v1830, %v1831
      %v1833 = vshll.u32 920167782, %v1818
      %v1834 = vshrl.u32 1326507024, %v1819
      %v1835 = vor.u32 %v1833, %v1834
      %vm1836 = vcmp.lt.s32.totalorder %v1817, 1
      %vm1837 = vcmp.lt.s32.totalorder %v1817, 2
      %vm1838 = vcmp.lt.s32.totalorder %v1817, 3
      %vm1839 = vcmp.lt.s32.totalorder %v1817, 4
      %v1840 = vsel %vm1836, %v1820, %v1823
      %v1841 = vsel %vm1839, %v1829, 2102212464
      %v1842 = vsel %vm1838, %v1826, %v1841
      %v1843 = vsel %vm1837, %v1840, %v1842
      %v1844 = vsel %vm1836, %v1823, %v1826
      %v1845 = vsel %vm1839, %v1832, 920167782
      %v1846 = vsel %vm1838, %v1829, %v1845
      %v1847 = vsel %vm1837, %v1844, %v1846
      %v1848 = vsel %vm1836, %v1826, %v1829
      %v1849 = vsel %vm1839, %v1835, 1326507024
      %v1850 = vsel %vm1838, %v1832, %v1849
      %v1851 = vsel %vm1837, %v1848, %v1850
      %v1852 = vshll.u32 %v1812, 8
      %v1853 = vmul.u32.u64.compose %v1852, %v1851
      %v1854 = vextract.low.u32 %v1853
      %v1855 = vextract.high.u32 %v1853
      %v1856 = vmul.u32.u64.compose %v1852, %v1847
      %v1857 = vextract.low.u32 %v1856
      %v1858 = vextract.high.u32 %v1856
      %v1859 = vmul.u32 %v1852, %v1843
      %v1860 = vadd.s32 %v1855, %v1857
      %vm1861 = vc.u32 %v1855, %v1857
      %v1862 = vadd.s32 %v1858, 1
      %v1863 = vsel %vm1861, %v1862, %v1858
      %v1864 = vadd.s32 %v1859, %v1863
      %v1865 = vadd.s32 %v1864, 536870912
      %v1866 = vshrl.u32 %v1865, 30
      %v1867 = vshll.u32 %v1866, 30
      %v1868 = vsub.s32 %v1864, %v1867
      %vm1869 = vcmp.lt.s32.totalorder %v1868, 0
      %v1870 = vsub.s32 0, %v1868
      %v1871 = vsel %vm1869, %v1870, %v1868
      %v1872 = vclz %v1871
      %v1873 = vsub.s32 %v1872, 2
      %vm1874 = vcmp.gt.s32.totalorder 0, %v1873
      %v1875 = vsel %vm1874, 0, %v1873
      %v1876 = vsub.s32 32, %v1875
      %v1877 = vshll.u32 %v1868, %v1875
      %v1878 = vshrl.u32 %v1860, %v1876
      %v1879 = vor.u32 %v1877, %v1878
      %v1880 = vsub.s32 4294967266, %v1875
      %v1881 = vadd.s32 %v1880, 127
      %v1882 = vshll.u32 %v1881, 23
      %v1883 = vor.u32 4788187, %v1882
      %v1884 = vand.u32 2147483647, %v1883
      %v1886 = vcvt.s32.f32 %v1879
      %v1887 = vmul.f32 %v1886, %v1884
      %v1888 = vxor.u32 %v1887, 2147483648
      %v1889 = vsel %vm1806, %v1888, %v1887
      %v1890 = vsub.s32 4, %v1866
      %v1891 = vsel %vm1806, %v1890, %v1866
      %v1892 = vsel %vm1805, %v575, %v1889
      %v1893 = vsel %vm1805, 0, %v1891
      %v1894 = vcosq.f32.pop %v1892
      %v1895 = vsinq.f32.pop %v1892
      %vm1896 = vweird.f32 %v575
      %v1897 = vadd.s32 %v1893, 3
      %v1898 = vand.u32 %v1897, 3
      %vm1899 = vcmp.lt.s32.totalorder %v1898, 2
      %vm1900 = vcmp.eq.s32.totalorder %v1898, 0
      %v1901 = vxor.u32 %v1895, 2147483648
      %v1902 = vsel %vm1900, %v1894, %v1901
      %vm1903 = vcmp.eq.s32.totalorder %v1898, 2
      %v1904 = vxor.u32 %v1894, 2147483648
      %v1905 = vsel %vm1903, %v1904, %v1895
      %v1906 = vsel %vm1899, %v1902, %v1905
      %v1907 = vsel %vm1896, nan, %v1906
      %v1908 = vand.u32 2147483647, %v576
      %vm1909 = vcmp.le.f32.partialorder %v1908, 0.7853982
      %vm1910 = vcmp.lt.s32.totalorder %v576, 0
      %v1911 = vand.u32 %v576, 2139095040
      %v1912 = vshrl.u32 %v1911, 23
      %v1913 = vsub.s32 %v1912, 127
      %v1914 = vand.u32 2147483647, %v576
      %v1915 = vand.u32 %v1914, 8388607
      %v1916 = vor.u32 %v1915, 8388608
      %v1917 = vsub.s32 0, %v1916
      %v1918 = vadd.s32 %v1913, 1
      %vm1919 = vcmp.gt.s32.totalorder %v1918, 0
      %v1920 = vsel %vm1919, %v1918, 0
      %v1921 = vshrl.u32 %v1920, 5
      %v1922 = vand.u32 %v1920, 31
      %v1923 = vsub.s32 32, %v1922
      %v1924 = vshrl.u32 683565275, %v1923
      %v1925 = vshll.u32 683565275, %v1922
      %v1926 = vshrl.u32 2475754826, %v1923
      %v1927 = vor.u32 %v1925, %v1926
      %v1928 = vshll.u32 2475754826, %v1922
      %v1929 = vshrl.u32 2131351028, %v1923
      %v1930 = vor.u32 %v1928, %v1929
      %v1931 = vshll.u32 2131351028, %v1922
      %v1932 = vshrl.u32 2102212464, %v1923
      %v1933 = vor.u32 %v1931, %v1932
      %v1934 = vshll.u32 2102212464, %v1922
      %v1935 = vshrl.u32 920167782, %v1923
      %v1936 = vor.u32 %v1934, %v1935
      %v1937 = vshll.u32 920167782, %v1922
      %v1938 = vshrl.u32 1326507024, %v1923
      %v1939 = vor.u32 %v1937, %v1938
      %vm1940 = vcmp.lt.s32.totalorder %v1921, 1
      %vm1941 = vcmp.lt.s32.totalorder %v1921, 2
      %vm1942 = vcmp.lt.s32.totalorder %v1921, 3
      %vm1943 = vcmp.lt.s32.totalorder %v1921, 4
      %v1944 = vsel %vm1940, %v1924, %v1927
      %v1945 = vsel %vm1943, %v1933, 2102212464
      %v1946 = vsel %vm1942, %v1930, %v1945
      %v1947 = vsel %vm1941, %v1944, %v1946
      %v1948 = vsel %vm1940, %v1927, %v1930
      %v1949 = vsel %vm1943, %v1936, 920167782
      %v1950 = vsel %vm1942, %v1933, %v1949
      %v1951 = vsel %vm1941, %v1948, %v1950
      %v1952 = vsel %vm1940, %v1930, %v1933
      %v1953 = vsel %vm1943, %v1939, 1326507024
      %v1954 = vsel %vm1942, %v1936, %v1953
      %v1955 = vsel %vm1941, %v1952, %v1954
      %v1956 = vshll.u32 %v1916, 8
      %v1957 = vmul.u32.u64.compose %v1956, %v1955
      %v1958 = vextract.low.u32 %v1957
      %v1959 = vextract.high.u32 %v1957
      %v1960 = vmul.u32.u64.compose %v1956, %v1951
      %v1961 = vextract.low.u32 %v1960
      %v1962 = vextract.high.u32 %v1960
      %v1963 = vmul.u32 %v1956, %v1947
      %v1964 = vadd.s32 %v1959, %v1961
      %vm1965 = vc.u32 %v1959, %v1961
      %v1966 = vadd.s32 %v1962, 1
      %v1967 = vsel %vm1965, %v1966, %v1962
      %v1968 = vadd.s32 %v1963, %v1967
      %v1969 = vadd.s32 %v1968, 536870912
      %v1970 = vshrl.u32 %v1969, 30
      %v1971 = vshll.u32 %v1970, 30
      %v1972 = vsub.s32 %v1968, %v1971
      %vm1973 = vcmp.lt.s32.totalorder %v1972, 0
      %v1974 = vsub.s32 0, %v1972
      %v1975 = vsel %vm1973, %v1974, %v1972
      %v1976 = vclz %v1975
      %v1977 = vsub.s32 %v1976, 2
      %vm1978 = vcmp.gt.s32.totalorder 0, %v1977
      %v1979 = vsel %vm1978, 0, %v1977
      %v1980 = vsub.s32 32, %v1979
      %v1981 = vshll.u32 %v1972, %v1979
      %v1982 = vshrl.u32 %v1964, %v1980
      %v1983 = vor.u32 %v1981, %v1982
      %v1984 = vsub.s32 4294967266, %v1979
      %v1985 = vadd.s32 %v1984, 127
      %v1986 = vshll.u32 %v1985, 23
      %v1987 = vor.u32 4788187, %v1986
      %v1988 = vand.u32 2147483647, %v1987
      %v1990 = vcvt.s32.f32 %v1983
      %v1991 = vmul.f32 %v1990, %v1988
      %v1992 = vxor.u32 %v1991, 2147483648
      %v1993 = vsel %vm1910, %v1992, %v1991
      %v1994 = vsub.s32 4, %v1970
      %v1995 = vsel %vm1910, %v1994, %v1970
      %v1996 = vsel %vm1909, %v576, %v1993
      %v1997 = vsel %vm1909, 0, %v1995
      %v1998 = vcosq.f32.pop %v1996
      %v1999 = vsinq.f32.pop %v1996
      %vm2000 = vweird.f32 %v576
      %v2001 = vadd.s32 %v1997, 3
      %v2002 = vand.u32 %v2001, 3
      %vm2003 = vcmp.lt.s32.totalorder %v2002, 2
      %vm2004 = vcmp.eq.s32.totalorder %v2002, 0
      %v2005 = vxor.u32 %v1999, 2147483648
      %v2006 = vsel %vm2004, %v1998, %v2005
      %vm2007 = vcmp.eq.s32.totalorder %v2002, 2
      %v2008 = vxor.u32 %v1998, 2147483648
      %v2009 = vsel %vm2007, %v2008, %v1999
      %v2010 = vsel %vm2003, %v2006, %v2009
      %v2011 = vsel %vm2000, nan, %v2010
      %v2012 = vand.u32 2147483647, %v577
      %vm2013 = vcmp.le.f32.partialorder %v2012, 0.7853982
      %vm2014 = vcmp.lt.s32.totalorder %v577, 0
      %v2015 = vand.u32 %v577, 2139095040
      %v2016 = vshrl.u32 %v2015, 23
      %v2017 = vsub.s32 %v2016, 127
      %v2018 = vand.u32 2147483647, %v577
      %v2019 = vand.u32 %v2018, 8388607
      %v2020 = vor.u32 %v2019, 8388608
      %v2021 = vsub.s32 0, %v2020
      %v2022 = vadd.s32 %v2017, 1
      %vm2023 = vcmp.gt.s32.totalorder %v2022, 0
      %v2024 = vsel %vm2023, %v2022, 0
      %v2025 = vshrl.u32 %v2024, 5
      %v2026 = vand.u32 %v2024, 31
      %v2027 = vsub.s32 32, %v2026
      %v2028 = vshrl.u32 683565275, %v2027
      %v2029 = vshll.u32 683565275, %v2026
      %v2030 = vshrl.u32 2475754826, %v2027
      %v2031 = vor.u32 %v2029, %v2030
      %v2032 = vshll.u32 2475754826, %v2026
      %v2033 = vshrl.u32 2131351028, %v2027
      %v2034 = vor.u32 %v2032, %v2033
      %v2035 = vshll.u32 2131351028, %v2026
      %v2036 = vshrl.u32 2102212464, %v2027
      %v2037 = vor.u32 %v2035, %v2036
      %v2038 = vshll.u32 2102212464, %v2026
      %v2039 = vshrl.u32 920167782, %v2027
      %v2040 = vor.u32 %v2038, %v2039
      %v2041 = vshll.u32 920167782, %v2026
      %v2042 = vshrl.u32 1326507024, %v2027
      %v2043 = vor.u32 %v2041, %v2042
      %vm2044 = vcmp.lt.s32.totalorder %v2025, 1
      %vm2045 = vcmp.lt.s32.totalorder %v2025, 2
      %vm2046 = vcmp.lt.s32.totalorder %v2025, 3
      %vm2047 = vcmp.lt.s32.totalorder %v2025, 4
      %v2048 = vsel %vm2044, %v2028, %v2031
      %v2049 = vsel %vm2047, %v2037, 2102212464
      %v2050 = vsel %vm2046, %v2034, %v2049
      %v2051 = vsel %vm2045, %v2048, %v2050
      %v2052 = vsel %vm2044, %v2031, %v2034
      %v2053 = vsel %vm2047, %v2040, 920167782
      %v2054 = vsel %vm2046, %v2037, %v2053
      %v2055 = vsel %vm2045, %v2052, %v2054
      %v2056 = vsel %vm2044, %v2034, %v2037
      %v2057 = vsel %vm2047, %v2043, 1326507024
      %v2058 = vsel %vm2046, %v2040, %v2057
      %v2059 = vsel %vm2045, %v2056, %v2058
      %v2060 = vshll.u32 %v2020, 8
      %v2061 = vmul.u32.u64.compose %v2060, %v2059
      %v2062 = vextract.low.u32 %v2061
      %v2063 = vextract.high.u32 %v2061
      %v2064 = vmul.u32.u64.compose %v2060, %v2055
      %v2065 = vextract.low.u32 %v2064
      %v2066 = vextract.high.u32 %v2064
      %v2067 = vmul.u32 %v2060, %v2051
      %v2068 = vadd.s32 %v2063, %v2065
      %vm2069 = vc.u32 %v2063, %v2065
      %v2070 = vadd.s32 %v2066, 1
      %v2071 = vsel %vm2069, %v2070, %v2066
      %v2072 = vadd.s32 %v2067, %v2071
      %v2073 = vadd.s32 %v2072, 536870912
      %v2074 = vshrl.u32 %v2073, 30
      %v2075 = vshll.u32 %v2074, 30
      %v2076 = vsub.s32 %v2072, %v2075
      %vm2077 = vcmp.lt.s32.totalorder %v2076, 0
      %v2078 = vsub.s32 0, %v2076
      %v2079 = vsel %vm2077, %v2078, %v2076
      %v2080 = vclz %v2079
      %v2081 = vsub.s32 %v2080, 2
      %vm2082 = vcmp.gt.s32.totalorder 0, %v2081
      %v2083 = vsel %vm2082, 0, %v2081
      %v2084 = vsub.s32 32, %v2083
      %v2085 = vshll.u32 %v2076, %v2083
      %v2086 = vshrl.u32 %v2068, %v2084
      %v2087 = vor.u32 %v2085, %v2086
      %v2088 = vsub.s32 4294967266, %v2083
      %v2089 = vadd.s32 %v2088, 127
      %v2090 = vshll.u32 %v2089, 23
      %v2091 = vor.u32 4788187, %v2090
      %v2092 = vand.u32 2147483647, %v2091
      %v2094 = vcvt.s32.f32 %v2087
      %v2095 = vmul.f32 %v2094, %v2092
      %v2096 = vxor.u32 %v2095, 2147483648
      %v2097 = vsel %vm2014, %v2096, %v2095
      %v2098 = vsub.s32 4, %v2074
      %v2099 = vsel %vm2014, %v2098, %v2074
      %v2100 = vsel %vm2013, %v577, %v2097
      %v2101 = vsel %vm2013, 0, %v2099
      %v2102 = vcosq.f32.pop %v2100
      %v2103 = vsinq.f32.pop %v2100
      %vm2104 = vweird.f32 %v577
      %v2105 = vadd.s32 %v2101, 3
      %v2106 = vand.u32 %v2105, 3
      %vm2107 = vcmp.lt.s32.totalorder %v2106, 2
      %vm2108 = vcmp.eq.s32.totalorder %v2106, 0
      %v2109 = vxor.u32 %v2103, 2147483648
      %v2110 = vsel %vm2108, %v2102, %v2109
      %vm2111 = vcmp.eq.s32.totalorder %v2106, 2
      %v2112 = vxor.u32 %v2102, 2147483648
      %v2113 = vsel %vm2111, %v2112, %v2103
      %v2114 = vsel %vm2107, %v2110, %v2113
      %v2115 = vsel %vm2104, nan, %v2114
      %v2116 = vand.u32 2147483647, %v578
      %vm2117 = vcmp.le.f32.partialorder %v2116, 0.7853982
      %vm2118 = vcmp.lt.s32.totalorder %v578, 0
      %v2119 = vand.u32 %v578, 2139095040
      %v2120 = vshrl.u32 %v2119, 23
      %v2121 = vsub.s32 %v2120, 127
      %v2122 = vand.u32 2147483647, %v578
      %v2123 = vand.u32 %v2122, 8388607
      %v2124 = vor.u32 %v2123, 8388608
      %v2125 = vsub.s32 0, %v2124
      %v2126 = vadd.s32 %v2121, 1
      %vm2127 = vcmp.gt.s32.totalorder %v2126, 0
      %v2128 = vsel %vm2127, %v2126, 0
      %v2129 = vshrl.u32 %v2128, 5
      %v2130 = vand.u32 %v2128, 31
      %v2131 = vsub.s32 32, %v2130
      %v2132 = vshrl.u32 683565275, %v2131
      %v2133 = vshll.u32 683565275, %v2130
      %v2134 = vshrl.u32 2475754826, %v2131
      %v2135 = vor.u32 %v2133, %v2134
      %v2136 = vshll.u32 2475754826, %v2130
      %v2137 = vshrl.u32 2131351028, %v2131
      %v2138 = vor.u32 %v2136, %v2137
      %v2139 = vshll.u32 2131351028, %v2130
      %v2140 = vshrl.u32 2102212464, %v2131
      %v2141 = vor.u32 %v2139, %v2140
      %v2142 = vshll.u32 2102212464, %v2130
      %v2143 = vshrl.u32 920167782, %v2131
      %v2144 = vor.u32 %v2142, %v2143
      %v2145 = vshll.u32 920167782, %v2130
      %v2146 = vshrl.u32 1326507024, %v2131
      %v2147 = vor.u32 %v2145, %v2146
      %vm2148 = vcmp.lt.s32.totalorder %v2129, 1
      %vm2149 = vcmp.lt.s32.totalorder %v2129, 2
      %vm2150 = vcmp.lt.s32.totalorder %v2129, 3
      %vm2151 = vcmp.lt.s32.totalorder %v2129, 4
      %v2152 = vsel %vm2148, %v2132, %v2135
      %v2153 = vsel %vm2151, %v2141, 2102212464
      %v2154 = vsel %vm2150, %v2138, %v2153
      %v2155 = vsel %vm2149, %v2152, %v2154
      %v2156 = vsel %vm2148, %v2135, %v2138
      %v2157 = vsel %vm2151, %v2144, 920167782
      %v2158 = vsel %vm2150, %v2141, %v2157
      %v2159 = vsel %vm2149, %v2156, %v2158
      %v2160 = vsel %vm2148, %v2138, %v2141
      %v2161 = vsel %vm2151, %v2147, 1326507024
      %v2162 = vsel %vm2150, %v2144, %v2161
      %v2163 = vsel %vm2149, %v2160, %v2162
      %v2164 = vshll.u32 %v2124, 8
      %v2165 = vmul.u32.u64.compose %v2164, %v2163
      %v2166 = vextract.low.u32 %v2165
      %v2167 = vextract.high.u32 %v2165
      %v2168 = vmul.u32.u64.compose %v2164, %v2159
      %v2169 = vextract.low.u32 %v2168
      %v2170 = vextract.high.u32 %v2168
      %v2171 = vmul.u32 %v2164, %v2155
      %v2172 = vadd.s32 %v2167, %v2169
      %vm2173 = vc.u32 %v2167, %v2169
      %v2174 = vadd.s32 %v2170, 1
      %v2175 = vsel %vm2173, %v2174, %v2170
      %v2176 = vadd.s32 %v2171, %v2175
      %v2177 = vadd.s32 %v2176, 536870912
      %v2178 = vshrl.u32 %v2177, 30
      %v2179 = vshll.u32 %v2178, 30
      %v2180 = vsub.s32 %v2176, %v2179
      %vm2181 = vcmp.lt.s32.totalorder %v2180, 0
      %v2182 = vsub.s32 0, %v2180
      %v2183 = vsel %vm2181, %v2182, %v2180
      %v2184 = vclz %v2183
      %v2185 = vsub.s32 %v2184, 2
      %vm2186 = vcmp.gt.s32.totalorder 0, %v2185
      %v2187 = vsel %vm2186, 0, %v2185
      %v2188 = vsub.s32 32, %v2187
      %v2189 = vshll.u32 %v2180, %v2187
      %v2190 = vshrl.u32 %v2172, %v2188
      %v2191 = vor.u32 %v2189, %v2190
      %v2192 = vsub.s32 4294967266, %v2187
      %v2193 = vadd.s32 %v2192, 127
      %v2194 = vshll.u32 %v2193, 23
      %v2195 = vor.u32 4788187, %v2194
      %v2196 = vand.u32 2147483647, %v2195
      %v2198 = vcvt.s32.f32 %v2191
      %v2199 = vmul.f32 %v2198, %v2196
      %v2200 = vxor.u32 %v2199, 2147483648
      %v2201 = vsel %vm2118, %v2200, %v2199
      %v2202 = vsub.s32 4, %v2178
      %v2203 = vsel %vm2118, %v2202, %v2178
      %v2204 = vsel %vm2117, %v578, %v2201
      %v2205 = vsel %vm2117, 0, %v2203
      %v2206 = vcosq.f32.pop %v2204
      %v2207 = vsinq.f32.pop %v2204
      %vm2208 = vweird.f32 %v578
      %v2209 = vadd.s32 %v2205, 3
      %v2210 = vand.u32 %v2209, 3
      %vm2211 = vcmp.lt.s32.totalorder %v2210, 2
      %vm2212 = vcmp.eq.s32.totalorder %v2210, 0
      %v2213 = vxor.u32 %v2207, 2147483648
      %v2214 = vsel %vm2212, %v2206, %v2213
      %vm2215 = vcmp.eq.s32.totalorder %v2210, 2
      %v2216 = vxor.u32 %v2206, 2147483648
      %v2217 = vsel %vm2215, %v2216, %v2207
      %v2218 = vsel %vm2211, %v2214, %v2217
      %v2219 = vsel %vm2208, nan, %v2218
      %v2220 = vand.u32 2147483647, %v579
      %vm2221 = vcmp.le.f32.partialorder %v2220, 0.7853982
      %vm2222 = vcmp.lt.s32.totalorder %v579, 0
      %v2223 = vand.u32 %v579, 2139095040
      %v2224 = vshrl.u32 %v2223, 23
      %v2225 = vsub.s32 %v2224, 127
      %v2226 = vand.u32 2147483647, %v579
      %v2227 = vand.u32 %v2226, 8388607
      %v2228 = vor.u32 %v2227, 8388608
      %v2229 = vsub.s32 0, %v2228
      %v2230 = vadd.s32 %v2225, 1
      %vm2231 = vcmp.gt.s32.totalorder %v2230, 0
      %v2232 = vsel %vm2231, %v2230, 0
      %v2233 = vshrl.u32 %v2232, 5
      %v2234 = vand.u32 %v2232, 31
      %v2235 = vsub.s32 32, %v2234
      %v2236 = vshrl.u32 683565275, %v2235
      %v2237 = vshll.u32 683565275, %v2234
      %v2238 = vshrl.u32 2475754826, %v2235
      %v2239 = vor.u32 %v2237, %v2238
      %v2240 = vshll.u32 2475754826, %v2234
      %v2241 = vshrl.u32 2131351028, %v2235
      %v2242 = vor.u32 %v2240, %v2241
      %v2243 = vshll.u32 2131351028, %v2234
      %v2244 = vshrl.u32 2102212464, %v2235
      %v2245 = vor.u32 %v2243, %v2244
      %v2246 = vshll.u32 2102212464, %v2234
      %v2247 = vshrl.u32 920167782, %v2235
      %v2248 = vor.u32 %v2246, %v2247
      %v2249 = vshll.u32 920167782, %v2234
      %v2250 = vshrl.u32 1326507024, %v2235
      %v2251 = vor.u32 %v2249, %v2250
      %vm2252 = vcmp.lt.s32.totalorder %v2233, 1
      %vm2253 = vcmp.lt.s32.totalorder %v2233, 2
      %vm2254 = vcmp.lt.s32.totalorder %v2233, 3
      %vm2255 = vcmp.lt.s32.totalorder %v2233, 4
      %v2256 = vsel %vm2252, %v2236, %v2239
      %v2257 = vsel %vm2255, %v2245, 2102212464
      %v2258 = vsel %vm2254, %v2242, %v2257
      %v2259 = vsel %vm2253, %v2256, %v2258
      %v2260 = vsel %vm2252, %v2239, %v2242
      %v2261 = vsel %vm2255, %v2248, 920167782
      %v2262 = vsel %vm2254, %v2245, %v2261
      %v2263 = vsel %vm2253, %v2260, %v2262
      %v2264 = vsel %vm2252, %v2242, %v2245
      %v2265 = vsel %vm2255, %v2251, 1326507024
      %v2266 = vsel %vm2254, %v2248, %v2265
      %v2267 = vsel %vm2253, %v2264, %v2266
      %v2268 = vshll.u32 %v2228, 8
      %v2269 = vmul.u32.u64.compose %v2268, %v2267
      %v2270 = vextract.low.u32 %v2269
      %v2271 = vextract.high.u32 %v2269
      %v2272 = vmul.u32.u64.compose %v2268, %v2263
      %v2273 = vextract.low.u32 %v2272
      %v2274 = vextract.high.u32 %v2272
      %v2275 = vmul.u32 %v2268, %v2259
      %v2276 = vadd.s32 %v2271, %v2273
      %vm2277 = vc.u32 %v2271, %v2273
      %v2278 = vadd.s32 %v2274, 1
      %v2279 = vsel %vm2277, %v2278, %v2274
      %v2280 = vadd.s32 %v2275, %v2279
      %v2281 = vadd.s32 %v2280, 536870912
      %v2282 = vshrl.u32 %v2281, 30
      %v2283 = vshll.u32 %v2282, 30
      %v2284 = vsub.s32 %v2280, %v2283
      %vm2285 = vcmp.lt.s32.totalorder %v2284, 0
      %v2286 = vsub.s32 0, %v2284
      %v2287 = vsel %vm2285, %v2286, %v2284
      %v2288 = vclz %v2287
      %v2289 = vsub.s32 %v2288, 2
      %vm2290 = vcmp.gt.s32.totalorder 0, %v2289
      %v2291 = vsel %vm2290, 0, %v2289
      %v2292 = vsub.s32 32, %v2291
      %v2293 = vshll.u32 %v2284, %v2291
      %v2294 = vshrl.u32 %v2276, %v2292
      %v2295 = vor.u32 %v2293, %v2294
      %v2296 = vsub.s32 4294967266, %v2291
      %v2297 = vadd.s32 %v2296, 127
      %v2298 = vshll.u32 %v2297, 23
      %v2299 = vor.u32 4788187, %v2298
      %v2300 = vand.u32 2147483647, %v2299
      %v2302 = vcvt.s32.f32 %v2295
      %v2303 = vmul.f32 %v2302, %v2300
      %v2304 = vxor.u32 %v2303, 2147483648
      %v2305 = vsel %vm2222, %v2304, %v2303
      %v2306 = vsub.s32 4, %v2282
      %v2307 = vsel %vm2222, %v2306, %v2282
      %v2308 = vsel %vm2221, %v579, %v2305
      %v2309 = vsel %vm2221, 0, %v2307
      %v2310 = vcosq.f32.pop %v2308
      %v2311 = vsinq.f32.pop %v2308
      %vm2312 = vweird.f32 %v579
      %v2313 = vadd.s32 %v2309, 3
      %v2314 = vand.u32 %v2313, 3
      %vm2315 = vcmp.lt.s32.totalorder %v2314, 2
      %vm2316 = vcmp.eq.s32.totalorder %v2314, 0
      %v2317 = vxor.u32 %v2311, 2147483648
      %v2318 = vsel %vm2316, %v2310, %v2317
      %vm2319 = vcmp.eq.s32.totalorder %v2314, 2
      %v2320 = vxor.u32 %v2310, 2147483648
      %v2321 = vsel %vm2319, %v2320, %v2311
      %v2322 = vsel %vm2315, %v2318, %v2321
      %v2323 = vsel %vm2312, nan, %v2322
      %v2324 = vand.u32 2147483647, %v564
      %vm2325 = vcmp.le.f32.partialorder %v2324, 0.7853982
      %vm2326 = vcmp.lt.s32.totalorder %v564, 0
      %v2327 = vand.u32 %v564, 2139095040
      %v2328 = vshrl.u32 %v2327, 23
      %v2329 = vsub.s32 %v2328, 127
      %v2330 = vand.u32 2147483647, %v564
      %v2331 = vand.u32 %v2330, 8388607
      %v2332 = vor.u32 %v2331, 8388608
      %v2333 = vsub.s32 0, %v2332
      %v2334 = vadd.s32 %v2329, 1
      %vm2335 = vcmp.gt.s32.totalorder %v2334, 0
      %v2336 = vsel %vm2335, %v2334, 0
      %v2337 = vshrl.u32 %v2336, 5
      %v2338 = vand.u32 %v2336, 31
      %v2339 = vsub.s32 32, %v2338
      %v2340 = vshrl.u32 683565275, %v2339
      %v2341 = vshll.u32 683565275, %v2338
      %v2342 = vshrl.u32 2475754826, %v2339
      %v2343 = vor.u32 %v2341, %v2342
      %v2344 = vshll.u32 2475754826, %v2338
      %v2345 = vshrl.u32 2131351028, %v2339
      %v2346 = vor.u32 %v2344, %v2345
      %v2347 = vshll.u32 2131351028, %v2338
      %v2348 = vshrl.u32 2102212464, %v2339
      %v2349 = vor.u32 %v2347, %v2348
      %v2350 = vshll.u32 2102212464, %v2338
      %v2351 = vshrl.u32 920167782, %v2339
      %v2352 = vor.u32 %v2350, %v2351
      %v2353 = vshll.u32 920167782, %v2338
      %v2354 = vshrl.u32 1326507024, %v2339
      %v2355 = vor.u32 %v2353, %v2354
      %vm2356 = vcmp.lt.s32.totalorder %v2337, 1
      %vm2357 = vcmp.lt.s32.totalorder %v2337, 2
      %vm2358 = vcmp.lt.s32.totalorder %v2337, 3
      %vm2359 = vcmp.lt.s32.totalorder %v2337, 4
      %v2360 = vsel %vm2356, %v2340, %v2343
      %v2361 = vsel %vm2359, %v2349, 2102212464
      %v2362 = vsel %vm2358, %v2346, %v2361
      %v2363 = vsel %vm2357, %v2360, %v2362
      %v2364 = vsel %vm2356, %v2343, %v2346
      %v2365 = vsel %vm2359, %v2352, 920167782
      %v2366 = vsel %vm2358, %v2349, %v2365
      %v2367 = vsel %vm2357, %v2364, %v2366
      %v2368 = vsel %vm2356, %v2346, %v2349
      %v2369 = vsel %vm2359, %v2355, 1326507024
      %v2370 = vsel %vm2358, %v2352, %v2369
      %v2371 = vsel %vm2357, %v2368, %v2370
      %v2372 = vshll.u32 %v2332, 8
      %v2373 = vmul.u32.u64.compose %v2372, %v2371
      %v2374 = vextract.low.u32 %v2373
      %v2375 = vextract.high.u32 %v2373
      %v2376 = vmul.u32.u64.compose %v2372, %v2367
      %v2377 = vextract.low.u32 %v2376
      %v2378 = vextract.high.u32 %v2376
      %v2379 = vmul.u32 %v2372, %v2363
      %v2380 = vadd.s32 %v2375, %v2377
      %vm2381 = vc.u32 %v2375, %v2377
      %v2382 = vadd.s32 %v2378, 1
      %v2383 = vsel %vm2381, %v2382, %v2378
      %v2384 = vadd.s32 %v2379, %v2383
      %v2385 = vadd.s32 %v2384, 536870912
      %v2386 = vshrl.u32 %v2385, 30
      %v2387 = vshll.u32 %v2386, 30
      %v2388 = vsub.s32 %v2384, %v2387
      %vm2389 = vcmp.lt.s32.totalorder %v2388, 0
      %v2390 = vsub.s32 0, %v2388
      %v2391 = vsel %vm2389, %v2390, %v2388
      %v2392 = vclz %v2391
      %v2393 = vsub.s32 %v2392, 2
      %vm2394 = vcmp.gt.s32.totalorder 0, %v2393
      %v2395 = vsel %vm2394, 0, %v2393
      %v2396 = vsub.s32 32, %v2395
      %v2397 = vshll.u32 %v2388, %v2395
      %v2398 = vshrl.u32 %v2380, %v2396
      %v2399 = vor.u32 %v2397, %v2398
      %v2400 = vsub.s32 4294967266, %v2395
      %v2401 = vadd.s32 %v2400, 127
      %v2402 = vshll.u32 %v2401, 23
      %v2403 = vor.u32 4788187, %v2402
      %v2404 = vand.u32 2147483647, %v2403
      %v2406 = vcvt.s32.f32 %v2399
      %v2407 = vmul.f32 %v2406, %v2404
      %v2408 = vxor.u32 %v2407, 2147483648
      %v2409 = vsel %vm2326, %v2408, %v2407
      %v2410 = vsub.s32 4, %v2386
      %v2411 = vsel %vm2326, %v2410, %v2386
      %v2412 = vsel %vm2325, %v564, %v2409
      %v2413 = vsel %vm2325, 0, %v2411
      %v2414 = vcosq.f32.pop %v2412
      %v2415 = vsinq.f32.pop %v2412
      %vm2416 = vweird.f32 %v564
      %v2417 = vand.u32 %v2413, 3
      %vm2418 = vcmp.lt.s32.totalorder %v2417, 2
      %vm2419 = vcmp.eq.s32.totalorder %v2417, 0
      %v2420 = vxor.u32 %v2415, 2147483648
      %v2421 = vsel %vm2419, %v2414, %v2420
      %vm2422 = vcmp.eq.s32.totalorder %v2417, 2
      %v2423 = vxor.u32 %v2414, 2147483648
      %v2424 = vsel %vm2422, %v2423, %v2415
      %v2425 = vsel %vm2418, %v2421, %v2424
      %v2426 = vsel %vm2416, nan, %v2425
      %v2427 = vand.u32 2147483647, %v565
      %vm2428 = vcmp.le.f32.partialorder %v2427, 0.7853982
      %vm2429 = vcmp.lt.s32.totalorder %v565, 0
      %v2430 = vand.u32 %v565, 2139095040
      %v2431 = vshrl.u32 %v2430, 23
      %v2432 = vsub.s32 %v2431, 127
      %v2433 = vand.u32 2147483647, %v565
      %v2434 = vand.u32 %v2433, 8388607
      %v2435 = vor.u32 %v2434, 8388608
      %v2436 = vsub.s32 0, %v2435
      %v2437 = vadd.s32 %v2432, 1
      %vm2438 = vcmp.gt.s32.totalorder %v2437, 0
      %v2439 = vsel %vm2438, %v2437, 0
      %v2440 = vshrl.u32 %v2439, 5
      %v2441 = vand.u32 %v2439, 31
      %v2442 = vsub.s32 32, %v2441
      %v2443 = vshrl.u32 683565275, %v2442
      %v2444 = vshll.u32 683565275, %v2441
      %v2445 = vshrl.u32 2475754826, %v2442
      %v2446 = vor.u32 %v2444, %v2445
      %v2447 = vshll.u32 2475754826, %v2441
      %v2448 = vshrl.u32 2131351028, %v2442
      %v2449 = vor.u32 %v2447, %v2448
      %v2450 = vshll.u32 2131351028, %v2441
      %v2451 = vshrl.u32 2102212464, %v2442
      %v2452 = vor.u32 %v2450, %v2451
      %v2453 = vshll.u32 2102212464, %v2441
      %v2454 = vshrl.u32 920167782, %v2442
      %v2455 = vor.u32 %v2453, %v2454
      %v2456 = vshll.u32 920167782, %v2441
      %v2457 = vshrl.u32 1326507024, %v2442
      %v2458 = vor.u32 %v2456, %v2457
      %vm2459 = vcmp.lt.s32.totalorder %v2440, 1
      %vm2460 = vcmp.lt.s32.totalorder %v2440, 2
      %vm2461 = vcmp.lt.s32.totalorder %v2440, 3
      %vm2462 = vcmp.lt.s32.totalorder %v2440, 4
      %v2463 = vsel %vm2459, %v2443, %v2446
      %v2464 = vsel %vm2462, %v2452, 2102212464
      %v2465 = vsel %vm2461, %v2449, %v2464
      %v2466 = vsel %vm2460, %v2463, %v2465
      %v2467 = vsel %vm2459, %v2446, %v2449
      %v2468 = vsel %vm2462, %v2455, 920167782
      %v2469 = vsel %vm2461, %v2452, %v2468
      %v2470 = vsel %vm2460, %v2467, %v2469
      %v2471 = vsel %vm2459, %v2449, %v2452
      %v2472 = vsel %vm2462, %v2458, 1326507024
      %v2473 = vsel %vm2461, %v2455, %v2472
      %v2474 = vsel %vm2460, %v2471, %v2473
      %v2475 = vshll.u32 %v2435, 8
      %v2476 = vmul.u32.u64.compose %v2475, %v2474
      %v2477 = vextract.low.u32 %v2476
      %v2478 = vextract.high.u32 %v2476
      %v2479 = vmul.u32.u64.compose %v2475, %v2470
      %v2480 = vextract.low.u32 %v2479
      %v2481 = vextract.high.u32 %v2479
      %v2482 = vmul.u32 %v2475, %v2466
      %v2483 = vadd.s32 %v2478, %v2480
      %vm2484 = vc.u32 %v2478, %v2480
      %v2485 = vadd.s32 %v2481, 1
      %v2486 = vsel %vm2484, %v2485, %v2481
      %v2487 = vadd.s32 %v2482, %v2486
      %v2488 = vadd.s32 %v2487, 536870912
      %v2489 = vshrl.u32 %v2488, 30
      %v2490 = vshll.u32 %v2489, 30
      %v2491 = vsub.s32 %v2487, %v2490
      %vm2492 = vcmp.lt.s32.totalorder %v2491, 0
      %v2493 = vsub.s32 0, %v2491
      %v2494 = vsel %vm2492, %v2493, %v2491
      %v2495 = vclz %v2494
      %v2496 = vsub.s32 %v2495, 2
      %vm2497 = vcmp.gt.s32.totalorder 0, %v2496
      %v2498 = vsel %vm2497, 0, %v2496
      %v2499 = vsub.s32 32, %v2498
      %v2500 = vshll.u32 %v2491, %v2498
      %v2501 = vshrl.u32 %v2483, %v2499
      %v2502 = vor.u32 %v2500, %v2501
      %v2503 = vsub.s32 4294967266, %v2498
      %v2504 = vadd.s32 %v2503, 127
      %v2505 = vshll.u32 %v2504, 23
      %v2506 = vor.u32 4788187, %v2505
      %v2507 = vand.u32 2147483647, %v2506
      %v2509 = vcvt.s32.f32 %v2502
      %v2510 = vmul.f32 %v2509, %v2507
      %v2511 = vxor.u32 %v2510, 2147483648
      %v2512 = vsel %vm2429, %v2511, %v2510
      %v2513 = vsub.s32 4, %v2489
      %v2514 = vsel %vm2429, %v2513, %v2489
      %v2515 = vsel %vm2428, %v565, %v2512
      %v2516 = vsel %vm2428, 0, %v2514
      %v2517 = vcosq.f32.pop %v2515
      %v2518 = vsinq.f32.pop %v2515
      %vm2519 = vweird.f32 %v565
      %v2520 = vand.u32 %v2516, 3
      %vm2521 = vcmp.lt.s32.totalorder %v2520, 2
      %vm2522 = vcmp.eq.s32.totalorder %v2520, 0
      %v2523 = vxor.u32 %v2518, 2147483648
      %v2524 = vsel %vm2522, %v2517, %v2523
      %vm2525 = vcmp.eq.s32.totalorder %v2520, 2
      %v2526 = vxor.u32 %v2517, 2147483648
      %v2527 = vsel %vm2525, %v2526, %v2518
      %v2528 = vsel %vm2521, %v2524, %v2527
      %v2529 = vsel %vm2519, nan, %v2528
      %v2530 = vand.u32 2147483647, %v566
      %vm2531 = vcmp.le.f32.partialorder %v2530, 0.7853982
      %vm2532 = vcmp.lt.s32.totalorder %v566, 0
      %v2533 = vand.u32 %v566, 2139095040
      %v2534 = vshrl.u32 %v2533, 23
      %v2535 = vsub.s32 %v2534, 127
      %v2536 = vand.u32 2147483647, %v566
      %v2537 = vand.u32 %v2536, 8388607
      %v2538 = vor.u32 %v2537, 8388608
      %v2539 = vsub.s32 0, %v2538
      %v2540 = vadd.s32 %v2535, 1
      %vm2541 = vcmp.gt.s32.totalorder %v2540, 0
      %v2542 = vsel %vm2541, %v2540, 0
      %v2543 = vshrl.u32 %v2542, 5
      %v2544 = vand.u32 %v2542, 31
      %v2545 = vsub.s32 32, %v2544
      %v2546 = vshrl.u32 683565275, %v2545
      %v2547 = vshll.u32 683565275, %v2544
      %v2548 = vshrl.u32 2475754826, %v2545
      %v2549 = vor.u32 %v2547, %v2548
      %v2550 = vshll.u32 2475754826, %v2544
      %v2551 = vshrl.u32 2131351028, %v2545
      %v2552 = vor.u32 %v2550, %v2551
      %v2553 = vshll.u32 2131351028, %v2544
      %v2554 = vshrl.u32 2102212464, %v2545
      %v2555 = vor.u32 %v2553, %v2554
      %v2556 = vshll.u32 2102212464, %v2544
      %v2557 = vshrl.u32 920167782, %v2545
      %v2558 = vor.u32 %v2556, %v2557
      %v2559 = vshll.u32 920167782, %v2544
      %v2560 = vshrl.u32 1326507024, %v2545
      %v2561 = vor.u32 %v2559, %v2560
      %vm2562 = vcmp.lt.s32.totalorder %v2543, 1
      %vm2563 = vcmp.lt.s32.totalorder %v2543, 2
      %vm2564 = vcmp.lt.s32.totalorder %v2543, 3
      %vm2565 = vcmp.lt.s32.totalorder %v2543, 4
      %v2566 = vsel %vm2562, %v2546, %v2549
      %v2567 = vsel %vm2565, %v2555, 2102212464
      %v2568 = vsel %vm2564, %v2552, %v2567
      %v2569 = vsel %vm2563, %v2566, %v2568
      %v2570 = vsel %vm2562, %v2549, %v2552
      %v2571 = vsel %vm2565, %v2558, 920167782
      %v2572 = vsel %vm2564, %v2555, %v2571
      %v2573 = vsel %vm2563, %v2570, %v2572
      %v2574 = vsel %vm2562, %v2552, %v2555
      %v2575 = vsel %vm2565, %v2561, 1326507024
      %v2576 = vsel %vm2564, %v2558, %v2575
      %v2577 = vsel %vm2563, %v2574, %v2576
      %v2578 = vshll.u32 %v2538, 8
      %v2579 = vmul.u32.u64.compose %v2578, %v2577
      %v2580 = vextract.low.u32 %v2579
      %v2581 = vextract.high.u32 %v2579
      %v2582 = vmul.u32.u64.compose %v2578, %v2573
      %v2583 = vextract.low.u32 %v2582
      %v2584 = vextract.high.u32 %v2582
      %v2585 = vmul.u32 %v2578, %v2569
      %v2586 = vadd.s32 %v2581, %v2583
      %vm2587 = vc.u32 %v2581, %v2583
      %v2588 = vadd.s32 %v2584, 1
      %v2589 = vsel %vm2587, %v2588, %v2584
      %v2590 = vadd.s32 %v2585, %v2589
      %v2591 = vadd.s32 %v2590, 536870912
      %v2592 = vshrl.u32 %v2591, 30
      %v2593 = vshll.u32 %v2592, 30
      %v2594 = vsub.s32 %v2590, %v2593
      %vm2595 = vcmp.lt.s32.totalorder %v2594, 0
      %v2596 = vsub.s32 0, %v2594
      %v2597 = vsel %vm2595, %v2596, %v2594
      %v2598 = vclz %v2597
      %v2599 = vsub.s32 %v2598, 2
      %vm2600 = vcmp.gt.s32.totalorder 0, %v2599
      %v2601 = vsel %vm2600, 0, %v2599
      %v2602 = vsub.s32 32, %v2601
      %v2603 = vshll.u32 %v2594, %v2601
      %v2604 = vshrl.u32 %v2586, %v2602
      %v2605 = vor.u32 %v2603, %v2604
      %v2606 = vsub.s32 4294967266, %v2601
      %v2607 = vadd.s32 %v2606, 127
      %v2608 = vshll.u32 %v2607, 23
      %v2609 = vor.u32 4788187, %v2608
      %v2610 = vand.u32 2147483647, %v2609
      %v2612 = vcvt.s32.f32 %v2605
      %v2613 = vmul.f32 %v2612, %v2610
      %v2614 = vxor.u32 %v2613, 2147483648
      %v2615 = vsel %vm2532, %v2614, %v2613
      %v2616 = vsub.s32 4, %v2592
      %v2617 = vsel %vm2532, %v2616, %v2592
      %v2618 = vsel %vm2531, %v566, %v2615
      %v2619 = vsel %vm2531, 0, %v2617
      %v2620 = vcosq.f32.pop %v2618
      %v2621 = vsinq.f32.pop %v2618
      %vm2622 = vweird.f32 %v566
      %v2623 = vand.u32 %v2619, 3
      %vm2624 = vcmp.lt.s32.totalorder %v2623, 2
      %vm2625 = vcmp.eq.s32.totalorder %v2623, 0
      %v2626 = vxor.u32 %v2621, 2147483648
      %v2627 = vsel %vm2625, %v2620, %v2626
      %vm2628 = vcmp.eq.s32.totalorder %v2623, 2
      %v2629 = vxor.u32 %v2620, 2147483648
      %v2630 = vsel %vm2628, %v2629, %v2621
      %v2631 = vsel %vm2624, %v2627, %v2630
      %v2632 = vsel %vm2622, nan, %v2631
      %v2633 = vand.u32 2147483647, %v567
      %vm2634 = vcmp.le.f32.partialorder %v2633, 0.7853982
      %vm2635 = vcmp.lt.s32.totalorder %v567, 0
      %v2636 = vand.u32 %v567, 2139095040
      %v2637 = vshrl.u32 %v2636, 23
      %v2638 = vsub.s32 %v2637, 127
      %v2639 = vand.u32 2147483647, %v567
      %v2640 = vand.u32 %v2639, 8388607
      %v2641 = vor.u32 %v2640, 8388608
      %v2642 = vsub.s32 0, %v2641
      %v2643 = vadd.s32 %v2638, 1
      %vm2644 = vcmp.gt.s32.totalorder %v2643, 0
      %v2645 = vsel %vm2644, %v2643, 0
      %v2646 = vshrl.u32 %v2645, 5
      %v2647 = vand.u32 %v2645, 31
      %v2648 = vsub.s32 32, %v2647
      %v2649 = vshrl.u32 683565275, %v2648
      %v2650 = vshll.u32 683565275, %v2647
      %v2651 = vshrl.u32 2475754826, %v2648
      %v2652 = vor.u32 %v2650, %v2651
      %v2653 = vshll.u32 2475754826, %v2647
      %v2654 = vshrl.u32 2131351028, %v2648
      %v2655 = vor.u32 %v2653, %v2654
      %v2656 = vshll.u32 2131351028, %v2647
      %v2657 = vshrl.u32 2102212464, %v2648
      %v2658 = vor.u32 %v2656, %v2657
      %v2659 = vshll.u32 2102212464, %v2647
      %v2660 = vshrl.u32 920167782, %v2648
      %v2661 = vor.u32 %v2659, %v2660
      %v2662 = vshll.u32 920167782, %v2647
      %v2663 = vshrl.u32 1326507024, %v2648
      %v2664 = vor.u32 %v2662, %v2663
      %vm2665 = vcmp.lt.s32.totalorder %v2646, 1
      %vm2666 = vcmp.lt.s32.totalorder %v2646, 2
      %vm2667 = vcmp.lt.s32.totalorder %v2646, 3
      %vm2668 = vcmp.lt.s32.totalorder %v2646, 4
      %v2669 = vsel %vm2665, %v2649, %v2652
      %v2670 = vsel %vm2668, %v2658, 2102212464
      %v2671 = vsel %vm2667, %v2655, %v2670
      %v2672 = vsel %vm2666, %v2669, %v2671
      %v2673 = vsel %vm2665, %v2652, %v2655
      %v2674 = vsel %vm2668, %v2661, 920167782
      %v2675 = vsel %vm2667, %v2658, %v2674
      %v2676 = vsel %vm2666, %v2673, %v2675
      %v2677 = vsel %vm2665, %v2655, %v2658
      %v2678 = vsel %vm2668, %v2664, 1326507024
      %v2679 = vsel %vm2667, %v2661, %v2678
      %v2680 = vsel %vm2666, %v2677, %v2679
      %v2681 = vshll.u32 %v2641, 8
      %v2682 = vmul.u32.u64.compose %v2681, %v2680
      %v2683 = vextract.low.u32 %v2682
      %v2684 = vextract.high.u32 %v2682
      %v2685 = vmul.u32.u64.compose %v2681, %v2676
      %v2686 = vextract.low.u32 %v2685
      %v2687 = vextract.high.u32 %v2685
      %v2688 = vmul.u32 %v2681, %v2672
      %v2689 = vadd.s32 %v2684, %v2686
      %vm2690 = vc.u32 %v2684, %v2686
      %v2691 = vadd.s32 %v2687, 1
      %v2692 = vsel %vm2690, %v2691, %v2687
      %v2693 = vadd.s32 %v2688, %v2692
      %v2694 = vadd.s32 %v2693, 536870912
      %v2695 = vshrl.u32 %v2694, 30
      %v2696 = vshll.u32 %v2695, 30
      %v2697 = vsub.s32 %v2693, %v2696
      %vm2698 = vcmp.lt.s32.totalorder %v2697, 0
      %v2699 = vsub.s32 0, %v2697
      %v2700 = vsel %vm2698, %v2699, %v2697
      %v2701 = vclz %v2700
      %v2702 = vsub.s32 %v2701, 2
      %vm2703 = vcmp.gt.s32.totalorder 0, %v2702
      %v2704 = vsel %vm2703, 0, %v2702
      %v2705 = vsub.s32 32, %v2704
      %v2706 = vshll.u32 %v2697, %v2704
      %v2707 = vshrl.u32 %v2689, %v2705
      %v2708 = vor.u32 %v2706, %v2707
      %v2709 = vsub.s32 4294967266, %v2704
      %v2710 = vadd.s32 %v2709, 127
      %v2711 = vshll.u32 %v2710, 23
      %v2712 = vor.u32 4788187, %v2711
      %v2713 = vand.u32 2147483647, %v2712
      %v2715 = vcvt.s32.f32 %v2708
      %v2716 = vmul.f32 %v2715, %v2713
      %v2717 = vxor.u32 %v2716, 2147483648
      %v2718 = vsel %vm2635, %v2717, %v2716
      %v2719 = vsub.s32 4, %v2695
      %v2720 = vsel %vm2635, %v2719, %v2695
      %v2721 = vsel %vm2634, %v567, %v2718
      %v2722 = vsel %vm2634, 0, %v2720
      %v2723 = vcosq.f32.pop %v2721
      %v2724 = vsinq.f32.pop %v2721
      %vm2725 = vweird.f32 %v567
      %v2726 = vand.u32 %v2722, 3
      %vm2727 = vcmp.lt.s32.totalorder %v2726, 2
      %vm2728 = vcmp.eq.s32.totalorder %v2726, 0
      %v2729 = vxor.u32 %v2724, 2147483648
      %v2730 = vsel %vm2728, %v2723, %v2729
      %vm2731 = vcmp.eq.s32.totalorder %v2726, 2
      %v2732 = vxor.u32 %v2723, 2147483648
      %v2733 = vsel %vm2731, %v2732, %v2724
      %v2734 = vsel %vm2727, %v2730, %v2733
      %v2735 = vsel %vm2725, nan, %v2734
      %v2736 = vand.u32 2147483647, %v568
      %vm2737 = vcmp.le.f32.partialorder %v2736, 0.7853982
      %vm2738 = vcmp.lt.s32.totalorder %v568, 0
      %v2739 = vand.u32 %v568, 2139095040
      %v2740 = vshrl.u32 %v2739, 23
      %v2741 = vsub.s32 %v2740, 127
      %v2742 = vand.u32 2147483647, %v568
      %v2743 = vand.u32 %v2742, 8388607
      %v2744 = vor.u32 %v2743, 8388608
      %v2745 = vsub.s32 0, %v2744
      %v2746 = vadd.s32 %v2741, 1
      %vm2747 = vcmp.gt.s32.totalorder %v2746, 0
      %v2748 = vsel %vm2747, %v2746, 0
      %v2749 = vshrl.u32 %v2748, 5
      %v2750 = vand.u32 %v2748, 31
      %v2751 = vsub.s32 32, %v2750
      %v2752 = vshrl.u32 683565275, %v2751
      %v2753 = vshll.u32 683565275, %v2750
      %v2754 = vshrl.u32 2475754826, %v2751
      %v2755 = vor.u32 %v2753, %v2754
      %v2756 = vshll.u32 2475754826, %v2750
      %v2757 = vshrl.u32 2131351028, %v2751
      %v2758 = vor.u32 %v2756, %v2757
      %v2759 = vshll.u32 2131351028, %v2750
      %v2760 = vshrl.u32 2102212464, %v2751
      %v2761 = vor.u32 %v2759, %v2760
      %v2762 = vshll.u32 2102212464, %v2750
      %v2763 = vshrl.u32 920167782, %v2751
      %v2764 = vor.u32 %v2762, %v2763
      %v2765 = vshll.u32 920167782, %v2750
      %v2766 = vshrl.u32 1326507024, %v2751
      %v2767 = vor.u32 %v2765, %v2766
      %vm2768 = vcmp.lt.s32.totalorder %v2749, 1
      %vm2769 = vcmp.lt.s32.totalorder %v2749, 2
      %vm2770 = vcmp.lt.s32.totalorder %v2749, 3
      %vm2771 = vcmp.lt.s32.totalorder %v2749, 4
      %v2772 = vsel %vm2768, %v2752, %v2755
      %v2773 = vsel %vm2771, %v2761, 2102212464
      %v2774 = vsel %vm2770, %v2758, %v2773
      %v2775 = vsel %vm2769, %v2772, %v2774
      %v2776 = vsel %vm2768, %v2755, %v2758
      %v2777 = vsel %vm2771, %v2764, 920167782
      %v2778 = vsel %vm2770, %v2761, %v2777
      %v2779 = vsel %vm2769, %v2776, %v2778
      %v2780 = vsel %vm2768, %v2758, %v2761
      %v2781 = vsel %vm2771, %v2767, 1326507024
      %v2782 = vsel %vm2770, %v2764, %v2781
      %v2783 = vsel %vm2769, %v2780, %v2782
      %v2784 = vshll.u32 %v2744, 8
      %v2785 = vmul.u32.u64.compose %v2784, %v2783
      %v2786 = vextract.low.u32 %v2785
      %v2787 = vextract.high.u32 %v2785
      %v2788 = vmul.u32.u64.compose %v2784, %v2779
      %v2789 = vextract.low.u32 %v2788
      %v2790 = vextract.high.u32 %v2788
      %v2791 = vmul.u32 %v2784, %v2775
      %v2792 = vadd.s32 %v2787, %v2789
      %vm2793 = vc.u32 %v2787, %v2789
      %v2794 = vadd.s32 %v2790, 1
      %v2795 = vsel %vm2793, %v2794, %v2790
      %v2796 = vadd.s32 %v2791, %v2795
      %v2797 = vadd.s32 %v2796, 536870912
      %v2798 = vshrl.u32 %v2797, 30
      %v2799 = vshll.u32 %v2798, 30
      %v2800 = vsub.s32 %v2796, %v2799
      %vm2801 = vcmp.lt.s32.totalorder %v2800, 0
      %v2802 = vsub.s32 0, %v2800
      %v2803 = vsel %vm2801, %v2802, %v2800
      %v2804 = vclz %v2803
      %v2805 = vsub.s32 %v2804, 2
      %vm2806 = vcmp.gt.s32.totalorder 0, %v2805
      %v2807 = vsel %vm2806, 0, %v2805
      %v2808 = vsub.s32 32, %v2807
      %v2809 = vshll.u32 %v2800, %v2807
      %v2810 = vshrl.u32 %v2792, %v2808
      %v2811 = vor.u32 %v2809, %v2810
      %v2812 = vsub.s32 4294967266, %v2807
      %v2813 = vadd.s32 %v2812, 127
      %v2814 = vshll.u32 %v2813, 23
      %v2815 = vor.u32 4788187, %v2814
      %v2816 = vand.u32 2147483647, %v2815
      %v2818 = vcvt.s32.f32 %v2811
      %v2819 = vmul.f32 %v2818, %v2816
      %v2820 = vxor.u32 %v2819, 2147483648
      %v2821 = vsel %vm2738, %v2820, %v2819
      %v2822 = vsub.s32 4, %v2798
      %v2823 = vsel %vm2738, %v2822, %v2798
      %v2824 = vsel %vm2737, %v568, %v2821
      %v2825 = vsel %vm2737, 0, %v2823
      %v2826 = vcosq.f32.pop %v2824
      %v2827 = vsinq.f32.pop %v2824
      %vm2828 = vweird.f32 %v568
      %v2829 = vand.u32 %v2825, 3
      %vm2830 = vcmp.lt.s32.totalorder %v2829, 2
      %vm2831 = vcmp.eq.s32.totalorder %v2829, 0
      %v2832 = vxor.u32 %v2827, 2147483648
      %v2833 = vsel %vm2831, %v2826, %v2832
      %vm2834 = vcmp.eq.s32.totalorder %v2829, 2
      %v2835 = vxor.u32 %v2826, 2147483648
      %v2836 = vsel %vm2834, %v2835, %v2827
      %v2837 = vsel %vm2830, %v2833, %v2836
      %v2838 = vsel %vm2828, nan, %v2837
      %v2839 = vand.u32 2147483647, %v569
      %vm2840 = vcmp.le.f32.partialorder %v2839, 0.7853982
      %vm2841 = vcmp.lt.s32.totalorder %v569, 0
      %v2842 = vand.u32 %v569, 2139095040
      %v2843 = vshrl.u32 %v2842, 23
      %v2844 = vsub.s32 %v2843, 127
      %v2845 = vand.u32 2147483647, %v569
      %v2846 = vand.u32 %v2845, 8388607
      %v2847 = vor.u32 %v2846, 8388608
      %v2848 = vsub.s32 0, %v2847
      %v2849 = vadd.s32 %v2844, 1
      %vm2850 = vcmp.gt.s32.totalorder %v2849, 0
      %v2851 = vsel %vm2850, %v2849, 0
      %v2852 = vshrl.u32 %v2851, 5
      %v2853 = vand.u32 %v2851, 31
      %v2854 = vsub.s32 32, %v2853
      %v2855 = vshrl.u32 683565275, %v2854
      %v2856 = vshll.u32 683565275, %v2853
      %v2857 = vshrl.u32 2475754826, %v2854
      %v2858 = vor.u32 %v2856, %v2857
      %v2859 = vshll.u32 2475754826, %v2853
      %v2860 = vshrl.u32 2131351028, %v2854
      %v2861 = vor.u32 %v2859, %v2860
      %v2862 = vshll.u32 2131351028, %v2853
      %v2863 = vshrl.u32 2102212464, %v2854
      %v2864 = vor.u32 %v2862, %v2863
      %v2865 = vshll.u32 2102212464, %v2853
      %v2866 = vshrl.u32 920167782, %v2854
      %v2867 = vor.u32 %v2865, %v2866
      %v2868 = vshll.u32 920167782, %v2853
      %v2869 = vshrl.u32 1326507024, %v2854
      %v2870 = vor.u32 %v2868, %v2869
      %vm2871 = vcmp.lt.s32.totalorder %v2852, 1
      %vm2872 = vcmp.lt.s32.totalorder %v2852, 2
      %vm2873 = vcmp.lt.s32.totalorder %v2852, 3
      %vm2874 = vcmp.lt.s32.totalorder %v2852, 4
      %v2875 = vsel %vm2871, %v2855, %v2858
      %v2876 = vsel %vm2874, %v2864, 2102212464
      %v2877 = vsel %vm2873, %v2861, %v2876
      %v2878 = vsel %vm2872, %v2875, %v2877
      %v2879 = vsel %vm2871, %v2858, %v2861
      %v2880 = vsel %vm2874, %v2867, 920167782
      %v2881 = vsel %vm2873, %v2864, %v2880
      %v2882 = vsel %vm2872, %v2879, %v2881
      %v2883 = vsel %vm2871, %v2861, %v2864
      %v2884 = vsel %vm2874, %v2870, 1326507024
      %v2885 = vsel %vm2873, %v2867, %v2884
      %v2886 = vsel %vm2872, %v2883, %v2885
      %v2887 = vshll.u32 %v2847, 8
      %v2888 = vmul.u32.u64.compose %v2887, %v2886
      %v2889 = vextract.low.u32 %v2888
      %v2890 = vextract.high.u32 %v2888
      %v2891 = vmul.u32.u64.compose %v2887, %v2882
      %v2892 = vextract.low.u32 %v2891
      %v2893 = vextract.high.u32 %v2891
      %v2894 = vmul.u32 %v2887, %v2878
      %v2895 = vadd.s32 %v2890, %v2892
      %vm2896 = vc.u32 %v2890, %v2892
      %v2897 = vadd.s32 %v2893, 1
      %v2898 = vsel %vm2896, %v2897, %v2893
      %v2899 = vadd.s32 %v2894, %v2898
      %v2900 = vadd.s32 %v2899, 536870912
      %v2901 = vshrl.u32 %v2900, 30
      %v2902 = vshll.u32 %v2901, 30
      %v2903 = vsub.s32 %v2899, %v2902
      %vm2904 = vcmp.lt.s32.totalorder %v2903, 0
      %v2905 = vsub.s32 0, %v2903
      %v2906 = vsel %vm2904, %v2905, %v2903
      %v2907 = vclz %v2906
      %v2908 = vsub.s32 %v2907, 2
      %vm2909 = vcmp.gt.s32.totalorder 0, %v2908
      %v2910 = vsel %vm2909, 0, %v2908
      %v2911 = vsub.s32 32, %v2910
      %v2912 = vshll.u32 %v2903, %v2910
      %v2913 = vshrl.u32 %v2895, %v2911
      %v2914 = vor.u32 %v2912, %v2913
      %v2915 = vsub.s32 4294967266, %v2910
      %v2916 = vadd.s32 %v2915, 127
      %v2917 = vshll.u32 %v2916, 23
      %v2918 = vor.u32 4788187, %v2917
      %v2919 = vand.u32 2147483647, %v2918
      %v2921 = vcvt.s32.f32 %v2914
      %v2922 = vmul.f32 %v2921, %v2919
      %v2923 = vxor.u32 %v2922, 2147483648
      %v2924 = vsel %vm2841, %v2923, %v2922
      %v2925 = vsub.s32 4, %v2901
      %v2926 = vsel %vm2841, %v2925, %v2901
      %v2927 = vsel %vm2840, %v569, %v2924
      %v2928 = vsel %vm2840, 0, %v2926
      %v2929 = vcosq.f32.pop %v2927
      %v2930 = vsinq.f32.pop %v2927
      %vm2931 = vweird.f32 %v569
      %v2932 = vand.u32 %v2928, 3
      %vm2933 = vcmp.lt.s32.totalorder %v2932, 2
      %vm2934 = vcmp.eq.s32.totalorder %v2932, 0
      %v2935 = vxor.u32 %v2930, 2147483648
      %v2936 = vsel %vm2934, %v2929, %v2935
      %vm2937 = vcmp.eq.s32.totalorder %v2932, 2
      %v2938 = vxor.u32 %v2929, 2147483648
      %v2939 = vsel %vm2937, %v2938, %v2930
      %v2940 = vsel %vm2933, %v2936, %v2939
      %v2941 = vsel %vm2931, nan, %v2940
      %v2942 = vand.u32 2147483647, %v570
      %vm2943 = vcmp.le.f32.partialorder %v2942, 0.7853982
      %vm2944 = vcmp.lt.s32.totalorder %v570, 0
      %v2945 = vand.u32 %v570, 2139095040
      %v2946 = vshrl.u32 %v2945, 23
      %v2947 = vsub.s32 %v2946, 127
      %v2948 = vand.u32 2147483647, %v570
      %v2949 = vand.u32 %v2948, 8388607
      %v2950 = vor.u32 %v2949, 8388608
      %v2951 = vsub.s32 0, %v2950
      %v2952 = vadd.s32 %v2947, 1
      %vm2953 = vcmp.gt.s32.totalorder %v2952, 0
      %v2954 = vsel %vm2953, %v2952, 0
      %v2955 = vshrl.u32 %v2954, 5
      %v2956 = vand.u32 %v2954, 31
      %v2957 = vsub.s32 32, %v2956
      %v2958 = vshrl.u32 683565275, %v2957
      %v2959 = vshll.u32 683565275, %v2956
      %v2960 = vshrl.u32 2475754826, %v2957
      %v2961 = vor.u32 %v2959, %v2960
      %v2962 = vshll.u32 2475754826, %v2956
      %v2963 = vshrl.u32 2131351028, %v2957
      %v2964 = vor.u32 %v2962, %v2963
      %v2965 = vshll.u32 2131351028, %v2956
      %v2966 = vshrl.u32 2102212464, %v2957
      %v2967 = vor.u32 %v2965, %v2966
      %v2968 = vshll.u32 2102212464, %v2956
      %v2969 = vshrl.u32 920167782, %v2957
      %v2970 = vor.u32 %v2968, %v2969
      %v2971 = vshll.u32 920167782, %v2956
      %v2972 = vshrl.u32 1326507024, %v2957
      %v2973 = vor.u32 %v2971, %v2972
      %vm2974 = vcmp.lt.s32.totalorder %v2955, 1
      %vm2975 = vcmp.lt.s32.totalorder %v2955, 2
      %vm2976 = vcmp.lt.s32.totalorder %v2955, 3
      %vm2977 = vcmp.lt.s32.totalorder %v2955, 4
      %v2978 = vsel %vm2974, %v2958, %v2961
      %v2979 = vsel %vm2977, %v2967, 2102212464
      %v2980 = vsel %vm2976, %v2964, %v2979
      %v2981 = vsel %vm2975, %v2978, %v2980
      %v2982 = vsel %vm2974, %v2961, %v2964
      %v2983 = vsel %vm2977, %v2970, 920167782
      %v2984 = vsel %vm2976, %v2967, %v2983
      %v2985 = vsel %vm2975, %v2982, %v2984
      %v2986 = vsel %vm2974, %v2964, %v2967
      %v2987 = vsel %vm2977, %v2973, 1326507024
      %v2988 = vsel %vm2976, %v2970, %v2987
      %v2989 = vsel %vm2975, %v2986, %v2988
      %v2990 = vshll.u32 %v2950, 8
      %v2991 = vmul.u32.u64.compose %v2990, %v2989
      %v2992 = vextract.low.u32 %v2991
      %v2993 = vextract.high.u32 %v2991
      %v2994 = vmul.u32.u64.compose %v2990, %v2985
      %v2995 = vextract.low.u32 %v2994
      %v2996 = vextract.high.u32 %v2994
      %v2997 = vmul.u32 %v2990, %v2981
      %v2998 = vadd.s32 %v2993, %v2995
      %vm2999 = vc.u32 %v2993, %v2995
      %v3000 = vadd.s32 %v2996, 1
      %v3001 = vsel %vm2999, %v3000, %v2996
      %v3002 = vadd.s32 %v2997, %v3001
      %v3003 = vadd.s32 %v3002, 536870912
      %v3004 = vshrl.u32 %v3003, 30
      %v3005 = vshll.u32 %v3004, 30
      %v3006 = vsub.s32 %v3002, %v3005
      %vm3007 = vcmp.lt.s32.totalorder %v3006, 0
      %v3008 = vsub.s32 0, %v3006
      %v3009 = vsel %vm3007, %v3008, %v3006
      %v3010 = vclz %v3009
      %v3011 = vsub.s32 %v3010, 2
      %vm3012 = vcmp.gt.s32.totalorder 0, %v3011
      %v3013 = vsel %vm3012, 0, %v3011
      %v3014 = vsub.s32 32, %v3013
      %v3015 = vshll.u32 %v3006, %v3013
      %v3016 = vshrl.u32 %v2998, %v3014
      %v3017 = vor.u32 %v3015, %v3016
      %v3018 = vsub.s32 4294967266, %v3013
      %v3019 = vadd.s32 %v3018, 127
      %v3020 = vshll.u32 %v3019, 23
      %v3021 = vor.u32 4788187, %v3020
      %v3022 = vand.u32 2147483647, %v3021
      %v3024 = vcvt.s32.f32 %v3017
      %v3025 = vmul.f32 %v3024, %v3022
      %v3026 = vxor.u32 %v3025, 2147483648
      %v3027 = vsel %vm2944, %v3026, %v3025
      %v3028 = vsub.s32 4, %v3004
      %v3029 = vsel %vm2944, %v3028, %v3004
      %v3030 = vsel %vm2943, %v570, %v3027
      %v3031 = vsel %vm2943, 0, %v3029
      %v3032 = vcosq.f32.pop %v3030
      %v3033 = vsinq.f32.pop %v3030
      %vm3034 = vweird.f32 %v570
      %v3035 = vand.u32 %v3031, 3
      %vm3036 = vcmp.lt.s32.totalorder %v3035, 2
      %vm3037 = vcmp.eq.s32.totalorder %v3035, 0
      %v3038 = vxor.u32 %v3033, 2147483648
      %v3039 = vsel %vm3037, %v3032, %v3038
      %vm3040 = vcmp.eq.s32.totalorder %v3035, 2
      %v3041 = vxor.u32 %v3032, 2147483648
      %v3042 = vsel %vm3040, %v3041, %v3033
      %v3043 = vsel %vm3036, %v3039, %v3042
      %v3044 = vsel %vm3034, nan, %v3043
      %v3045 = vand.u32 2147483647, %v571
      %vm3046 = vcmp.le.f32.partialorder %v3045, 0.7853982
      %vm3047 = vcmp.lt.s32.totalorder %v571, 0
      %v3048 = vand.u32 %v571, 2139095040
      %v3049 = vshrl.u32 %v3048, 23
      %v3050 = vsub.s32 %v3049, 127
      %v3051 = vand.u32 2147483647, %v571
      %v3052 = vand.u32 %v3051, 8388607
      %v3053 = vor.u32 %v3052, 8388608
      %v3054 = vsub.s32 0, %v3053
      %v3055 = vadd.s32 %v3050, 1
      %vm3056 = vcmp.gt.s32.totalorder %v3055, 0
      %v3057 = vsel %vm3056, %v3055, 0
      %v3058 = vshrl.u32 %v3057, 5
      %v3059 = vand.u32 %v3057, 31
      %v3060 = vsub.s32 32, %v3059
      %v3061 = vshrl.u32 683565275, %v3060
      %v3062 = vshll.u32 683565275, %v3059
      %v3063 = vshrl.u32 2475754826, %v3060
      %v3064 = vor.u32 %v3062, %v3063
      %v3065 = vshll.u32 2475754826, %v3059
      %v3066 = vshrl.u32 2131351028, %v3060
      %v3067 = vor.u32 %v3065, %v3066
      %v3068 = vshll.u32 2131351028, %v3059
      %v3069 = vshrl.u32 2102212464, %v3060
      %v3070 = vor.u32 %v3068, %v3069
      %v3071 = vshll.u32 2102212464, %v3059
      %v3072 = vshrl.u32 920167782, %v3060
      %v3073 = vor.u32 %v3071, %v3072
      %v3074 = vshll.u32 920167782, %v3059
      %v3075 = vshrl.u32 1326507024, %v3060
      %v3076 = vor.u32 %v3074, %v3075
      %vm3077 = vcmp.lt.s32.totalorder %v3058, 1
      %vm3078 = vcmp.lt.s32.totalorder %v3058, 2
      %vm3079 = vcmp.lt.s32.totalorder %v3058, 3
      %vm3080 = vcmp.lt.s32.totalorder %v3058, 4
      %v3081 = vsel %vm3077, %v3061, %v3064
      %v3082 = vsel %vm3080, %v3070, 2102212464
      %v3083 = vsel %vm3079, %v3067, %v3082
      %v3084 = vsel %vm3078, %v3081, %v3083
      %v3085 = vsel %vm3077, %v3064, %v3067
      %v3086 = vsel %vm3080, %v3073, 920167782
      %v3087 = vsel %vm3079, %v3070, %v3086
      %v3088 = vsel %vm3078, %v3085, %v3087
      %v3089 = vsel %vm3077, %v3067, %v3070
      %v3090 = vsel %vm3080, %v3076, 1326507024
      %v3091 = vsel %vm3079, %v3073, %v3090
      %v3092 = vsel %vm3078, %v3089, %v3091
      %v3093 = vshll.u32 %v3053, 8
      %v3094 = vmul.u32.u64.compose %v3093, %v3092
      %v3095 = vextract.low.u32 %v3094
      %v3096 = vextract.high.u32 %v3094
      %v3097 = vmul.u32.u64.compose %v3093, %v3088
      %v3098 = vextract.low.u32 %v3097
      %v3099 = vextract.high.u32 %v3097
      %v3100 = vmul.u32 %v3093, %v3084
      %v3101 = vadd.s32 %v3096, %v3098
      %vm3102 = vc.u32 %v3096, %v3098
      %v3103 = vadd.s32 %v3099, 1
      %v3104 = vsel %vm3102, %v3103, %v3099
      %v3105 = vadd.s32 %v3100, %v3104
      %v3106 = vadd.s32 %v3105, 536870912
      %v3107 = vshrl.u32 %v3106, 30
      %v3108 = vshll.u32 %v3107, 30
      %v3109 = vsub.s32 %v3105, %v3108
      %vm3110 = vcmp.lt.s32.totalorder %v3109, 0
      %v3111 = vsub.s32 0, %v3109
      %v3112 = vsel %vm3110, %v3111, %v3109
      %v3113 = vclz %v3112
      %v3114 = vsub.s32 %v3113, 2
      %vm3115 = vcmp.gt.s32.totalorder 0, %v3114
      %v3116 = vsel %vm3115, 0, %v3114
      %v3117 = vsub.s32 32, %v3116
      %v3118 = vshll.u32 %v3109, %v3116
      %v3119 = vshrl.u32 %v3101, %v3117
      %v3120 = vor.u32 %v3118, %v3119
      %v3121 = vsub.s32 4294967266, %v3116
      %v3122 = vadd.s32 %v3121, 127
      %v3123 = vshll.u32 %v3122, 23
      %v3124 = vor.u32 4788187, %v3123
      %v3125 = vand.u32 2147483647, %v3124
      %v3127 = vcvt.s32.f32 %v3120
      %v3128 = vmul.f32 %v3127, %v3125
      %v3129 = vxor.u32 %v3128, 2147483648
      %v3130 = vsel %vm3047, %v3129, %v3128
      %v3131 = vsub.s32 4, %v3107
      %v3132 = vsel %vm3047, %v3131, %v3107
      %v3133 = vsel %vm3046, %v571, %v3130
      %v3134 = vsel %vm3046, 0, %v3132
      %v3135 = vcosq.f32.pop %v3133
      %v3136 = vsinq.f32.pop %v3133
      %vm3137 = vweird.f32 %v571
      %v3138 = vand.u32 %v3134, 3
      %vm3139 = vcmp.lt.s32.totalorder %v3138, 2
      %vm3140 = vcmp.eq.s32.totalorder %v3138, 0
      %v3141 = vxor.u32 %v3136, 2147483648
      %v3142 = vsel %vm3140, %v3135, %v3141
      %vm3143 = vcmp.eq.s32.totalorder %v3138, 2
      %v3144 = vxor.u32 %v3135, 2147483648
      %v3145 = vsel %vm3143, %v3144, %v3136
      %v3146 = vsel %vm3139, %v3142, %v3145
      %v3147 = vsel %vm3137, nan, %v3146
      %v3148 = vand.u32 2147483647, %v572
      %vm3149 = vcmp.le.f32.partialorder %v3148, 0.7853982
      %vm3150 = vcmp.lt.s32.totalorder %v572, 0
      %v3151 = vand.u32 %v572, 2139095040
      %v3152 = vshrl.u32 %v3151, 23
      %v3153 = vsub.s32 %v3152, 127
      %v3154 = vand.u32 2147483647, %v572
      %v3155 = vand.u32 %v3154, 8388607
      %v3156 = vor.u32 %v3155, 8388608
      %v3157 = vsub.s32 0, %v3156
      %v3158 = vadd.s32 %v3153, 1
      %vm3159 = vcmp.gt.s32.totalorder %v3158, 0
      %v3160 = vsel %vm3159, %v3158, 0
      %v3161 = vshrl.u32 %v3160, 5
      %v3162 = vand.u32 %v3160, 31
      %v3163 = vsub.s32 32, %v3162
      %v3164 = vshrl.u32 683565275, %v3163
      %v3165 = vshll.u32 683565275, %v3162
      %v3166 = vshrl.u32 2475754826, %v3163
      %v3167 = vor.u32 %v3165, %v3166
      %v3168 = vshll.u32 2475754826, %v3162
      %v3169 = vshrl.u32 2131351028, %v3163
      %v3170 = vor.u32 %v3168, %v3169
      %v3171 = vshll.u32 2131351028, %v3162
      %v3172 = vshrl.u32 2102212464, %v3163
      %v3173 = vor.u32 %v3171, %v3172
      %v3174 = vshll.u32 2102212464, %v3162
      %v3175 = vshrl.u32 920167782, %v3163
      %v3176 = vor.u32 %v3174, %v3175
      %v3177 = vshll.u32 920167782, %v3162
      %v3178 = vshrl.u32 1326507024, %v3163
      %v3179 = vor.u32 %v3177, %v3178
      %vm3180 = vcmp.lt.s32.totalorder %v3161, 1
      %vm3181 = vcmp.lt.s32.totalorder %v3161, 2
      %vm3182 = vcmp.lt.s32.totalorder %v3161, 3
      %vm3183 = vcmp.lt.s32.totalorder %v3161, 4
      %v3184 = vsel %vm3180, %v3164, %v3167
      %v3185 = vsel %vm3183, %v3173, 2102212464
      %v3186 = vsel %vm3182, %v3170, %v3185
      %v3187 = vsel %vm3181, %v3184, %v3186
      %v3188 = vsel %vm3180, %v3167, %v3170
      %v3189 = vsel %vm3183, %v3176, 920167782
      %v3190 = vsel %vm3182, %v3173, %v3189
      %v3191 = vsel %vm3181, %v3188, %v3190
      %v3192 = vsel %vm3180, %v3170, %v3173
      %v3193 = vsel %vm3183, %v3179, 1326507024
      %v3194 = vsel %vm3182, %v3176, %v3193
      %v3195 = vsel %vm3181, %v3192, %v3194
      %v3196 = vshll.u32 %v3156, 8
      %v3197 = vmul.u32.u64.compose %v3196, %v3195
      %v3198 = vextract.low.u32 %v3197
      %v3199 = vextract.high.u32 %v3197
      %v3200 = vmul.u32.u64.compose %v3196, %v3191
      %v3201 = vextract.low.u32 %v3200
      %v3202 = vextract.high.u32 %v3200
      %v3203 = vmul.u32 %v3196, %v3187
      %v3204 = vadd.s32 %v3199, %v3201
      %vm3205 = vc.u32 %v3199, %v3201
      %v3206 = vadd.s32 %v3202, 1
      %v3207 = vsel %vm3205, %v3206, %v3202
      %v3208 = vadd.s32 %v3203, %v3207
      %v3209 = vadd.s32 %v3208, 536870912
      %v3210 = vshrl.u32 %v3209, 30
      %v3211 = vshll.u32 %v3210, 30
      %v3212 = vsub.s32 %v3208, %v3211
      %vm3213 = vcmp.lt.s32.totalorder %v3212, 0
      %v3214 = vsub.s32 0, %v3212
      %v3215 = vsel %vm3213, %v3214, %v3212
      %v3216 = vclz %v3215
      %v3217 = vsub.s32 %v3216, 2
      %vm3218 = vcmp.gt.s32.totalorder 0, %v3217
      %v3219 = vsel %vm3218, 0, %v3217
      %v3220 = vsub.s32 32, %v3219
      %v3221 = vshll.u32 %v3212, %v3219
      %v3222 = vshrl.u32 %v3204, %v3220
      %v3223 = vor.u32 %v3221, %v3222
      %v3224 = vsub.s32 4294967266, %v3219
      %v3225 = vadd.s32 %v3224, 127
      %v3226 = vshll.u32 %v3225, 23
      %v3227 = vor.u32 4788187, %v3226
      %v3228 = vand.u32 2147483647, %v3227
      %v3230 = vcvt.s32.f32 %v3223
      %v3231 = vmul.f32 %v3230, %v3228
      %v3232 = vxor.u32 %v3231, 2147483648
      %v3233 = vsel %vm3150, %v3232, %v3231
      %v3234 = vsub.s32 4, %v3210
      %v3235 = vsel %vm3150, %v3234, %v3210
      %v3236 = vsel %vm3149, %v572, %v3233
      %v3237 = vsel %vm3149, 0, %v3235
      %v3238 = vcosq.f32.pop %v3236
      %v3239 = vsinq.f32.pop %v3236
      %vm3240 = vweird.f32 %v572
      %v3241 = vand.u32 %v3237, 3
      %vm3242 = vcmp.lt.s32.totalorder %v3241, 2
      %vm3243 = vcmp.eq.s32.totalorder %v3241, 0
      %v3244 = vxor.u32 %v3239, 2147483648
      %v3245 = vsel %vm3243, %v3238, %v3244
      %vm3246 = vcmp.eq.s32.totalorder %v3241, 2
      %v3247 = vxor.u32 %v3238, 2147483648
      %v3248 = vsel %vm3246, %v3247, %v3239
      %v3249 = vsel %vm3242, %v3245, %v3248
      %v3250 = vsel %vm3240, nan, %v3249
      %v3251 = vand.u32 2147483647, %v573
      %vm3252 = vcmp.le.f32.partialorder %v3251, 0.7853982
      %vm3253 = vcmp.lt.s32.totalorder %v573, 0
      %v3254 = vand.u32 %v573, 2139095040
      %v3255 = vshrl.u32 %v3254, 23
      %v3256 = vsub.s32 %v3255, 127
      %v3257 = vand.u32 2147483647, %v573
      %v3258 = vand.u32 %v3257, 8388607
      %v3259 = vor.u32 %v3258, 8388608
      %v3260 = vsub.s32 0, %v3259
      %v3261 = vadd.s32 %v3256, 1
      %vm3262 = vcmp.gt.s32.totalorder %v3261, 0
      %v3263 = vsel %vm3262, %v3261, 0
      %v3264 = vshrl.u32 %v3263, 5
      %v3265 = vand.u32 %v3263, 31
      %v3266 = vsub.s32 32, %v3265
      %v3267 = vshrl.u32 683565275, %v3266
      %v3268 = vshll.u32 683565275, %v3265
      %v3269 = vshrl.u32 2475754826, %v3266
      %v3270 = vor.u32 %v3268, %v3269
      %v3271 = vshll.u32 2475754826, %v3265
      %v3272 = vshrl.u32 2131351028, %v3266
      %v3273 = vor.u32 %v3271, %v3272
      %v3274 = vshll.u32 2131351028, %v3265
      %v3275 = vshrl.u32 2102212464, %v3266
      %v3276 = vor.u32 %v3274, %v3275
      %v3277 = vshll.u32 2102212464, %v3265
      %v3278 = vshrl.u32 920167782, %v3266
      %v3279 = vor.u32 %v3277, %v3278
      %v3280 = vshll.u32 920167782, %v3265
      %v3281 = vshrl.u32 1326507024, %v3266
      %v3282 = vor.u32 %v3280, %v3281
      %vm3283 = vcmp.lt.s32.totalorder %v3264, 1
      %vm3284 = vcmp.lt.s32.totalorder %v3264, 2
      %vm3285 = vcmp.lt.s32.totalorder %v3264, 3
      %vm3286 = vcmp.lt.s32.totalorder %v3264, 4
      %v3287 = vsel %vm3283, %v3267, %v3270
      %v3288 = vsel %vm3286, %v3276, 2102212464
      %v3289 = vsel %vm3285, %v3273, %v3288
      %v3290 = vsel %vm3284, %v3287, %v3289
      %v3291 = vsel %vm3283, %v3270, %v3273
      %v3292 = vsel %vm3286, %v3279, 920167782
      %v3293 = vsel %vm3285, %v3276, %v3292
      %v3294 = vsel %vm3284, %v3291, %v3293
      %v3295 = vsel %vm3283, %v3273, %v3276
      %v3296 = vsel %vm3286, %v3282, 1326507024
      %v3297 = vsel %vm3285, %v3279, %v3296
      %v3298 = vsel %vm3284, %v3295, %v3297
      %v3299 = vshll.u32 %v3259, 8
      %v3300 = vmul.u32.u64.compose %v3299, %v3298
      %v3301 = vextract.low.u32 %v3300
      %v3302 = vextract.high.u32 %v3300
      %v3303 = vmul.u32.u64.compose %v3299, %v3294
      %v3304 = vextract.low.u32 %v3303
      %v3305 = vextract.high.u32 %v3303
      %v3306 = vmul.u32 %v3299, %v3290
      %v3307 = vadd.s32 %v3302, %v3304
      %vm3308 = vc.u32 %v3302, %v3304
      %v3309 = vadd.s32 %v3305, 1
      %v3310 = vsel %vm3308, %v3309, %v3305
      %v3311 = vadd.s32 %v3306, %v3310
      %v3312 = vadd.s32 %v3311, 536870912
      %v3313 = vshrl.u32 %v3312, 30
      %v3314 = vshll.u32 %v3313, 30
      %v3315 = vsub.s32 %v3311, %v3314
      %vm3316 = vcmp.lt.s32.totalorder %v3315, 0
      %v3317 = vsub.s32 0, %v3315
      %v3318 = vsel %vm3316, %v3317, %v3315
      %v3319 = vclz %v3318
      %v3320 = vsub.s32 %v3319, 2
      %vm3321 = vcmp.gt.s32.totalorder 0, %v3320
      %v3322 = vsel %vm3321, 0, %v3320
      %v3323 = vsub.s32 32, %v3322
      %v3324 = vshll.u32 %v3315, %v3322
      %v3325 = vshrl.u32 %v3307, %v3323
      %v3326 = vor.u32 %v3324, %v3325
      %v3327 = vsub.s32 4294967266, %v3322
      %v3328 = vadd.s32 %v3327, 127
      %v3329 = vshll.u32 %v3328, 23
      %v3330 = vor.u32 4788187, %v3329
      %v3331 = vand.u32 2147483647, %v3330
      %v3333 = vcvt.s32.f32 %v3326
      %v3334 = vmul.f32 %v3333, %v3331
      %v3335 = vxor.u32 %v3334, 2147483648
      %v3336 = vsel %vm3253, %v3335, %v3334
      %v3337 = vsub.s32 4, %v3313
      %v3338 = vsel %vm3253, %v3337, %v3313
      %v3339 = vsel %vm3252, %v573, %v3336
      %v3340 = vsel %vm3252, 0, %v3338
      %v3341 = vcosq.f32.pop %v3339
      %v3342 = vsinq.f32.pop %v3339
      %vm3343 = vweird.f32 %v573
      %v3344 = vand.u32 %v3340, 3
      %vm3345 = vcmp.lt.s32.totalorder %v3344, 2
      %vm3346 = vcmp.eq.s32.totalorder %v3344, 0
      %v3347 = vxor.u32 %v3342, 2147483648
      %v3348 = vsel %vm3346, %v3341, %v3347
      %vm3349 = vcmp.eq.s32.totalorder %v3344, 2
      %v3350 = vxor.u32 %v3341, 2147483648
      %v3351 = vsel %vm3349, %v3350, %v3342
      %v3352 = vsel %vm3345, %v3348, %v3351
      %v3353 = vsel %vm3343, nan, %v3352
      %v3354 = vand.u32 2147483647, %v574
      %vm3355 = vcmp.le.f32.partialorder %v3354, 0.7853982
      %vm3356 = vcmp.lt.s32.totalorder %v574, 0
      %v3357 = vand.u32 %v574, 2139095040
      %v3358 = vshrl.u32 %v3357, 23
      %v3359 = vsub.s32 %v3358, 127
      %v3360 = vand.u32 2147483647, %v574
      %v3361 = vand.u32 %v3360, 8388607
      %v3362 = vor.u32 %v3361, 8388608
      %v3363 = vsub.s32 0, %v3362
      %v3364 = vadd.s32 %v3359, 1
      %vm3365 = vcmp.gt.s32.totalorder %v3364, 0
      %v3366 = vsel %vm3365, %v3364, 0
      %v3367 = vshrl.u32 %v3366, 5
      %v3368 = vand.u32 %v3366, 31
      %v3369 = vsub.s32 32, %v3368
      %v3370 = vshrl.u32 683565275, %v3369
      %v3371 = vshll.u32 683565275, %v3368
      %v3372 = vshrl.u32 2475754826, %v3369
      %v3373 = vor.u32 %v3371, %v3372
      %v3374 = vshll.u32 2475754826, %v3368
      %v3375 = vshrl.u32 2131351028, %v3369
      %v3376 = vor.u32 %v3374, %v3375
      %v3377 = vshll.u32 2131351028, %v3368
      %v3378 = vshrl.u32 2102212464, %v3369
      %v3379 = vor.u32 %v3377, %v3378
      %v3380 = vshll.u32 2102212464, %v3368
      %v3381 = vshrl.u32 920167782, %v3369
      %v3382 = vor.u32 %v3380, %v3381
      %v3383 = vshll.u32 920167782, %v3368
      %v3384 = vshrl.u32 1326507024, %v3369
      %v3385 = vor.u32 %v3383, %v3384
      %vm3386 = vcmp.lt.s32.totalorder %v3367, 1
      %vm3387 = vcmp.lt.s32.totalorder %v3367, 2
      %vm3388 = vcmp.lt.s32.totalorder %v3367, 3
      %vm3389 = vcmp.lt.s32.totalorder %v3367, 4
      %v3390 = vsel %vm3386, %v3370, %v3373
      %v3391 = vsel %vm3389, %v3379, 2102212464
      %v3392 = vsel %vm3388, %v3376, %v3391
      %v3393 = vsel %vm3387, %v3390, %v3392
      %v3394 = vsel %vm3386, %v3373, %v3376
      %v3395 = vsel %vm3389, %v3382, 920167782
      %v3396 = vsel %vm3388, %v3379, %v3395
      %v3397 = vsel %vm3387, %v3394, %v3396
      %v3398 = vsel %vm3386, %v3376, %v3379
      %v3399 = vsel %vm3389, %v3385, 1326507024
      %v3400 = vsel %vm3388, %v3382, %v3399
      %v3401 = vsel %vm3387, %v3398, %v3400
      %v3402 = vshll.u32 %v3362, 8
      %v3403 = vmul.u32.u64.compose %v3402, %v3401
      %v3404 = vextract.low.u32 %v3403
      %v3405 = vextract.high.u32 %v3403
      %v3406 = vmul.u32.u64.compose %v3402, %v3397
      %v3407 = vextract.low.u32 %v3406
      %v3408 = vextract.high.u32 %v3406
      %v3409 = vmul.u32 %v3402, %v3393
      %v3410 = vadd.s32 %v3405, %v3407
      %vm3411 = vc.u32 %v3405, %v3407
      %v3412 = vadd.s32 %v3408, 1
      %v3413 = vsel %vm3411, %v3412, %v3408
      %v3414 = vadd.s32 %v3409, %v3413
      %v3415 = vadd.s32 %v3414, 536870912
      %v3416 = vshrl.u32 %v3415, 30
      %v3417 = vshll.u32 %v3416, 30
      %v3418 = vsub.s32 %v3414, %v3417
      %vm3419 = vcmp.lt.s32.totalorder %v3418, 0
      %v3420 = vsub.s32 0, %v3418
      %v3421 = vsel %vm3419, %v3420, %v3418
      %v3422 = vclz %v3421
      %v3423 = vsub.s32 %v3422, 2
      %vm3424 = vcmp.gt.s32.totalorder 0, %v3423
      %v3425 = vsel %vm3424, 0, %v3423
      %v3426 = vsub.s32 32, %v3425
      %v3427 = vshll.u32 %v3418, %v3425
      %v3428 = vshrl.u32 %v3410, %v3426
      %v3429 = vor.u32 %v3427, %v3428
      %v3430 = vsub.s32 4294967266, %v3425
      %v3431 = vadd.s32 %v3430, 127
      %v3432 = vshll.u32 %v3431, 23
      %v3433 = vor.u32 4788187, %v3432
      %v3434 = vand.u32 2147483647, %v3433
      %v3436 = vcvt.s32.f32 %v3429
      %v3437 = vmul.f32 %v3436, %v3434
      %v3438 = vxor.u32 %v3437, 2147483648
      %v3439 = vsel %vm3356, %v3438, %v3437
      %v3440 = vsub.s32 4, %v3416
      %v3441 = vsel %vm3356, %v3440, %v3416
      %v3442 = vsel %vm3355, %v574, %v3439
      %v3443 = vsel %vm3355, 0, %v3441
      %v3444 = vcosq.f32.pop %v3442
      %v3445 = vsinq.f32.pop %v3442
      %vm3446 = vweird.f32 %v574
      %v3447 = vand.u32 %v3443, 3
      %vm3448 = vcmp.lt.s32.totalorder %v3447, 2
      %vm3449 = vcmp.eq.s32.totalorder %v3447, 0
      %v3450 = vxor.u32 %v3445, 2147483648
      %v3451 = vsel %vm3449, %v3444, %v3450
      %vm3452 = vcmp.eq.s32.totalorder %v3447, 2
      %v3453 = vxor.u32 %v3444, 2147483648
      %v3454 = vsel %vm3452, %v3453, %v3445
      %v3455 = vsel %vm3448, %v3451, %v3454
      %v3456 = vsel %vm3446, nan, %v3455
      %v3457 = vand.u32 2147483647, %v575
      %vm3458 = vcmp.le.f32.partialorder %v3457, 0.7853982
      %vm3459 = vcmp.lt.s32.totalorder %v575, 0
      %v3460 = vand.u32 %v575, 2139095040
      %v3461 = vshrl.u32 %v3460, 23
      %v3462 = vsub.s32 %v3461, 127
      %v3463 = vand.u32 2147483647, %v575
      %v3464 = vand.u32 %v3463, 8388607
      %v3465 = vor.u32 %v3464, 8388608
      %v3466 = vsub.s32 0, %v3465
      %v3467 = vadd.s32 %v3462, 1
      %vm3468 = vcmp.gt.s32.totalorder %v3467, 0
      %v3469 = vsel %vm3468, %v3467, 0
      %v3470 = vshrl.u32 %v3469, 5
      %v3471 = vand.u32 %v3469, 31
      %v3472 = vsub.s32 32, %v3471
      %v3473 = vshrl.u32 683565275, %v3472
      %v3474 = vshll.u32 683565275, %v3471
      %v3475 = vshrl.u32 2475754826, %v3472
      %v3476 = vor.u32 %v3474, %v3475
      %v3477 = vshll.u32 2475754826, %v3471
      %v3478 = vshrl.u32 2131351028, %v3472
      %v3479 = vor.u32 %v3477, %v3478
      %v3480 = vshll.u32 2131351028, %v3471
      %v3481 = vshrl.u32 2102212464, %v3472
      %v3482 = vor.u32 %v3480, %v3481
      %v3483 = vshll.u32 2102212464, %v3471
      %v3484 = vshrl.u32 920167782, %v3472
      %v3485 = vor.u32 %v3483, %v3484
      %v3486 = vshll.u32 920167782, %v3471
      %v3487 = vshrl.u32 1326507024, %v3472
      %v3488 = vor.u32 %v3486, %v3487
      %vm3489 = vcmp.lt.s32.totalorder %v3470, 1
      %vm3490 = vcmp.lt.s32.totalorder %v3470, 2
      %vm3491 = vcmp.lt.s32.totalorder %v3470, 3
      %vm3492 = vcmp.lt.s32.totalorder %v3470, 4
      %v3493 = vsel %vm3489, %v3473, %v3476
      %v3494 = vsel %vm3492, %v3482, 2102212464
      %v3495 = vsel %vm3491, %v3479, %v3494
      %v3496 = vsel %vm3490, %v3493, %v3495
      %v3497 = vsel %vm3489, %v3476, %v3479
      %v3498 = vsel %vm3492, %v3485, 920167782
      %v3499 = vsel %vm3491, %v3482, %v3498
      %v3500 = vsel %vm3490, %v3497, %v3499
      %v3501 = vsel %vm3489, %v3479, %v3482
      %v3502 = vsel %vm3492, %v3488, 1326507024
      %v3503 = vsel %vm3491, %v3485, %v3502
      %v3504 = vsel %vm3490, %v3501, %v3503
      %v3505 = vshll.u32 %v3465, 8
      %v3506 = vmul.u32.u64.compose %v3505, %v3504
      %v3507 = vextract.low.u32 %v3506
      %v3508 = vextract.high.u32 %v3506
      %v3509 = vmul.u32.u64.compose %v3505, %v3500
      %v3510 = vextract.low.u32 %v3509
      %v3511 = vextract.high.u32 %v3509
      %v3512 = vmul.u32 %v3505, %v3496
      %v3513 = vadd.s32 %v3508, %v3510
      %vm3514 = vc.u32 %v3508, %v3510
      %v3515 = vadd.s32 %v3511, 1
      %v3516 = vsel %vm3514, %v3515, %v3511
      %v3517 = vadd.s32 %v3512, %v3516
      %v3518 = vadd.s32 %v3517, 536870912
      %v3519 = vshrl.u32 %v3518, 30
      %v3520 = vshll.u32 %v3519, 30
      %v3521 = vsub.s32 %v3517, %v3520
      %vm3522 = vcmp.lt.s32.totalorder %v3521, 0
      %v3523 = vsub.s32 0, %v3521
      %v3524 = vsel %vm3522, %v3523, %v3521
      %v3525 = vclz %v3524
      %v3526 = vsub.s32 %v3525, 2
      %vm3527 = vcmp.gt.s32.totalorder 0, %v3526
      %v3528 = vsel %vm3527, 0, %v3526
      %v3529 = vsub.s32 32, %v3528
      %v3530 = vshll.u32 %v3521, %v3528
      %v3531 = vshrl.u32 %v3513, %v3529
      %v3532 = vor.u32 %v3530, %v3531
      %v3533 = vsub.s32 4294967266, %v3528
      %v3534 = vadd.s32 %v3533, 127
      %v3535 = vshll.u32 %v3534, 23
      %v3536 = vor.u32 4788187, %v3535
      %v3537 = vand.u32 2147483647, %v3536
      %v3539 = vcvt.s32.f32 %v3532
      %v3540 = vmul.f32 %v3539, %v3537
      %v3541 = vxor.u32 %v3540, 2147483648
      %v3542 = vsel %vm3459, %v3541, %v3540
      %v3543 = vsub.s32 4, %v3519
      %v3544 = vsel %vm3459, %v3543, %v3519
      %v3545 = vsel %vm3458, %v575, %v3542
      %v3546 = vsel %vm3458, 0, %v3544
      %v3547 = vcosq.f32.pop %v3545
      %v3548 = vsinq.f32.pop %v3545
      %vm3549 = vweird.f32 %v575
      %v3550 = vand.u32 %v3546, 3
      %vm3551 = vcmp.lt.s32.totalorder %v3550, 2
      %vm3552 = vcmp.eq.s32.totalorder %v3550, 0
      %v3553 = vxor.u32 %v3548, 2147483648
      %v3554 = vsel %vm3552, %v3547, %v3553
      %vm3555 = vcmp.eq.s32.totalorder %v3550, 2
      %v3556 = vxor.u32 %v3547, 2147483648
      %v3557 = vsel %vm3555, %v3556, %v3548
      %v3558 = vsel %vm3551, %v3554, %v3557
      %v3559 = vsel %vm3549, nan, %v3558
      %v3560 = vand.u32 2147483647, %v576
      %vm3561 = vcmp.le.f32.partialorder %v3560, 0.7853982
      %vm3562 = vcmp.lt.s32.totalorder %v576, 0
      %v3563 = vand.u32 %v576, 2139095040
      %v3564 = vshrl.u32 %v3563, 23
      %v3565 = vsub.s32 %v3564, 127
      %v3566 = vand.u32 2147483647, %v576
      %v3567 = vand.u32 %v3566, 8388607
      %v3568 = vor.u32 %v3567, 8388608
      %v3569 = vsub.s32 0, %v3568
      %v3570 = vadd.s32 %v3565, 1
      %vm3571 = vcmp.gt.s32.totalorder %v3570, 0
      %v3572 = vsel %vm3571, %v3570, 0
      %v3573 = vshrl.u32 %v3572, 5
      %v3574 = vand.u32 %v3572, 31
      %v3575 = vsub.s32 32, %v3574
      %v3576 = vshrl.u32 683565275, %v3575
      %v3577 = vshll.u32 683565275, %v3574
      %v3578 = vshrl.u32 2475754826, %v3575
      %v3579 = vor.u32 %v3577, %v3578
      %v3580 = vshll.u32 2475754826, %v3574
      %v3581 = vshrl.u32 2131351028, %v3575
      %v3582 = vor.u32 %v3580, %v3581
      %v3583 = vshll.u32 2131351028, %v3574
      %v3584 = vshrl.u32 2102212464, %v3575
      %v3585 = vor.u32 %v3583, %v3584
      %v3586 = vshll.u32 2102212464, %v3574
      %v3587 = vshrl.u32 920167782, %v3575
      %v3588 = vor.u32 %v3586, %v3587
      %v3589 = vshll.u32 920167782, %v3574
      %v3590 = vshrl.u32 1326507024, %v3575
      %v3591 = vor.u32 %v3589, %v3590
      %vm3592 = vcmp.lt.s32.totalorder %v3573, 1
      %vm3593 = vcmp.lt.s32.totalorder %v3573, 2
      %vm3594 = vcmp.lt.s32.totalorder %v3573, 3
      %vm3595 = vcmp.lt.s32.totalorder %v3573, 4
      %v3596 = vsel %vm3592, %v3576, %v3579
      %v3597 = vsel %vm3595, %v3585, 2102212464
      %v3598 = vsel %vm3594, %v3582, %v3597
      %v3599 = vsel %vm3593, %v3596, %v3598
      %v3600 = vsel %vm3592, %v3579, %v3582
      %v3601 = vsel %vm3595, %v3588, 920167782
      %v3602 = vsel %vm3594, %v3585, %v3601
      %v3603 = vsel %vm3593, %v3600, %v3602
      %v3604 = vsel %vm3592, %v3582, %v3585
      %v3605 = vsel %vm3595, %v3591, 1326507024
      %v3606 = vsel %vm3594, %v3588, %v3605
      %v3607 = vsel %vm3593, %v3604, %v3606
      %v3608 = vshll.u32 %v3568, 8
      %v3609 = vmul.u32.u64.compose %v3608, %v3607
      %v3610 = vextract.low.u32 %v3609
      %v3611 = vextract.high.u32 %v3609
      %v3612 = vmul.u32.u64.compose %v3608, %v3603
      %v3613 = vextract.low.u32 %v3612
      %v3614 = vextract.high.u32 %v3612
      %v3615 = vmul.u32 %v3608, %v3599
      %v3616 = vadd.s32 %v3611, %v3613
      %vm3617 = vc.u32 %v3611, %v3613
      %v3618 = vadd.s32 %v3614, 1
      %v3619 = vsel %vm3617, %v3618, %v3614
      %v3620 = vadd.s32 %v3615, %v3619
      %v3621 = vadd.s32 %v3620, 536870912
      %v3622 = vshrl.u32 %v3621, 30
      %v3623 = vshll.u32 %v3622, 30
      %v3624 = vsub.s32 %v3620, %v3623
      %vm3625 = vcmp.lt.s32.totalorder %v3624, 0
      %v3626 = vsub.s32 0, %v3624
      %v3627 = vsel %vm3625, %v3626, %v3624
      %v3628 = vclz %v3627
      %v3629 = vsub.s32 %v3628, 2
      %vm3630 = vcmp.gt.s32.totalorder 0, %v3629
      %v3631 = vsel %vm3630, 0, %v3629
      %v3632 = vsub.s32 32, %v3631
      %v3633 = vshll.u32 %v3624, %v3631
      %v3634 = vshrl.u32 %v3616, %v3632
      %v3635 = vor.u32 %v3633, %v3634
      %v3636 = vsub.s32 4294967266, %v3631
      %v3637 = vadd.s32 %v3636, 127
      %v3638 = vshll.u32 %v3637, 23
      %v3639 = vor.u32 4788187, %v3638
      %v3640 = vand.u32 2147483647, %v3639
      %v3642 = vcvt.s32.f32 %v3635
      %v3643 = vmul.f32 %v3642, %v3640
      %v3644 = vxor.u32 %v3643, 2147483648
      %v3645 = vsel %vm3562, %v3644, %v3643
      %v3646 = vsub.s32 4, %v3622
      %v3647 = vsel %vm3562, %v3646, %v3622
      %v3648 = vsel %vm3561, %v576, %v3645
      %v3649 = vsel %vm3561, 0, %v3647
      %v3650 = vcosq.f32.pop %v3648
      %v3651 = vsinq.f32.pop %v3648
      %vm3652 = vweird.f32 %v576
      %v3653 = vand.u32 %v3649, 3
      %vm3654 = vcmp.lt.s32.totalorder %v3653, 2
      %vm3655 = vcmp.eq.s32.totalorder %v3653, 0
      %v3656 = vxor.u32 %v3651, 2147483648
      %v3657 = vsel %vm3655, %v3650, %v3656
      %vm3658 = vcmp.eq.s32.totalorder %v3653, 2
      %v3659 = vxor.u32 %v3650, 2147483648
      %v3660 = vsel %vm3658, %v3659, %v3651
      %v3661 = vsel %vm3654, %v3657, %v3660
      %v3662 = vsel %vm3652, nan, %v3661
      %v3663 = vand.u32 2147483647, %v577
      %vm3664 = vcmp.le.f32.partialorder %v3663, 0.7853982
      %vm3665 = vcmp.lt.s32.totalorder %v577, 0
      %v3666 = vand.u32 %v577, 2139095040
      %v3667 = vshrl.u32 %v3666, 23
      %v3668 = vsub.s32 %v3667, 127
      %v3669 = vand.u32 2147483647, %v577
      %v3670 = vand.u32 %v3669, 8388607
      %v3671 = vor.u32 %v3670, 8388608
      %v3672 = vsub.s32 0, %v3671
      %v3673 = vadd.s32 %v3668, 1
      %vm3674 = vcmp.gt.s32.totalorder %v3673, 0
      %v3675 = vsel %vm3674, %v3673, 0
      %v3676 = vshrl.u32 %v3675, 5
      %v3677 = vand.u32 %v3675, 31
      %v3678 = vsub.s32 32, %v3677
      %v3679 = vshrl.u32 683565275, %v3678
      %v3680 = vshll.u32 683565275, %v3677
      %v3681 = vshrl.u32 2475754826, %v3678
      %v3682 = vor.u32 %v3680, %v3681
      %v3683 = vshll.u32 2475754826, %v3677
      %v3684 = vshrl.u32 2131351028, %v3678
      %v3685 = vor.u32 %v3683, %v3684
      %v3686 = vshll.u32 2131351028, %v3677
      %v3687 = vshrl.u32 2102212464, %v3678
      %v3688 = vor.u32 %v3686, %v3687
      %v3689 = vshll.u32 2102212464, %v3677
      %v3690 = vshrl.u32 920167782, %v3678
      %v3691 = vor.u32 %v3689, %v3690
      %v3692 = vshll.u32 920167782, %v3677
      %v3693 = vshrl.u32 1326507024, %v3678
      %v3694 = vor.u32 %v3692, %v3693
      %vm3695 = vcmp.lt.s32.totalorder %v3676, 1
      %vm3696 = vcmp.lt.s32.totalorder %v3676, 2
      %vm3697 = vcmp.lt.s32.totalorder %v3676, 3
      %vm3698 = vcmp.lt.s32.totalorder %v3676, 4
      %v3699 = vsel %vm3695, %v3679, %v3682
      %v3700 = vsel %vm3698, %v3688, 2102212464
      %v3701 = vsel %vm3697, %v3685, %v3700
      %v3702 = vsel %vm3696, %v3699, %v3701
      %v3703 = vsel %vm3695, %v3682, %v3685
      %v3704 = vsel %vm3698, %v3691, 920167782
      %v3705 = vsel %vm3697, %v3688, %v3704
      %v3706 = vsel %vm3696, %v3703, %v3705
      %v3707 = vsel %vm3695, %v3685, %v3688
      %v3708 = vsel %vm3698, %v3694, 1326507024
      %v3709 = vsel %vm3697, %v3691, %v3708
      %v3710 = vsel %vm3696, %v3707, %v3709
      %v3711 = vshll.u32 %v3671, 8
      %v3712 = vmul.u32.u64.compose %v3711, %v3710
      %v3713 = vextract.low.u32 %v3712
      %v3714 = vextract.high.u32 %v3712
      %v3715 = vmul.u32.u64.compose %v3711, %v3706
      %v3716 = vextract.low.u32 %v3715
      %v3717 = vextract.high.u32 %v3715
      %v3718 = vmul.u32 %v3711, %v3702
      %v3719 = vadd.s32 %v3714, %v3716
      %vm3720 = vc.u32 %v3714, %v3716
      %v3721 = vadd.s32 %v3717, 1
      %v3722 = vsel %vm3720, %v3721, %v3717
      %v3723 = vadd.s32 %v3718, %v3722
      %v3724 = vadd.s32 %v3723, 536870912
      %v3725 = vshrl.u32 %v3724, 30
      %v3726 = vshll.u32 %v3725, 30
      %v3727 = vsub.s32 %v3723, %v3726
      %vm3728 = vcmp.lt.s32.totalorder %v3727, 0
      %v3729 = vsub.s32 0, %v3727
      %v3730 = vsel %vm3728, %v3729, %v3727
      %v3731 = vclz %v3730
      %v3732 = vsub.s32 %v3731, 2
      %vm3733 = vcmp.gt.s32.totalorder 0, %v3732
      %v3734 = vsel %vm3733, 0, %v3732
      %v3735 = vsub.s32 32, %v3734
      %v3736 = vshll.u32 %v3727, %v3734
      %v3737 = vshrl.u32 %v3719, %v3735
      %v3738 = vor.u32 %v3736, %v3737
      %v3739 = vsub.s32 4294967266, %v3734
      %v3740 = vadd.s32 %v3739, 127
      %v3741 = vshll.u32 %v3740, 23
      %v3742 = vor.u32 4788187, %v3741
      %v3743 = vand.u32 2147483647, %v3742
      %v3745 = vcvt.s32.f32 %v3738
      %v3746 = vmul.f32 %v3745, %v3743
      %v3747 = vxor.u32 %v3746, 2147483648
      %v3748 = vsel %vm3665, %v3747, %v3746
      %v3749 = vsub.s32 4, %v3725
      %v3750 = vsel %vm3665, %v3749, %v3725
      %v3751 = vsel %vm3664, %v577, %v3748
      %v3752 = vsel %vm3664, 0, %v3750
      %v3753 = vcosq.f32.pop %v3751
      %v3754 = vsinq.f32.pop %v3751
      %vm3755 = vweird.f32 %v577
      %v3756 = vand.u32 %v3752, 3
      %vm3757 = vcmp.lt.s32.totalorder %v3756, 2
      %vm3758 = vcmp.eq.s32.totalorder %v3756, 0
      %v3759 = vxor.u32 %v3754, 2147483648
      %v3760 = vsel %vm3758, %v3753, %v3759
      %vm3761 = vcmp.eq.s32.totalorder %v3756, 2
      %v3762 = vxor.u32 %v3753, 2147483648
      %v3763 = vsel %vm3761, %v3762, %v3754
      %v3764 = vsel %vm3757, %v3760, %v3763
      %v3765 = vsel %vm3755, nan, %v3764
      %v3766 = vand.u32 2147483647, %v578
      %vm3767 = vcmp.le.f32.partialorder %v3766, 0.7853982
      %vm3768 = vcmp.lt.s32.totalorder %v578, 0
      %v3769 = vand.u32 %v578, 2139095040
      %v3770 = vshrl.u32 %v3769, 23
      %v3771 = vsub.s32 %v3770, 127
      %v3772 = vand.u32 2147483647, %v578
      %v3773 = vand.u32 %v3772, 8388607
      %v3774 = vor.u32 %v3773, 8388608
      %v3775 = vsub.s32 0, %v3774
      %v3776 = vadd.s32 %v3771, 1
      %vm3777 = vcmp.gt.s32.totalorder %v3776, 0
      %v3778 = vsel %vm3777, %v3776, 0
      %v3779 = vshrl.u32 %v3778, 5
      %v3780 = vand.u32 %v3778, 31
      %v3781 = vsub.s32 32, %v3780
      %v3782 = vshrl.u32 683565275, %v3781
      %v3783 = vshll.u32 683565275, %v3780
      %v3784 = vshrl.u32 2475754826, %v3781
      %v3785 = vor.u32 %v3783, %v3784
      %v3786 = vshll.u32 2475754826, %v3780
      %v3787 = vshrl.u32 2131351028, %v3781
      %v3788 = vor.u32 %v3786, %v3787
      %v3789 = vshll.u32 2131351028, %v3780
      %v3790 = vshrl.u32 2102212464, %v3781
      %v3791 = vor.u32 %v3789, %v3790
      %v3792 = vshll.u32 2102212464, %v3780
      %v3793 = vshrl.u32 920167782, %v3781
      %v3794 = vor.u32 %v3792, %v3793
      %v3795 = vshll.u32 920167782, %v3780
      %v3796 = vshrl.u32 1326507024, %v3781
      %v3797 = vor.u32 %v3795, %v3796
      %vm3798 = vcmp.lt.s32.totalorder %v3779, 1
      %vm3799 = vcmp.lt.s32.totalorder %v3779, 2
      %vm3800 = vcmp.lt.s32.totalorder %v3779, 3
      %vm3801 = vcmp.lt.s32.totalorder %v3779, 4
      %v3802 = vsel %vm3798, %v3782, %v3785
      %v3803 = vsel %vm3801, %v3791, 2102212464
      %v3804 = vsel %vm3800, %v3788, %v3803
      %v3805 = vsel %vm3799, %v3802, %v3804
      %v3806 = vsel %vm3798, %v3785, %v3788
      %v3807 = vsel %vm3801, %v3794, 920167782
      %v3808 = vsel %vm3800, %v3791, %v3807
      %v3809 = vsel %vm3799, %v3806, %v3808
      %v3810 = vsel %vm3798, %v3788, %v3791
      %v3811 = vsel %vm3801, %v3797, 1326507024
      %v3812 = vsel %vm3800, %v3794, %v3811
      %v3813 = vsel %vm3799, %v3810, %v3812
      %v3814 = vshll.u32 %v3774, 8
      %v3815 = vmul.u32.u64.compose %v3814, %v3813
      %v3816 = vextract.low.u32 %v3815
      %v3817 = vextract.high.u32 %v3815
      %v3818 = vmul.u32.u64.compose %v3814, %v3809
      %v3819 = vextract.low.u32 %v3818
      %v3820 = vextract.high.u32 %v3818
      %v3821 = vmul.u32 %v3814, %v3805
      %v3822 = vadd.s32 %v3817, %v3819
      %vm3823 = vc.u32 %v3817, %v3819
      %v3824 = vadd.s32 %v3820, 1
      %v3825 = vsel %vm3823, %v3824, %v3820
      %v3826 = vadd.s32 %v3821, %v3825
      %v3827 = vadd.s32 %v3826, 536870912
      %v3828 = vshrl.u32 %v3827, 30
      %v3829 = vshll.u32 %v3828, 30
      %v3830 = vsub.s32 %v3826, %v3829
      %vm3831 = vcmp.lt.s32.totalorder %v3830, 0
      %v3832 = vsub.s32 0, %v3830
      %v3833 = vsel %vm3831, %v3832, %v3830
      %v3834 = vclz %v3833
      %v3835 = vsub.s32 %v3834, 2
      %vm3836 = vcmp.gt.s32.totalorder 0, %v3835
      %v3837 = vsel %vm3836, 0, %v3835
      %v3838 = vsub.s32 32, %v3837
      %v3839 = vshll.u32 %v3830, %v3837
      %v3840 = vshrl.u32 %v3822, %v3838
      %v3841 = vor.u32 %v3839, %v3840
      %v3842 = vsub.s32 4294967266, %v3837
      %v3843 = vadd.s32 %v3842, 127
      %v3844 = vshll.u32 %v3843, 23
      %v3845 = vor.u32 4788187, %v3844
      %v3846 = vand.u32 2147483647, %v3845
      %v3848 = vcvt.s32.f32 %v3841
      %v3849 = vmul.f32 %v3848, %v3846
      %v3850 = vxor.u32 %v3849, 2147483648
      %v3851 = vsel %vm3768, %v3850, %v3849
      %v3852 = vsub.s32 4, %v3828
      %v3853 = vsel %vm3768, %v3852, %v3828
      %v3854 = vsel %vm3767, %v578, %v3851
      %v3855 = vsel %vm3767, 0, %v3853
      %v3856 = vcosq.f32.pop %v3854
      %v3857 = vsinq.f32.pop %v3854
      %vm3858 = vweird.f32 %v578
      %v3859 = vand.u32 %v3855, 3
      %vm3860 = vcmp.lt.s32.totalorder %v3859, 2
      %vm3861 = vcmp.eq.s32.totalorder %v3859, 0
      %v3862 = vxor.u32 %v3857, 2147483648
      %v3863 = vsel %vm3861, %v3856, %v3862
      %vm3864 = vcmp.eq.s32.totalorder %v3859, 2
      %v3865 = vxor.u32 %v3856, 2147483648
      %v3866 = vsel %vm3864, %v3865, %v3857
      %v3867 = vsel %vm3860, %v3863, %v3866
      %v3868 = vsel %vm3858, nan, %v3867
      %v3869 = vand.u32 2147483647, %v579
      %vm3870 = vcmp.le.f32.partialorder %v3869, 0.7853982
      %vm3871 = vcmp.lt.s32.totalorder %v579, 0
      %v3872 = vand.u32 %v579, 2139095040
      %v3873 = vshrl.u32 %v3872, 23
      %v3874 = vsub.s32 %v3873, 127
      %v3875 = vand.u32 2147483647, %v579
      %v3876 = vand.u32 %v3875, 8388607
      %v3877 = vor.u32 %v3876, 8388608
      %v3878 = vsub.s32 0, %v3877
      %v3879 = vadd.s32 %v3874, 1
      %vm3880 = vcmp.gt.s32.totalorder %v3879, 0
      %v3881 = vsel %vm3880, %v3879, 0
      %v3882 = vshrl.u32 %v3881, 5
      %v3883 = vand.u32 %v3881, 31
      %v3884 = vsub.s32 32, %v3883
      %v3885 = vshrl.u32 683565275, %v3884
      %v3886 = vshll.u32 683565275, %v3883
      %v3887 = vshrl.u32 2475754826, %v3884
      %v3888 = vor.u32 %v3886, %v3887
      %v3889 = vshll.u32 2475754826, %v3883
      %v3890 = vshrl.u32 2131351028, %v3884
      %v3891 = vor.u32 %v3889, %v3890
      %v3892 = vshll.u32 2131351028, %v3883
      %v3893 = vshrl.u32 2102212464, %v3884
      %v3894 = vor.u32 %v3892, %v3893
      %v3895 = vshll.u32 2102212464, %v3883
      %v3896 = vshrl.u32 920167782, %v3884
      %v3897 = vor.u32 %v3895, %v3896
      %v3898 = vshll.u32 920167782, %v3883
      %v3899 = vshrl.u32 1326507024, %v3884
      %v3900 = vor.u32 %v3898, %v3899
      %vm3901 = vcmp.lt.s32.totalorder %v3882, 1
      %vm3902 = vcmp.lt.s32.totalorder %v3882, 2
      %vm3903 = vcmp.lt.s32.totalorder %v3882, 3
      %vm3904 = vcmp.lt.s32.totalorder %v3882, 4
      %v3905 = vsel %vm3901, %v3885, %v3888
      %v3906 = vsel %vm3904, %v3894, 2102212464
      %v3907 = vsel %vm3903, %v3891, %v3906
      %v3908 = vsel %vm3902, %v3905, %v3907
      %v3909 = vsel %vm3901, %v3888, %v3891
      %v3910 = vsel %vm3904, %v3897, 920167782
      %v3911 = vsel %vm3903, %v3894, %v3910
      %v3912 = vsel %vm3902, %v3909, %v3911
      %v3913 = vsel %vm3901, %v3891, %v3894
      %v3914 = vsel %vm3904, %v3900, 1326507024
      %v3915 = vsel %vm3903, %v3897, %v3914
      %v3916 = vsel %vm3902, %v3913, %v3915
      %v3917 = vshll.u32 %v3877, 8
      %v3918 = vmul.u32.u64.compose %v3917, %v3916
      %v3919 = vextract.low.u32 %v3918
      %v3920 = vextract.high.u32 %v3918
      %v3921 = vmul.u32.u64.compose %v3917, %v3912
      %v3922 = vextract.low.u32 %v3921
      %v3923 = vextract.high.u32 %v3921
      %v3924 = vmul.u32 %v3917, %v3908
      %v3925 = vadd.s32 %v3920, %v3922
      %vm3926 = vc.u32 %v3920, %v3922
      %v3927 = vadd.s32 %v3923, 1
      %v3928 = vsel %vm3926, %v3927, %v3923
      %v3929 = vadd.s32 %v3924, %v3928
      %v3930 = vadd.s32 %v3929, 536870912
      %v3931 = vshrl.u32 %v3930, 30
      %v3932 = vshll.u32 %v3931, 30
      %v3933 = vsub.s32 %v3929, %v3932
      %vm3934 = vcmp.lt.s32.totalorder %v3933, 0
      %v3935 = vsub.s32 0, %v3933
      %v3936 = vsel %vm3934, %v3935, %v3933
      %v3937 = vclz %v3936
      %v3938 = vsub.s32 %v3937, 2
      %vm3939 = vcmp.gt.s32.totalorder 0, %v3938
      %v3940 = vsel %vm3939, 0, %v3938
      %v3941 = vsub.s32 32, %v3940
      %v3942 = vshll.u32 %v3933, %v3940
      %v3943 = vshrl.u32 %v3925, %v3941
      %v3944 = vor.u32 %v3942, %v3943
      %v3945 = vsub.s32 4294967266, %v3940
      %v3946 = vadd.s32 %v3945, 127
      %v3947 = vshll.u32 %v3946, 23
      %v3948 = vor.u32 4788187, %v3947
      %v3949 = vand.u32 2147483647, %v3948
      %v3951 = vcvt.s32.f32 %v3944
      %v3952 = vmul.f32 %v3951, %v3949
      %v3953 = vxor.u32 %v3952, 2147483648
      %v3954 = vsel %vm3871, %v3953, %v3952
      %v3955 = vsub.s32 4, %v3931
      %v3956 = vsel %vm3871, %v3955, %v3931
      %v3957 = vsel %vm3870, %v579, %v3954
      %v3958 = vsel %vm3870, 0, %v3956
      %v3959 = vcosq.f32.pop %v3957
      %v3960 = vsinq.f32.pop %v3957
      %vm3961 = vweird.f32 %v579
      %v3962 = vand.u32 %v3958, 3
      %vm3963 = vcmp.lt.s32.totalorder %v3962, 2
      %vm3964 = vcmp.eq.s32.totalorder %v3962, 0
      %v3965 = vxor.u32 %v3960, 2147483648
      %v3966 = vsel %vm3964, %v3959, %v3965
      %vm3967 = vcmp.eq.s32.totalorder %v3962, 2
      %v3968 = vxor.u32 %v3959, 2147483648
      %v3969 = vsel %vm3967, %v3968, %v3960
      %v3970 = vsel %vm3963, %v3966, %v3969
      %v3971 = vsel %vm3961, nan, %v3970
      %v3972 = vand.u32 2147483647, %v644
      %vm3973 = vcmp.le.f32.partialorder %v3972, 0.7853982
      %vm3974 = vcmp.lt.s32.totalorder %v644, 0
      %v3975 = vand.u32 %v644, 2139095040
      %v3976 = vshrl.u32 %v3975, 23
      %v3977 = vsub.s32 %v3976, 127
      %v3978 = vand.u32 2147483647, %v644
      %v3979 = vand.u32 %v3978, 8388607
      %v3980 = vor.u32 %v3979, 8388608
      %v3981 = vsub.s32 0, %v3980
      %v3982 = vadd.s32 %v3977, 1
      %vm3983 = vcmp.gt.s32.totalorder %v3982, 0
      %v3984 = vsel %vm3983, %v3982, 0
      %v3985 = vshrl.u32 %v3984, 5
      %v3986 = vand.u32 %v3984, 31
      %v3987 = vsub.s32 32, %v3986
      %v3988 = vshrl.u32 683565275, %v3987
      %v3989 = vshll.u32 683565275, %v3986
      %v3990 = vshrl.u32 2475754826, %v3987
      %v3991 = vor.u32 %v3989, %v3990
      %v3992 = vshll.u32 2475754826, %v3986
      %v3993 = vshrl.u32 2131351028, %v3987
      %v3994 = vor.u32 %v3992, %v3993
      %v3995 = vshll.u32 2131351028, %v3986
      %v3996 = vshrl.u32 2102212464, %v3987
      %v3997 = vor.u32 %v3995, %v3996
      %v3998 = vshll.u32 2102212464, %v3986
      %v3999 = vshrl.u32 920167782, %v3987
      %v4000 = vor.u32 %v3998, %v3999
      %v4001 = vshll.u32 920167782, %v3986
      %v4002 = vshrl.u32 1326507024, %v3987
      %v4003 = vor.u32 %v4001, %v4002
      %vm4004 = vcmp.lt.s32.totalorder %v3985, 1
      %vm4005 = vcmp.lt.s32.totalorder %v3985, 2
      %vm4006 = vcmp.lt.s32.totalorder %v3985, 3
      %vm4007 = vcmp.lt.s32.totalorder %v3985, 4
      %v4008 = vsel %vm4004, %v3988, %v3991
      %v4009 = vsel %vm4007, %v3997, 2102212464
      %v4010 = vsel %vm4006, %v3994, %v4009
      %v4011 = vsel %vm4005, %v4008, %v4010
      %v4012 = vsel %vm4004, %v3991, %v3994
      %v4013 = vsel %vm4007, %v4000, 920167782
      %v4014 = vsel %vm4006, %v3997, %v4013
      %v4015 = vsel %vm4005, %v4012, %v4014
      %v4016 = vsel %vm4004, %v3994, %v3997
      %v4017 = vsel %vm4007, %v4003, 1326507024
      %v4018 = vsel %vm4006, %v4000, %v4017
      %v4019 = vsel %vm4005, %v4016, %v4018
      %v4020 = vshll.u32 %v3980, 8
      %v4021 = vmul.u32.u64.compose %v4020, %v4019
      %v4022 = vextract.low.u32 %v4021
      %v4023 = vextract.high.u32 %v4021
      %v4024 = vmul.u32.u64.compose %v4020, %v4015
      %v4025 = vextract.low.u32 %v4024
      %v4026 = vextract.high.u32 %v4024
      %v4027 = vmul.u32 %v4020, %v4011
      %v4028 = vadd.s32 %v4023, %v4025
      %vm4029 = vc.u32 %v4023, %v4025
      %v4030 = vadd.s32 %v4026, 1
      %v4031 = vsel %vm4029, %v4030, %v4026
      %v4032 = vadd.s32 %v4027, %v4031
      %v4033 = vadd.s32 %v4032, 536870912
      %v4034 = vshrl.u32 %v4033, 30
      %v4035 = vshll.u32 %v4034, 30
      %v4036 = vsub.s32 %v4032, %v4035
      %vm4037 = vcmp.lt.s32.totalorder %v4036, 0
      %v4038 = vsub.s32 0, %v4036
      %v4039 = vsel %vm4037, %v4038, %v4036
      %v4040 = vclz %v4039
      %v4041 = vsub.s32 %v4040, 2
      %vm4042 = vcmp.gt.s32.totalorder 0, %v4041
      %v4043 = vsel %vm4042, 0, %v4041
      %v4044 = vsub.s32 32, %v4043
      %v4045 = vshll.u32 %v4036, %v4043
      %v4046 = vshrl.u32 %v4028, %v4044
      %v4047 = vor.u32 %v4045, %v4046
      %v4048 = vsub.s32 4294967266, %v4043
      %v4049 = vadd.s32 %v4048, 127
      %v4050 = vshll.u32 %v4049, 23
      %v4051 = vor.u32 4788187, %v4050
      %v4052 = vand.u32 2147483647, %v4051
      %v4054 = vcvt.s32.f32 %v4047
      %v4055 = vmul.f32 %v4054, %v4052
      %v4056 = vxor.u32 %v4055, 2147483648
      %v4057 = vsel %vm3974, %v4056, %v4055
      %v4058 = vsub.s32 4, %v4034
      %v4059 = vsel %vm3974, %v4058, %v4034
      %v4060 = vsel %vm3973, %v644, %v4057
      %v4061 = vsel %vm3973, 0, %v4059
      %v4062 = vcosq.f32.pop %v4060
      %v4063 = vsinq.f32.pop %v4060
      %vm4064 = vweird.f32 %v644
      %v4065 = vadd.s32 %v4061, 3
      %v4066 = vand.u32 %v4065, 3
      %vm4067 = vcmp.lt.s32.totalorder %v4066, 2
      %vm4068 = vcmp.eq.s32.totalorder %v4066, 0
      %v4069 = vxor.u32 %v4063, 2147483648
      %v4070 = vsel %vm4068, %v4062, %v4069
      %vm4071 = vcmp.eq.s32.totalorder %v4066, 2
      %v4072 = vxor.u32 %v4062, 2147483648
      %v4073 = vsel %vm4071, %v4072, %v4063
      %v4074 = vsel %vm4067, %v4070, %v4073
      %v4075 = vsel %vm4064, nan, %v4074
      %v4076 = vand.u32 2147483647, %v645
      %vm4077 = vcmp.le.f32.partialorder %v4076, 0.7853982
      %vm4078 = vcmp.lt.s32.totalorder %v645, 0
      %v4079 = vand.u32 %v645, 2139095040
      %v4080 = vshrl.u32 %v4079, 23
      %v4081 = vsub.s32 %v4080, 127
      %v4082 = vand.u32 2147483647, %v645
      %v4083 = vand.u32 %v4082, 8388607
      %v4084 = vor.u32 %v4083, 8388608
      %v4085 = vsub.s32 0, %v4084
      %v4086 = vadd.s32 %v4081, 1
      %vm4087 = vcmp.gt.s32.totalorder %v4086, 0
      %v4088 = vsel %vm4087, %v4086, 0
      %v4089 = vshrl.u32 %v4088, 5
      %v4090 = vand.u32 %v4088, 31
      %v4091 = vsub.s32 32, %v4090
      %v4092 = vshrl.u32 683565275, %v4091
      %v4093 = vshll.u32 683565275, %v4090
      %v4094 = vshrl.u32 2475754826, %v4091
      %v4095 = vor.u32 %v4093, %v4094
      %v4096 = vshll.u32 2475754826, %v4090
      %v4097 = vshrl.u32 2131351028, %v4091
      %v4098 = vor.u32 %v4096, %v4097
      %v4099 = vshll.u32 2131351028, %v4090
      %v4100 = vshrl.u32 2102212464, %v4091
      %v4101 = vor.u32 %v4099, %v4100
      %v4102 = vshll.u32 2102212464, %v4090
      %v4103 = vshrl.u32 920167782, %v4091
      %v4104 = vor.u32 %v4102, %v4103
      %v4105 = vshll.u32 920167782, %v4090
      %v4106 = vshrl.u32 1326507024, %v4091
      %v4107 = vor.u32 %v4105, %v4106
      %vm4108 = vcmp.lt.s32.totalorder %v4089, 1
      %vm4109 = vcmp.lt.s32.totalorder %v4089, 2
      %vm4110 = vcmp.lt.s32.totalorder %v4089, 3
      %vm4111 = vcmp.lt.s32.totalorder %v4089, 4
      %v4112 = vsel %vm4108, %v4092, %v4095
      %v4113 = vsel %vm4111, %v4101, 2102212464
      %v4114 = vsel %vm4110, %v4098, %v4113
      %v4115 = vsel %vm4109, %v4112, %v4114
      %v4116 = vsel %vm4108, %v4095, %v4098
      %v4117 = vsel %vm4111, %v4104, 920167782
      %v4118 = vsel %vm4110, %v4101, %v4117
      %v4119 = vsel %vm4109, %v4116, %v4118
      %v4120 = vsel %vm4108, %v4098, %v4101
      %v4121 = vsel %vm4111, %v4107, 1326507024
      %v4122 = vsel %vm4110, %v4104, %v4121
      %v4123 = vsel %vm4109, %v4120, %v4122
      %v4124 = vshll.u32 %v4084, 8
      %v4125 = vmul.u32.u64.compose %v4124, %v4123
      %v4126 = vextract.low.u32 %v4125
      %v4127 = vextract.high.u32 %v4125
      %v4128 = vmul.u32.u64.compose %v4124, %v4119
      %v4129 = vextract.low.u32 %v4128
      %v4130 = vextract.high.u32 %v4128
      %v4131 = vmul.u32 %v4124, %v4115
      %v4132 = vadd.s32 %v4127, %v4129
      %vm4133 = vc.u32 %v4127, %v4129
      %v4134 = vadd.s32 %v4130, 1
      %v4135 = vsel %vm4133, %v4134, %v4130
      %v4136 = vadd.s32 %v4131, %v4135
      %v4137 = vadd.s32 %v4136, 536870912
      %v4138 = vshrl.u32 %v4137, 30
      %v4139 = vshll.u32 %v4138, 30
      %v4140 = vsub.s32 %v4136, %v4139
      %vm4141 = vcmp.lt.s32.totalorder %v4140, 0
      %v4142 = vsub.s32 0, %v4140
      %v4143 = vsel %vm4141, %v4142, %v4140
      %v4144 = vclz %v4143
      %v4145 = vsub.s32 %v4144, 2
      %vm4146 = vcmp.gt.s32.totalorder 0, %v4145
      %v4147 = vsel %vm4146, 0, %v4145
      %v4148 = vsub.s32 32, %v4147
      %v4149 = vshll.u32 %v4140, %v4147
      %v4150 = vshrl.u32 %v4132, %v4148
      %v4151 = vor.u32 %v4149, %v4150
      %v4152 = vsub.s32 4294967266, %v4147
      %v4153 = vadd.s32 %v4152, 127
      %v4154 = vshll.u32 %v4153, 23
      %v4155 = vor.u32 4788187, %v4154
      %v4156 = vand.u32 2147483647, %v4155
      %v4158 = vcvt.s32.f32 %v4151
      %v4159 = vmul.f32 %v4158, %v4156
      %v4160 = vxor.u32 %v4159, 2147483648
      %v4161 = vsel %vm4078, %v4160, %v4159
      %v4162 = vsub.s32 4, %v4138
      %v4163 = vsel %vm4078, %v4162, %v4138
      %v4164 = vsel %vm4077, %v645, %v4161
      %v4165 = vsel %vm4077, 0, %v4163
      %v4166 = vcosq.f32.pop %v4164
      %v4167 = vsinq.f32.pop %v4164
      %vm4168 = vweird.f32 %v645
      %v4169 = vadd.s32 %v4165, 3
      %v4170 = vand.u32 %v4169, 3
      %vm4171 = vcmp.lt.s32.totalorder %v4170, 2
      %vm4172 = vcmp.eq.s32.totalorder %v4170, 0
      %v4173 = vxor.u32 %v4167, 2147483648
      %v4174 = vsel %vm4172, %v4166, %v4173
      %vm4175 = vcmp.eq.s32.totalorder %v4170, 2
      %v4176 = vxor.u32 %v4166, 2147483648
      %v4177 = vsel %vm4175, %v4176, %v4167
      %v4178 = vsel %vm4171, %v4174, %v4177
      %v4179 = vsel %vm4168, nan, %v4178
      %v4180 = vand.u32 2147483647, %v646
      %vm4181 = vcmp.le.f32.partialorder %v4180, 0.7853982
      %vm4182 = vcmp.lt.s32.totalorder %v646, 0
      %v4183 = vand.u32 %v646, 2139095040
      %v4184 = vshrl.u32 %v4183, 23
      %v4185 = vsub.s32 %v4184, 127
      %v4186 = vand.u32 2147483647, %v646
      %v4187 = vand.u32 %v4186, 8388607
      %v4188 = vor.u32 %v4187, 8388608
      %v4189 = vsub.s32 0, %v4188
      %v4190 = vadd.s32 %v4185, 1
      %vm4191 = vcmp.gt.s32.totalorder %v4190, 0
      %v4192 = vsel %vm4191, %v4190, 0
      %v4193 = vshrl.u32 %v4192, 5
      %v4194 = vand.u32 %v4192, 31
      %v4195 = vsub.s32 32, %v4194
      %v4196 = vshrl.u32 683565275, %v4195
      %v4197 = vshll.u32 683565275, %v4194
      %v4198 = vshrl.u32 2475754826, %v4195
      %v4199 = vor.u32 %v4197, %v4198
      %v4200 = vshll.u32 2475754826, %v4194
      %v4201 = vshrl.u32 2131351028, %v4195
      %v4202 = vor.u32 %v4200, %v4201
      %v4203 = vshll.u32 2131351028, %v4194
      %v4204 = vshrl.u32 2102212464, %v4195
      %v4205 = vor.u32 %v4203, %v4204
      %v4206 = vshll.u32 2102212464, %v4194
      %v4207 = vshrl.u32 920167782, %v4195
      %v4208 = vor.u32 %v4206, %v4207
      %v4209 = vshll.u32 920167782, %v4194
      %v4210 = vshrl.u32 1326507024, %v4195
      %v4211 = vor.u32 %v4209, %v4210
      %vm4212 = vcmp.lt.s32.totalorder %v4193, 1
      %vm4213 = vcmp.lt.s32.totalorder %v4193, 2
      %vm4214 = vcmp.lt.s32.totalorder %v4193, 3
      %vm4215 = vcmp.lt.s32.totalorder %v4193, 4
      %v4216 = vsel %vm4212, %v4196, %v4199
      %v4217 = vsel %vm4215, %v4205, 2102212464
      %v4218 = vsel %vm4214, %v4202, %v4217
      %v4219 = vsel %vm4213, %v4216, %v4218
      %v4220 = vsel %vm4212, %v4199, %v4202
      %v4221 = vsel %vm4215, %v4208, 920167782
      %v4222 = vsel %vm4214, %v4205, %v4221
      %v4223 = vsel %vm4213, %v4220, %v4222
      %v4224 = vsel %vm4212, %v4202, %v4205
      %v4225 = vsel %vm4215, %v4211, 1326507024
      %v4226 = vsel %vm4214, %v4208, %v4225
      %v4227 = vsel %vm4213, %v4224, %v4226
      %v4228 = vshll.u32 %v4188, 8
      %v4229 = vmul.u32.u64.compose %v4228, %v4227
      %v4230 = vextract.low.u32 %v4229
      %v4231 = vextract.high.u32 %v4229
      %v4232 = vmul.u32.u64.compose %v4228, %v4223
      %v4233 = vextract.low.u32 %v4232
      %v4234 = vextract.high.u32 %v4232
      %v4235 = vmul.u32 %v4228, %v4219
      %v4236 = vadd.s32 %v4231, %v4233
      %vm4237 = vc.u32 %v4231, %v4233
      %v4238 = vadd.s32 %v4234, 1
      %v4239 = vsel %vm4237, %v4238, %v4234
      %v4240 = vadd.s32 %v4235, %v4239
      %v4241 = vadd.s32 %v4240, 536870912
      %v4242 = vshrl.u32 %v4241, 30
      %v4243 = vshll.u32 %v4242, 30
      %v4244 = vsub.s32 %v4240, %v4243
      %vm4245 = vcmp.lt.s32.totalorder %v4244, 0
      %v4246 = vsub.s32 0, %v4244
      %v4247 = vsel %vm4245, %v4246, %v4244
      %v4248 = vclz %v4247
      %v4249 = vsub.s32 %v4248, 2
      %vm4250 = vcmp.gt.s32.totalorder 0, %v4249
      %v4251 = vsel %vm4250, 0, %v4249
      %v4252 = vsub.s32 32, %v4251
      %v4253 = vshll.u32 %v4244, %v4251
      %v4254 = vshrl.u32 %v4236, %v4252
      %v4255 = vor.u32 %v4253, %v4254
      %v4256 = vsub.s32 4294967266, %v4251
      %v4257 = vadd.s32 %v4256, 127
      %v4258 = vshll.u32 %v4257, 23
      %v4259 = vor.u32 4788187, %v4258
      %v4260 = vand.u32 2147483647, %v4259
      %v4262 = vcvt.s32.f32 %v4255
      %v4263 = vmul.f32 %v4262, %v4260
      %v4264 = vxor.u32 %v4263, 2147483648
      %v4265 = vsel %vm4182, %v4264, %v4263
      %v4266 = vsub.s32 4, %v4242
      %v4267 = vsel %vm4182, %v4266, %v4242
      %v4268 = vsel %vm4181, %v646, %v4265
      %v4269 = vsel %vm4181, 0, %v4267
      %v4270 = vcosq.f32.pop %v4268
      %v4271 = vsinq.f32.pop %v4268
      %vm4272 = vweird.f32 %v646
      %v4273 = vadd.s32 %v4269, 3
      %v4274 = vand.u32 %v4273, 3
      %vm4275 = vcmp.lt.s32.totalorder %v4274, 2
      %vm4276 = vcmp.eq.s32.totalorder %v4274, 0
      %v4277 = vxor.u32 %v4271, 2147483648
      %v4278 = vsel %vm4276, %v4270, %v4277
      %vm4279 = vcmp.eq.s32.totalorder %v4274, 2
      %v4280 = vxor.u32 %v4270, 2147483648
      %v4281 = vsel %vm4279, %v4280, %v4271
      %v4282 = vsel %vm4275, %v4278, %v4281
      %v4283 = vsel %vm4272, nan, %v4282
      %v4284 = vand.u32 2147483647, %v647
      %vm4285 = vcmp.le.f32.partialorder %v4284, 0.7853982
      %vm4286 = vcmp.lt.s32.totalorder %v647, 0
      %v4287 = vand.u32 %v647, 2139095040
      %v4288 = vshrl.u32 %v4287, 23
      %v4289 = vsub.s32 %v4288, 127
      %v4290 = vand.u32 2147483647, %v647
      %v4291 = vand.u32 %v4290, 8388607
      %v4292 = vor.u32 %v4291, 8388608
      %v4293 = vsub.s32 0, %v4292
      %v4294 = vadd.s32 %v4289, 1
      %vm4295 = vcmp.gt.s32.totalorder %v4294, 0
      %v4296 = vsel %vm4295, %v4294, 0
      %v4297 = vshrl.u32 %v4296, 5
      %v4298 = vand.u32 %v4296, 31
      %v4299 = vsub.s32 32, %v4298
      %v4300 = vshrl.u32 683565275, %v4299
      %v4301 = vshll.u32 683565275, %v4298
      %v4302 = vshrl.u32 2475754826, %v4299
      %v4303 = vor.u32 %v4301, %v4302
      %v4304 = vshll.u32 2475754826, %v4298
      %v4305 = vshrl.u32 2131351028, %v4299
      %v4306 = vor.u32 %v4304, %v4305
      %v4307 = vshll.u32 2131351028, %v4298
      %v4308 = vshrl.u32 2102212464, %v4299
      %v4309 = vor.u32 %v4307, %v4308
      %v4310 = vshll.u32 2102212464, %v4298
      %v4311 = vshrl.u32 920167782, %v4299
      %v4312 = vor.u32 %v4310, %v4311
      %v4313 = vshll.u32 920167782, %v4298
      %v4314 = vshrl.u32 1326507024, %v4299
      %v4315 = vor.u32 %v4313, %v4314
      %vm4316 = vcmp.lt.s32.totalorder %v4297, 1
      %vm4317 = vcmp.lt.s32.totalorder %v4297, 2
      %vm4318 = vcmp.lt.s32.totalorder %v4297, 3
      %vm4319 = vcmp.lt.s32.totalorder %v4297, 4
      %v4320 = vsel %vm4316, %v4300, %v4303
      %v4321 = vsel %vm4319, %v4309, 2102212464
      %v4322 = vsel %vm4318, %v4306, %v4321
      %v4323 = vsel %vm4317, %v4320, %v4322
      %v4324 = vsel %vm4316, %v4303, %v4306
      %v4325 = vsel %vm4319, %v4312, 920167782
      %v4326 = vsel %vm4318, %v4309, %v4325
      %v4327 = vsel %vm4317, %v4324, %v4326
      %v4328 = vsel %vm4316, %v4306, %v4309
      %v4329 = vsel %vm4319, %v4315, 1326507024
      %v4330 = vsel %vm4318, %v4312, %v4329
      %v4331 = vsel %vm4317, %v4328, %v4330
      %v4332 = vshll.u32 %v4292, 8
      %v4333 = vmul.u32.u64.compose %v4332, %v4331
      %v4334 = vextract.low.u32 %v4333
      %v4335 = vextract.high.u32 %v4333
      %v4336 = vmul.u32.u64.compose %v4332, %v4327
      %v4337 = vextract.low.u32 %v4336
      %v4338 = vextract.high.u32 %v4336
      %v4339 = vmul.u32 %v4332, %v4323
      %v4340 = vadd.s32 %v4335, %v4337
      %vm4341 = vc.u32 %v4335, %v4337
      %v4342 = vadd.s32 %v4338, 1
      %v4343 = vsel %vm4341, %v4342, %v4338
      %v4344 = vadd.s32 %v4339, %v4343
      %v4345 = vadd.s32 %v4344, 536870912
      %v4346 = vshrl.u32 %v4345, 30
      %v4347 = vshll.u32 %v4346, 30
      %v4348 = vsub.s32 %v4344, %v4347
      %vm4349 = vcmp.lt.s32.totalorder %v4348, 0
      %v4350 = vsub.s32 0, %v4348
      %v4351 = vsel %vm4349, %v4350, %v4348
      %v4352 = vclz %v4351
      %v4353 = vsub.s32 %v4352, 2
      %vm4354 = vcmp.gt.s32.totalorder 0, %v4353
      %v4355 = vsel %vm4354, 0, %v4353
      %v4356 = vsub.s32 32, %v4355
      %v4357 = vshll.u32 %v4348, %v4355
      %v4358 = vshrl.u32 %v4340, %v4356
      %v4359 = vor.u32 %v4357, %v4358
      %v4360 = vsub.s32 4294967266, %v4355
      %v4361 = vadd.s32 %v4360, 127
      %v4362 = vshll.u32 %v4361, 23
      %v4363 = vor.u32 4788187, %v4362
      %v4364 = vand.u32 2147483647, %v4363
      %v4366 = vcvt.s32.f32 %v4359
      %v4367 = vmul.f32 %v4366, %v4364
      %v4368 = vxor.u32 %v4367, 2147483648
      %v4369 = vsel %vm4286, %v4368, %v4367
      %v4370 = vsub.s32 4, %v4346
      %v4371 = vsel %vm4286, %v4370, %v4346
      %v4372 = vsel %vm4285, %v647, %v4369
      %v4373 = vsel %vm4285, 0, %v4371
      %v4374 = vcosq.f32.pop %v4372
      %v4375 = vsinq.f32.pop %v4372
      %vm4376 = vweird.f32 %v647
      %v4377 = vadd.s32 %v4373, 3
      %v4378 = vand.u32 %v4377, 3
      %vm4379 = vcmp.lt.s32.totalorder %v4378, 2
      %vm4380 = vcmp.eq.s32.totalorder %v4378, 0
      %v4381 = vxor.u32 %v4375, 2147483648
      %v4382 = vsel %vm4380, %v4374, %v4381
      %vm4383 = vcmp.eq.s32.totalorder %v4378, 2
      %v4384 = vxor.u32 %v4374, 2147483648
      %v4385 = vsel %vm4383, %v4384, %v4375
      %v4386 = vsel %vm4379, %v4382, %v4385
      %v4387 = vsel %vm4376, nan, %v4386
      %v4388 = vand.u32 2147483647, %v648
      %vm4389 = vcmp.le.f32.partialorder %v4388, 0.7853982
      %vm4390 = vcmp.lt.s32.totalorder %v648, 0
      %v4391 = vand.u32 %v648, 2139095040
      %v4392 = vshrl.u32 %v4391, 23
      %v4393 = vsub.s32 %v4392, 127
      %v4394 = vand.u32 2147483647, %v648
      %v4395 = vand.u32 %v4394, 8388607
      %v4396 = vor.u32 %v4395, 8388608
      %v4397 = vsub.s32 0, %v4396
      %v4398 = vadd.s32 %v4393, 1
      %vm4399 = vcmp.gt.s32.totalorder %v4398, 0
      %v4400 = vsel %vm4399, %v4398, 0
      %v4401 = vshrl.u32 %v4400, 5
      %v4402 = vand.u32 %v4400, 31
      %v4403 = vsub.s32 32, %v4402
      %v4404 = vshrl.u32 683565275, %v4403
      %v4405 = vshll.u32 683565275, %v4402
      %v4406 = vshrl.u32 2475754826, %v4403
      %v4407 = vor.u32 %v4405, %v4406
      %v4408 = vshll.u32 2475754826, %v4402
      %v4409 = vshrl.u32 2131351028, %v4403
      %v4410 = vor.u32 %v4408, %v4409
      %v4411 = vshll.u32 2131351028, %v4402
      %v4412 = vshrl.u32 2102212464, %v4403
      %v4413 = vor.u32 %v4411, %v4412
      %v4414 = vshll.u32 2102212464, %v4402
      %v4415 = vshrl.u32 920167782, %v4403
      %v4416 = vor.u32 %v4414, %v4415
      %v4417 = vshll.u32 920167782, %v4402
      %v4418 = vshrl.u32 1326507024, %v4403
      %v4419 = vor.u32 %v4417, %v4418
      %vm4420 = vcmp.lt.s32.totalorder %v4401, 1
      %vm4421 = vcmp.lt.s32.totalorder %v4401, 2
      %vm4422 = vcmp.lt.s32.totalorder %v4401, 3
      %vm4423 = vcmp.lt.s32.totalorder %v4401, 4
      %v4424 = vsel %vm4420, %v4404, %v4407
      %v4425 = vsel %vm4423, %v4413, 2102212464
      %v4426 = vsel %vm4422, %v4410, %v4425
      %v4427 = vsel %vm4421, %v4424, %v4426
      %v4428 = vsel %vm4420, %v4407, %v4410
      %v4429 = vsel %vm4423, %v4416, 920167782
      %v4430 = vsel %vm4422, %v4413, %v4429
      %v4431 = vsel %vm4421, %v4428, %v4430
      %v4432 = vsel %vm4420, %v4410, %v4413
      %v4433 = vsel %vm4423, %v4419, 1326507024
      %v4434 = vsel %vm4422, %v4416, %v4433
      %v4435 = vsel %vm4421, %v4432, %v4434
      %v4436 = vshll.u32 %v4396, 8
      %v4437 = vmul.u32.u64.compose %v4436, %v4435
      %v4438 = vextract.low.u32 %v4437
      %v4439 = vextract.high.u32 %v4437
      %v4440 = vmul.u32.u64.compose %v4436, %v4431
      %v4441 = vextract.low.u32 %v4440
      %v4442 = vextract.high.u32 %v4440
      %v4443 = vmul.u32 %v4436, %v4427
      %v4444 = vadd.s32 %v4439, %v4441
      %vm4445 = vc.u32 %v4439, %v4441
      %v4446 = vadd.s32 %v4442, 1
      %v4447 = vsel %vm4445, %v4446, %v4442
      %v4448 = vadd.s32 %v4443, %v4447
      %v4449 = vadd.s32 %v4448, 536870912
      %v4450 = vshrl.u32 %v4449, 30
      %v4451 = vshll.u32 %v4450, 30
      %v4452 = vsub.s32 %v4448, %v4451
      %vm4453 = vcmp.lt.s32.totalorder %v4452, 0
      %v4454 = vsub.s32 0, %v4452
      %v4455 = vsel %vm4453, %v4454, %v4452
      %v4456 = vclz %v4455
      %v4457 = vsub.s32 %v4456, 2
      %vm4458 = vcmp.gt.s32.totalorder 0, %v4457
      %v4459 = vsel %vm4458, 0, %v4457
      %v4460 = vsub.s32 32, %v4459
      %v4461 = vshll.u32 %v4452, %v4459
      %v4462 = vshrl.u32 %v4444, %v4460
      %v4463 = vor.u32 %v4461, %v4462
      %v4464 = vsub.s32 4294967266, %v4459
      %v4465 = vadd.s32 %v4464, 127
      %v4466 = vshll.u32 %v4465, 23
      %v4467 = vor.u32 4788187, %v4466
      %v4468 = vand.u32 2147483647, %v4467
      %v4470 = vcvt.s32.f32 %v4463
      %v4471 = vmul.f32 %v4470, %v4468
      %v4472 = vxor.u32 %v4471, 2147483648
      %v4473 = vsel %vm4390, %v4472, %v4471
      %v4474 = vsub.s32 4, %v4450
      %v4475 = vsel %vm4390, %v4474, %v4450
      %v4476 = vsel %vm4389, %v648, %v4473
      %v4477 = vsel %vm4389, 0, %v4475
      %v4478 = vcosq.f32.pop %v4476
      %v4479 = vsinq.f32.pop %v4476
      %vm4480 = vweird.f32 %v648
      %v4481 = vadd.s32 %v4477, 3
      %v4482 = vand.u32 %v4481, 3
      %vm4483 = vcmp.lt.s32.totalorder %v4482, 2
      %vm4484 = vcmp.eq.s32.totalorder %v4482, 0
      %v4485 = vxor.u32 %v4479, 2147483648
      %v4486 = vsel %vm4484, %v4478, %v4485
      %vm4487 = vcmp.eq.s32.totalorder %v4482, 2
      %v4488 = vxor.u32 %v4478, 2147483648
      %v4489 = vsel %vm4487, %v4488, %v4479
      %v4490 = vsel %vm4483, %v4486, %v4489
      %v4491 = vsel %vm4480, nan, %v4490
      %v4492 = vand.u32 2147483647, %v649
      %vm4493 = vcmp.le.f32.partialorder %v4492, 0.7853982
      %vm4494 = vcmp.lt.s32.totalorder %v649, 0
      %v4495 = vand.u32 %v649, 2139095040
      %v4496 = vshrl.u32 %v4495, 23
      %v4497 = vsub.s32 %v4496, 127
      %v4498 = vand.u32 2147483647, %v649
      %v4499 = vand.u32 %v4498, 8388607
      %v4500 = vor.u32 %v4499, 8388608
      %v4501 = vsub.s32 0, %v4500
      %v4502 = vadd.s32 %v4497, 1
      %vm4503 = vcmp.gt.s32.totalorder %v4502, 0
      %v4504 = vsel %vm4503, %v4502, 0
      %v4505 = vshrl.u32 %v4504, 5
      %v4506 = vand.u32 %v4504, 31
      %v4507 = vsub.s32 32, %v4506
      %v4508 = vshrl.u32 683565275, %v4507
      %v4509 = vshll.u32 683565275, %v4506
      %v4510 = vshrl.u32 2475754826, %v4507
      %v4511 = vor.u32 %v4509, %v4510
      %v4512 = vshll.u32 2475754826, %v4506
      %v4513 = vshrl.u32 2131351028, %v4507
      %v4514 = vor.u32 %v4512, %v4513
      %v4515 = vshll.u32 2131351028, %v4506
      %v4516 = vshrl.u32 2102212464, %v4507
      %v4517 = vor.u32 %v4515, %v4516
      %v4518 = vshll.u32 2102212464, %v4506
      %v4519 = vshrl.u32 920167782, %v4507
      %v4520 = vor.u32 %v4518, %v4519
      %v4521 = vshll.u32 920167782, %v4506
      %v4522 = vshrl.u32 1326507024, %v4507
      %v4523 = vor.u32 %v4521, %v4522
      %vm4524 = vcmp.lt.s32.totalorder %v4505, 1
      %vm4525 = vcmp.lt.s32.totalorder %v4505, 2
      %vm4526 = vcmp.lt.s32.totalorder %v4505, 3
      %vm4527 = vcmp.lt.s32.totalorder %v4505, 4
      %v4528 = vsel %vm4524, %v4508, %v4511
      %v4529 = vsel %vm4527, %v4517, 2102212464
      %v4530 = vsel %vm4526, %v4514, %v4529
      %v4531 = vsel %vm4525, %v4528, %v4530
      %v4532 = vsel %vm4524, %v4511, %v4514
      %v4533 = vsel %vm4527, %v4520, 920167782
      %v4534 = vsel %vm4526, %v4517, %v4533
      %v4535 = vsel %vm4525, %v4532, %v4534
      %v4536 = vsel %vm4524, %v4514, %v4517
      %v4537 = vsel %vm4527, %v4523, 1326507024
      %v4538 = vsel %vm4526, %v4520, %v4537
      %v4539 = vsel %vm4525, %v4536, %v4538
      %v4540 = vshll.u32 %v4500, 8
      %v4541 = vmul.u32.u64.compose %v4540, %v4539
      %v4542 = vextract.low.u32 %v4541
      %v4543 = vextract.high.u32 %v4541
      %v4544 = vmul.u32.u64.compose %v4540, %v4535
      %v4545 = vextract.low.u32 %v4544
      %v4546 = vextract.high.u32 %v4544
      %v4547 = vmul.u32 %v4540, %v4531
      %v4548 = vadd.s32 %v4543, %v4545
      %vm4549 = vc.u32 %v4543, %v4545
      %v4550 = vadd.s32 %v4546, 1
      %v4551 = vsel %vm4549, %v4550, %v4546
      %v4552 = vadd.s32 %v4547, %v4551
      %v4553 = vadd.s32 %v4552, 536870912
      %v4554 = vshrl.u32 %v4553, 30
      %v4555 = vshll.u32 %v4554, 30
      %v4556 = vsub.s32 %v4552, %v4555
      %vm4557 = vcmp.lt.s32.totalorder %v4556, 0
      %v4558 = vsub.s32 0, %v4556
      %v4559 = vsel %vm4557, %v4558, %v4556
      %v4560 = vclz %v4559
      %v4561 = vsub.s32 %v4560, 2
      %vm4562 = vcmp.gt.s32.totalorder 0, %v4561
      %v4563 = vsel %vm4562, 0, %v4561
      %v4564 = vsub.s32 32, %v4563
      %v4565 = vshll.u32 %v4556, %v4563
      %v4566 = vshrl.u32 %v4548, %v4564
      %v4567 = vor.u32 %v4565, %v4566
      %v4568 = vsub.s32 4294967266, %v4563
      %v4569 = vadd.s32 %v4568, 127
      %v4570 = vshll.u32 %v4569, 23
      %v4571 = vor.u32 4788187, %v4570
      %v4572 = vand.u32 2147483647, %v4571
      %v4574 = vcvt.s32.f32 %v4567
      %v4575 = vmul.f32 %v4574, %v4572
      %v4576 = vxor.u32 %v4575, 2147483648
      %v4577 = vsel %vm4494, %v4576, %v4575
      %v4578 = vsub.s32 4, %v4554
      %v4579 = vsel %vm4494, %v4578, %v4554
      %v4580 = vsel %vm4493, %v649, %v4577
      %v4581 = vsel %vm4493, 0, %v4579
      %v4582 = vcosq.f32.pop %v4580
      %v4583 = vsinq.f32.pop %v4580
      %vm4584 = vweird.f32 %v649
      %v4585 = vadd.s32 %v4581, 3
      %v4586 = vand.u32 %v4585, 3
      %vm4587 = vcmp.lt.s32.totalorder %v4586, 2
      %vm4588 = vcmp.eq.s32.totalorder %v4586, 0
      %v4589 = vxor.u32 %v4583, 2147483648
      %v4590 = vsel %vm4588, %v4582, %v4589
      %vm4591 = vcmp.eq.s32.totalorder %v4586, 2
      %v4592 = vxor.u32 %v4582, 2147483648
      %v4593 = vsel %vm4591, %v4592, %v4583
      %v4594 = vsel %vm4587, %v4590, %v4593
      %v4595 = vsel %vm4584, nan, %v4594
      %v4596 = vand.u32 2147483647, %v650
      %vm4597 = vcmp.le.f32.partialorder %v4596, 0.7853982
      %vm4598 = vcmp.lt.s32.totalorder %v650, 0
      %v4599 = vand.u32 %v650, 2139095040
      %v4600 = vshrl.u32 %v4599, 23
      %v4601 = vsub.s32 %v4600, 127
      %v4602 = vand.u32 2147483647, %v650
      %v4603 = vand.u32 %v4602, 8388607
      %v4604 = vor.u32 %v4603, 8388608
      %v4605 = vsub.s32 0, %v4604
      %v4606 = vadd.s32 %v4601, 1
      %vm4607 = vcmp.gt.s32.totalorder %v4606, 0
      %v4608 = vsel %vm4607, %v4606, 0
      %v4609 = vshrl.u32 %v4608, 5
      %v4610 = vand.u32 %v4608, 31
      %v4611 = vsub.s32 32, %v4610
      %v4612 = vshrl.u32 683565275, %v4611
      %v4613 = vshll.u32 683565275, %v4610
      %v4614 = vshrl.u32 2475754826, %v4611
      %v4615 = vor.u32 %v4613, %v4614
      %v4616 = vshll.u32 2475754826, %v4610
      %v4617 = vshrl.u32 2131351028, %v4611
      %v4618 = vor.u32 %v4616, %v4617
      %v4619 = vshll.u32 2131351028, %v4610
      %v4620 = vshrl.u32 2102212464, %v4611
      %v4621 = vor.u32 %v4619, %v4620
      %v4622 = vshll.u32 2102212464, %v4610
      %v4623 = vshrl.u32 920167782, %v4611
      %v4624 = vor.u32 %v4622, %v4623
      %v4625 = vshll.u32 920167782, %v4610
      %v4626 = vshrl.u32 1326507024, %v4611
      %v4627 = vor.u32 %v4625, %v4626
      %vm4628 = vcmp.lt.s32.totalorder %v4609, 1
      %vm4629 = vcmp.lt.s32.totalorder %v4609, 2
      %vm4630 = vcmp.lt.s32.totalorder %v4609, 3
      %vm4631 = vcmp.lt.s32.totalorder %v4609, 4
      %v4632 = vsel %vm4628, %v4612, %v4615
      %v4633 = vsel %vm4631, %v4621, 2102212464
      %v4634 = vsel %vm4630, %v4618, %v4633
      %v4635 = vsel %vm4629, %v4632, %v4634
      %v4636 = vsel %vm4628, %v4615, %v4618
      %v4637 = vsel %vm4631, %v4624, 920167782
      %v4638 = vsel %vm4630, %v4621, %v4637
      %v4639 = vsel %vm4629, %v4636, %v4638
      %v4640 = vsel %vm4628, %v4618, %v4621
      %v4641 = vsel %vm4631, %v4627, 1326507024
      %v4642 = vsel %vm4630, %v4624, %v4641
      %v4643 = vsel %vm4629, %v4640, %v4642
      %v4644 = vshll.u32 %v4604, 8
      %v4645 = vmul.u32.u64.compose %v4644, %v4643
      %v4646 = vextract.low.u32 %v4645
      %v4647 = vextract.high.u32 %v4645
      %v4648 = vmul.u32.u64.compose %v4644, %v4639
      %v4649 = vextract.low.u32 %v4648
      %v4650 = vextract.high.u32 %v4648
      %v4651 = vmul.u32 %v4644, %v4635
      %v4652 = vadd.s32 %v4647, %v4649
      %vm4653 = vc.u32 %v4647, %v4649
      %v4654 = vadd.s32 %v4650, 1
      %v4655 = vsel %vm4653, %v4654, %v4650
      %v4656 = vadd.s32 %v4651, %v4655
      %v4657 = vadd.s32 %v4656, 536870912
      %v4658 = vshrl.u32 %v4657, 30
      %v4659 = vshll.u32 %v4658, 30
      %v4660 = vsub.s32 %v4656, %v4659
      %vm4661 = vcmp.lt.s32.totalorder %v4660, 0
      %v4662 = vsub.s32 0, %v4660
      %v4663 = vsel %vm4661, %v4662, %v4660
      %v4664 = vclz %v4663
      %v4665 = vsub.s32 %v4664, 2
      %vm4666 = vcmp.gt.s32.totalorder 0, %v4665
      %v4667 = vsel %vm4666, 0, %v4665
      %v4668 = vsub.s32 32, %v4667
      %v4669 = vshll.u32 %v4660, %v4667
      %v4670 = vshrl.u32 %v4652, %v4668
      %v4671 = vor.u32 %v4669, %v4670
      %v4672 = vsub.s32 4294967266, %v4667
      %v4673 = vadd.s32 %v4672, 127
      %v4674 = vshll.u32 %v4673, 23
      %v4675 = vor.u32 4788187, %v4674
      %v4676 = vand.u32 2147483647, %v4675
      %v4678 = vcvt.s32.f32 %v4671
      %v4679 = vmul.f32 %v4678, %v4676
      %v4680 = vxor.u32 %v4679, 2147483648
      %v4681 = vsel %vm4598, %v4680, %v4679
      %v4682 = vsub.s32 4, %v4658
      %v4683 = vsel %vm4598, %v4682, %v4658
      %v4684 = vsel %vm4597, %v650, %v4681
      %v4685 = vsel %vm4597, 0, %v4683
      %v4686 = vcosq.f32.pop %v4684
      %v4687 = vsinq.f32.pop %v4684
      %vm4688 = vweird.f32 %v650
      %v4689 = vadd.s32 %v4685, 3
      %v4690 = vand.u32 %v4689, 3
      %vm4691 = vcmp.lt.s32.totalorder %v4690, 2
      %vm4692 = vcmp.eq.s32.totalorder %v4690, 0
      %v4693 = vxor.u32 %v4687, 2147483648
      %v4694 = vsel %vm4692, %v4686, %v4693
      %vm4695 = vcmp.eq.s32.totalorder %v4690, 2
      %v4696 = vxor.u32 %v4686, 2147483648
      %v4697 = vsel %vm4695, %v4696, %v4687
      %v4698 = vsel %vm4691, %v4694, %v4697
      %v4699 = vsel %vm4688, nan, %v4698
      %v4700 = vand.u32 2147483647, %v651
      %vm4701 = vcmp.le.f32.partialorder %v4700, 0.7853982
      %vm4702 = vcmp.lt.s32.totalorder %v651, 0
      %v4703 = vand.u32 %v651, 2139095040
      %v4704 = vshrl.u32 %v4703, 23
      %v4705 = vsub.s32 %v4704, 127
      %v4706 = vand.u32 2147483647, %v651
      %v4707 = vand.u32 %v4706, 8388607
      %v4708 = vor.u32 %v4707, 8388608
      %v4709 = vsub.s32 0, %v4708
      %v4710 = vadd.s32 %v4705, 1
      %vm4711 = vcmp.gt.s32.totalorder %v4710, 0
      %v4712 = vsel %vm4711, %v4710, 0
      %v4713 = vshrl.u32 %v4712, 5
      %v4714 = vand.u32 %v4712, 31
      %v4715 = vsub.s32 32, %v4714
      %v4716 = vshrl.u32 683565275, %v4715
      %v4717 = vshll.u32 683565275, %v4714
      %v4718 = vshrl.u32 2475754826, %v4715
      %v4719 = vor.u32 %v4717, %v4718
      %v4720 = vshll.u32 2475754826, %v4714
      %v4721 = vshrl.u32 2131351028, %v4715
      %v4722 = vor.u32 %v4720, %v4721
      %v4723 = vshll.u32 2131351028, %v4714
      %v4724 = vshrl.u32 2102212464, %v4715
      %v4725 = vor.u32 %v4723, %v4724
      %v4726 = vshll.u32 2102212464, %v4714
      %v4727 = vshrl.u32 920167782, %v4715
      %v4728 = vor.u32 %v4726, %v4727
      %v4729 = vshll.u32 920167782, %v4714
      %v4730 = vshrl.u32 1326507024, %v4715
      %v4731 = vor.u32 %v4729, %v4730
      %vm4732 = vcmp.lt.s32.totalorder %v4713, 1
      %vm4733 = vcmp.lt.s32.totalorder %v4713, 2
      %vm4734 = vcmp.lt.s32.totalorder %v4713, 3
      %vm4735 = vcmp.lt.s32.totalorder %v4713, 4
      %v4736 = vsel %vm4732, %v4716, %v4719
      %v4737 = vsel %vm4735, %v4725, 2102212464
      %v4738 = vsel %vm4734, %v4722, %v4737
      %v4739 = vsel %vm4733, %v4736, %v4738
      %v4740 = vsel %vm4732, %v4719, %v4722
      %v4741 = vsel %vm4735, %v4728, 920167782
      %v4742 = vsel %vm4734, %v4725, %v4741
      %v4743 = vsel %vm4733, %v4740, %v4742
      %v4744 = vsel %vm4732, %v4722, %v4725
      %v4745 = vsel %vm4735, %v4731, 1326507024
      %v4746 = vsel %vm4734, %v4728, %v4745
      %v4747 = vsel %vm4733, %v4744, %v4746
      %v4748 = vshll.u32 %v4708, 8
      %v4749 = vmul.u32.u64.compose %v4748, %v4747
      %v4750 = vextract.low.u32 %v4749
      %v4751 = vextract.high.u32 %v4749
      %v4752 = vmul.u32.u64.compose %v4748, %v4743
      %v4753 = vextract.low.u32 %v4752
      %v4754 = vextract.high.u32 %v4752
      %v4755 = vmul.u32 %v4748, %v4739
      %v4756 = vadd.s32 %v4751, %v4753
      %vm4757 = vc.u32 %v4751, %v4753
      %v4758 = vadd.s32 %v4754, 1
      %v4759 = vsel %vm4757, %v4758, %v4754
      %v4760 = vadd.s32 %v4755, %v4759
      %v4761 = vadd.s32 %v4760, 536870912
      %v4762 = vshrl.u32 %v4761, 30
      %v4763 = vshll.u32 %v4762, 30
      %v4764 = vsub.s32 %v4760, %v4763
      %vm4765 = vcmp.lt.s32.totalorder %v4764, 0
      %v4766 = vsub.s32 0, %v4764
      %v4767 = vsel %vm4765, %v4766, %v4764
      %v4768 = vclz %v4767
      %v4769 = vsub.s32 %v4768, 2
      %vm4770 = vcmp.gt.s32.totalorder 0, %v4769
      %v4771 = vsel %vm4770, 0, %v4769
      %v4772 = vsub.s32 32, %v4771
      %v4773 = vshll.u32 %v4764, %v4771
      %v4774 = vshrl.u32 %v4756, %v4772
      %v4775 = vor.u32 %v4773, %v4774
      %v4776 = vsub.s32 4294967266, %v4771
      %v4777 = vadd.s32 %v4776, 127
      %v4778 = vshll.u32 %v4777, 23
      %v4779 = vor.u32 4788187, %v4778
      %v4780 = vand.u32 2147483647, %v4779
      %v4782 = vcvt.s32.f32 %v4775
      %v4783 = vmul.f32 %v4782, %v4780
      %v4784 = vxor.u32 %v4783, 2147483648
      %v4785 = vsel %vm4702, %v4784, %v4783
      %v4786 = vsub.s32 4, %v4762
      %v4787 = vsel %vm4702, %v4786, %v4762
      %v4788 = vsel %vm4701, %v651, %v4785
      %v4789 = vsel %vm4701, 0, %v4787
      %v4790 = vcosq.f32.pop %v4788
      %v4791 = vsinq.f32.pop %v4788
      %vm4792 = vweird.f32 %v651
      %v4793 = vadd.s32 %v4789, 3
      %v4794 = vand.u32 %v4793, 3
      %vm4795 = vcmp.lt.s32.totalorder %v4794, 2
      %vm4796 = vcmp.eq.s32.totalorder %v4794, 0
      %v4797 = vxor.u32 %v4791, 2147483648
      %v4798 = vsel %vm4796, %v4790, %v4797
      %vm4799 = vcmp.eq.s32.totalorder %v4794, 2
      %v4800 = vxor.u32 %v4790, 2147483648
      %v4801 = vsel %vm4799, %v4800, %v4791
      %v4802 = vsel %vm4795, %v4798, %v4801
      %v4803 = vsel %vm4792, nan, %v4802
      %v4804 = vand.u32 2147483647, %v652
      %vm4805 = vcmp.le.f32.partialorder %v4804, 0.7853982
      %vm4806 = vcmp.lt.s32.totalorder %v652, 0
      %v4807 = vand.u32 %v652, 2139095040
      %v4808 = vshrl.u32 %v4807, 23
      %v4809 = vsub.s32 %v4808, 127
      %v4810 = vand.u32 2147483647, %v652
      %v4811 = vand.u32 %v4810, 8388607
      %v4812 = vor.u32 %v4811, 8388608
      %v4813 = vsub.s32 0, %v4812
      %v4814 = vadd.s32 %v4809, 1
      %vm4815 = vcmp.gt.s32.totalorder %v4814, 0
      %v4816 = vsel %vm4815, %v4814, 0
      %v4817 = vshrl.u32 %v4816, 5
      %v4818 = vand.u32 %v4816, 31
      %v4819 = vsub.s32 32, %v4818
      %v4820 = vshrl.u32 683565275, %v4819
      %v4821 = vshll.u32 683565275, %v4818
      %v4822 = vshrl.u32 2475754826, %v4819
      %v4823 = vor.u32 %v4821, %v4822
      %v4824 = vshll.u32 2475754826, %v4818
      %v4825 = vshrl.u32 2131351028, %v4819
      %v4826 = vor.u32 %v4824, %v4825
      %v4827 = vshll.u32 2131351028, %v4818
      %v4828 = vshrl.u32 2102212464, %v4819
      %v4829 = vor.u32 %v4827, %v4828
      %v4830 = vshll.u32 2102212464, %v4818
      %v4831 = vshrl.u32 920167782, %v4819
      %v4832 = vor.u32 %v4830, %v4831
      %v4833 = vshll.u32 920167782, %v4818
      %v4834 = vshrl.u32 1326507024, %v4819
      %v4835 = vor.u32 %v4833, %v4834
      %vm4836 = vcmp.lt.s32.totalorder %v4817, 1
      %vm4837 = vcmp.lt.s32.totalorder %v4817, 2
      %vm4838 = vcmp.lt.s32.totalorder %v4817, 3
      %vm4839 = vcmp.lt.s32.totalorder %v4817, 4
      %v4840 = vsel %vm4836, %v4820, %v4823
      %v4841 = vsel %vm4839, %v4829, 2102212464
      %v4842 = vsel %vm4838, %v4826, %v4841
      %v4843 = vsel %vm4837, %v4840, %v4842
      %v4844 = vsel %vm4836, %v4823, %v4826
      %v4845 = vsel %vm4839, %v4832, 920167782
      %v4846 = vsel %vm4838, %v4829, %v4845
      %v4847 = vsel %vm4837, %v4844, %v4846
      %v4848 = vsel %vm4836, %v4826, %v4829
      %v4849 = vsel %vm4839, %v4835, 1326507024
      %v4850 = vsel %vm4838, %v4832, %v4849
      %v4851 = vsel %vm4837, %v4848, %v4850
      %v4852 = vshll.u32 %v4812, 8
      %v4853 = vmul.u32.u64.compose %v4852, %v4851
      %v4854 = vextract.low.u32 %v4853
      %v4855 = vextract.high.u32 %v4853
      %v4856 = vmul.u32.u64.compose %v4852, %v4847
      %v4857 = vextract.low.u32 %v4856
      %v4858 = vextract.high.u32 %v4856
      %v4859 = vmul.u32 %v4852, %v4843
      %v4860 = vadd.s32 %v4855, %v4857
      %vm4861 = vc.u32 %v4855, %v4857
      %v4862 = vadd.s32 %v4858, 1
      %v4863 = vsel %vm4861, %v4862, %v4858
      %v4864 = vadd.s32 %v4859, %v4863
      %v4865 = vadd.s32 %v4864, 536870912
      %v4866 = vshrl.u32 %v4865, 30
      %v4867 = vshll.u32 %v4866, 30
      %v4868 = vsub.s32 %v4864, %v4867
      %vm4869 = vcmp.lt.s32.totalorder %v4868, 0
      %v4870 = vsub.s32 0, %v4868
      %v4871 = vsel %vm4869, %v4870, %v4868
      %v4872 = vclz %v4871
      %v4873 = vsub.s32 %v4872, 2
      %vm4874 = vcmp.gt.s32.totalorder 0, %v4873
      %v4875 = vsel %vm4874, 0, %v4873
      %v4876 = vsub.s32 32, %v4875
      %v4877 = vshll.u32 %v4868, %v4875
      %v4878 = vshrl.u32 %v4860, %v4876
      %v4879 = vor.u32 %v4877, %v4878
      %v4880 = vsub.s32 4294967266, %v4875
      %v4881 = vadd.s32 %v4880, 127
      %v4882 = vshll.u32 %v4881, 23
      %v4883 = vor.u32 4788187, %v4882
      %v4884 = vand.u32 2147483647, %v4883
      %v4886 = vcvt.s32.f32 %v4879
      %v4887 = vmul.f32 %v4886, %v4884
      %v4888 = vxor.u32 %v4887, 2147483648
      %v4889 = vsel %vm4806, %v4888, %v4887
      %v4890 = vsub.s32 4, %v4866
      %v4891 = vsel %vm4806, %v4890, %v4866
      %v4892 = vsel %vm4805, %v652, %v4889
      %v4893 = vsel %vm4805, 0, %v4891
      %v4894 = vcosq.f32.pop %v4892
      %v4895 = vsinq.f32.pop %v4892
      %vm4896 = vweird.f32 %v652
      %v4897 = vadd.s32 %v4893, 3
      %v4898 = vand.u32 %v4897, 3
      %vm4899 = vcmp.lt.s32.totalorder %v4898, 2
      %vm4900 = vcmp.eq.s32.totalorder %v4898, 0
      %v4901 = vxor.u32 %v4895, 2147483648
      %v4902 = vsel %vm4900, %v4894, %v4901
      %vm4903 = vcmp.eq.s32.totalorder %v4898, 2
      %v4904 = vxor.u32 %v4894, 2147483648
      %v4905 = vsel %vm4903, %v4904, %v4895
      %v4906 = vsel %vm4899, %v4902, %v4905
      %v4907 = vsel %vm4896, nan, %v4906
      %v4908 = vand.u32 2147483647, %v653
      %vm4909 = vcmp.le.f32.partialorder %v4908, 0.7853982
      %vm4910 = vcmp.lt.s32.totalorder %v653, 0
      %v4911 = vand.u32 %v653, 2139095040
      %v4912 = vshrl.u32 %v4911, 23
      %v4913 = vsub.s32 %v4912, 127
      %v4914 = vand.u32 2147483647, %v653
      %v4915 = vand.u32 %v4914, 8388607
      %v4916 = vor.u32 %v4915, 8388608
      %v4917 = vsub.s32 0, %v4916
      %v4918 = vadd.s32 %v4913, 1
      %vm4919 = vcmp.gt.s32.totalorder %v4918, 0
      %v4920 = vsel %vm4919, %v4918, 0
      %v4921 = vshrl.u32 %v4920, 5
      %v4922 = vand.u32 %v4920, 31
      %v4923 = vsub.s32 32, %v4922
      %v4924 = vshrl.u32 683565275, %v4923
      %v4925 = vshll.u32 683565275, %v4922
      %v4926 = vshrl.u32 2475754826, %v4923
      %v4927 = vor.u32 %v4925, %v4926
      %v4928 = vshll.u32 2475754826, %v4922
      %v4929 = vshrl.u32 2131351028, %v4923
      %v4930 = vor.u32 %v4928, %v4929
      %v4931 = vshll.u32 2131351028, %v4922
      %v4932 = vshrl.u32 2102212464, %v4923
      %v4933 = vor.u32 %v4931, %v4932
      %v4934 = vshll.u32 2102212464, %v4922
      %v4935 = vshrl.u32 920167782, %v4923
      %v4936 = vor.u32 %v4934, %v4935
      %v4937 = vshll.u32 920167782, %v4922
      %v4938 = vshrl.u32 1326507024, %v4923
      %v4939 = vor.u32 %v4937, %v4938
      %vm4940 = vcmp.lt.s32.totalorder %v4921, 1
      %vm4941 = vcmp.lt.s32.totalorder %v4921, 2
      %vm4942 = vcmp.lt.s32.totalorder %v4921, 3
      %vm4943 = vcmp.lt.s32.totalorder %v4921, 4
      %v4944 = vsel %vm4940, %v4924, %v4927
      %v4945 = vsel %vm4943, %v4933, 2102212464
      %v4946 = vsel %vm4942, %v4930, %v4945
      %v4947 = vsel %vm4941, %v4944, %v4946
      %v4948 = vsel %vm4940, %v4927, %v4930
      %v4949 = vsel %vm4943, %v4936, 920167782
      %v4950 = vsel %vm4942, %v4933, %v4949
      %v4951 = vsel %vm4941, %v4948, %v4950
      %v4952 = vsel %vm4940, %v4930, %v4933
      %v4953 = vsel %vm4943, %v4939, 1326507024
      %v4954 = vsel %vm4942, %v4936, %v4953
      %v4955 = vsel %vm4941, %v4952, %v4954
      %v4956 = vshll.u32 %v4916, 8
      %v4957 = vmul.u32.u64.compose %v4956, %v4955
      %v4958 = vextract.low.u32 %v4957
      %v4959 = vextract.high.u32 %v4957
      %v4960 = vmul.u32.u64.compose %v4956, %v4951
      %v4961 = vextract.low.u32 %v4960
      %v4962 = vextract.high.u32 %v4960
      %v4963 = vmul.u32 %v4956, %v4947
      %v4964 = vadd.s32 %v4959, %v4961
      %vm4965 = vc.u32 %v4959, %v4961
      %v4966 = vadd.s32 %v4962, 1
      %v4967 = vsel %vm4965, %v4966, %v4962
      %v4968 = vadd.s32 %v4963, %v4967
      %v4969 = vadd.s32 %v4968, 536870912
      %v4970 = vshrl.u32 %v4969, 30
      %v4971 = vshll.u32 %v4970, 30
      %v4972 = vsub.s32 %v4968, %v4971
      %vm4973 = vcmp.lt.s32.totalorder %v4972, 0
      %v4974 = vsub.s32 0, %v4972
      %v4975 = vsel %vm4973, %v4974, %v4972
      %v4976 = vclz %v4975
      %v4977 = vsub.s32 %v4976, 2
      %vm4978 = vcmp.gt.s32.totalorder 0, %v4977
      %v4979 = vsel %vm4978, 0, %v4977
      %v4980 = vsub.s32 32, %v4979
      %v4981 = vshll.u32 %v4972, %v4979
      %v4982 = vshrl.u32 %v4964, %v4980
      %v4983 = vor.u32 %v4981, %v4982
      %v4984 = vsub.s32 4294967266, %v4979
      %v4985 = vadd.s32 %v4984, 127
      %v4986 = vshll.u32 %v4985, 23
      %v4987 = vor.u32 4788187, %v4986
      %v4988 = vand.u32 2147483647, %v4987
      %v4990 = vcvt.s32.f32 %v4983
      %v4991 = vmul.f32 %v4990, %v4988
      %v4992 = vxor.u32 %v4991, 2147483648
      %v4993 = vsel %vm4910, %v4992, %v4991
      %v4994 = vsub.s32 4, %v4970
      %v4995 = vsel %vm4910, %v4994, %v4970
      %v4996 = vsel %vm4909, %v653, %v4993
      %v4997 = vsel %vm4909, 0, %v4995
      %v4998 = vcosq.f32.pop %v4996
      %v4999 = vsinq.f32.pop %v4996
      %vm5000 = vweird.f32 %v653
      %v5001 = vadd.s32 %v4997, 3
      %v5002 = vand.u32 %v5001, 3
      %vm5003 = vcmp.lt.s32.totalorder %v5002, 2
      %vm5004 = vcmp.eq.s32.totalorder %v5002, 0
      %v5005 = vxor.u32 %v4999, 2147483648
      %v5006 = vsel %vm5004, %v4998, %v5005
      %vm5007 = vcmp.eq.s32.totalorder %v5002, 2
      %v5008 = vxor.u32 %v4998, 2147483648
      %v5009 = vsel %vm5007, %v5008, %v4999
      %v5010 = vsel %vm5003, %v5006, %v5009
      %v5011 = vsel %vm5000, nan, %v5010
      %v5012 = vand.u32 2147483647, %v654
      %vm5013 = vcmp.le.f32.partialorder %v5012, 0.7853982
      %vm5014 = vcmp.lt.s32.totalorder %v654, 0
      %v5015 = vand.u32 %v654, 2139095040
      %v5016 = vshrl.u32 %v5015, 23
      %v5017 = vsub.s32 %v5016, 127
      %v5018 = vand.u32 2147483647, %v654
      %v5019 = vand.u32 %v5018, 8388607
      %v5020 = vor.u32 %v5019, 8388608
      %v5021 = vsub.s32 0, %v5020
      %v5022 = vadd.s32 %v5017, 1
      %vm5023 = vcmp.gt.s32.totalorder %v5022, 0
      %v5024 = vsel %vm5023, %v5022, 0
      %v5025 = vshrl.u32 %v5024, 5
      %v5026 = vand.u32 %v5024, 31
      %v5027 = vsub.s32 32, %v5026
      %v5028 = vshrl.u32 683565275, %v5027
      %v5029 = vshll.u32 683565275, %v5026
      %v5030 = vshrl.u32 2475754826, %v5027
      %v5031 = vor.u32 %v5029, %v5030
      %v5032 = vshll.u32 2475754826, %v5026
      %v5033 = vshrl.u32 2131351028, %v5027
      %v5034 = vor.u32 %v5032, %v5033
      %v5035 = vshll.u32 2131351028, %v5026
      %v5036 = vshrl.u32 2102212464, %v5027
      %v5037 = vor.u32 %v5035, %v5036
      %v5038 = vshll.u32 2102212464, %v5026
      %v5039 = vshrl.u32 920167782, %v5027
      %v5040 = vor.u32 %v5038, %v5039
      %v5041 = vshll.u32 920167782, %v5026
      %v5042 = vshrl.u32 1326507024, %v5027
      %v5043 = vor.u32 %v5041, %v5042
      %vm5044 = vcmp.lt.s32.totalorder %v5025, 1
      %vm5045 = vcmp.lt.s32.totalorder %v5025, 2
      %vm5046 = vcmp.lt.s32.totalorder %v5025, 3
      %vm5047 = vcmp.lt.s32.totalorder %v5025, 4
      %v5048 = vsel %vm5044, %v5028, %v5031
      %v5049 = vsel %vm5047, %v5037, 2102212464
      %v5050 = vsel %vm5046, %v5034, %v5049
      %v5051 = vsel %vm5045, %v5048, %v5050
      %v5052 = vsel %vm5044, %v5031, %v5034
      %v5053 = vsel %vm5047, %v5040, 920167782
      %v5054 = vsel %vm5046, %v5037, %v5053
      %v5055 = vsel %vm5045, %v5052, %v5054
      %v5056 = vsel %vm5044, %v5034, %v5037
      %v5057 = vsel %vm5047, %v5043, 1326507024
      %v5058 = vsel %vm5046, %v5040, %v5057
      %v5059 = vsel %vm5045, %v5056, %v5058
      %v5060 = vshll.u32 %v5020, 8
      %v5061 = vmul.u32.u64.compose %v5060, %v5059
      %v5062 = vextract.low.u32 %v5061
      %v5063 = vextract.high.u32 %v5061
      %v5064 = vmul.u32.u64.compose %v5060, %v5055
      %v5065 = vextract.low.u32 %v5064
      %v5066 = vextract.high.u32 %v5064
      %v5067 = vmul.u32 %v5060, %v5051
      %v5068 = vadd.s32 %v5063, %v5065
      %vm5069 = vc.u32 %v5063, %v5065
      %v5070 = vadd.s32 %v5066, 1
      %v5071 = vsel %vm5069, %v5070, %v5066
      %v5072 = vadd.s32 %v5067, %v5071
      %v5073 = vadd.s32 %v5072, 536870912
      %v5074 = vshrl.u32 %v5073, 30
      %v5075 = vshll.u32 %v5074, 30
      %v5076 = vsub.s32 %v5072, %v5075
      %vm5077 = vcmp.lt.s32.totalorder %v5076, 0
      %v5078 = vsub.s32 0, %v5076
      %v5079 = vsel %vm5077, %v5078, %v5076
      %v5080 = vclz %v5079
      %v5081 = vsub.s32 %v5080, 2
      %vm5082 = vcmp.gt.s32.totalorder 0, %v5081
      %v5083 = vsel %vm5082, 0, %v5081
      %v5084 = vsub.s32 32, %v5083
      %v5085 = vshll.u32 %v5076, %v5083
      %v5086 = vshrl.u32 %v5068, %v5084
      %v5087 = vor.u32 %v5085, %v5086
      %v5088 = vsub.s32 4294967266, %v5083
      %v5089 = vadd.s32 %v5088, 127
      %v5090 = vshll.u32 %v5089, 23
      %v5091 = vor.u32 4788187, %v5090
      %v5092 = vand.u32 2147483647, %v5091
      %v5094 = vcvt.s32.f32 %v5087
      %v5095 = vmul.f32 %v5094, %v5092
      %v5096 = vxor.u32 %v5095, 2147483648
      %v5097 = vsel %vm5014, %v5096, %v5095
      %v5098 = vsub.s32 4, %v5074
      %v5099 = vsel %vm5014, %v5098, %v5074
      %v5100 = vsel %vm5013, %v654, %v5097
      %v5101 = vsel %vm5013, 0, %v5099
      %v5102 = vcosq.f32.pop %v5100
      %v5103 = vsinq.f32.pop %v5100
      %vm5104 = vweird.f32 %v654
      %v5105 = vadd.s32 %v5101, 3
      %v5106 = vand.u32 %v5105, 3
      %vm5107 = vcmp.lt.s32.totalorder %v5106, 2
      %vm5108 = vcmp.eq.s32.totalorder %v5106, 0
      %v5109 = vxor.u32 %v5103, 2147483648
      %v5110 = vsel %vm5108, %v5102, %v5109
      %vm5111 = vcmp.eq.s32.totalorder %v5106, 2
      %v5112 = vxor.u32 %v5102, 2147483648
      %v5113 = vsel %vm5111, %v5112, %v5103
      %v5114 = vsel %vm5107, %v5110, %v5113
      %v5115 = vsel %vm5104, nan, %v5114
      %v5116 = vand.u32 2147483647, %v655
      %vm5117 = vcmp.le.f32.partialorder %v5116, 0.7853982
      %vm5118 = vcmp.lt.s32.totalorder %v655, 0
      %v5119 = vand.u32 %v655, 2139095040
      %v5120 = vshrl.u32 %v5119, 23
      %v5121 = vsub.s32 %v5120, 127
      %v5122 = vand.u32 2147483647, %v655
      %v5123 = vand.u32 %v5122, 8388607
      %v5124 = vor.u32 %v5123, 8388608
      %v5125 = vsub.s32 0, %v5124
      %v5126 = vadd.s32 %v5121, 1
      %vm5127 = vcmp.gt.s32.totalorder %v5126, 0
      %v5128 = vsel %vm5127, %v5126, 0
      %v5129 = vshrl.u32 %v5128, 5
      %v5130 = vand.u32 %v5128, 31
      %v5131 = vsub.s32 32, %v5130
      %v5132 = vshrl.u32 683565275, %v5131
      %v5133 = vshll.u32 683565275, %v5130
      %v5134 = vshrl.u32 2475754826, %v5131
      %v5135 = vor.u32 %v5133, %v5134
      %v5136 = vshll.u32 2475754826, %v5130
      %v5137 = vshrl.u32 2131351028, %v5131
      %v5138 = vor.u32 %v5136, %v5137
      %v5139 = vshll.u32 2131351028, %v5130
      %v5140 = vshrl.u32 2102212464, %v5131
      %v5141 = vor.u32 %v5139, %v5140
      %v5142 = vshll.u32 2102212464, %v5130
      %v5143 = vshrl.u32 920167782, %v5131
      %v5144 = vor.u32 %v5142, %v5143
      %v5145 = vshll.u32 920167782, %v5130
      %v5146 = vshrl.u32 1326507024, %v5131
      %v5147 = vor.u32 %v5145, %v5146
      %vm5148 = vcmp.lt.s32.totalorder %v5129, 1
      %vm5149 = vcmp.lt.s32.totalorder %v5129, 2
      %vm5150 = vcmp.lt.s32.totalorder %v5129, 3
      %vm5151 = vcmp.lt.s32.totalorder %v5129, 4
      %v5152 = vsel %vm5148, %v5132, %v5135
      %v5153 = vsel %vm5151, %v5141, 2102212464
      %v5154 = vsel %vm5150, %v5138, %v5153
      %v5155 = vsel %vm5149, %v5152, %v5154
      %v5156 = vsel %vm5148, %v5135, %v5138
      %v5157 = vsel %vm5151, %v5144, 920167782
      %v5158 = vsel %vm5150, %v5141, %v5157
      %v5159 = vsel %vm5149, %v5156, %v5158
      %v5160 = vsel %vm5148, %v5138, %v5141
      %v5161 = vsel %vm5151, %v5147, 1326507024
      %v5162 = vsel %vm5150, %v5144, %v5161
      %v5163 = vsel %vm5149, %v5160, %v5162
      %v5164 = vshll.u32 %v5124, 8
      %v5165 = vmul.u32.u64.compose %v5164, %v5163
      %v5166 = vextract.low.u32 %v5165
      %v5167 = vextract.high.u32 %v5165
      %v5168 = vmul.u32.u64.compose %v5164, %v5159
      %v5169 = vextract.low.u32 %v5168
      %v5170 = vextract.high.u32 %v5168
      %v5171 = vmul.u32 %v5164, %v5155
      %v5172 = vadd.s32 %v5167, %v5169
      %vm5173 = vc.u32 %v5167, %v5169
      %v5174 = vadd.s32 %v5170, 1
      %v5175 = vsel %vm5173, %v5174, %v5170
      %v5176 = vadd.s32 %v5171, %v5175
      %v5177 = vadd.s32 %v5176, 536870912
      %v5178 = vshrl.u32 %v5177, 30
      %v5179 = vshll.u32 %v5178, 30
      %v5180 = vsub.s32 %v5176, %v5179
      %vm5181 = vcmp.lt.s32.totalorder %v5180, 0
      %v5182 = vsub.s32 0, %v5180
      %v5183 = vsel %vm5181, %v5182, %v5180
      %v5184 = vclz %v5183
      %v5185 = vsub.s32 %v5184, 2
      %vm5186 = vcmp.gt.s32.totalorder 0, %v5185
      %v5187 = vsel %vm5186, 0, %v5185
      %v5188 = vsub.s32 32, %v5187
      %v5189 = vshll.u32 %v5180, %v5187
      %v5190 = vshrl.u32 %v5172, %v5188
      %v5191 = vor.u32 %v5189, %v5190
      %v5192 = vsub.s32 4294967266, %v5187
      %v5193 = vadd.s32 %v5192, 127
      %v5194 = vshll.u32 %v5193, 23
      %v5195 = vor.u32 4788187, %v5194
      %v5196 = vand.u32 2147483647, %v5195
      %v5198 = vcvt.s32.f32 %v5191
      %v5199 = vmul.f32 %v5198, %v5196
      %v5200 = vxor.u32 %v5199, 2147483648
      %v5201 = vsel %vm5118, %v5200, %v5199
      %v5202 = vsub.s32 4, %v5178
      %v5203 = vsel %vm5118, %v5202, %v5178
      %v5204 = vsel %vm5117, %v655, %v5201
      %v5205 = vsel %vm5117, 0, %v5203
      %v5206 = vcosq.f32.pop %v5204
      %v5207 = vsinq.f32.pop %v5204
      %vm5208 = vweird.f32 %v655
      %v5209 = vadd.s32 %v5205, 3
      %v5210 = vand.u32 %v5209, 3
      %vm5211 = vcmp.lt.s32.totalorder %v5210, 2
      %vm5212 = vcmp.eq.s32.totalorder %v5210, 0
      %v5213 = vxor.u32 %v5207, 2147483648
      %v5214 = vsel %vm5212, %v5206, %v5213
      %vm5215 = vcmp.eq.s32.totalorder %v5210, 2
      %v5216 = vxor.u32 %v5206, 2147483648
      %v5217 = vsel %vm5215, %v5216, %v5207
      %v5218 = vsel %vm5211, %v5214, %v5217
      %v5219 = vsel %vm5208, nan, %v5218
      %v5220 = vand.u32 2147483647, %v656
      %vm5221 = vcmp.le.f32.partialorder %v5220, 0.7853982
      %vm5222 = vcmp.lt.s32.totalorder %v656, 0
      %v5223 = vand.u32 %v656, 2139095040
      %v5224 = vshrl.u32 %v5223, 23
      %v5225 = vsub.s32 %v5224, 127
      %v5226 = vand.u32 2147483647, %v656
      %v5227 = vand.u32 %v5226, 8388607
      %v5228 = vor.u32 %v5227, 8388608
      %v5229 = vsub.s32 0, %v5228
      %v5230 = vadd.s32 %v5225, 1
      %vm5231 = vcmp.gt.s32.totalorder %v5230, 0
      %v5232 = vsel %vm5231, %v5230, 0
      %v5233 = vshrl.u32 %v5232, 5
      %v5234 = vand.u32 %v5232, 31
      %v5235 = vsub.s32 32, %v5234
      %v5236 = vshrl.u32 683565275, %v5235
      %v5237 = vshll.u32 683565275, %v5234
      %v5238 = vshrl.u32 2475754826, %v5235
      %v5239 = vor.u32 %v5237, %v5238
      %v5240 = vshll.u32 2475754826, %v5234
      %v5241 = vshrl.u32 2131351028, %v5235
      %v5242 = vor.u32 %v5240, %v5241
      %v5243 = vshll.u32 2131351028, %v5234
      %v5244 = vshrl.u32 2102212464, %v5235
      %v5245 = vor.u32 %v5243, %v5244
      %v5246 = vshll.u32 2102212464, %v5234
      %v5247 = vshrl.u32 920167782, %v5235
      %v5248 = vor.u32 %v5246, %v5247
      %v5249 = vshll.u32 920167782, %v5234
      %v5250 = vshrl.u32 1326507024, %v5235
      %v5251 = vor.u32 %v5249, %v5250
      %vm5252 = vcmp.lt.s32.totalorder %v5233, 1
      %vm5253 = vcmp.lt.s32.totalorder %v5233, 2
      %vm5254 = vcmp.lt.s32.totalorder %v5233, 3
      %vm5255 = vcmp.lt.s32.totalorder %v5233, 4
      %v5256 = vsel %vm5252, %v5236, %v5239
      %v5257 = vsel %vm5255, %v5245, 2102212464
      %v5258 = vsel %vm5254, %v5242, %v5257
      %v5259 = vsel %vm5253, %v5256, %v5258
      %v5260 = vsel %vm5252, %v5239, %v5242
      %v5261 = vsel %vm5255, %v5248, 920167782
      %v5262 = vsel %vm5254, %v5245, %v5261
      %v5263 = vsel %vm5253, %v5260, %v5262
      %v5264 = vsel %vm5252, %v5242, %v5245
      %v5265 = vsel %vm5255, %v5251, 1326507024
      %v5266 = vsel %vm5254, %v5248, %v5265
      %v5267 = vsel %vm5253, %v5264, %v5266
      %v5268 = vshll.u32 %v5228, 8
      %v5269 = vmul.u32.u64.compose %v5268, %v5267
      %v5270 = vextract.low.u32 %v5269
      %v5271 = vextract.high.u32 %v5269
      %v5272 = vmul.u32.u64.compose %v5268, %v5263
      %v5273 = vextract.low.u32 %v5272
      %v5274 = vextract.high.u32 %v5272
      %v5275 = vmul.u32 %v5268, %v5259
      %v5276 = vadd.s32 %v5271, %v5273
      %vm5277 = vc.u32 %v5271, %v5273
      %v5278 = vadd.s32 %v5274, 1
      %v5279 = vsel %vm5277, %v5278, %v5274
      %v5280 = vadd.s32 %v5275, %v5279
      %v5281 = vadd.s32 %v5280, 536870912
      %v5282 = vshrl.u32 %v5281, 30
      %v5283 = vshll.u32 %v5282, 30
      %v5284 = vsub.s32 %v5280, %v5283
      %vm5285 = vcmp.lt.s32.totalorder %v5284, 0
      %v5286 = vsub.s32 0, %v5284
      %v5287 = vsel %vm5285, %v5286, %v5284
      %v5288 = vclz %v5287
      %v5289 = vsub.s32 %v5288, 2
      %vm5290 = vcmp.gt.s32.totalorder 0, %v5289
      %v5291 = vsel %vm5290, 0, %v5289
      %v5292 = vsub.s32 32, %v5291
      %v5293 = vshll.u32 %v5284, %v5291
      %v5294 = vshrl.u32 %v5276, %v5292
      %v5295 = vor.u32 %v5293, %v5294
      %v5296 = vsub.s32 4294967266, %v5291
      %v5297 = vadd.s32 %v5296, 127
      %v5298 = vshll.u32 %v5297, 23
      %v5299 = vor.u32 4788187, %v5298
      %v5300 = vand.u32 2147483647, %v5299
      %v5302 = vcvt.s32.f32 %v5295
      %v5303 = vmul.f32 %v5302, %v5300
      %v5304 = vxor.u32 %v5303, 2147483648
      %v5305 = vsel %vm5222, %v5304, %v5303
      %v5306 = vsub.s32 4, %v5282
      %v5307 = vsel %vm5222, %v5306, %v5282
      %v5308 = vsel %vm5221, %v656, %v5305
      %v5309 = vsel %vm5221, 0, %v5307
      %v5310 = vcosq.f32.pop %v5308
      %v5311 = vsinq.f32.pop %v5308
      %vm5312 = vweird.f32 %v656
      %v5313 = vadd.s32 %v5309, 3
      %v5314 = vand.u32 %v5313, 3
      %vm5315 = vcmp.lt.s32.totalorder %v5314, 2
      %vm5316 = vcmp.eq.s32.totalorder %v5314, 0
      %v5317 = vxor.u32 %v5311, 2147483648
      %v5318 = vsel %vm5316, %v5310, %v5317
      %vm5319 = vcmp.eq.s32.totalorder %v5314, 2
      %v5320 = vxor.u32 %v5310, 2147483648
      %v5321 = vsel %vm5319, %v5320, %v5311
      %v5322 = vsel %vm5315, %v5318, %v5321
      %v5323 = vsel %vm5312, nan, %v5322
      %v5324 = vand.u32 2147483647, %v657
      %vm5325 = vcmp.le.f32.partialorder %v5324, 0.7853982
      %vm5326 = vcmp.lt.s32.totalorder %v657, 0
      %v5327 = vand.u32 %v657, 2139095040
      %v5328 = vshrl.u32 %v5327, 23
      %v5329 = vsub.s32 %v5328, 127
      %v5330 = vand.u32 2147483647, %v657
      %v5331 = vand.u32 %v5330, 8388607
      %v5332 = vor.u32 %v5331, 8388608
      %v5333 = vsub.s32 0, %v5332
      %v5334 = vadd.s32 %v5329, 1
      %vm5335 = vcmp.gt.s32.totalorder %v5334, 0
      %v5336 = vsel %vm5335, %v5334, 0
      %v5337 = vshrl.u32 %v5336, 5
      %v5338 = vand.u32 %v5336, 31
      %v5339 = vsub.s32 32, %v5338
      %v5340 = vshrl.u32 683565275, %v5339
      %v5341 = vshll.u32 683565275, %v5338
      %v5342 = vshrl.u32 2475754826, %v5339
      %v5343 = vor.u32 %v5341, %v5342
      %v5344 = vshll.u32 2475754826, %v5338
      %v5345 = vshrl.u32 2131351028, %v5339
      %v5346 = vor.u32 %v5344, %v5345
      %v5347 = vshll.u32 2131351028, %v5338
      %v5348 = vshrl.u32 2102212464, %v5339
      %v5349 = vor.u32 %v5347, %v5348
      %v5350 = vshll.u32 2102212464, %v5338
      %v5351 = vshrl.u32 920167782, %v5339
      %v5352 = vor.u32 %v5350, %v5351
      %v5353 = vshll.u32 920167782, %v5338
      %v5354 = vshrl.u32 1326507024, %v5339
      %v5355 = vor.u32 %v5353, %v5354
      %vm5356 = vcmp.lt.s32.totalorder %v5337, 1
      %vm5357 = vcmp.lt.s32.totalorder %v5337, 2
      %vm5358 = vcmp.lt.s32.totalorder %v5337, 3
      %vm5359 = vcmp.lt.s32.totalorder %v5337, 4
      %v5360 = vsel %vm5356, %v5340, %v5343
      %v5361 = vsel %vm5359, %v5349, 2102212464
      %v5362 = vsel %vm5358, %v5346, %v5361
      %v5363 = vsel %vm5357, %v5360, %v5362
      %v5364 = vsel %vm5356, %v5343, %v5346
      %v5365 = vsel %vm5359, %v5352, 920167782
      %v5366 = vsel %vm5358, %v5349, %v5365
      %v5367 = vsel %vm5357, %v5364, %v5366
      %v5368 = vsel %vm5356, %v5346, %v5349
      %v5369 = vsel %vm5359, %v5355, 1326507024
      %v5370 = vsel %vm5358, %v5352, %v5369
      %v5371 = vsel %vm5357, %v5368, %v5370
      %v5372 = vshll.u32 %v5332, 8
      %v5373 = vmul.u32.u64.compose %v5372, %v5371
      %v5374 = vextract.low.u32 %v5373
      %v5375 = vextract.high.u32 %v5373
      %v5376 = vmul.u32.u64.compose %v5372, %v5367
      %v5377 = vextract.low.u32 %v5376
      %v5378 = vextract.high.u32 %v5376
      %v5379 = vmul.u32 %v5372, %v5363
      %v5380 = vadd.s32 %v5375, %v5377
      %vm5381 = vc.u32 %v5375, %v5377
      %v5382 = vadd.s32 %v5378, 1
      %v5383 = vsel %vm5381, %v5382, %v5378
      %v5384 = vadd.s32 %v5379, %v5383
      %v5385 = vadd.s32 %v5384, 536870912
      %v5386 = vshrl.u32 %v5385, 30
      %v5387 = vshll.u32 %v5386, 30
      %v5388 = vsub.s32 %v5384, %v5387
      %vm5389 = vcmp.lt.s32.totalorder %v5388, 0
      %v5390 = vsub.s32 0, %v5388
      %v5391 = vsel %vm5389, %v5390, %v5388
      %v5392 = vclz %v5391
      %v5393 = vsub.s32 %v5392, 2
      %vm5394 = vcmp.gt.s32.totalorder 0, %v5393
      %v5395 = vsel %vm5394, 0, %v5393
      %v5396 = vsub.s32 32, %v5395
      %v5397 = vshll.u32 %v5388, %v5395
      %v5398 = vshrl.u32 %v5380, %v5396
      %v5399 = vor.u32 %v5397, %v5398
      %v5400 = vsub.s32 4294967266, %v5395
      %v5401 = vadd.s32 %v5400, 127
      %v5402 = vshll.u32 %v5401, 23
      %v5403 = vor.u32 4788187, %v5402
      %v5404 = vand.u32 2147483647, %v5403
      %v5406 = vcvt.s32.f32 %v5399
      %v5407 = vmul.f32 %v5406, %v5404
      %v5408 = vxor.u32 %v5407, 2147483648
      %v5409 = vsel %vm5326, %v5408, %v5407
      %v5410 = vsub.s32 4, %v5386
      %v5411 = vsel %vm5326, %v5410, %v5386
      %v5412 = vsel %vm5325, %v657, %v5409
      %v5413 = vsel %vm5325, 0, %v5411
      %v5414 = vcosq.f32.pop %v5412
      %v5415 = vsinq.f32.pop %v5412
      %vm5416 = vweird.f32 %v657
      %v5417 = vadd.s32 %v5413, 3
      %v5418 = vand.u32 %v5417, 3
      %vm5419 = vcmp.lt.s32.totalorder %v5418, 2
      %vm5420 = vcmp.eq.s32.totalorder %v5418, 0
      %v5421 = vxor.u32 %v5415, 2147483648
      %v5422 = vsel %vm5420, %v5414, %v5421
      %vm5423 = vcmp.eq.s32.totalorder %v5418, 2
      %v5424 = vxor.u32 %v5414, 2147483648
      %v5425 = vsel %vm5423, %v5424, %v5415
      %v5426 = vsel %vm5419, %v5422, %v5425
      %v5427 = vsel %vm5416, nan, %v5426
      %v5428 = vand.u32 2147483647, %v658
      %vm5429 = vcmp.le.f32.partialorder %v5428, 0.7853982
      %vm5430 = vcmp.lt.s32.totalorder %v658, 0
      %v5431 = vand.u32 %v658, 2139095040
      %v5432 = vshrl.u32 %v5431, 23
      %v5433 = vsub.s32 %v5432, 127
      %v5434 = vand.u32 2147483647, %v658
      %v5435 = vand.u32 %v5434, 8388607
      %v5436 = vor.u32 %v5435, 8388608
      %v5437 = vsub.s32 0, %v5436
      %v5438 = vadd.s32 %v5433, 1
      %vm5439 = vcmp.gt.s32.totalorder %v5438, 0
      %v5440 = vsel %vm5439, %v5438, 0
      %v5441 = vshrl.u32 %v5440, 5
      %v5442 = vand.u32 %v5440, 31
      %v5443 = vsub.s32 32, %v5442
      %v5444 = vshrl.u32 683565275, %v5443
      %v5445 = vshll.u32 683565275, %v5442
      %v5446 = vshrl.u32 2475754826, %v5443
      %v5447 = vor.u32 %v5445, %v5446
      %v5448 = vshll.u32 2475754826, %v5442
      %v5449 = vshrl.u32 2131351028, %v5443
      %v5450 = vor.u32 %v5448, %v5449
      %v5451 = vshll.u32 2131351028, %v5442
      %v5452 = vshrl.u32 2102212464, %v5443
      %v5453 = vor.u32 %v5451, %v5452
      %v5454 = vshll.u32 2102212464, %v5442
      %v5455 = vshrl.u32 920167782, %v5443
      %v5456 = vor.u32 %v5454, %v5455
      %v5457 = vshll.u32 920167782, %v5442
      %v5458 = vshrl.u32 1326507024, %v5443
      %v5459 = vor.u32 %v5457, %v5458
      %vm5460 = vcmp.lt.s32.totalorder %v5441, 1
      %vm5461 = vcmp.lt.s32.totalorder %v5441, 2
      %vm5462 = vcmp.lt.s32.totalorder %v5441, 3
      %vm5463 = vcmp.lt.s32.totalorder %v5441, 4
      %v5464 = vsel %vm5460, %v5444, %v5447
      %v5465 = vsel %vm5463, %v5453, 2102212464
      %v5466 = vsel %vm5462, %v5450, %v5465
      %v5467 = vsel %vm5461, %v5464, %v5466
      %v5468 = vsel %vm5460, %v5447, %v5450
      %v5469 = vsel %vm5463, %v5456, 920167782
      %v5470 = vsel %vm5462, %v5453, %v5469
      %v5471 = vsel %vm5461, %v5468, %v5470
      %v5472 = vsel %vm5460, %v5450, %v5453
      %v5473 = vsel %vm5463, %v5459, 1326507024
      %v5474 = vsel %vm5462, %v5456, %v5473
      %v5475 = vsel %vm5461, %v5472, %v5474
      %v5476 = vshll.u32 %v5436, 8
      %v5477 = vmul.u32.u64.compose %v5476, %v5475
      %v5478 = vextract.low.u32 %v5477
      %v5479 = vextract.high.u32 %v5477
      %v5480 = vmul.u32.u64.compose %v5476, %v5471
      %v5481 = vextract.low.u32 %v5480
      %v5482 = vextract.high.u32 %v5480
      %v5483 = vmul.u32 %v5476, %v5467
      %v5484 = vadd.s32 %v5479, %v5481
      %vm5485 = vc.u32 %v5479, %v5481
      %v5486 = vadd.s32 %v5482, 1
      %v5487 = vsel %vm5485, %v5486, %v5482
      %v5488 = vadd.s32 %v5483, %v5487
      %v5489 = vadd.s32 %v5488, 536870912
      %v5490 = vshrl.u32 %v5489, 30
      %v5491 = vshll.u32 %v5490, 30
      %v5492 = vsub.s32 %v5488, %v5491
      %vm5493 = vcmp.lt.s32.totalorder %v5492, 0
      %v5494 = vsub.s32 0, %v5492
      %v5495 = vsel %vm5493, %v5494, %v5492
      %v5496 = vclz %v5495
      %v5497 = vsub.s32 %v5496, 2
      %vm5498 = vcmp.gt.s32.totalorder 0, %v5497
      %v5499 = vsel %vm5498, 0, %v5497
      %v5500 = vsub.s32 32, %v5499
      %v5501 = vshll.u32 %v5492, %v5499
      %v5502 = vshrl.u32 %v5484, %v5500
      %v5503 = vor.u32 %v5501, %v5502
      %v5504 = vsub.s32 4294967266, %v5499
      %v5505 = vadd.s32 %v5504, 127
      %v5506 = vshll.u32 %v5505, 23
      %v5507 = vor.u32 4788187, %v5506
      %v5508 = vand.u32 2147483647, %v5507
      %v5510 = vcvt.s32.f32 %v5503
      %v5511 = vmul.f32 %v5510, %v5508
      %v5512 = vxor.u32 %v5511, 2147483648
      %v5513 = vsel %vm5430, %v5512, %v5511
      %v5514 = vsub.s32 4, %v5490
      %v5515 = vsel %vm5430, %v5514, %v5490
      %v5516 = vsel %vm5429, %v658, %v5513
      %v5517 = vsel %vm5429, 0, %v5515
      %v5518 = vcosq.f32.pop %v5516
      %v5519 = vsinq.f32.pop %v5516
      %vm5520 = vweird.f32 %v658
      %v5521 = vadd.s32 %v5517, 3
      %v5522 = vand.u32 %v5521, 3
      %vm5523 = vcmp.lt.s32.totalorder %v5522, 2
      %vm5524 = vcmp.eq.s32.totalorder %v5522, 0
      %v5525 = vxor.u32 %v5519, 2147483648
      %v5526 = vsel %vm5524, %v5518, %v5525
      %vm5527 = vcmp.eq.s32.totalorder %v5522, 2
      %v5528 = vxor.u32 %v5518, 2147483648
      %v5529 = vsel %vm5527, %v5528, %v5519
      %v5530 = vsel %vm5523, %v5526, %v5529
      %v5531 = vsel %vm5520, nan, %v5530
      %v5532 = vand.u32 2147483647, %v659
      %vm5533 = vcmp.le.f32.partialorder %v5532, 0.7853982
      %vm5534 = vcmp.lt.s32.totalorder %v659, 0
      %v5535 = vand.u32 %v659, 2139095040
      %v5536 = vshrl.u32 %v5535, 23
      %v5537 = vsub.s32 %v5536, 127
      %v5538 = vand.u32 2147483647, %v659
      %v5539 = vand.u32 %v5538, 8388607
      %v5540 = vor.u32 %v5539, 8388608
      %v5541 = vsub.s32 0, %v5540
      %v5542 = vadd.s32 %v5537, 1
      %vm5543 = vcmp.gt.s32.totalorder %v5542, 0
      %v5544 = vsel %vm5543, %v5542, 0
      %v5545 = vshrl.u32 %v5544, 5
      %v5546 = vand.u32 %v5544, 31
      %v5547 = vsub.s32 32, %v5546
      %v5548 = vshrl.u32 683565275, %v5547
      %v5549 = vshll.u32 683565275, %v5546
      %v5550 = vshrl.u32 2475754826, %v5547
      %v5551 = vor.u32 %v5549, %v5550
      %v5552 = vshll.u32 2475754826, %v5546
      %v5553 = vshrl.u32 2131351028, %v5547
      %v5554 = vor.u32 %v5552, %v5553
      %v5555 = vshll.u32 2131351028, %v5546
      %v5556 = vshrl.u32 2102212464, %v5547
      %v5557 = vor.u32 %v5555, %v5556
      %v5558 = vshll.u32 2102212464, %v5546
      %v5559 = vshrl.u32 920167782, %v5547
      %v5560 = vor.u32 %v5558, %v5559
      %v5561 = vshll.u32 920167782, %v5546
      %v5562 = vshrl.u32 1326507024, %v5547
      %v5563 = vor.u32 %v5561, %v5562
      %vm5564 = vcmp.lt.s32.totalorder %v5545, 1
      %vm5565 = vcmp.lt.s32.totalorder %v5545, 2
      %vm5566 = vcmp.lt.s32.totalorder %v5545, 3
      %vm5567 = vcmp.lt.s32.totalorder %v5545, 4
      %v5568 = vsel %vm5564, %v5548, %v5551
      %v5569 = vsel %vm5567, %v5557, 2102212464
      %v5570 = vsel %vm5566, %v5554, %v5569
      %v5571 = vsel %vm5565, %v5568, %v5570
      %v5572 = vsel %vm5564, %v5551, %v5554
      %v5573 = vsel %vm5567, %v5560, 920167782
      %v5574 = vsel %vm5566, %v5557, %v5573
      %v5575 = vsel %vm5565, %v5572, %v5574
      %v5576 = vsel %vm5564, %v5554, %v5557
      %v5577 = vsel %vm5567, %v5563, 1326507024
      %v5578 = vsel %vm5566, %v5560, %v5577
      %v5579 = vsel %vm5565, %v5576, %v5578
      %v5580 = vshll.u32 %v5540, 8
      %v5581 = vmul.u32.u64.compose %v5580, %v5579
      %v5582 = vextract.low.u32 %v5581
      %v5583 = vextract.high.u32 %v5581
      %v5584 = vmul.u32.u64.compose %v5580, %v5575
      %v5585 = vextract.low.u32 %v5584
      %v5586 = vextract.high.u32 %v5584
      %v5587 = vmul.u32 %v5580, %v5571
      %v5588 = vadd.s32 %v5583, %v5585
      %vm5589 = vc.u32 %v5583, %v5585
      %v5590 = vadd.s32 %v5586, 1
      %v5591 = vsel %vm5589, %v5590, %v5586
      %v5592 = vadd.s32 %v5587, %v5591
      %v5593 = vadd.s32 %v5592, 536870912
      %v5594 = vshrl.u32 %v5593, 30
      %v5595 = vshll.u32 %v5594, 30
      %v5596 = vsub.s32 %v5592, %v5595
      %vm5597 = vcmp.lt.s32.totalorder %v5596, 0
      %v5598 = vsub.s32 0, %v5596
      %v5599 = vsel %vm5597, %v5598, %v5596
      %v5600 = vclz %v5599
      %v5601 = vsub.s32 %v5600, 2
      %vm5602 = vcmp.gt.s32.totalorder 0, %v5601
      %v5603 = vsel %vm5602, 0, %v5601
      %v5604 = vsub.s32 32, %v5603
      %v5605 = vshll.u32 %v5596, %v5603
      %v5606 = vshrl.u32 %v5588, %v5604
      %v5607 = vor.u32 %v5605, %v5606
      %v5608 = vsub.s32 4294967266, %v5603
      %v5609 = vadd.s32 %v5608, 127
      %v5610 = vshll.u32 %v5609, 23
      %v5611 = vor.u32 4788187, %v5610
      %v5612 = vand.u32 2147483647, %v5611
      %v5614 = vcvt.s32.f32 %v5607
      %v5615 = vmul.f32 %v5614, %v5612
      %v5616 = vxor.u32 %v5615, 2147483648
      %v5617 = vsel %vm5534, %v5616, %v5615
      %v5618 = vsub.s32 4, %v5594
      %v5619 = vsel %vm5534, %v5618, %v5594
      %v5620 = vsel %vm5533, %v659, %v5617
      %v5621 = vsel %vm5533, 0, %v5619
      %v5622 = vcosq.f32.pop %v5620
      %v5623 = vsinq.f32.pop %v5620
      %vm5624 = vweird.f32 %v659
      %v5625 = vadd.s32 %v5621, 3
      %v5626 = vand.u32 %v5625, 3
      %vm5627 = vcmp.lt.s32.totalorder %v5626, 2
      %vm5628 = vcmp.eq.s32.totalorder %v5626, 0
      %v5629 = vxor.u32 %v5623, 2147483648
      %v5630 = vsel %vm5628, %v5622, %v5629
      %vm5631 = vcmp.eq.s32.totalorder %v5626, 2
      %v5632 = vxor.u32 %v5622, 2147483648
      %v5633 = vsel %vm5631, %v5632, %v5623
      %v5634 = vsel %vm5627, %v5630, %v5633
      %v5635 = vsel %vm5624, nan, %v5634
      %v5636 = vand.u32 2147483647, %v644
      %vm5637 = vcmp.le.f32.partialorder %v5636, 0.7853982
      %vm5638 = vcmp.lt.s32.totalorder %v644, 0
      %v5639 = vand.u32 %v644, 2139095040
      %v5640 = vshrl.u32 %v5639, 23
      %v5641 = vsub.s32 %v5640, 127
      %v5642 = vand.u32 2147483647, %v644
      %v5643 = vand.u32 %v5642, 8388607
      %v5644 = vor.u32 %v5643, 8388608
      %v5645 = vsub.s32 0, %v5644
      %v5646 = vadd.s32 %v5641, 1
      %vm5647 = vcmp.gt.s32.totalorder %v5646, 0
      %v5648 = vsel %vm5647, %v5646, 0
      %v5649 = vshrl.u32 %v5648, 5
      %v5650 = vand.u32 %v5648, 31
      %v5651 = vsub.s32 32, %v5650
      %v5652 = vshrl.u32 683565275, %v5651
      %v5653 = vshll.u32 683565275, %v5650
      %v5654 = vshrl.u32 2475754826, %v5651
      %v5655 = vor.u32 %v5653, %v5654
      %v5656 = vshll.u32 2475754826, %v5650
      %v5657 = vshrl.u32 2131351028, %v5651
      %v5658 = vor.u32 %v5656, %v5657
      %v5659 = vshll.u32 2131351028, %v5650
      %v5660 = vshrl.u32 2102212464, %v5651
      %v5661 = vor.u32 %v5659, %v5660
      %v5662 = vshll.u32 2102212464, %v5650
      %v5663 = vshrl.u32 920167782, %v5651
      %v5664 = vor.u32 %v5662, %v5663
      %v5665 = vshll.u32 920167782, %v5650
      %v5666 = vshrl.u32 1326507024, %v5651
      %v5667 = vor.u32 %v5665, %v5666
      %vm5668 = vcmp.lt.s32.totalorder %v5649, 1
      %vm5669 = vcmp.lt.s32.totalorder %v5649, 2
      %vm5670 = vcmp.lt.s32.totalorder %v5649, 3
      %vm5671 = vcmp.lt.s32.totalorder %v5649, 4
      %v5672 = vsel %vm5668, %v5652, %v5655
      %v5673 = vsel %vm5671, %v5661, 2102212464
      %v5674 = vsel %vm5670, %v5658, %v5673
      %v5675 = vsel %vm5669, %v5672, %v5674
      %v5676 = vsel %vm5668, %v5655, %v5658
      %v5677 = vsel %vm5671, %v5664, 920167782
      %v5678 = vsel %vm5670, %v5661, %v5677
      %v5679 = vsel %vm5669, %v5676, %v5678
      %v5680 = vsel %vm5668, %v5658, %v5661
      %v5681 = vsel %vm5671, %v5667, 1326507024
      %v5682 = vsel %vm5670, %v5664, %v5681
      %v5683 = vsel %vm5669, %v5680, %v5682
      %v5684 = vshll.u32 %v5644, 8
      %v5685 = vmul.u32.u64.compose %v5684, %v5683
      %v5686 = vextract.low.u32 %v5685
      %v5687 = vextract.high.u32 %v5685
      %v5688 = vmul.u32.u64.compose %v5684, %v5679
      %v5689 = vextract.low.u32 %v5688
      %v5690 = vextract.high.u32 %v5688
      %v5691 = vmul.u32 %v5684, %v5675
      %v5692 = vadd.s32 %v5687, %v5689
      %vm5693 = vc.u32 %v5687, %v5689
      %v5694 = vadd.s32 %v5690, 1
      %v5695 = vsel %vm5693, %v5694, %v5690
      %v5696 = vadd.s32 %v5691, %v5695
      %v5697 = vadd.s32 %v5696, 536870912
      %v5698 = vshrl.u32 %v5697, 30
      %v5699 = vshll.u32 %v5698, 30
      %v5700 = vsub.s32 %v5696, %v5699
      %vm5701 = vcmp.lt.s32.totalorder %v5700, 0
      %v5702 = vsub.s32 0, %v5700
      %v5703 = vsel %vm5701, %v5702, %v5700
      %v5704 = vclz %v5703
      %v5705 = vsub.s32 %v5704, 2
      %vm5706 = vcmp.gt.s32.totalorder 0, %v5705
      %v5707 = vsel %vm5706, 0, %v5705
      %v5708 = vsub.s32 32, %v5707
      %v5709 = vshll.u32 %v5700, %v5707
      %v5710 = vshrl.u32 %v5692, %v5708
      %v5711 = vor.u32 %v5709, %v5710
      %v5712 = vsub.s32 4294967266, %v5707
      %v5713 = vadd.s32 %v5712, 127
      %v5714 = vshll.u32 %v5713, 23
      %v5715 = vor.u32 4788187, %v5714
      %v5716 = vand.u32 2147483647, %v5715
      %v5718 = vcvt.s32.f32 %v5711
      %v5719 = vmul.f32 %v5718, %v5716
      %v5720 = vxor.u32 %v5719, 2147483648
      %v5721 = vsel %vm5638, %v5720, %v5719
      %v5722 = vsub.s32 4, %v5698
      %v5723 = vsel %vm5638, %v5722, %v5698
      %v5724 = vsel %vm5637, %v644, %v5721
      %v5725 = vsel %vm5637, 0, %v5723
      %v5726 = vcosq.f32.pop %v5724
      %v5727 = vsinq.f32.pop %v5724
      %vm5728 = vweird.f32 %v644
      %v5729 = vand.u32 %v5725, 3
      %vm5730 = vcmp.lt.s32.totalorder %v5729, 2
      %vm5731 = vcmp.eq.s32.totalorder %v5729, 0
      %v5732 = vxor.u32 %v5727, 2147483648
      %v5733 = vsel %vm5731, %v5726, %v5732
      %vm5734 = vcmp.eq.s32.totalorder %v5729, 2
      %v5735 = vxor.u32 %v5726, 2147483648
      %v5736 = vsel %vm5734, %v5735, %v5727
      %v5737 = vsel %vm5730, %v5733, %v5736
      %v5738 = vsel %vm5728, nan, %v5737
      %v5739 = vand.u32 2147483647, %v645
      %vm5740 = vcmp.le.f32.partialorder %v5739, 0.7853982
      %vm5741 = vcmp.lt.s32.totalorder %v645, 0
      %v5742 = vand.u32 %v645, 2139095040
      %v5743 = vshrl.u32 %v5742, 23
      %v5744 = vsub.s32 %v5743, 127
      %v5745 = vand.u32 2147483647, %v645
      %v5746 = vand.u32 %v5745, 8388607
      %v5747 = vor.u32 %v5746, 8388608
      %v5748 = vsub.s32 0, %v5747
      %v5749 = vadd.s32 %v5744, 1
      %vm5750 = vcmp.gt.s32.totalorder %v5749, 0
      %v5751 = vsel %vm5750, %v5749, 0
      %v5752 = vshrl.u32 %v5751, 5
      %v5753 = vand.u32 %v5751, 31
      %v5754 = vsub.s32 32, %v5753
      %v5755 = vshrl.u32 683565275, %v5754
      %v5756 = vshll.u32 683565275, %v5753
      %v5757 = vshrl.u32 2475754826, %v5754
      %v5758 = vor.u32 %v5756, %v5757
      %v5759 = vshll.u32 2475754826, %v5753
      %v5760 = vshrl.u32 2131351028, %v5754
      %v5761 = vor.u32 %v5759, %v5760
      %v5762 = vshll.u32 2131351028, %v5753
      %v5763 = vshrl.u32 2102212464, %v5754
      %v5764 = vor.u32 %v5762, %v5763
      %v5765 = vshll.u32 2102212464, %v5753
      %v5766 = vshrl.u32 920167782, %v5754
      %v5767 = vor.u32 %v5765, %v5766
      %v5768 = vshll.u32 920167782, %v5753
      %v5769 = vshrl.u32 1326507024, %v5754
      %v5770 = vor.u32 %v5768, %v5769
      %vm5771 = vcmp.lt.s32.totalorder %v5752, 1
      %vm5772 = vcmp.lt.s32.totalorder %v5752, 2
      %vm5773 = vcmp.lt.s32.totalorder %v5752, 3
      %vm5774 = vcmp.lt.s32.totalorder %v5752, 4
      %v5775 = vsel %vm5771, %v5755, %v5758
      %v5776 = vsel %vm5774, %v5764, 2102212464
      %v5777 = vsel %vm5773, %v5761, %v5776
      %v5778 = vsel %vm5772, %v5775, %v5777
      %v5779 = vsel %vm5771, %v5758, %v5761
      %v5780 = vsel %vm5774, %v5767, 920167782
      %v5781 = vsel %vm5773, %v5764, %v5780
      %v5782 = vsel %vm5772, %v5779, %v5781
      %v5783 = vsel %vm5771, %v5761, %v5764
      %v5784 = vsel %vm5774, %v5770, 1326507024
      %v5785 = vsel %vm5773, %v5767, %v5784
      %v5786 = vsel %vm5772, %v5783, %v5785
      %v5787 = vshll.u32 %v5747, 8
      %v5788 = vmul.u32.u64.compose %v5787, %v5786
      %v5789 = vextract.low.u32 %v5788
      %v5790 = vextract.high.u32 %v5788
      %v5791 = vmul.u32.u64.compose %v5787, %v5782
      %v5792 = vextract.low.u32 %v5791
      %v5793 = vextract.high.u32 %v5791
      %v5794 = vmul.u32 %v5787, %v5778
      %v5795 = vadd.s32 %v5790, %v5792
      %vm5796 = vc.u32 %v5790, %v5792
      %v5797 = vadd.s32 %v5793, 1
      %v5798 = vsel %vm5796, %v5797, %v5793
      %v5799 = vadd.s32 %v5794, %v5798
      %v5800 = vadd.s32 %v5799, 536870912
      %v5801 = vshrl.u32 %v5800, 30
      %v5802 = vshll.u32 %v5801, 30
      %v5803 = vsub.s32 %v5799, %v5802
      %vm5804 = vcmp.lt.s32.totalorder %v5803, 0
      %v5805 = vsub.s32 0, %v5803
      %v5806 = vsel %vm5804, %v5805, %v5803
      %v5807 = vclz %v5806
      %v5808 = vsub.s32 %v5807, 2
      %vm5809 = vcmp.gt.s32.totalorder 0, %v5808
      %v5810 = vsel %vm5809, 0, %v5808
      %v5811 = vsub.s32 32, %v5810
      %v5812 = vshll.u32 %v5803, %v5810
      %v5813 = vshrl.u32 %v5795, %v5811
      %v5814 = vor.u32 %v5812, %v5813
      %v5815 = vsub.s32 4294967266, %v5810
      %v5816 = vadd.s32 %v5815, 127
      %v5817 = vshll.u32 %v5816, 23
      %v5818 = vor.u32 4788187, %v5817
      %v5819 = vand.u32 2147483647, %v5818
      %v5821 = vcvt.s32.f32 %v5814
      %v5822 = vmul.f32 %v5821, %v5819
      %v5823 = vxor.u32 %v5822, 2147483648
      %v5824 = vsel %vm5741, %v5823, %v5822
      %v5825 = vsub.s32 4, %v5801
      %v5826 = vsel %vm5741, %v5825, %v5801
      %v5827 = vsel %vm5740, %v645, %v5824
      %v5828 = vsel %vm5740, 0, %v5826
      %v5829 = vcosq.f32.pop %v5827
      %v5830 = vsinq.f32.pop %v5827
      %vm5831 = vweird.f32 %v645
      %v5832 = vand.u32 %v5828, 3
      %vm5833 = vcmp.lt.s32.totalorder %v5832, 2
      %vm5834 = vcmp.eq.s32.totalorder %v5832, 0
      %v5835 = vxor.u32 %v5830, 2147483648
      %v5836 = vsel %vm5834, %v5829, %v5835
      %vm5837 = vcmp.eq.s32.totalorder %v5832, 2
      %v5838 = vxor.u32 %v5829, 2147483648
      %v5839 = vsel %vm5837, %v5838, %v5830
      %v5840 = vsel %vm5833, %v5836, %v5839
      %v5841 = vsel %vm5831, nan, %v5840
      %v5842 = vand.u32 2147483647, %v646
      %vm5843 = vcmp.le.f32.partialorder %v5842, 0.7853982
      %vm5844 = vcmp.lt.s32.totalorder %v646, 0
      %v5845 = vand.u32 %v646, 2139095040
      %v5846 = vshrl.u32 %v5845, 23
      %v5847 = vsub.s32 %v5846, 127
      %v5848 = vand.u32 2147483647, %v646
      %v5849 = vand.u32 %v5848, 8388607
      %v5850 = vor.u32 %v5849, 8388608
      %v5851 = vsub.s32 0, %v5850
      %v5852 = vadd.s32 %v5847, 1
      %vm5853 = vcmp.gt.s32.totalorder %v5852, 0
      %v5854 = vsel %vm5853, %v5852, 0
      %v5855 = vshrl.u32 %v5854, 5
      %v5856 = vand.u32 %v5854, 31
      %v5857 = vsub.s32 32, %v5856
      %v5858 = vshrl.u32 683565275, %v5857
      %v5859 = vshll.u32 683565275, %v5856
      %v5860 = vshrl.u32 2475754826, %v5857
      %v5861 = vor.u32 %v5859, %v5860
      %v5862 = vshll.u32 2475754826, %v5856
      %v5863 = vshrl.u32 2131351028, %v5857
      %v5864 = vor.u32 %v5862, %v5863
      %v5865 = vshll.u32 2131351028, %v5856
      %v5866 = vshrl.u32 2102212464, %v5857
      %v5867 = vor.u32 %v5865, %v5866
      %v5868 = vshll.u32 2102212464, %v5856
      %v5869 = vshrl.u32 920167782, %v5857
      %v5870 = vor.u32 %v5868, %v5869
      %v5871 = vshll.u32 920167782, %v5856
      %v5872 = vshrl.u32 1326507024, %v5857
      %v5873 = vor.u32 %v5871, %v5872
      %vm5874 = vcmp.lt.s32.totalorder %v5855, 1
      %vm5875 = vcmp.lt.s32.totalorder %v5855, 2
      %vm5876 = vcmp.lt.s32.totalorder %v5855, 3
      %vm5877 = vcmp.lt.s32.totalorder %v5855, 4
      %v5878 = vsel %vm5874, %v5858, %v5861
      %v5879 = vsel %vm5877, %v5867, 2102212464
      %v5880 = vsel %vm5876, %v5864, %v5879
      %v5881 = vsel %vm5875, %v5878, %v5880
      %v5882 = vsel %vm5874, %v5861, %v5864
      %v5883 = vsel %vm5877, %v5870, 920167782
      %v5884 = vsel %vm5876, %v5867, %v5883
      %v5885 = vsel %vm5875, %v5882, %v5884
      %v5886 = vsel %vm5874, %v5864, %v5867
      %v5887 = vsel %vm5877, %v5873, 1326507024
      %v5888 = vsel %vm5876, %v5870, %v5887
      %v5889 = vsel %vm5875, %v5886, %v5888
      %v5890 = vshll.u32 %v5850, 8
      %v5891 = vmul.u32.u64.compose %v5890, %v5889
      %v5892 = vextract.low.u32 %v5891
      %v5893 = vextract.high.u32 %v5891
      %v5894 = vmul.u32.u64.compose %v5890, %v5885
      %v5895 = vextract.low.u32 %v5894
      %v5896 = vextract.high.u32 %v5894
      %v5897 = vmul.u32 %v5890, %v5881
      %v5898 = vadd.s32 %v5893, %v5895
      %vm5899 = vc.u32 %v5893, %v5895
      %v5900 = vadd.s32 %v5896, 1
      %v5901 = vsel %vm5899, %v5900, %v5896
      %v5902 = vadd.s32 %v5897, %v5901
      %v5903 = vadd.s32 %v5902, 536870912
      %v5904 = vshrl.u32 %v5903, 30
      %v5905 = vshll.u32 %v5904, 30
      %v5906 = vsub.s32 %v5902, %v5905
      %vm5907 = vcmp.lt.s32.totalorder %v5906, 0
      %v5908 = vsub.s32 0, %v5906
      %v5909 = vsel %vm5907, %v5908, %v5906
      %v5910 = vclz %v5909
      %v5911 = vsub.s32 %v5910, 2
      %vm5912 = vcmp.gt.s32.totalorder 0, %v5911
      %v5913 = vsel %vm5912, 0, %v5911
      %v5914 = vsub.s32 32, %v5913
      %v5915 = vshll.u32 %v5906, %v5913
      %v5916 = vshrl.u32 %v5898, %v5914
      %v5917 = vor.u32 %v5915, %v5916
      %v5918 = vsub.s32 4294967266, %v5913
      %v5919 = vadd.s32 %v5918, 127
      %v5920 = vshll.u32 %v5919, 23
      %v5921 = vor.u32 4788187, %v5920
      %v5922 = vand.u32 2147483647, %v5921
      %v5924 = vcvt.s32.f32 %v5917
      %v5925 = vmul.f32 %v5924, %v5922
      %v5926 = vxor.u32 %v5925, 2147483648
      %v5927 = vsel %vm5844, %v5926, %v5925
      %v5928 = vsub.s32 4, %v5904
      %v5929 = vsel %vm5844, %v5928, %v5904
      %v5930 = vsel %vm5843, %v646, %v5927
      %v5931 = vsel %vm5843, 0, %v5929
      %v5932 = vcosq.f32.pop %v5930
      %v5933 = vsinq.f32.pop %v5930
      %vm5934 = vweird.f32 %v646
      %v5935 = vand.u32 %v5931, 3
      %vm5936 = vcmp.lt.s32.totalorder %v5935, 2
      %vm5937 = vcmp.eq.s32.totalorder %v5935, 0
      %v5938 = vxor.u32 %v5933, 2147483648
      %v5939 = vsel %vm5937, %v5932, %v5938
      %vm5940 = vcmp.eq.s32.totalorder %v5935, 2
      %v5941 = vxor.u32 %v5932, 2147483648
      %v5942 = vsel %vm5940, %v5941, %v5933
      %v5943 = vsel %vm5936, %v5939, %v5942
      %v5944 = vsel %vm5934, nan, %v5943
      %v5945 = vand.u32 2147483647, %v647
      %vm5946 = vcmp.le.f32.partialorder %v5945, 0.7853982
      %vm5947 = vcmp.lt.s32.totalorder %v647, 0
      %v5948 = vand.u32 %v647, 2139095040
      %v5949 = vshrl.u32 %v5948, 23
      %v5950 = vsub.s32 %v5949, 127
      %v5951 = vand.u32 2147483647, %v647
      %v5952 = vand.u32 %v5951, 8388607
      %v5953 = vor.u32 %v5952, 8388608
      %v5954 = vsub.s32 0, %v5953
      %v5955 = vadd.s32 %v5950, 1
      %vm5956 = vcmp.gt.s32.totalorder %v5955, 0
      %v5957 = vsel %vm5956, %v5955, 0
      %v5958 = vshrl.u32 %v5957, 5
      %v5959 = vand.u32 %v5957, 31
      %v5960 = vsub.s32 32, %v5959
      %v5961 = vshrl.u32 683565275, %v5960
      %v5962 = vshll.u32 683565275, %v5959
      %v5963 = vshrl.u32 2475754826, %v5960
      %v5964 = vor.u32 %v5962, %v5963
      %v5965 = vshll.u32 2475754826, %v5959
      %v5966 = vshrl.u32 2131351028, %v5960
      %v5967 = vor.u32 %v5965, %v5966
      %v5968 = vshll.u32 2131351028, %v5959
      %v5969 = vshrl.u32 2102212464, %v5960
      %v5970 = vor.u32 %v5968, %v5969
      %v5971 = vshll.u32 2102212464, %v5959
      %v5972 = vshrl.u32 920167782, %v5960
      %v5973 = vor.u32 %v5971, %v5972
      %v5974 = vshll.u32 920167782, %v5959
      %v5975 = vshrl.u32 1326507024, %v5960
      %v5976 = vor.u32 %v5974, %v5975
      %vm5977 = vcmp.lt.s32.totalorder %v5958, 1
      %vm5978 = vcmp.lt.s32.totalorder %v5958, 2
      %vm5979 = vcmp.lt.s32.totalorder %v5958, 3
      %vm5980 = vcmp.lt.s32.totalorder %v5958, 4
      %v5981 = vsel %vm5977, %v5961, %v5964
      %v5982 = vsel %vm5980, %v5970, 2102212464
      %v5983 = vsel %vm5979, %v5967, %v5982
      %v5984 = vsel %vm5978, %v5981, %v5983
      %v5985 = vsel %vm5977, %v5964, %v5967
      %v5986 = vsel %vm5980, %v5973, 920167782
      %v5987 = vsel %vm5979, %v5970, %v5986
      %v5988 = vsel %vm5978, %v5985, %v5987
      %v5989 = vsel %vm5977, %v5967, %v5970
      %v5990 = vsel %vm5980, %v5976, 1326507024
      %v5991 = vsel %vm5979, %v5973, %v5990
      %v5992 = vsel %vm5978, %v5989, %v5991
      %v5993 = vshll.u32 %v5953, 8
      %v5994 = vmul.u32.u64.compose %v5993, %v5992
      %v5995 = vextract.low.u32 %v5994
      %v5996 = vextract.high.u32 %v5994
      %v5997 = vmul.u32.u64.compose %v5993, %v5988
      %v5998 = vextract.low.u32 %v5997
      %v5999 = vextract.high.u32 %v5997
      %v6000 = vmul.u32 %v5993, %v5984
      %v6001 = vadd.s32 %v5996, %v5998
      %vm6002 = vc.u32 %v5996, %v5998
      %v6003 = vadd.s32 %v5999, 1
      %v6004 = vsel %vm6002, %v6003, %v5999
      %v6005 = vadd.s32 %v6000, %v6004
      %v6006 = vadd.s32 %v6005, 536870912
      %v6007 = vshrl.u32 %v6006, 30
      %v6008 = vshll.u32 %v6007, 30
      %v6009 = vsub.s32 %v6005, %v6008
      %vm6010 = vcmp.lt.s32.totalorder %v6009, 0
      %v6011 = vsub.s32 0, %v6009
      %v6012 = vsel %vm6010, %v6011, %v6009
      %v6013 = vclz %v6012
      %v6014 = vsub.s32 %v6013, 2
      %vm6015 = vcmp.gt.s32.totalorder 0, %v6014
      %v6016 = vsel %vm6015, 0, %v6014
      %v6017 = vsub.s32 32, %v6016
      %v6018 = vshll.u32 %v6009, %v6016
      %v6019 = vshrl.u32 %v6001, %v6017
      %v6020 = vor.u32 %v6018, %v6019
      %v6021 = vsub.s32 4294967266, %v6016
      %v6022 = vadd.s32 %v6021, 127
      %v6023 = vshll.u32 %v6022, 23
      %v6024 = vor.u32 4788187, %v6023
      %v6025 = vand.u32 2147483647, %v6024
      %v6027 = vcvt.s32.f32 %v6020
      %v6028 = vmul.f32 %v6027, %v6025
      %v6029 = vxor.u32 %v6028, 2147483648
      %v6030 = vsel %vm5947, %v6029, %v6028
      %v6031 = vsub.s32 4, %v6007
      %v6032 = vsel %vm5947, %v6031, %v6007
      %v6033 = vsel %vm5946, %v647, %v6030
      %v6034 = vsel %vm5946, 0, %v6032
      %v6035 = vcosq.f32.pop %v6033
      %v6036 = vsinq.f32.pop %v6033
      %vm6037 = vweird.f32 %v647
      %v6038 = vand.u32 %v6034, 3
      %vm6039 = vcmp.lt.s32.totalorder %v6038, 2
      %vm6040 = vcmp.eq.s32.totalorder %v6038, 0
      %v6041 = vxor.u32 %v6036, 2147483648
      %v6042 = vsel %vm6040, %v6035, %v6041
      %vm6043 = vcmp.eq.s32.totalorder %v6038, 2
      %v6044 = vxor.u32 %v6035, 2147483648
      %v6045 = vsel %vm6043, %v6044, %v6036
      %v6046 = vsel %vm6039, %v6042, %v6045
      %v6047 = vsel %vm6037, nan, %v6046
      %v6048 = vand.u32 2147483647, %v648
      %vm6049 = vcmp.le.f32.partialorder %v6048, 0.7853982
      %vm6050 = vcmp.lt.s32.totalorder %v648, 0
      %v6051 = vand.u32 %v648, 2139095040
      %v6052 = vshrl.u32 %v6051, 23
      %v6053 = vsub.s32 %v6052, 127
      %v6054 = vand.u32 2147483647, %v648
      %v6055 = vand.u32 %v6054, 8388607
      %v6056 = vor.u32 %v6055, 8388608
      %v6057 = vsub.s32 0, %v6056
      %v6058 = vadd.s32 %v6053, 1
      %vm6059 = vcmp.gt.s32.totalorder %v6058, 0
      %v6060 = vsel %vm6059, %v6058, 0
      %v6061 = vshrl.u32 %v6060, 5
      %v6062 = vand.u32 %v6060, 31
      %v6063 = vsub.s32 32, %v6062
      %v6064 = vshrl.u32 683565275, %v6063
      %v6065 = vshll.u32 683565275, %v6062
      %v6066 = vshrl.u32 2475754826, %v6063
      %v6067 = vor.u32 %v6065, %v6066
      %v6068 = vshll.u32 2475754826, %v6062
      %v6069 = vshrl.u32 2131351028, %v6063
      %v6070 = vor.u32 %v6068, %v6069
      %v6071 = vshll.u32 2131351028, %v6062
      %v6072 = vshrl.u32 2102212464, %v6063
      %v6073 = vor.u32 %v6071, %v6072
      %v6074 = vshll.u32 2102212464, %v6062
      %v6075 = vshrl.u32 920167782, %v6063
      %v6076 = vor.u32 %v6074, %v6075
      %v6077 = vshll.u32 920167782, %v6062
      %v6078 = vshrl.u32 1326507024, %v6063
      %v6079 = vor.u32 %v6077, %v6078
      %vm6080 = vcmp.lt.s32.totalorder %v6061, 1
      %vm6081 = vcmp.lt.s32.totalorder %v6061, 2
      %vm6082 = vcmp.lt.s32.totalorder %v6061, 3
      %vm6083 = vcmp.lt.s32.totalorder %v6061, 4
      %v6084 = vsel %vm6080, %v6064, %v6067
      %v6085 = vsel %vm6083, %v6073, 2102212464
      %v6086 = vsel %vm6082, %v6070, %v6085
      %v6087 = vsel %vm6081, %v6084, %v6086
      %v6088 = vsel %vm6080, %v6067, %v6070
      %v6089 = vsel %vm6083, %v6076, 920167782
      %v6090 = vsel %vm6082, %v6073, %v6089
      %v6091 = vsel %vm6081, %v6088, %v6090
      %v6092 = vsel %vm6080, %v6070, %v6073
      %v6093 = vsel %vm6083, %v6079, 1326507024
      %v6094 = vsel %vm6082, %v6076, %v6093
      %v6095 = vsel %vm6081, %v6092, %v6094
      %v6096 = vshll.u32 %v6056, 8
      %v6097 = vmul.u32.u64.compose %v6096, %v6095
      %v6098 = vextract.low.u32 %v6097
      %v6099 = vextract.high.u32 %v6097
      %v6100 = vmul.u32.u64.compose %v6096, %v6091
      %v6101 = vextract.low.u32 %v6100
      %v6102 = vextract.high.u32 %v6100
      %v6103 = vmul.u32 %v6096, %v6087
      %v6104 = vadd.s32 %v6099, %v6101
      %vm6105 = vc.u32 %v6099, %v6101
      %v6106 = vadd.s32 %v6102, 1
      %v6107 = vsel %vm6105, %v6106, %v6102
      %v6108 = vadd.s32 %v6103, %v6107
      %v6109 = vadd.s32 %v6108, 536870912
      %v6110 = vshrl.u32 %v6109, 30
      %v6111 = vshll.u32 %v6110, 30
      %v6112 = vsub.s32 %v6108, %v6111
      %vm6113 = vcmp.lt.s32.totalorder %v6112, 0
      %v6114 = vsub.s32 0, %v6112
      %v6115 = vsel %vm6113, %v6114, %v6112
      %v6116 = vclz %v6115
      %v6117 = vsub.s32 %v6116, 2
      %vm6118 = vcmp.gt.s32.totalorder 0, %v6117
      %v6119 = vsel %vm6118, 0, %v6117
      %v6120 = vsub.s32 32, %v6119
      %v6121 = vshll.u32 %v6112, %v6119
      %v6122 = vshrl.u32 %v6104, %v6120
      %v6123 = vor.u32 %v6121, %v6122
      %v6124 = vsub.s32 4294967266, %v6119
      %v6125 = vadd.s32 %v6124, 127
      %v6126 = vshll.u32 %v6125, 23
      %v6127 = vor.u32 4788187, %v6126
      %v6128 = vand.u32 2147483647, %v6127
      %v6130 = vcvt.s32.f32 %v6123
      %v6131 = vmul.f32 %v6130, %v6128
      %v6132 = vxor.u32 %v6131, 2147483648
      %v6133 = vsel %vm6050, %v6132, %v6131
      %v6134 = vsub.s32 4, %v6110
      %v6135 = vsel %vm6050, %v6134, %v6110
      %v6136 = vsel %vm6049, %v648, %v6133
      %v6137 = vsel %vm6049, 0, %v6135
      %v6138 = vcosq.f32.pop %v6136
      %v6139 = vsinq.f32.pop %v6136
      %vm6140 = vweird.f32 %v648
      %v6141 = vand.u32 %v6137, 3
      %vm6142 = vcmp.lt.s32.totalorder %v6141, 2
      %vm6143 = vcmp.eq.s32.totalorder %v6141, 0
      %v6144 = vxor.u32 %v6139, 2147483648
      %v6145 = vsel %vm6143, %v6138, %v6144
      %vm6146 = vcmp.eq.s32.totalorder %v6141, 2
      %v6147 = vxor.u32 %v6138, 2147483648
      %v6148 = vsel %vm6146, %v6147, %v6139
      %v6149 = vsel %vm6142, %v6145, %v6148
      %v6150 = vsel %vm6140, nan, %v6149
      %v6151 = vand.u32 2147483647, %v649
      %vm6152 = vcmp.le.f32.partialorder %v6151, 0.7853982
      %vm6153 = vcmp.lt.s32.totalorder %v649, 0
      %v6154 = vand.u32 %v649, 2139095040
      %v6155 = vshrl.u32 %v6154, 23
      %v6156 = vsub.s32 %v6155, 127
      %v6157 = vand.u32 2147483647, %v649
      %v6158 = vand.u32 %v6157, 8388607
      %v6159 = vor.u32 %v6158, 8388608
      %v6160 = vsub.s32 0, %v6159
      %v6161 = vadd.s32 %v6156, 1
      %vm6162 = vcmp.gt.s32.totalorder %v6161, 0
      %v6163 = vsel %vm6162, %v6161, 0
      %v6164 = vshrl.u32 %v6163, 5
      %v6165 = vand.u32 %v6163, 31
      %v6166 = vsub.s32 32, %v6165
      %v6167 = vshrl.u32 683565275, %v6166
      %v6168 = vshll.u32 683565275, %v6165
      %v6169 = vshrl.u32 2475754826, %v6166
      %v6170 = vor.u32 %v6168, %v6169
      %v6171 = vshll.u32 2475754826, %v6165
      %v6172 = vshrl.u32 2131351028, %v6166
      %v6173 = vor.u32 %v6171, %v6172
      %v6174 = vshll.u32 2131351028, %v6165
      %v6175 = vshrl.u32 2102212464, %v6166
      %v6176 = vor.u32 %v6174, %v6175
      %v6177 = vshll.u32 2102212464, %v6165
      %v6178 = vshrl.u32 920167782, %v6166
      %v6179 = vor.u32 %v6177, %v6178
      %v6180 = vshll.u32 920167782, %v6165
      %v6181 = vshrl.u32 1326507024, %v6166
      %v6182 = vor.u32 %v6180, %v6181
      %vm6183 = vcmp.lt.s32.totalorder %v6164, 1
      %vm6184 = vcmp.lt.s32.totalorder %v6164, 2
      %vm6185 = vcmp.lt.s32.totalorder %v6164, 3
      %vm6186 = vcmp.lt.s32.totalorder %v6164, 4
      %v6187 = vsel %vm6183, %v6167, %v6170
      %v6188 = vsel %vm6186, %v6176, 2102212464
      %v6189 = vsel %vm6185, %v6173, %v6188
      %v6190 = vsel %vm6184, %v6187, %v6189
      %v6191 = vsel %vm6183, %v6170, %v6173
      %v6192 = vsel %vm6186, %v6179, 920167782
      %v6193 = vsel %vm6185, %v6176, %v6192
      %v6194 = vsel %vm6184, %v6191, %v6193
      %v6195 = vsel %vm6183, %v6173, %v6176
      %v6196 = vsel %vm6186, %v6182, 1326507024
      %v6197 = vsel %vm6185, %v6179, %v6196
      %v6198 = vsel %vm6184, %v6195, %v6197
      %v6199 = vshll.u32 %v6159, 8
      %v6200 = vmul.u32.u64.compose %v6199, %v6198
      %v6201 = vextract.low.u32 %v6200
      %v6202 = vextract.high.u32 %v6200
      %v6203 = vmul.u32.u64.compose %v6199, %v6194
      %v6204 = vextract.low.u32 %v6203
      %v6205 = vextract.high.u32 %v6203
      %v6206 = vmul.u32 %v6199, %v6190
      %v6207 = vadd.s32 %v6202, %v6204
      %vm6208 = vc.u32 %v6202, %v6204
      %v6209 = vadd.s32 %v6205, 1
      %v6210 = vsel %vm6208, %v6209, %v6205
      %v6211 = vadd.s32 %v6206, %v6210
      %v6212 = vadd.s32 %v6211, 536870912
      %v6213 = vshrl.u32 %v6212, 30
      %v6214 = vshll.u32 %v6213, 30
      %v6215 = vsub.s32 %v6211, %v6214
      %vm6216 = vcmp.lt.s32.totalorder %v6215, 0
      %v6217 = vsub.s32 0, %v6215
      %v6218 = vsel %vm6216, %v6217, %v6215
      %v6219 = vclz %v6218
      %v6220 = vsub.s32 %v6219, 2
      %vm6221 = vcmp.gt.s32.totalorder 0, %v6220
      %v6222 = vsel %vm6221, 0, %v6220
      %v6223 = vsub.s32 32, %v6222
      %v6224 = vshll.u32 %v6215, %v6222
      %v6225 = vshrl.u32 %v6207, %v6223
      %v6226 = vor.u32 %v6224, %v6225
      %v6227 = vsub.s32 4294967266, %v6222
      %v6228 = vadd.s32 %v6227, 127
      %v6229 = vshll.u32 %v6228, 23
      %v6230 = vor.u32 4788187, %v6229
      %v6231 = vand.u32 2147483647, %v6230
      %v6233 = vcvt.s32.f32 %v6226
      %v6234 = vmul.f32 %v6233, %v6231
      %v6235 = vxor.u32 %v6234, 2147483648
      %v6236 = vsel %vm6153, %v6235, %v6234
      %v6237 = vsub.s32 4, %v6213
      %v6238 = vsel %vm6153, %v6237, %v6213
      %v6239 = vsel %vm6152, %v649, %v6236
      %v6240 = vsel %vm6152, 0, %v6238
      %v6241 = vcosq.f32.pop %v6239
      %v6242 = vsinq.f32.pop %v6239
      %vm6243 = vweird.f32 %v649
      %v6244 = vand.u32 %v6240, 3
      %vm6245 = vcmp.lt.s32.totalorder %v6244, 2
      %vm6246 = vcmp.eq.s32.totalorder %v6244, 0
      %v6247 = vxor.u32 %v6242, 2147483648
      %v6248 = vsel %vm6246, %v6241, %v6247
      %vm6249 = vcmp.eq.s32.totalorder %v6244, 2
      %v6250 = vxor.u32 %v6241, 2147483648
      %v6251 = vsel %vm6249, %v6250, %v6242
      %v6252 = vsel %vm6245, %v6248, %v6251
      %v6253 = vsel %vm6243, nan, %v6252
      %v6254 = vand.u32 2147483647, %v650
      %vm6255 = vcmp.le.f32.partialorder %v6254, 0.7853982
      %vm6256 = vcmp.lt.s32.totalorder %v650, 0
      %v6257 = vand.u32 %v650, 2139095040
      %v6258 = vshrl.u32 %v6257, 23
      %v6259 = vsub.s32 %v6258, 127
      %v6260 = vand.u32 2147483647, %v650
      %v6261 = vand.u32 %v6260, 8388607
      %v6262 = vor.u32 %v6261, 8388608
      %v6263 = vsub.s32 0, %v6262
      %v6264 = vadd.s32 %v6259, 1
      %vm6265 = vcmp.gt.s32.totalorder %v6264, 0
      %v6266 = vsel %vm6265, %v6264, 0
      %v6267 = vshrl.u32 %v6266, 5
      %v6268 = vand.u32 %v6266, 31
      %v6269 = vsub.s32 32, %v6268
      %v6270 = vshrl.u32 683565275, %v6269
      %v6271 = vshll.u32 683565275, %v6268
      %v6272 = vshrl.u32 2475754826, %v6269
      %v6273 = vor.u32 %v6271, %v6272
      %v6274 = vshll.u32 2475754826, %v6268
      %v6275 = vshrl.u32 2131351028, %v6269
      %v6276 = vor.u32 %v6274, %v6275
      %v6277 = vshll.u32 2131351028, %v6268
      %v6278 = vshrl.u32 2102212464, %v6269
      %v6279 = vor.u32 %v6277, %v6278
      %v6280 = vshll.u32 2102212464, %v6268
      %v6281 = vshrl.u32 920167782, %v6269
      %v6282 = vor.u32 %v6280, %v6281
      %v6283 = vshll.u32 920167782, %v6268
      %v6284 = vshrl.u32 1326507024, %v6269
      %v6285 = vor.u32 %v6283, %v6284
      %vm6286 = vcmp.lt.s32.totalorder %v6267, 1
      %vm6287 = vcmp.lt.s32.totalorder %v6267, 2
      %vm6288 = vcmp.lt.s32.totalorder %v6267, 3
      %vm6289 = vcmp.lt.s32.totalorder %v6267, 4
      %v6290 = vsel %vm6286, %v6270, %v6273
      %v6291 = vsel %vm6289, %v6279, 2102212464
      %v6292 = vsel %vm6288, %v6276, %v6291
      %v6293 = vsel %vm6287, %v6290, %v6292
      %v6294 = vsel %vm6286, %v6273, %v6276
      %v6295 = vsel %vm6289, %v6282, 920167782
      %v6296 = vsel %vm6288, %v6279, %v6295
      %v6297 = vsel %vm6287, %v6294, %v6296
      %v6298 = vsel %vm6286, %v6276, %v6279
      %v6299 = vsel %vm6289, %v6285, 1326507024
      %v6300 = vsel %vm6288, %v6282, %v6299
      %v6301 = vsel %vm6287, %v6298, %v6300
      %v6302 = vshll.u32 %v6262, 8
      %v6303 = vmul.u32.u64.compose %v6302, %v6301
      %v6304 = vextract.low.u32 %v6303
      %v6305 = vextract.high.u32 %v6303
      %v6306 = vmul.u32.u64.compose %v6302, %v6297
      %v6307 = vextract.low.u32 %v6306
      %v6308 = vextract.high.u32 %v6306
      %v6309 = vmul.u32 %v6302, %v6293
      %v6310 = vadd.s32 %v6305, %v6307
      %vm6311 = vc.u32 %v6305, %v6307
      %v6312 = vadd.s32 %v6308, 1
      %v6313 = vsel %vm6311, %v6312, %v6308
      %v6314 = vadd.s32 %v6309, %v6313
      %v6315 = vadd.s32 %v6314, 536870912
      %v6316 = vshrl.u32 %v6315, 30
      %v6317 = vshll.u32 %v6316, 30
      %v6318 = vsub.s32 %v6314, %v6317
      %vm6319 = vcmp.lt.s32.totalorder %v6318, 0
      %v6320 = vsub.s32 0, %v6318
      %v6321 = vsel %vm6319, %v6320, %v6318
      %v6322 = vclz %v6321
      %v6323 = vsub.s32 %v6322, 2
      %vm6324 = vcmp.gt.s32.totalorder 0, %v6323
      %v6325 = vsel %vm6324, 0, %v6323
      %v6326 = vsub.s32 32, %v6325
      %v6327 = vshll.u32 %v6318, %v6325
      %v6328 = vshrl.u32 %v6310, %v6326
      %v6329 = vor.u32 %v6327, %v6328
      %v6330 = vsub.s32 4294967266, %v6325
      %v6331 = vadd.s32 %v6330, 127
      %v6332 = vshll.u32 %v6331, 23
      %v6333 = vor.u32 4788187, %v6332
      %v6334 = vand.u32 2147483647, %v6333
      %v6336 = vcvt.s32.f32 %v6329
      %v6337 = vmul.f32 %v6336, %v6334
      %v6338 = vxor.u32 %v6337, 2147483648
      %v6339 = vsel %vm6256, %v6338, %v6337
      %v6340 = vsub.s32 4, %v6316
      %v6341 = vsel %vm6256, %v6340, %v6316
      %v6342 = vsel %vm6255, %v650, %v6339
      %v6343 = vsel %vm6255, 0, %v6341
      %v6344 = vcosq.f32.pop %v6342
      %v6345 = vsinq.f32.pop %v6342
      %vm6346 = vweird.f32 %v650
      %v6347 = vand.u32 %v6343, 3
      %vm6348 = vcmp.lt.s32.totalorder %v6347, 2
      %vm6349 = vcmp.eq.s32.totalorder %v6347, 0
      %v6350 = vxor.u32 %v6345, 2147483648
      %v6351 = vsel %vm6349, %v6344, %v6350
      %vm6352 = vcmp.eq.s32.totalorder %v6347, 2
      %v6353 = vxor.u32 %v6344, 2147483648
      %v6354 = vsel %vm6352, %v6353, %v6345
      %v6355 = vsel %vm6348, %v6351, %v6354
      %v6356 = vsel %vm6346, nan, %v6355
      %v6357 = vand.u32 2147483647, %v651
      %vm6358 = vcmp.le.f32.partialorder %v6357, 0.7853982
      %vm6359 = vcmp.lt.s32.totalorder %v651, 0
      %v6360 = vand.u32 %v651, 2139095040
      %v6361 = vshrl.u32 %v6360, 23
      %v6362 = vsub.s32 %v6361, 127
      %v6363 = vand.u32 2147483647, %v651
      %v6364 = vand.u32 %v6363, 8388607
      %v6365 = vor.u32 %v6364, 8388608
      %v6366 = vsub.s32 0, %v6365
      %v6367 = vadd.s32 %v6362, 1
      %vm6368 = vcmp.gt.s32.totalorder %v6367, 0
      %v6369 = vsel %vm6368, %v6367, 0
      %v6370 = vshrl.u32 %v6369, 5
      %v6371 = vand.u32 %v6369, 31
      %v6372 = vsub.s32 32, %v6371
      %v6373 = vshrl.u32 683565275, %v6372
      %v6374 = vshll.u32 683565275, %v6371
      %v6375 = vshrl.u32 2475754826, %v6372
      %v6376 = vor.u32 %v6374, %v6375
      %v6377 = vshll.u32 2475754826, %v6371
      %v6378 = vshrl.u32 2131351028, %v6372
      %v6379 = vor.u32 %v6377, %v6378
      %v6380 = vshll.u32 2131351028, %v6371
      %v6381 = vshrl.u32 2102212464, %v6372
      %v6382 = vor.u32 %v6380, %v6381
      %v6383 = vshll.u32 2102212464, %v6371
      %v6384 = vshrl.u32 920167782, %v6372
      %v6385 = vor.u32 %v6383, %v6384
      %v6386 = vshll.u32 920167782, %v6371
      %v6387 = vshrl.u32 1326507024, %v6372
      %v6388 = vor.u32 %v6386, %v6387
      %vm6389 = vcmp.lt.s32.totalorder %v6370, 1
      %vm6390 = vcmp.lt.s32.totalorder %v6370, 2
      %vm6391 = vcmp.lt.s32.totalorder %v6370, 3
      %vm6392 = vcmp.lt.s32.totalorder %v6370, 4
      %v6393 = vsel %vm6389, %v6373, %v6376
      %v6394 = vsel %vm6392, %v6382, 2102212464
      %v6395 = vsel %vm6391, %v6379, %v6394
      %v6396 = vsel %vm6390, %v6393, %v6395
      %v6397 = vsel %vm6389, %v6376, %v6379
      %v6398 = vsel %vm6392, %v6385, 920167782
      %v6399 = vsel %vm6391, %v6382, %v6398
      %v6400 = vsel %vm6390, %v6397, %v6399
      %v6401 = vsel %vm6389, %v6379, %v6382
      %v6402 = vsel %vm6392, %v6388, 1326507024
      %v6403 = vsel %vm6391, %v6385, %v6402
      %v6404 = vsel %vm6390, %v6401, %v6403
      %v6405 = vshll.u32 %v6365, 8
      %v6406 = vmul.u32.u64.compose %v6405, %v6404
      %v6407 = vextract.low.u32 %v6406
      %v6408 = vextract.high.u32 %v6406
      %v6409 = vmul.u32.u64.compose %v6405, %v6400
      %v6410 = vextract.low.u32 %v6409
      %v6411 = vextract.high.u32 %v6409
      %v6412 = vmul.u32 %v6405, %v6396
      %v6413 = vadd.s32 %v6408, %v6410
      %vm6414 = vc.u32 %v6408, %v6410
      %v6415 = vadd.s32 %v6411, 1
      %v6416 = vsel %vm6414, %v6415, %v6411
      %v6417 = vadd.s32 %v6412, %v6416
      %v6418 = vadd.s32 %v6417, 536870912
      %v6419 = vshrl.u32 %v6418, 30
      %v6420 = vshll.u32 %v6419, 30
      %v6421 = vsub.s32 %v6417, %v6420
      %vm6422 = vcmp.lt.s32.totalorder %v6421, 0
      %v6423 = vsub.s32 0, %v6421
      %v6424 = vsel %vm6422, %v6423, %v6421
      %v6425 = vclz %v6424
      %v6426 = vsub.s32 %v6425, 2
      %vm6427 = vcmp.gt.s32.totalorder 0, %v6426
      %v6428 = vsel %vm6427, 0, %v6426
      %v6429 = vsub.s32 32, %v6428
      %v6430 = vshll.u32 %v6421, %v6428
      %v6431 = vshrl.u32 %v6413, %v6429
      %v6432 = vor.u32 %v6430, %v6431
      %v6433 = vsub.s32 4294967266, %v6428
      %v6434 = vadd.s32 %v6433, 127
      %v6435 = vshll.u32 %v6434, 23
      %v6436 = vor.u32 4788187, %v6435
      %v6437 = vand.u32 2147483647, %v6436
      %v6439 = vcvt.s32.f32 %v6432
      %v6440 = vmul.f32 %v6439, %v6437
      %v6441 = vxor.u32 %v6440, 2147483648
      %v6442 = vsel %vm6359, %v6441, %v6440
      %v6443 = vsub.s32 4, %v6419
      %v6444 = vsel %vm6359, %v6443, %v6419
      %v6445 = vsel %vm6358, %v651, %v6442
      %v6446 = vsel %vm6358, 0, %v6444
      %v6447 = vcosq.f32.pop %v6445
      %v6448 = vsinq.f32.pop %v6445
      %vm6449 = vweird.f32 %v651
      %v6450 = vand.u32 %v6446, 3
      %vm6451 = vcmp.lt.s32.totalorder %v6450, 2
      %vm6452 = vcmp.eq.s32.totalorder %v6450, 0
      %v6453 = vxor.u32 %v6448, 2147483648
      %v6454 = vsel %vm6452, %v6447, %v6453
      %vm6455 = vcmp.eq.s32.totalorder %v6450, 2
      %v6456 = vxor.u32 %v6447, 2147483648
      %v6457 = vsel %vm6455, %v6456, %v6448
      %v6458 = vsel %vm6451, %v6454, %v6457
      %v6459 = vsel %vm6449, nan, %v6458
      %v6460 = vand.u32 2147483647, %v652
      %vm6461 = vcmp.le.f32.partialorder %v6460, 0.7853982
      %vm6462 = vcmp.lt.s32.totalorder %v652, 0
      %v6463 = vand.u32 %v652, 2139095040
      %v6464 = vshrl.u32 %v6463, 23
      %v6465 = vsub.s32 %v6464, 127
      %v6466 = vand.u32 2147483647, %v652
      %v6467 = vand.u32 %v6466, 8388607
      %v6468 = vor.u32 %v6467, 8388608
      %v6469 = vsub.s32 0, %v6468
      %v6470 = vadd.s32 %v6465, 1
      %vm6471 = vcmp.gt.s32.totalorder %v6470, 0
      %v6472 = vsel %vm6471, %v6470, 0
      %v6473 = vshrl.u32 %v6472, 5
      %v6474 = vand.u32 %v6472, 31
      %v6475 = vsub.s32 32, %v6474
      %v6476 = vshrl.u32 683565275, %v6475
      %v6477 = vshll.u32 683565275, %v6474
      %v6478 = vshrl.u32 2475754826, %v6475
      %v6479 = vor.u32 %v6477, %v6478
      %v6480 = vshll.u32 2475754826, %v6474
      %v6481 = vshrl.u32 2131351028, %v6475
      %v6482 = vor.u32 %v6480, %v6481
      %v6483 = vshll.u32 2131351028, %v6474
      %v6484 = vshrl.u32 2102212464, %v6475
      %v6485 = vor.u32 %v6483, %v6484
      %v6486 = vshll.u32 2102212464, %v6474
      %v6487 = vshrl.u32 920167782, %v6475
      %v6488 = vor.u32 %v6486, %v6487
      %v6489 = vshll.u32 920167782, %v6474
      %v6490 = vshrl.u32 1326507024, %v6475
      %v6491 = vor.u32 %v6489, %v6490
      %vm6492 = vcmp.lt.s32.totalorder %v6473, 1
      %vm6493 = vcmp.lt.s32.totalorder %v6473, 2
      %vm6494 = vcmp.lt.s32.totalorder %v6473, 3
      %vm6495 = vcmp.lt.s32.totalorder %v6473, 4
      %v6496 = vsel %vm6492, %v6476, %v6479
      %v6497 = vsel %vm6495, %v6485, 2102212464
      %v6498 = vsel %vm6494, %v6482, %v6497
      %v6499 = vsel %vm6493, %v6496, %v6498
      %v6500 = vsel %vm6492, %v6479, %v6482
      %v6501 = vsel %vm6495, %v6488, 920167782
      %v6502 = vsel %vm6494, %v6485, %v6501
      %v6503 = vsel %vm6493, %v6500, %v6502
      %v6504 = vsel %vm6492, %v6482, %v6485
      %v6505 = vsel %vm6495, %v6491, 1326507024
      %v6506 = vsel %vm6494, %v6488, %v6505
      %v6507 = vsel %vm6493, %v6504, %v6506
      %v6508 = vshll.u32 %v6468, 8
      %v6509 = vmul.u32.u64.compose %v6508, %v6507
      %v6510 = vextract.low.u32 %v6509
      %v6511 = vextract.high.u32 %v6509
      %v6512 = vmul.u32.u64.compose %v6508, %v6503
      %v6513 = vextract.low.u32 %v6512
      %v6514 = vextract.high.u32 %v6512
      %v6515 = vmul.u32 %v6508, %v6499
      %v6516 = vadd.s32 %v6511, %v6513
      %vm6517 = vc.u32 %v6511, %v6513
      %v6518 = vadd.s32 %v6514, 1
      %v6519 = vsel %vm6517, %v6518, %v6514
      %v6520 = vadd.s32 %v6515, %v6519
      %v6521 = vadd.s32 %v6520, 536870912
      %v6522 = vshrl.u32 %v6521, 30
      %v6523 = vshll.u32 %v6522, 30
      %v6524 = vsub.s32 %v6520, %v6523
      %vm6525 = vcmp.lt.s32.totalorder %v6524, 0
      %v6526 = vsub.s32 0, %v6524
      %v6527 = vsel %vm6525, %v6526, %v6524
      %v6528 = vclz %v6527
      %v6529 = vsub.s32 %v6528, 2
      %vm6530 = vcmp.gt.s32.totalorder 0, %v6529
      %v6531 = vsel %vm6530, 0, %v6529
      %v6532 = vsub.s32 32, %v6531
      %v6533 = vshll.u32 %v6524, %v6531
      %v6534 = vshrl.u32 %v6516, %v6532
      %v6535 = vor.u32 %v6533, %v6534
      %v6536 = vsub.s32 4294967266, %v6531
      %v6537 = vadd.s32 %v6536, 127
      %v6538 = vshll.u32 %v6537, 23
      %v6539 = vor.u32 4788187, %v6538
      %v6540 = vand.u32 2147483647, %v6539
      %v6542 = vcvt.s32.f32 %v6535
      %v6543 = vmul.f32 %v6542, %v6540
      %v6544 = vxor.u32 %v6543, 2147483648
      %v6545 = vsel %vm6462, %v6544, %v6543
      %v6546 = vsub.s32 4, %v6522
      %v6547 = vsel %vm6462, %v6546, %v6522
      %v6548 = vsel %vm6461, %v652, %v6545
      %v6549 = vsel %vm6461, 0, %v6547
      %v6550 = vcosq.f32.pop %v6548
      %v6551 = vsinq.f32.pop %v6548
      %vm6552 = vweird.f32 %v652
      %v6553 = vand.u32 %v6549, 3
      %vm6554 = vcmp.lt.s32.totalorder %v6553, 2
      %vm6555 = vcmp.eq.s32.totalorder %v6553, 0
      %v6556 = vxor.u32 %v6551, 2147483648
      %v6557 = vsel %vm6555, %v6550, %v6556
      %vm6558 = vcmp.eq.s32.totalorder %v6553, 2
      %v6559 = vxor.u32 %v6550, 2147483648
      %v6560 = vsel %vm6558, %v6559, %v6551
      %v6561 = vsel %vm6554, %v6557, %v6560
      %v6562 = vsel %vm6552, nan, %v6561
      %v6563 = vand.u32 2147483647, %v653
      %vm6564 = vcmp.le.f32.partialorder %v6563, 0.7853982
      %vm6565 = vcmp.lt.s32.totalorder %v653, 0
      %v6566 = vand.u32 %v653, 2139095040
      %v6567 = vshrl.u32 %v6566, 23
      %v6568 = vsub.s32 %v6567, 127
      %v6569 = vand.u32 2147483647, %v653
      %v6570 = vand.u32 %v6569, 8388607
      %v6571 = vor.u32 %v6570, 8388608
      %v6572 = vsub.s32 0, %v6571
      %v6573 = vadd.s32 %v6568, 1
      %vm6574 = vcmp.gt.s32.totalorder %v6573, 0
      %v6575 = vsel %vm6574, %v6573, 0
      %v6576 = vshrl.u32 %v6575, 5
      %v6577 = vand.u32 %v6575, 31
      %v6578 = vsub.s32 32, %v6577
      %v6579 = vshrl.u32 683565275, %v6578
      %v6580 = vshll.u32 683565275, %v6577
      %v6581 = vshrl.u32 2475754826, %v6578
      %v6582 = vor.u32 %v6580, %v6581
      %v6583 = vshll.u32 2475754826, %v6577
      %v6584 = vshrl.u32 2131351028, %v6578
      %v6585 = vor.u32 %v6583, %v6584
      %v6586 = vshll.u32 2131351028, %v6577
      %v6587 = vshrl.u32 2102212464, %v6578
      %v6588 = vor.u32 %v6586, %v6587
      %v6589 = vshll.u32 2102212464, %v6577
      %v6590 = vshrl.u32 920167782, %v6578
      %v6591 = vor.u32 %v6589, %v6590
      %v6592 = vshll.u32 920167782, %v6577
      %v6593 = vshrl.u32 1326507024, %v6578
      %v6594 = vor.u32 %v6592, %v6593
      %vm6595 = vcmp.lt.s32.totalorder %v6576, 1
      %vm6596 = vcmp.lt.s32.totalorder %v6576, 2
      %vm6597 = vcmp.lt.s32.totalorder %v6576, 3
      %vm6598 = vcmp.lt.s32.totalorder %v6576, 4
      %v6599 = vsel %vm6595, %v6579, %v6582
      %v6600 = vsel %vm6598, %v6588, 2102212464
      %v6601 = vsel %vm6597, %v6585, %v6600
      %v6602 = vsel %vm6596, %v6599, %v6601
      %v6603 = vsel %vm6595, %v6582, %v6585
      %v6604 = vsel %vm6598, %v6591, 920167782
      %v6605 = vsel %vm6597, %v6588, %v6604
      %v6606 = vsel %vm6596, %v6603, %v6605
      %v6607 = vsel %vm6595, %v6585, %v6588
      %v6608 = vsel %vm6598, %v6594, 1326507024
      %v6609 = vsel %vm6597, %v6591, %v6608
      %v6610 = vsel %vm6596, %v6607, %v6609
      %v6611 = vshll.u32 %v6571, 8
      %v6612 = vmul.u32.u64.compose %v6611, %v6610
      %v6613 = vextract.low.u32 %v6612
      %v6614 = vextract.high.u32 %v6612
      %v6615 = vmul.u32.u64.compose %v6611, %v6606
      %v6616 = vextract.low.u32 %v6615
      %v6617 = vextract.high.u32 %v6615
      %v6618 = vmul.u32 %v6611, %v6602
      %v6619 = vadd.s32 %v6614, %v6616
      %vm6620 = vc.u32 %v6614, %v6616
      %v6621 = vadd.s32 %v6617, 1
      %v6622 = vsel %vm6620, %v6621, %v6617
      %v6623 = vadd.s32 %v6618, %v6622
      %v6624 = vadd.s32 %v6623, 536870912
      %v6625 = vshrl.u32 %v6624, 30
      %v6626 = vshll.u32 %v6625, 30
      %v6627 = vsub.s32 %v6623, %v6626
      %vm6628 = vcmp.lt.s32.totalorder %v6627, 0
      %v6629 = vsub.s32 0, %v6627
      %v6630 = vsel %vm6628, %v6629, %v6627
      %v6631 = vclz %v6630
      %v6632 = vsub.s32 %v6631, 2
      %vm6633 = vcmp.gt.s32.totalorder 0, %v6632
      %v6634 = vsel %vm6633, 0, %v6632
      %v6635 = vsub.s32 32, %v6634
      %v6636 = vshll.u32 %v6627, %v6634
      %v6637 = vshrl.u32 %v6619, %v6635
      %v6638 = vor.u32 %v6636, %v6637
      %v6639 = vsub.s32 4294967266, %v6634
      %v6640 = vadd.s32 %v6639, 127
      %v6641 = vshll.u32 %v6640, 23
      %v6642 = vor.u32 4788187, %v6641
      %v6643 = vand.u32 2147483647, %v6642
      %v6645 = vcvt.s32.f32 %v6638
      %v6646 = vmul.f32 %v6645, %v6643
      %v6647 = vxor.u32 %v6646, 2147483648
      %v6648 = vsel %vm6565, %v6647, %v6646
      %v6649 = vsub.s32 4, %v6625
      %v6650 = vsel %vm6565, %v6649, %v6625
      %v6651 = vsel %vm6564, %v653, %v6648
      %v6652 = vsel %vm6564, 0, %v6650
      %v6653 = vcosq.f32.pop %v6651
      %v6654 = vsinq.f32.pop %v6651
      %vm6655 = vweird.f32 %v653
      %v6656 = vand.u32 %v6652, 3
      %vm6657 = vcmp.lt.s32.totalorder %v6656, 2
      %vm6658 = vcmp.eq.s32.totalorder %v6656, 0
      %v6659 = vxor.u32 %v6654, 2147483648
      %v6660 = vsel %vm6658, %v6653, %v6659
      %vm6661 = vcmp.eq.s32.totalorder %v6656, 2
      %v6662 = vxor.u32 %v6653, 2147483648
      %v6663 = vsel %vm6661, %v6662, %v6654
      %v6664 = vsel %vm6657, %v6660, %v6663
      %v6665 = vsel %vm6655, nan, %v6664
      %v6666 = vand.u32 2147483647, %v654
      %vm6667 = vcmp.le.f32.partialorder %v6666, 0.7853982
      %vm6668 = vcmp.lt.s32.totalorder %v654, 0
      %v6669 = vand.u32 %v654, 2139095040
      %v6670 = vshrl.u32 %v6669, 23
      %v6671 = vsub.s32 %v6670, 127
      %v6672 = vand.u32 2147483647, %v654
      %v6673 = vand.u32 %v6672, 8388607
      %v6674 = vor.u32 %v6673, 8388608
      %v6675 = vsub.s32 0, %v6674
      %v6676 = vadd.s32 %v6671, 1
      %vm6677 = vcmp.gt.s32.totalorder %v6676, 0
      %v6678 = vsel %vm6677, %v6676, 0
      %v6679 = vshrl.u32 %v6678, 5
      %v6680 = vand.u32 %v6678, 31
      %v6681 = vsub.s32 32, %v6680
      %v6682 = vshrl.u32 683565275, %v6681
      %v6683 = vshll.u32 683565275, %v6680
      %v6684 = vshrl.u32 2475754826, %v6681
      %v6685 = vor.u32 %v6683, %v6684
      %v6686 = vshll.u32 2475754826, %v6680
      %v6687 = vshrl.u32 2131351028, %v6681
      %v6688 = vor.u32 %v6686, %v6687
      %v6689 = vshll.u32 2131351028, %v6680
      %v6690 = vshrl.u32 2102212464, %v6681
      %v6691 = vor.u32 %v6689, %v6690
      %v6692 = vshll.u32 2102212464, %v6680
      %v6693 = vshrl.u32 920167782, %v6681
      %v6694 = vor.u32 %v6692, %v6693
      %v6695 = vshll.u32 920167782, %v6680
      %v6696 = vshrl.u32 1326507024, %v6681
      %v6697 = vor.u32 %v6695, %v6696
      %vm6698 = vcmp.lt.s32.totalorder %v6679, 1
      %vm6699 = vcmp.lt.s32.totalorder %v6679, 2
      %vm6700 = vcmp.lt.s32.totalorder %v6679, 3
      %vm6701 = vcmp.lt.s32.totalorder %v6679, 4
      %v6702 = vsel %vm6698, %v6682, %v6685
      %v6703 = vsel %vm6701, %v6691, 2102212464
      %v6704 = vsel %vm6700, %v6688, %v6703
      %v6705 = vsel %vm6699, %v6702, %v6704
      %v6706 = vsel %vm6698, %v6685, %v6688
      %v6707 = vsel %vm6701, %v6694, 920167782
      %v6708 = vsel %vm6700, %v6691, %v6707
      %v6709 = vsel %vm6699, %v6706, %v6708
      %v6710 = vsel %vm6698, %v6688, %v6691
      %v6711 = vsel %vm6701, %v6697, 1326507024
      %v6712 = vsel %vm6700, %v6694, %v6711
      %v6713 = vsel %vm6699, %v6710, %v6712
      %v6714 = vshll.u32 %v6674, 8
      %v6715 = vmul.u32.u64.compose %v6714, %v6713
      %v6716 = vextract.low.u32 %v6715
      %v6717 = vextract.high.u32 %v6715
      %v6718 = vmul.u32.u64.compose %v6714, %v6709
      %v6719 = vextract.low.u32 %v6718
      %v6720 = vextract.high.u32 %v6718
      %v6721 = vmul.u32 %v6714, %v6705
      %v6722 = vadd.s32 %v6717, %v6719
      %vm6723 = vc.u32 %v6717, %v6719
      %v6724 = vadd.s32 %v6720, 1
      %v6725 = vsel %vm6723, %v6724, %v6720
      %v6726 = vadd.s32 %v6721, %v6725
      %v6727 = vadd.s32 %v6726, 536870912
      %v6728 = vshrl.u32 %v6727, 30
      %v6729 = vshll.u32 %v6728, 30
      %v6730 = vsub.s32 %v6726, %v6729
      %vm6731 = vcmp.lt.s32.totalorder %v6730, 0
      %v6732 = vsub.s32 0, %v6730
      %v6733 = vsel %vm6731, %v6732, %v6730
      %v6734 = vclz %v6733
      %v6735 = vsub.s32 %v6734, 2
      %vm6736 = vcmp.gt.s32.totalorder 0, %v6735
      %v6737 = vsel %vm6736, 0, %v6735
      %v6738 = vsub.s32 32, %v6737
      %v6739 = vshll.u32 %v6730, %v6737
      %v6740 = vshrl.u32 %v6722, %v6738
      %v6741 = vor.u32 %v6739, %v6740
      %v6742 = vsub.s32 4294967266, %v6737
      %v6743 = vadd.s32 %v6742, 127
      %v6744 = vshll.u32 %v6743, 23
      %v6745 = vor.u32 4788187, %v6744
      %v6746 = vand.u32 2147483647, %v6745
      %v6748 = vcvt.s32.f32 %v6741
      %v6749 = vmul.f32 %v6748, %v6746
      %v6750 = vxor.u32 %v6749, 2147483648
      %v6751 = vsel %vm6668, %v6750, %v6749
      %v6752 = vsub.s32 4, %v6728
      %v6753 = vsel %vm6668, %v6752, %v6728
      %v6754 = vsel %vm6667, %v654, %v6751
      %v6755 = vsel %vm6667, 0, %v6753
      %v6756 = vcosq.f32.pop %v6754
      %v6757 = vsinq.f32.pop %v6754
      %vm6758 = vweird.f32 %v654
      %v6759 = vand.u32 %v6755, 3
      %vm6760 = vcmp.lt.s32.totalorder %v6759, 2
      %vm6761 = vcmp.eq.s32.totalorder %v6759, 0
      %v6762 = vxor.u32 %v6757, 2147483648
      %v6763 = vsel %vm6761, %v6756, %v6762
      %vm6764 = vcmp.eq.s32.totalorder %v6759, 2
      %v6765 = vxor.u32 %v6756, 2147483648
      %v6766 = vsel %vm6764, %v6765, %v6757
      %v6767 = vsel %vm6760, %v6763, %v6766
      %v6768 = vsel %vm6758, nan, %v6767
      %v6769 = vand.u32 2147483647, %v655
      %vm6770 = vcmp.le.f32.partialorder %v6769, 0.7853982
      %vm6771 = vcmp.lt.s32.totalorder %v655, 0
      %v6772 = vand.u32 %v655, 2139095040
      %v6773 = vshrl.u32 %v6772, 23
      %v6774 = vsub.s32 %v6773, 127
      %v6775 = vand.u32 2147483647, %v655
      %v6776 = vand.u32 %v6775, 8388607
      %v6777 = vor.u32 %v6776, 8388608
      %v6778 = vsub.s32 0, %v6777
      %v6779 = vadd.s32 %v6774, 1
      %vm6780 = vcmp.gt.s32.totalorder %v6779, 0
      %v6781 = vsel %vm6780, %v6779, 0
      %v6782 = vshrl.u32 %v6781, 5
      %v6783 = vand.u32 %v6781, 31
      %v6784 = vsub.s32 32, %v6783
      %v6785 = vshrl.u32 683565275, %v6784
      %v6786 = vshll.u32 683565275, %v6783
      %v6787 = vshrl.u32 2475754826, %v6784
      %v6788 = vor.u32 %v6786, %v6787
      %v6789 = vshll.u32 2475754826, %v6783
      %v6790 = vshrl.u32 2131351028, %v6784
      %v6791 = vor.u32 %v6789, %v6790
      %v6792 = vshll.u32 2131351028, %v6783
      %v6793 = vshrl.u32 2102212464, %v6784
      %v6794 = vor.u32 %v6792, %v6793
      %v6795 = vshll.u32 2102212464, %v6783
      %v6796 = vshrl.u32 920167782, %v6784
      %v6797 = vor.u32 %v6795, %v6796
      %v6798 = vshll.u32 920167782, %v6783
      %v6799 = vshrl.u32 1326507024, %v6784
      %v6800 = vor.u32 %v6798, %v6799
      %vm6801 = vcmp.lt.s32.totalorder %v6782, 1
      %vm6802 = vcmp.lt.s32.totalorder %v6782, 2
      %vm6803 = vcmp.lt.s32.totalorder %v6782, 3
      %vm6804 = vcmp.lt.s32.totalorder %v6782, 4
      %v6805 = vsel %vm6801, %v6785, %v6788
      %v6806 = vsel %vm6804, %v6794, 2102212464
      %v6807 = vsel %vm6803, %v6791, %v6806
      %v6808 = vsel %vm6802, %v6805, %v6807
      %v6809 = vsel %vm6801, %v6788, %v6791
      %v6810 = vsel %vm6804, %v6797, 920167782
      %v6811 = vsel %vm6803, %v6794, %v6810
      %v6812 = vsel %vm6802, %v6809, %v6811
      %v6813 = vsel %vm6801, %v6791, %v6794
      %v6814 = vsel %vm6804, %v6800, 1326507024
      %v6815 = vsel %vm6803, %v6797, %v6814
      %v6816 = vsel %vm6802, %v6813, %v6815
      %v6817 = vshll.u32 %v6777, 8
      %v6818 = vmul.u32.u64.compose %v6817, %v6816
      %v6819 = vextract.low.u32 %v6818
      %v6820 = vextract.high.u32 %v6818
      %v6821 = vmul.u32.u64.compose %v6817, %v6812
      %v6822 = vextract.low.u32 %v6821
      %v6823 = vextract.high.u32 %v6821
      %v6824 = vmul.u32 %v6817, %v6808
      %v6825 = vadd.s32 %v6820, %v6822
      %vm6826 = vc.u32 %v6820, %v6822
      %v6827 = vadd.s32 %v6823, 1
      %v6828 = vsel %vm6826, %v6827, %v6823
      %v6829 = vadd.s32 %v6824, %v6828
      %v6830 = vadd.s32 %v6829, 536870912
      %v6831 = vshrl.u32 %v6830, 30
      %v6832 = vshll.u32 %v6831, 30
      %v6833 = vsub.s32 %v6829, %v6832
      %vm6834 = vcmp.lt.s32.totalorder %v6833, 0
      %v6835 = vsub.s32 0, %v6833
      %v6836 = vsel %vm6834, %v6835, %v6833
      %v6837 = vclz %v6836
      %v6838 = vsub.s32 %v6837, 2
      %vm6839 = vcmp.gt.s32.totalorder 0, %v6838
      %v6840 = vsel %vm6839, 0, %v6838
      %v6841 = vsub.s32 32, %v6840
      %v6842 = vshll.u32 %v6833, %v6840
      %v6843 = vshrl.u32 %v6825, %v6841
      %v6844 = vor.u32 %v6842, %v6843
      %v6845 = vsub.s32 4294967266, %v6840
      %v6846 = vadd.s32 %v6845, 127
      %v6847 = vshll.u32 %v6846, 23
      %v6848 = vor.u32 4788187, %v6847
      %v6849 = vand.u32 2147483647, %v6848
      %v6851 = vcvt.s32.f32 %v6844
      %v6852 = vmul.f32 %v6851, %v6849
      %v6853 = vxor.u32 %v6852, 2147483648
      %v6854 = vsel %vm6771, %v6853, %v6852
      %v6855 = vsub.s32 4, %v6831
      %v6856 = vsel %vm6771, %v6855, %v6831
      %v6857 = vsel %vm6770, %v655, %v6854
      %v6858 = vsel %vm6770, 0, %v6856
      %v6859 = vcosq.f32.pop %v6857
      %v6860 = vsinq.f32.pop %v6857
      %vm6861 = vweird.f32 %v655
      %v6862 = vand.u32 %v6858, 3
      %vm6863 = vcmp.lt.s32.totalorder %v6862, 2
      %vm6864 = vcmp.eq.s32.totalorder %v6862, 0
      %v6865 = vxor.u32 %v6860, 2147483648
      %v6866 = vsel %vm6864, %v6859, %v6865
      %vm6867 = vcmp.eq.s32.totalorder %v6862, 2
      %v6868 = vxor.u32 %v6859, 2147483648
      %v6869 = vsel %vm6867, %v6868, %v6860
      %v6870 = vsel %vm6863, %v6866, %v6869
      %v6871 = vsel %vm6861, nan, %v6870
      %v6872 = vand.u32 2147483647, %v656
      %vm6873 = vcmp.le.f32.partialorder %v6872, 0.7853982
      %vm6874 = vcmp.lt.s32.totalorder %v656, 0
      %v6875 = vand.u32 %v656, 2139095040
      %v6876 = vshrl.u32 %v6875, 23
      %v6877 = vsub.s32 %v6876, 127
      %v6878 = vand.u32 2147483647, %v656
      %v6879 = vand.u32 %v6878, 8388607
      %v6880 = vor.u32 %v6879, 8388608
      %v6881 = vsub.s32 0, %v6880
      %v6882 = vadd.s32 %v6877, 1
      %vm6883 = vcmp.gt.s32.totalorder %v6882, 0
      %v6884 = vsel %vm6883, %v6882, 0
      %v6885 = vshrl.u32 %v6884, 5
      %v6886 = vand.u32 %v6884, 31
      %v6887 = vsub.s32 32, %v6886
      %v6888 = vshrl.u32 683565275, %v6887
      %v6889 = vshll.u32 683565275, %v6886
      %v6890 = vshrl.u32 2475754826, %v6887
      %v6891 = vor.u32 %v6889, %v6890
      %v6892 = vshll.u32 2475754826, %v6886
      %v6893 = vshrl.u32 2131351028, %v6887
      %v6894 = vor.u32 %v6892, %v6893
      %v6895 = vshll.u32 2131351028, %v6886
      %v6896 = vshrl.u32 2102212464, %v6887
      %v6897 = vor.u32 %v6895, %v6896
      %v6898 = vshll.u32 2102212464, %v6886
      %v6899 = vshrl.u32 920167782, %v6887
      %v6900 = vor.u32 %v6898, %v6899
      %v6901 = vshll.u32 920167782, %v6886
      %v6902 = vshrl.u32 1326507024, %v6887
      %v6903 = vor.u32 %v6901, %v6902
      %vm6904 = vcmp.lt.s32.totalorder %v6885, 1
      %vm6905 = vcmp.lt.s32.totalorder %v6885, 2
      %vm6906 = vcmp.lt.s32.totalorder %v6885, 3
      %vm6907 = vcmp.lt.s32.totalorder %v6885, 4
      %v6908 = vsel %vm6904, %v6888, %v6891
      %v6909 = vsel %vm6907, %v6897, 2102212464
      %v6910 = vsel %vm6906, %v6894, %v6909
      %v6911 = vsel %vm6905, %v6908, %v6910
      %v6912 = vsel %vm6904, %v6891, %v6894
      %v6913 = vsel %vm6907, %v6900, 920167782
      %v6914 = vsel %vm6906, %v6897, %v6913
      %v6915 = vsel %vm6905, %v6912, %v6914
      %v6916 = vsel %vm6904, %v6894, %v6897
      %v6917 = vsel %vm6907, %v6903, 1326507024
      %v6918 = vsel %vm6906, %v6900, %v6917
      %v6919 = vsel %vm6905, %v6916, %v6918
      %v6920 = vshll.u32 %v6880, 8
      %v6921 = vmul.u32.u64.compose %v6920, %v6919
      %v6922 = vextract.low.u32 %v6921
      %v6923 = vextract.high.u32 %v6921
      %v6924 = vmul.u32.u64.compose %v6920, %v6915
      %v6925 = vextract.low.u32 %v6924
      %v6926 = vextract.high.u32 %v6924
      %v6927 = vmul.u32 %v6920, %v6911
      %v6928 = vadd.s32 %v6923, %v6925
      %vm6929 = vc.u32 %v6923, %v6925
      %v6930 = vadd.s32 %v6926, 1
      %v6931 = vsel %vm6929, %v6930, %v6926
      %v6932 = vadd.s32 %v6927, %v6931
      %v6933 = vadd.s32 %v6932, 536870912
      %v6934 = vshrl.u32 %v6933, 30
      %v6935 = vshll.u32 %v6934, 30
      %v6936 = vsub.s32 %v6932, %v6935
      %vm6937 = vcmp.lt.s32.totalorder %v6936, 0
      %v6938 = vsub.s32 0, %v6936
      %v6939 = vsel %vm6937, %v6938, %v6936
      %v6940 = vclz %v6939
      %v6941 = vsub.s32 %v6940, 2
      %vm6942 = vcmp.gt.s32.totalorder 0, %v6941
      %v6943 = vsel %vm6942, 0, %v6941
      %v6944 = vsub.s32 32, %v6943
      %v6945 = vshll.u32 %v6936, %v6943
      %v6946 = vshrl.u32 %v6928, %v6944
      %v6947 = vor.u32 %v6945, %v6946
      %v6948 = vsub.s32 4294967266, %v6943
      %v6949 = vadd.s32 %v6948, 127
      %v6950 = vshll.u32 %v6949, 23
      %v6951 = vor.u32 4788187, %v6950
      %v6952 = vand.u32 2147483647, %v6951
      %v6954 = vcvt.s32.f32 %v6947
      %v6955 = vmul.f32 %v6954, %v6952
      %v6956 = vxor.u32 %v6955, 2147483648
      %v6957 = vsel %vm6874, %v6956, %v6955
      %v6958 = vsub.s32 4, %v6934
      %v6959 = vsel %vm6874, %v6958, %v6934
      %v6960 = vsel %vm6873, %v656, %v6957
      %v6961 = vsel %vm6873, 0, %v6959
      %v6962 = vcosq.f32.pop %v6960
      %v6963 = vsinq.f32.pop %v6960
      %vm6964 = vweird.f32 %v656
      %v6965 = vand.u32 %v6961, 3
      %vm6966 = vcmp.lt.s32.totalorder %v6965, 2
      %vm6967 = vcmp.eq.s32.totalorder %v6965, 0
      %v6968 = vxor.u32 %v6963, 2147483648
      %v6969 = vsel %vm6967, %v6962, %v6968
      %vm6970 = vcmp.eq.s32.totalorder %v6965, 2
      %v6971 = vxor.u32 %v6962, 2147483648
      %v6972 = vsel %vm6970, %v6971, %v6963
      %v6973 = vsel %vm6966, %v6969, %v6972
      %v6974 = vsel %vm6964, nan, %v6973
      %v6975 = vand.u32 2147483647, %v657
      %vm6976 = vcmp.le.f32.partialorder %v6975, 0.7853982
      %vm6977 = vcmp.lt.s32.totalorder %v657, 0
      %v6978 = vand.u32 %v657, 2139095040
      %v6979 = vshrl.u32 %v6978, 23
      %v6980 = vsub.s32 %v6979, 127
      %v6981 = vand.u32 2147483647, %v657
      %v6982 = vand.u32 %v6981, 8388607
      %v6983 = vor.u32 %v6982, 8388608
      %v6984 = vsub.s32 0, %v6983
      %v6985 = vadd.s32 %v6980, 1
      %vm6986 = vcmp.gt.s32.totalorder %v6985, 0
      %v6987 = vsel %vm6986, %v6985, 0
      %v6988 = vshrl.u32 %v6987, 5
      %v6989 = vand.u32 %v6987, 31
      %v6990 = vsub.s32 32, %v6989
      %v6991 = vshrl.u32 683565275, %v6990
      %v6992 = vshll.u32 683565275, %v6989
      %v6993 = vshrl.u32 2475754826, %v6990
      %v6994 = vor.u32 %v6992, %v6993
      %v6995 = vshll.u32 2475754826, %v6989
      %v6996 = vshrl.u32 2131351028, %v6990
      %v6997 = vor.u32 %v6995, %v6996
      %v6998 = vshll.u32 2131351028, %v6989
      %v6999 = vshrl.u32 2102212464, %v6990
      %v7000 = vor.u32 %v6998, %v6999
      %v7001 = vshll.u32 2102212464, %v6989
      %v7002 = vshrl.u32 920167782, %v6990
      %v7003 = vor.u32 %v7001, %v7002
      %v7004 = vshll.u32 920167782, %v6989
      %v7005 = vshrl.u32 1326507024, %v6990
      %v7006 = vor.u32 %v7004, %v7005
      %vm7007 = vcmp.lt.s32.totalorder %v6988, 1
      %vm7008 = vcmp.lt.s32.totalorder %v6988, 2
      %vm7009 = vcmp.lt.s32.totalorder %v6988, 3
      %vm7010 = vcmp.lt.s32.totalorder %v6988, 4
      %v7011 = vsel %vm7007, %v6991, %v6994
      %v7012 = vsel %vm7010, %v7000, 2102212464
      %v7013 = vsel %vm7009, %v6997, %v7012
      %v7014 = vsel %vm7008, %v7011, %v7013
      %v7015 = vsel %vm7007, %v6994, %v6997
      %v7016 = vsel %vm7010, %v7003, 920167782
      %v7017 = vsel %vm7009, %v7000, %v7016
      %v7018 = vsel %vm7008, %v7015, %v7017
      %v7019 = vsel %vm7007, %v6997, %v7000
      %v7020 = vsel %vm7010, %v7006, 1326507024
      %v7021 = vsel %vm7009, %v7003, %v7020
      %v7022 = vsel %vm7008, %v7019, %v7021
      %v7023 = vshll.u32 %v6983, 8
      %v7024 = vmul.u32.u64.compose %v7023, %v7022
      %v7025 = vextract.low.u32 %v7024
      %v7026 = vextract.high.u32 %v7024
      %v7027 = vmul.u32.u64.compose %v7023, %v7018
      %v7028 = vextract.low.u32 %v7027
      %v7029 = vextract.high.u32 %v7027
      %v7030 = vmul.u32 %v7023, %v7014
      %v7031 = vadd.s32 %v7026, %v7028
      %vm7032 = vc.u32 %v7026, %v7028
      %v7033 = vadd.s32 %v7029, 1
      %v7034 = vsel %vm7032, %v7033, %v7029
      %v7035 = vadd.s32 %v7030, %v7034
      %v7036 = vadd.s32 %v7035, 536870912
      %v7037 = vshrl.u32 %v7036, 30
      %v7038 = vshll.u32 %v7037, 30
      %v7039 = vsub.s32 %v7035, %v7038
      %vm7040 = vcmp.lt.s32.totalorder %v7039, 0
      %v7041 = vsub.s32 0, %v7039
      %v7042 = vsel %vm7040, %v7041, %v7039
      %v7043 = vclz %v7042
      %v7044 = vsub.s32 %v7043, 2
      %vm7045 = vcmp.gt.s32.totalorder 0, %v7044
      %v7046 = vsel %vm7045, 0, %v7044
      %v7047 = vsub.s32 32, %v7046
      %v7048 = vshll.u32 %v7039, %v7046
      %v7049 = vshrl.u32 %v7031, %v7047
      %v7050 = vor.u32 %v7048, %v7049
      %v7051 = vsub.s32 4294967266, %v7046
      %v7052 = vadd.s32 %v7051, 127
      %v7053 = vshll.u32 %v7052, 23
      %v7054 = vor.u32 4788187, %v7053
      %v7055 = vand.u32 2147483647, %v7054
      %v7057 = vcvt.s32.f32 %v7050
      %v7058 = vmul.f32 %v7057, %v7055
      %v7059 = vxor.u32 %v7058, 2147483648
      %v7060 = vsel %vm6977, %v7059, %v7058
      %v7061 = vsub.s32 4, %v7037
      %v7062 = vsel %vm6977, %v7061, %v7037
      %v7063 = vsel %vm6976, %v657, %v7060
      %v7064 = vsel %vm6976, 0, %v7062
      %v7065 = vcosq.f32.pop %v7063
      %v7066 = vsinq.f32.pop %v7063
      %vm7067 = vweird.f32 %v657
      %v7068 = vand.u32 %v7064, 3
      %vm7069 = vcmp.lt.s32.totalorder %v7068, 2
      %vm7070 = vcmp.eq.s32.totalorder %v7068, 0
      %v7071 = vxor.u32 %v7066, 2147483648
      %v7072 = vsel %vm7070, %v7065, %v7071
      %vm7073 = vcmp.eq.s32.totalorder %v7068, 2
      %v7074 = vxor.u32 %v7065, 2147483648
      %v7075 = vsel %vm7073, %v7074, %v7066
      %v7076 = vsel %vm7069, %v7072, %v7075
      %v7077 = vsel %vm7067, nan, %v7076
      %v7078 = vand.u32 2147483647, %v658
      %vm7079 = vcmp.le.f32.partialorder %v7078, 0.7853982
      %vm7080 = vcmp.lt.s32.totalorder %v658, 0
      %v7081 = vand.u32 %v658, 2139095040
      %v7082 = vshrl.u32 %v7081, 23
      %v7083 = vsub.s32 %v7082, 127
      %v7084 = vand.u32 2147483647, %v658
      %v7085 = vand.u32 %v7084, 8388607
      %v7086 = vor.u32 %v7085, 8388608
      %v7087 = vsub.s32 0, %v7086
      %v7088 = vadd.s32 %v7083, 1
      %vm7089 = vcmp.gt.s32.totalorder %v7088, 0
      %v7090 = vsel %vm7089, %v7088, 0
      %v7091 = vshrl.u32 %v7090, 5
      %v7092 = vand.u32 %v7090, 31
      %v7093 = vsub.s32 32, %v7092
      %v7094 = vshrl.u32 683565275, %v7093
      %v7095 = vshll.u32 683565275, %v7092
      %v7096 = vshrl.u32 2475754826, %v7093
      %v7097 = vor.u32 %v7095, %v7096
      %v7098 = vshll.u32 2475754826, %v7092
      %v7099 = vshrl.u32 2131351028, %v7093
      %v7100 = vor.u32 %v7098, %v7099
      %v7101 = vshll.u32 2131351028, %v7092
      %v7102 = vshrl.u32 2102212464, %v7093
      %v7103 = vor.u32 %v7101, %v7102
      %v7104 = vshll.u32 2102212464, %v7092
      %v7105 = vshrl.u32 920167782, %v7093
      %v7106 = vor.u32 %v7104, %v7105
      %v7107 = vshll.u32 920167782, %v7092
      %v7108 = vshrl.u32 1326507024, %v7093
      %v7109 = vor.u32 %v7107, %v7108
      %vm7110 = vcmp.lt.s32.totalorder %v7091, 1
      %vm7111 = vcmp.lt.s32.totalorder %v7091, 2
      %vm7112 = vcmp.lt.s32.totalorder %v7091, 3
      %vm7113 = vcmp.lt.s32.totalorder %v7091, 4
      %v7114 = vsel %vm7110, %v7094, %v7097
      %v7115 = vsel %vm7113, %v7103, 2102212464
      %v7116 = vsel %vm7112, %v7100, %v7115
      %v7117 = vsel %vm7111, %v7114, %v7116
      %v7118 = vsel %vm7110, %v7097, %v7100
      %v7119 = vsel %vm7113, %v7106, 920167782
      %v7120 = vsel %vm7112, %v7103, %v7119
      %v7121 = vsel %vm7111, %v7118, %v7120
      %v7122 = vsel %vm7110, %v7100, %v7103
      %v7123 = vsel %vm7113, %v7109, 1326507024
      %v7124 = vsel %vm7112, %v7106, %v7123
      %v7125 = vsel %vm7111, %v7122, %v7124
      %v7126 = vshll.u32 %v7086, 8
      %v7127 = vmul.u32.u64.compose %v7126, %v7125
      %v7128 = vextract.low.u32 %v7127
      %v7129 = vextract.high.u32 %v7127
      %v7130 = vmul.u32.u64.compose %v7126, %v7121
      %v7131 = vextract.low.u32 %v7130
      %v7132 = vextract.high.u32 %v7130
      %v7133 = vmul.u32 %v7126, %v7117
      %v7134 = vadd.s32 %v7129, %v7131
      %vm7135 = vc.u32 %v7129, %v7131
      %v7136 = vadd.s32 %v7132, 1
      %v7137 = vsel %vm7135, %v7136, %v7132
      %v7138 = vadd.s32 %v7133, %v7137
      %v7139 = vadd.s32 %v7138, 536870912
      %v7140 = vshrl.u32 %v7139, 30
      %v7141 = vshll.u32 %v7140, 30
      %v7142 = vsub.s32 %v7138, %v7141
      %vm7143 = vcmp.lt.s32.totalorder %v7142, 0
      %v7144 = vsub.s32 0, %v7142
      %v7145 = vsel %vm7143, %v7144, %v7142
      %v7146 = vclz %v7145
      %v7147 = vsub.s32 %v7146, 2
      %vm7148 = vcmp.gt.s32.totalorder 0, %v7147
      %v7149 = vsel %vm7148, 0, %v7147
      %v7150 = vsub.s32 32, %v7149
      %v7151 = vshll.u32 %v7142, %v7149
      %v7152 = vshrl.u32 %v7134, %v7150
      %v7153 = vor.u32 %v7151, %v7152
      %v7154 = vsub.s32 4294967266, %v7149
      %v7155 = vadd.s32 %v7154, 127
      %v7156 = vshll.u32 %v7155, 23
      %v7157 = vor.u32 4788187, %v7156
      %v7158 = vand.u32 2147483647, %v7157
      %v7160 = vcvt.s32.f32 %v7153
      %v7161 = vmul.f32 %v7160, %v7158
      %v7162 = vxor.u32 %v7161, 2147483648
      %v7163 = vsel %vm7080, %v7162, %v7161
      %v7164 = vsub.s32 4, %v7140
      %v7165 = vsel %vm7080, %v7164, %v7140
      %v7166 = vsel %vm7079, %v658, %v7163
      %v7167 = vsel %vm7079, 0, %v7165
      %v7168 = vcosq.f32.pop %v7166
      %v7169 = vsinq.f32.pop %v7166
      %vm7170 = vweird.f32 %v658
      %v7171 = vand.u32 %v7167, 3
      %vm7172 = vcmp.lt.s32.totalorder %v7171, 2
      %vm7173 = vcmp.eq.s32.totalorder %v7171, 0
      %v7174 = vxor.u32 %v7169, 2147483648
      %v7175 = vsel %vm7173, %v7168, %v7174
      %vm7176 = vcmp.eq.s32.totalorder %v7171, 2
      %v7177 = vxor.u32 %v7168, 2147483648
      %v7178 = vsel %vm7176, %v7177, %v7169
      %v7179 = vsel %vm7172, %v7175, %v7178
      %v7180 = vsel %vm7170, nan, %v7179
      %v7181 = vand.u32 2147483647, %v659
      %vm7182 = vcmp.le.f32.partialorder %v7181, 0.7853982
      %vm7183 = vcmp.lt.s32.totalorder %v659, 0
      %v7184 = vand.u32 %v659, 2139095040
      %v7185 = vshrl.u32 %v7184, 23
      %v7186 = vsub.s32 %v7185, 127
      %v7187 = vand.u32 2147483647, %v659
      %v7188 = vand.u32 %v7187, 8388607
      %v7189 = vor.u32 %v7188, 8388608
      %v7190 = vsub.s32 0, %v7189
      %v7191 = vadd.s32 %v7186, 1
      %vm7192 = vcmp.gt.s32.totalorder %v7191, 0
      %v7193 = vsel %vm7192, %v7191, 0
      %v7194 = vshrl.u32 %v7193, 5
      %v7195 = vand.u32 %v7193, 31
      %v7196 = vsub.s32 32, %v7195
      %v7197 = vshrl.u32 683565275, %v7196
      %v7198 = vshll.u32 683565275, %v7195
      %v7199 = vshrl.u32 2475754826, %v7196
      %v7200 = vor.u32 %v7198, %v7199
      %v7201 = vshll.u32 2475754826, %v7195
      %v7202 = vshrl.u32 2131351028, %v7196
      %v7203 = vor.u32 %v7201, %v7202
      %v7204 = vshll.u32 2131351028, %v7195
      %v7205 = vshrl.u32 2102212464, %v7196
      %v7206 = vor.u32 %v7204, %v7205
      %v7207 = vshll.u32 2102212464, %v7195
      %v7208 = vshrl.u32 920167782, %v7196
      %v7209 = vor.u32 %v7207, %v7208
      %v7210 = vshll.u32 920167782, %v7195
      %v7211 = vshrl.u32 1326507024, %v7196
      %v7212 = vor.u32 %v7210, %v7211
      %vm7213 = vcmp.lt.s32.totalorder %v7194, 1
      %vm7214 = vcmp.lt.s32.totalorder %v7194, 2
      %vm7215 = vcmp.lt.s32.totalorder %v7194, 3
      %vm7216 = vcmp.lt.s32.totalorder %v7194, 4
      %v7217 = vsel %vm7213, %v7197, %v7200
      %v7218 = vsel %vm7216, %v7206, 2102212464
      %v7219 = vsel %vm7215, %v7203, %v7218
      %v7220 = vsel %vm7214, %v7217, %v7219
      %v7221 = vsel %vm7213, %v7200, %v7203
      %v7222 = vsel %vm7216, %v7209, 920167782
      %v7223 = vsel %vm7215, %v7206, %v7222
      %v7224 = vsel %vm7214, %v7221, %v7223
      %v7225 = vsel %vm7213, %v7203, %v7206
      %v7226 = vsel %vm7216, %v7212, 1326507024
      %v7227 = vsel %vm7215, %v7209, %v7226
      %v7228 = vsel %vm7214, %v7225, %v7227
      %v7229 = vshll.u32 %v7189, 8
      %v7230 = vmul.u32.u64.compose %v7229, %v7228
      %v7231 = vextract.low.u32 %v7230
      %v7232 = vextract.high.u32 %v7230
      %v7233 = vmul.u32.u64.compose %v7229, %v7224
      %v7234 = vextract.low.u32 %v7233
      %v7235 = vextract.high.u32 %v7233
      %v7236 = vmul.u32 %v7229, %v7220
      %v7237 = vadd.s32 %v7232, %v7234
      %vm7238 = vc.u32 %v7232, %v7234
      %v7239 = vadd.s32 %v7235, 1
      %v7240 = vsel %vm7238, %v7239, %v7235
      %v7241 = vadd.s32 %v7236, %v7240
      %v7242 = vadd.s32 %v7241, 536870912
      %v7243 = vshrl.u32 %v7242, 30
      %v7244 = vshll.u32 %v7243, 30
      %v7245 = vsub.s32 %v7241, %v7244
      %vm7246 = vcmp.lt.s32.totalorder %v7245, 0
      %v7247 = vsub.s32 0, %v7245
      %v7248 = vsel %vm7246, %v7247, %v7245
      %v7249 = vclz %v7248
      %v7250 = vsub.s32 %v7249, 2
      %vm7251 = vcmp.gt.s32.totalorder 0, %v7250
      %v7252 = vsel %vm7251, 0, %v7250
      %v7253 = vsub.s32 32, %v7252
      %v7254 = vshll.u32 %v7245, %v7252
      %v7255 = vshrl.u32 %v7237, %v7253
      %v7256 = vor.u32 %v7254, %v7255
      %v7257 = vsub.s32 4294967266, %v7252
      %v7258 = vadd.s32 %v7257, 127
      %v7259 = vshll.u32 %v7258, 23
      %v7260 = vor.u32 4788187, %v7259
      %v7261 = vand.u32 2147483647, %v7260
      %v7263 = vcvt.s32.f32 %v7256
      %v7264 = vmul.f32 %v7263, %v7261
      %v7265 = vxor.u32 %v7264, 2147483648
      %v7266 = vsel %vm7183, %v7265, %v7264
      %v7267 = vsub.s32 4, %v7243
      %v7268 = vsel %vm7183, %v7267, %v7243
      %v7269 = vsel %vm7182, %v659, %v7266
      %v7270 = vsel %vm7182, 0, %v7268
      %v7271 = vcosq.f32.pop %v7269
      %v7272 = vsinq.f32.pop %v7269
      %vm7273 = vweird.f32 %v659
      %v7274 = vand.u32 %v7270, 3
      %vm7275 = vcmp.lt.s32.totalorder %v7274, 2
      %vm7276 = vcmp.eq.s32.totalorder %v7274, 0
      %v7277 = vxor.u32 %v7272, 2147483648
      %v7278 = vsel %vm7276, %v7271, %v7277
      %vm7279 = vcmp.eq.s32.totalorder %v7274, 2
      %v7280 = vxor.u32 %v7271, 2147483648
      %v7281 = vsel %vm7279, %v7280, %v7272
      %v7282 = vsel %vm7275, %v7278, %v7281
      %v7283 = vsel %vm7273, nan, %v7282
      %7300 = vrot.lane.b32.xlu0 %v763, 2
      %v7301 = vpop.permute.xlu0 %7300
      %7302 = vrot.lane.b32.xlu0 %v867, 2
      %v7303 = vpop.permute.xlu0 %7302
      %7304 = vrot.lane.b32.xlu0 %v971, 2
      %v7305 = vpop.permute.xlu0 %7304
      %7306 = vrot.lane.b32.xlu0 %v1075, 2
      %v7307 = vpop.permute.xlu0 %7306
      %7308 = vrot.lane.b32.xlu0 %v1179, 2
      %v7309 = vpop.permute.xlu0 %7308
      %7310 = vrot.lane.b32.xlu0 %v1283, 2
      %v7311 = vpop.permute.xlu0 %7310
      %7312 = vrot.lane.b32.xlu0 %v1387, 2
      %v7313 = vpop.permute.xlu0 %7312
      %7314 = vrot.lane.b32.xlu0 %v1491, 2
      %v7315 = vpop.permute.xlu0 %7314
      %7316 = vrot.lane.b32.xlu0 %v1595, 2
      %v7317 = vpop.permute.xlu0 %7316
      %7318 = vrot.lane.b32.xlu0 %v1699, 2
      %v7319 = vpop.permute.xlu0 %7318
      %7320 = vrot.lane.b32.xlu0 %v1803, 2
      %v7321 = vpop.permute.xlu0 %7320
      %7322 = vrot.lane.b32.xlu0 %v1907, 2
      %v7323 = vpop.permute.xlu0 %7322
      %7324 = vrot.lane.b32.xlu0 %v2011, 2
      %v7325 = vpop.permute.xlu0 %7324
      %7326 = vrot.lane.b32.xlu0 %v2115, 2
      %v7327 = vpop.permute.xlu0 %7326
      %7328 = vrot.lane.b32.xlu0 %v2219, 2
      %v7329 = vpop.permute.xlu0 %7328
      %7330 = vrot.lane.b32.xlu0 %v2323, 2
      %v7331 = vpop.permute.xlu0 %7330
      %7364 = vrot.lane.b32.xlu0 %v2426, 8
      %v7365 = vpop.permute.xlu0 %7364
      %7366 = vrot.lane.b32.xlu0 %v2529, 8
      %v7367 = vpop.permute.xlu0 %7366
      %7368 = vrot.lane.b32.xlu0 %v2632, 8
      %v7369 = vpop.permute.xlu0 %7368
      %7370 = vrot.lane.b32.xlu0 %v2735, 8
      %v7371 = vpop.permute.xlu0 %7370
      %7372 = vrot.lane.b32.xlu0 %v2838, 8
      %v7373 = vpop.permute.xlu0 %7372
      %7374 = vrot.lane.b32.xlu0 %v2941, 8
      %v7375 = vpop.permute.xlu0 %7374
      %7376 = vrot.lane.b32.xlu0 %v3044, 8
      %v7377 = vpop.permute.xlu0 %7376
      %7378 = vrot.lane.b32.xlu0 %v3147, 8
      %v7379 = vpop.permute.xlu0 %7378
      %7380 = vrot.lane.b32.xlu0 %v3250, 8
      %v7381 = vpop.permute.xlu0 %7380
      %7382 = vrot.lane.b32.xlu0 %v3353, 8
      %v7383 = vpop.permute.xlu0 %7382
      %7384 = vrot.lane.b32.xlu0 %v3456, 8
      %v7385 = vpop.permute.xlu0 %7384
      %7386 = vrot.lane.b32.xlu0 %v3559, 8
      %v7387 = vpop.permute.xlu0 %7386
      %7388 = vrot.lane.b32.xlu0 %v3662, 8
      %v7389 = vpop.permute.xlu0 %7388
      %7390 = vrot.lane.b32.xlu0 %v3765, 8
      %v7391 = vpop.permute.xlu0 %7390
      %7392 = vrot.lane.b32.xlu0 %v3868, 8
      %v7393 = vpop.permute.xlu0 %7392
      %7394 = vrot.lane.b32.xlu0 %v3971, 8
      %v7395 = vpop.permute.xlu0 %7394
      %7428 = vrot.lane.b32.xlu0 %v4075, 14
      %v7429 = vpop.permute.xlu0 %7428
      %7430 = vrot.lane.b32.xlu0 %v4179, 14
      %v7431 = vpop.permute.xlu0 %7430
      %7432 = vrot.lane.b32.xlu0 %v4283, 14
      %v7433 = vpop.permute.xlu0 %7432
      %7434 = vrot.lane.b32.xlu0 %v4387, 14
      %v7435 = vpop.permute.xlu0 %7434
      %7436 = vrot.lane.b32.xlu0 %v4491, 14
      %v7437 = vpop.permute.xlu0 %7436
      %7438 = vrot.lane.b32.xlu0 %v4595, 14
      %v7439 = vpop.permute.xlu0 %7438
      %7440 = vrot.lane.b32.xlu0 %v4699, 14
      %v7441 = vpop.permute.xlu0 %7440
      %7442 = vrot.lane.b32.xlu0 %v4803, 14
      %v7443 = vpop.permute.xlu0 %7442
      %7444 = vrot.lane.b32.xlu0 %v4907, 14
      %v7445 = vpop.permute.xlu0 %7444
      %7446 = vrot.lane.b32.xlu0 %v5011, 14
      %v7447 = vpop.permute.xlu0 %7446
      %7448 = vrot.lane.b32.xlu0 %v5115, 14
      %v7449 = vpop.permute.xlu0 %7448
      %7450 = vrot.lane.b32.xlu0 %v5219, 14
      %v7451 = vpop.permute.xlu0 %7450
      %7452 = vrot.lane.b32.xlu0 %v5323, 14
      %v7453 = vpop.permute.xlu0 %7452
      %7454 = vrot.lane.b32.xlu0 %v5427, 14
      %v7455 = vpop.permute.xlu0 %7454
      %7456 = vrot.lane.b32.xlu0 %v5531, 14
      %v7457 = vpop.permute.xlu0 %7456
      %7458 = vrot.lane.b32.xlu0 %v5635, 14
      %v7459 = vpop.permute.xlu0 %7458
      %7492 = vrot.lane.b32.xlu0 %v5738, 20
      %v7493 = vpop.permute.xlu0 %7492
      %7494 = vrot.lane.b32.xlu0 %v5841, 20
      %v7495 = vpop.permute.xlu0 %7494
      %7496 = vrot.lane.b32.xlu0 %v5944, 20
      %v7497 = vpop.permute.xlu0 %7496
      %7498 = vrot.lane.b32.xlu0 %v6047, 20
      %v7499 = vpop.permute.xlu0 %7498
      %7500 = vrot.lane.b32.xlu0 %v6150, 20
      %v7501 = vpop.permute.xlu0 %7500
      %7502 = vrot.lane.b32.xlu0 %v6253, 20
      %v7503 = vpop.permute.xlu0 %7502
      %7504 = vrot.lane.b32.xlu0 %v6356, 20
      %v7505 = vpop.permute.xlu0 %7504
      %7506 = vrot.lane.b32.xlu0 %v6459, 20
      %v7507 = vpop.permute.xlu0 %7506
      %7508 = vrot.lane.b32.xlu0 %v6562, 20
      %v7509 = vpop.permute.xlu0 %7508
      %7510 = vrot.lane.b32.xlu0 %v6665, 20
      %v7511 = vpop.permute.xlu0 %7510
      %7512 = vrot.lane.b32.xlu0 %v6768, 20
      %v7513 = vpop.permute.xlu0 %7512
      %7514 = vrot.lane.b32.xlu0 %v6871, 20
      %v7515 = vpop.permute.xlu0 %7514
      %7516 = vrot.lane.b32.xlu0 %v6974, 20
      %v7517 = vpop.permute.xlu0 %7516
      %7518 = vrot.lane.b32.xlu0 %v7077, 20
      %v7519 = vpop.permute.xlu0 %7518
      %7520 = vrot.lane.b32.xlu0 %v7180, 20
      %v7521 = vpop.permute.xlu0 %7520
      %7522 = vrot.lane.b32.xlu0 %v7283, 20
      %v7523 = vpop.permute.xlu0 %7522
      %vm7540 = vcmask 15360
      %v7541 = vsel %vm7540, %v461, %v7301
      %v7542 = vsel %vm7540, %v462, %v7303
      %v7543 = vsel %vm7540, %v463, %v7305
      %v7544 = vsel %vm7540, %v464, %v7307
      %v7545 = vsel %vm7540, %v465, %v7309
      %v7546 = vsel %vm7540, %v466, %v7311
      %v7547 = vsel %vm7540, %v467, %v7313
      %v7548 = vsel %vm7540, %v468, %v7315
      %v7549 = vsel %vm7540, %v469, %v7317
      %v7550 = vsel %vm7540, %v470, %v7319
      %v7551 = vsel %vm7540, %v471, %v7321
      %v7552 = vsel %vm7540, %v472, %v7323
      %v7553 = vsel %vm7540, %v473, %v7325
      %v7554 = vsel %vm7540, %v474, %v7327
      %v7555 = vsel %vm7540, %v475, %v7329
      %v7556 = vsel %vm7540, %v476, %v7331
      %vm7557 = vcmask 64512
      %v7558 = vsel %vm7557, %v7541, %v7365
      %v7559 = vsel %vm7557, %v7542, %v7367
      %v7560 = vsel %vm7557, %v7543, %v7369
      %v7561 = vsel %vm7557, %v7544, %v7371
      %v7562 = vsel %vm7557, %v7545, %v7373
      %v7563 = vsel %vm7557, %v7546, %v7375
      %v7564 = vsel %vm7557, %v7547, %v7377
      %v7565 = vsel %vm7557, %v7548, %v7379
      %v7566 = vsel %vm7557, %v7549, %v7381
      %v7567 = vsel %vm7557, %v7550, %v7383
      %v7568 = vsel %vm7557, %v7551, %v7385
      %v7569 = vsel %vm7557, %v7552, %v7387
      %v7570 = vsel %vm7557, %v7553, %v7389
      %v7571 = vsel %vm7557, %v7554, %v7391
      %v7572 = vsel %vm7557, %v7555, %v7393
      %v7573 = vsel %vm7557, %v7556, %v7395
      %vm7574 = vcmask 113664
      %v7575 = vsel %vm7574, %v7558, %v7429
      %v7576 = vsel %vm7574, %v7559, %v7431
      %v7577 = vsel %vm7574, %v7560, %v7433
      %v7578 = vsel %vm7574, %v7561, %v7435
      %v7579 = vsel %vm7574, %v7562, %v7437
      %v7580 = vsel %vm7574, %v7563, %v7439
      %v7581 = vsel %vm7574, %v7564, %v7441
      %v7582 = vsel %vm7574, %v7565, %v7443
      %v7583 = vsel %vm7574, %v7566, %v7445
      %v7584 = vsel %vm7574, %v7567, %v7447
      %v7585 = vsel %vm7574, %v7568, %v7449
      %v7586 = vsel %vm7574, %v7569, %v7451
      %v7587 = vsel %vm7574, %v7570, %v7453
      %v7588 = vsel %vm7574, %v7571, %v7455
      %v7589 = vsel %vm7574, %v7572, %v7457
      %v7590 = vsel %vm7574, %v7573, %v7459
      %vm7591 = vcmask 162816
      %v7592 = vsel %vm7591, %v7575, %v7493
      %v7593 = vsel %vm7591, %v7576, %v7495
      %v7594 = vsel %vm7591, %v7577, %v7497
      %v7595 = vsel %vm7591, %v7578, %v7499
      %v7596 = vsel %vm7591, %v7579, %v7501
      %v7597 = vsel %vm7591, %v7580, %v7503
      %v7598 = vsel %vm7591, %v7581, %v7505
      %v7599 = vsel %vm7591, %v7582, %v7507
      %v7600 = vsel %vm7591, %v7583, %v7509
      %v7601 = vsel %vm7591, %v7584, %v7511
      %v7602 = vsel %vm7591, %v7585, %v7513
      %v7603 = vsel %vm7591, %v7586, %v7515
      %v7604 = vsel %vm7591, %v7587, %v7517
      %v7605 = vsel %vm7591, %v7588, %v7519
      %v7606 = vsel %vm7591, %v7589, %v7521
      %v7607 = vsel %vm7591, %v7590, %v7523
      %vm7608 = vcmask 211968
      %v7609 = vsel %vm7608, %v7592, 0.0
      %v7610 = vsel %vm7608, %v7593, 0.0
      %v7611 = vsel %vm7608, %v7594, 0.0
      %v7612 = vsel %vm7608, %v7595, 0.0
      %v7613 = vsel %vm7608, %v7596, 0.0
      %v7614 = vsel %vm7608, %v7597, 0.0
      %v7615 = vsel %vm7608, %v7598, 0.0
      %v7616 = vsel %vm7608, %v7599, 0.0
      %v7617 = vsel %vm7608, %v7600, 0.0
      %v7618 = vsel %vm7608, %v7601, 0.0
      %v7619 = vsel %vm7608, %v7602, 0.0
      %v7620 = vsel %vm7608, %v7603, 0.0
      %v7621 = vsel %vm7608, %v7604, 0.0
      %v7622 = vsel %vm7608, %v7605, 0.0
      %v7623 = vsel %vm7608, %v7606, 0.0
      %v7624 = vsel %vm7608, %v7607, 0.0
      %v7625 = vpack.c.bf16 %v7610, %v7609
      %v7626 = vpack.c.bf16 %v7612, %v7611
      %v7627 = vpack.c.bf16 %v7614, %v7613
      %v7628 = vpack.c.bf16 %v7616, %v7615
      %v7629 = vpack.c.bf16 %v7618, %v7617
      %v7630 = vpack.c.bf16 %v7620, %v7619
      %v7631 = vpack.c.bf16 %v7622, %v7621
      %v7632 = vpack.c.bf16 %v7624, %v7623
      %v7633 = vld [vmem:[%s2] sm:$0xf]
      %v7634 = vld [vmem:[%s2 + $0x4] sm:$0xf]
      %v7635 = vld [vmem:[%s2 + $0x8] sm:$0xf]
      %v7636 = vld [vmem:[%s2 + $0xc] sm:$0xf]
      %v7637 = vld [vmem:[%s2 + $0x10] sm:$0xf]
      %v7638 = vld [vmem:[%s2 + $0x14] sm:$0xf]
      %v7639 = vld [vmem:[%s2 + $0x18] sm:$0xf]
      %v7640 = vld [vmem:[%s2 + $0x1c] sm:$0xf]
      %v7641 = vld [vmem:[%s2 + $0x20] sm:$0xf]
      %v7642 = vld [vmem:[%s2 + $0x24] sm:$0xf]
      %v7643 = vld [vmem:[%s2 + $0x28] sm:$0xf]
      %v7644 = vld [vmem:[%s2 + $0x2c] sm:$0xf]
      %v7645 = vld [vmem:[%s2 + $0x30] sm:$0xf]
      %v7646 = vld [vmem:[%s2 + $0x34] sm:$0xf]
      %v7647 = vld [vmem:[%s2 + $0x38] sm:$0xf]
      %v7648 = vld [vmem:[%s2 + $0x3c] sm:$0xf]
      %v7649 = vld [vmem:[%s3] sm:$0x1]
      %v7651 = vlaneseq
      %v7652 = vshrl.u32 %v7651, 7
      %v7653 = vsub.s32 0, %v7652
      %v7654 = vrot.slane %v7649, %v7653
      %v7672 = vunpack.c.l.b16 %v7633
      %v7673 = vunpack.c.l.b16 %v7634
      %v7674 = vunpack.c.l.b16 %v7635
      %v7675 = vunpack.c.l.b16 %v7636
      %v7676 = vunpack.c.l.b16 %v7637
      %v7677 = vunpack.c.l.b16 %v7638
      %v7678 = vunpack.c.l.b16 %v7639
      %v7679 = vunpack.c.l.b16 %v7640
      %v7680 = vunpack.c.l.b16 %v7641
      %v7681 = vunpack.c.l.b16 %v7642
      %v7682 = vunpack.c.l.b16 %v7643
      %v7683 = vunpack.c.l.b16 %v7644
      %v7684 = vunpack.c.l.b16 %v7645
      %v7685 = vunpack.c.l.b16 %v7646
      %v7686 = vunpack.c.l.b16 %v7647
      %v7687 = vunpack.c.l.b16 %v7648
      %v7688 = vpack.c.b16 %v7673, %v7672
      %v7689 = vpack.c.b16 %v7675, %v7674
      %v7690 = vpack.c.b16 %v7677, %v7676
      %v7691 = vpack.c.b16 %v7679, %v7678
      %v7692 = vpack.c.b16 %v7681, %v7680
      %v7693 = vpack.c.b16 %v7683, %v7682
      %v7694 = vpack.c.b16 %v7685, %v7684
      %v7695 = vpack.c.b16 %v7687, %v7686
      %7704 = vmatprep.subr.bf16.mxu0 0
      %7705 = vmatpush1.bf16.msra.mxu0 %v7688
      %7706 = vmatprep.subr.bf16.mxu0 0
      %7707 = vmatpush1.bf16.msra.mxu0 %v7689
      %7708 = vmatprep.subr.bf16.mxu0 0
      %7709 = vmatpush1.bf16.msra.mxu0 %v7690
      %7710 = vmatprep.subr.bf16.mxu0 0
      %7711 = vmatpush1.bf16.msra.mxu0 %v7691
      %7712 = vmatprep.subr.bf16.mxu0 0
      %7713 = vmatpush1.bf16.msra.mxu0 %v7692
      %7714 = vmatprep.subr.bf16.mxu0 0
      %7715 = vmatpush1.bf16.msra.mxu0 %v7693
      %7716 = vmatprep.subr.bf16.mxu0 0
      %7717 = vmatpush1.bf16.msra.mxu0 %v7694
      %7718 = vmatprep.subr.bf16.mxu0 0
      %7719 = vmatpush1.bf16.msra.mxu0 %v7695
      %7720 = vmatprep.subr.bf16.mxu0 0
      %7721 = vmatpush1.bf16.msra.mxu0 0
      %7722 = vmatprep.subr.bf16.mxu0 0
      %7723 = vmatpush1.bf16.msra.mxu0 0
      %7724 = vmatprep.subr.bf16.mxu0 0
      %7725 = vmatpush1.bf16.msra.mxu0 0
      %7726 = vmatprep.subr.bf16.mxu0 0
      %7727 = vmatpush1.bf16.msra.mxu0 0
      %7728 = vmatprep.subr.bf16.mxu0 0
      %7729 = vmatpush1.bf16.msra.mxu0 0
      %7730 = vmatprep.subr.bf16.mxu0 0
      %7731 = vmatpush1.bf16.msra.mxu0 0
      %7732 = vmatprep.subr.bf16.mxu0 0
      %7733 = vmatpush1.bf16.msra.mxu0 0
      %7734 = vmatprep.subr.bf16.mxu0 0
      %7735 = vmatpush1.bf16.msra.mxu0 0
      %7736 = vmatprep.mubr.bf16.mxu0 0
      %7737 = vmatmul.mubr.bf16.gmra.mrb[0].mxu0 %v7625
      %v7738 = vpop.f32.mrb[0].mxu0
      %v7739 = vadd.f32 %v7654, %v7738
      %v7740 = vpop.f32.mrb[0].mxu0
      %v7741 = vpop.f32.mrb[0].mxu0
      %v7742 = vadd.f32 %v7654, %v7741
      %v7743 = vpop.f32.mrb[0].mxu0
      %7744 = vmatprep.mubr.bf16.mxu0 0
      %7745 = vmatmul.mubr.bf16.gmra.mrb[0].mxu0 %v7626
      %v7746 = vpop.f32.mrb[0].mxu0
      %v7747 = vadd.f32 %v7654, %v7746
      %v7748 = vpop.f32.mrb[0].mxu0
      %v7749 = vpop.f32.mrb[0].mxu0
      %v7750 = vadd.f32 %v7654, %v7749
      %v7751 = vpop.f32.mrb[0].mxu0
      %7752 = vmatprep.mubr.bf16.mxu0 0
      %7753 = vmatmul.mubr.bf16.gmra.mrb[0].mxu0 %v7627
      %v7754 = vpop.f32.mrb[0].mxu0
      %v7755 = vadd.f32 %v7654, %v7754
      %v7756 = vpop.f32.mrb[0].mxu0
      %v7757 = vpop.f32.mrb[0].mxu0
      %v7758 = vadd.f32 %v7654, %v7757
      %v7759 = vpop.f32.mrb[0].mxu0
      %7760 = vmatprep.mubr.bf16.mxu0 0
      %7761 = vmatmul.mubr.bf16.gmra.mrb[0].mxu0 %v7628
      %v7762 = vpop.f32.mrb[0].mxu0
      %v7763 = vadd.f32 %v7654, %v7762
      %v7764 = vpop.f32.mrb[0].mxu0
      %v7765 = vpop.f32.mrb[0].mxu0
      %v7766 = vadd.f32 %v7654, %v7765
      %v7767 = vpop.f32.mrb[0].mxu0
      %7768 = vmatprep.mubr.bf16.mxu0 0
      %7769 = vmatmul.mubr.bf16.gmra.mrb[0].mxu0 %v7629
      %v7770 = vpop.f32.mrb[0].mxu0
      %v7771 = vadd.f32 %v7654, %v7770
      %v7772 = vpop.f32.mrb[0].mxu0
      %v7773 = vpop.f32.mrb[0].mxu0
      %v7774 = vadd.f32 %v7654, %v7773
      %v7775 = vpop.f32.mrb[0].mxu0
      %7776 = vmatprep.mubr.bf16.mxu0 0
      %7777 = vmatmul.mubr.bf16.gmra.mrb[0].mxu0 %v7630
      %v7778 = vpop.f32.mrb[0].mxu0
      %v7779 = vadd.f32 %v7654, %v7778
      %v7780 = vpop.f32.mrb[0].mxu0
      %v7781 = vpop.f32.mrb[0].mxu0
      %v7782 = vadd.f32 %v7654, %v7781
      %v7783 = vpop.f32.mrb[0].mxu0
      %7784 = vmatprep.mubr.bf16.mxu0 0
      %7785 = vmatmul.mubr.bf16.gmra.mrb[0].mxu0 %v7631
      %v7786 = vpop.f32.mrb[0].mxu0
      %v7787 = vadd.f32 %v7654, %v7786
      %v7788 = vpop.f32.mrb[0].mxu0
      %v7789 = vpop.f32.mrb[0].mxu0
      %v7790 = vadd.f32 %v7654, %v7789
      %v7791 = vpop.f32.mrb[0].mxu0
      %7792 = vmatprep.mubr.bf16.mxu0 0
      %7793 = vmatmul.mubr.bf16.gmra.mrb[0].mxu0 %v7632
      %v7794 = vpop.f32.mrb[0].mxu0
      %v7795 = vadd.f32 %v7654, %v7794
      %v7796 = vpop.f32.mrb[0].mxu0
      %v7797 = vpop.f32.mrb[0].mxu0
      %v7798 = vadd.f32 %v7654, %v7797
      %v7799 = vpop.f32.mrb[0].mxu0
      %7800 = vdwg.mxu0
      %v7801 = vld [vmem:[%s4] sm:$0x1]
      %v7802 = vld [vmem:[%s5] sm:$0x1]
      %vm7803 = vcmask 523264
      %v7804 = vsel %vm7803, %v7739, 0.0
      %7805 = vadd.xlane.f32.xlu0 %v7804
      %v7806 = vpop.xlane.xlu0 %7805
      %v7807 = vsel %vm7803, %v7742, 0.0
      %7808 = vadd.xlane.f32.xlu0 %v7807
      %v7809 = vpop.xlane.xlu0 %7808
      %v7810 = vsel %vm7803, %v7747, 0.0
      %7811 = vadd.xlane.f32.xlu0 %v7810
      %v7812 = vpop.xlane.xlu0 %7811
      %v7813 = vsel %vm7803, %v7750, 0.0
      %7814 = vadd.xlane.f32.xlu0 %v7813
      %v7815 = vpop.xlane.xlu0 %7814
      %v7816 = vsel %vm7803, %v7755, 0.0
      %7817 = vadd.xlane.f32.xlu0 %v7816
      %v7818 = vpop.xlane.xlu0 %7817
      %v7819 = vsel %vm7803, %v7758, 0.0
      %7820 = vadd.xlane.f32.xlu0 %v7819
      %v7821 = vpop.xlane.xlu0 %7820
      %v7822 = vsel %vm7803, %v7763, 0.0
      %7823 = vadd.xlane.f32.xlu0 %v7822
      %v7824 = vpop.xlane.xlu0 %7823
      %v7825 = vsel %vm7803, %v7766, 0.0
      %7826 = vadd.xlane.f32.xlu0 %v7825
      %v7827 = vpop.xlane.xlu0 %7826
      %v7828 = vsel %vm7803, %v7771, 0.0
      %7829 = vadd.xlane.f32.xlu0 %v7828
      %v7830 = vpop.xlane.xlu0 %7829
      %v7831 = vsel %vm7803, %v7774, 0.0
      %7832 = vadd.xlane.f32.xlu0 %v7831
      %v7833 = vpop.xlane.xlu0 %7832
      %v7834 = vsel %vm7803, %v7779, 0.0
      %7835 = vadd.xlane.f32.xlu0 %v7834
      %v7836 = vpop.xlane.xlu0 %7835
      %v7837 = vsel %vm7803, %v7782, 0.0
      %7838 = vadd.xlane.f32.xlu0 %v7837
      %v7839 = vpop.xlane.xlu0 %7838
      %v7840 = vsel %vm7803, %v7787, 0.0
      %7841 = vadd.xlane.f32.xlu0 %v7840
      %v7842 = vpop.xlane.xlu0 %7841
      %v7843 = vsel %vm7803, %v7790, 0.0
      %7844 = vadd.xlane.f32.xlu0 %v7843
      %v7845 = vpop.xlane.xlu0 %7844
      %v7846 = vsel %vm7803, %v7795, 0.0
      %7847 = vadd.xlane.f32.xlu0 %v7846
      %v7848 = vpop.xlane.xlu0 %7847
      %v7849 = vsel %vm7803, %v7798, 0.0
      %7850 = vadd.xlane.f32.xlu0 %v7849
      %v7851 = vpop.xlane.xlu0 %7850
      %v7852 = vrcp.pop 64.0
      %v7853 = vmul.f32 %v7806, %v7852
      %v7854 = vmul.f32 %v7809, %v7852
      %v7855 = vmul.f32 %v7812, %v7852
      %v7856 = vmul.f32 %v7815, %v7852
      %v7857 = vmul.f32 %v7818, %v7852
      %v7858 = vmul.f32 %v7821, %v7852
      %v7859 = vmul.f32 %v7824, %v7852
      %v7860 = vmul.f32 %v7827, %v7852
      %v7861 = vmul.f32 %v7830, %v7852
      %v7862 = vmul.f32 %v7833, %v7852
      %v7863 = vmul.f32 %v7836, %v7852
      %v7864 = vmul.f32 %v7839, %v7852
      %v7865 = vmul.f32 %v7842, %v7852
      %v7866 = vmul.f32 %v7845, %v7852
      %v7867 = vmul.f32 %v7848, %v7852
      %v7868 = vmul.f32 %v7851, %v7852
      %v7869 = vsub.f32 %v7739, %v7853
      %v7870 = vsub.f32 %v7742, %v7854
      %v7871 = vsub.f32 %v7747, %v7855
      %v7872 = vsub.f32 %v7750, %v7856
      %v7873 = vsub.f32 %v7755, %v7857
      %v7874 = vsub.f32 %v7758, %v7858
      %v7875 = vsub.f32 %v7763, %v7859
      %v7876 = vsub.f32 %v7766, %v7860
      %v7877 = vsub.f32 %v7771, %v7861
      %v7878 = vsub.f32 %v7774, %v7862
      %v7879 = vsub.f32 %v7779, %v7863
      %v7880 = vsub.f32 %v7782, %v7864
      %v7881 = vsub.f32 %v7787, %v7865
      %v7882 = vsub.f32 %v7790, %v7866
      %v7883 = vsub.f32 %v7795, %v7867
      %v7884 = vsub.f32 %v7798, %v7868
      %v7885 = vmul.f32 %v7869, %v7869
      %v7886 = vmul.f32 %v7870, %v7870
      %v7887 = vmul.f32 %v7871, %v7871
      %v7888 = vmul.f32 %v7872, %v7872
      %v7889 = vmul.f32 %v7873, %v7873
      %v7890 = vmul.f32 %v7874, %v7874
      %v7891 = vmul.f32 %v7875, %v7875
      %v7892 = vmul.f32 %v7876, %v7876
      %v7893 = vmul.f32 %v7877, %v7877
      %v7894 = vmul.f32 %v7878, %v7878
      %v7895 = vmul.f32 %v7879, %v7879
      %v7896 = vmul.f32 %v7880, %v7880
      %v7897 = vmul.f32 %v7881, %v7881
      %v7898 = vmul.f32 %v7882, %v7882
      %v7899 = vmul.f32 %v7883, %v7883
      %v7900 = vmul.f32 %v7884, %v7884
      %v7901 = vsel %vm7803, %v7885, 0.0
      %7902 = vadd.xlane.f32.xlu0 %v7901
      %v7903 = vpop.xlane.xlu0 %7902
      %v7904 = vsel %vm7803, %v7886, 0.0
      %7905 = vadd.xlane.f32.xlu0 %v7904
      %v7906 = vpop.xlane.xlu0 %7905
      %v7907 = vsel %vm7803, %v7887, 0.0
      %7908 = vadd.xlane.f32.xlu0 %v7907
      %v7909 = vpop.xlane.xlu0 %7908
      %v7910 = vsel %vm7803, %v7888, 0.0
      %7911 = vadd.xlane.f32.xlu0 %v7910
      %v7912 = vpop.xlane.xlu0 %7911
      %v7913 = vsel %vm7803, %v7889, 0.0
      %7914 = vadd.xlane.f32.xlu0 %v7913
      %v7915 = vpop.xlane.xlu0 %7914
      %v7916 = vsel %vm7803, %v7890, 0.0
      %7917 = vadd.xlane.f32.xlu0 %v7916
      %v7918 = vpop.xlane.xlu0 %7917
      %v7919 = vsel %vm7803, %v7891, 0.0
      %7920 = vadd.xlane.f32.xlu0 %v7919
      %v7921 = vpop.xlane.xlu0 %7920
      %v7922 = vsel %vm7803, %v7892, 0.0
      %7923 = vadd.xlane.f32.xlu0 %v7922
      %v7924 = vpop.xlane.xlu0 %7923
      %v7925 = vsel %vm7803, %v7893, 0.0
      %7926 = vadd.xlane.f32.xlu0 %v7925
      %v7927 = vpop.xlane.xlu0 %7926
      %v7928 = vsel %vm7803, %v7894, 0.0
      %7929 = vadd.xlane.f32.xlu0 %v7928
      %v7930 = vpop.xlane.xlu0 %7929
      %v7931 = vsel %vm7803, %v7895, 0.0
      %7932 = vadd.xlane.f32.xlu0 %v7931
      %v7933 = vpop.xlane.xlu0 %7932
      %v7934 = vsel %vm7803, %v7896, 0.0
      %7935 = vadd.xlane.f32.xlu0 %v7934
      %v7936 = vpop.xlane.xlu0 %7935
      %v7937 = vsel %vm7803, %v7897, 0.0
      %7938 = vadd.xlane.f32.xlu0 %v7937
      %v7939 = vpop.xlane.xlu0 %7938
      %v7940 = vsel %vm7803, %v7898, 0.0
      %7941 = vadd.xlane.f32.xlu0 %v7940
      %v7942 = vpop.xlane.xlu0 %7941
      %v7943 = vsel %vm7803, %v7899, 0.0
      %7944 = vadd.xlane.f32.xlu0 %v7943
      %v7945 = vpop.xlane.xlu0 %7944
      %v7946 = vsel %vm7803, %v7900, 0.0
      %7947 = vadd.xlane.f32.xlu0 %v7946
      %v7948 = vpop.xlane.xlu0 %7947
      %v7949 = vmul.f32 %v7903, %v7852
      %v7950 = vmul.f32 %v7906, %v7852
      %v7951 = vmul.f32 %v7909, %v7852
      %v7952 = vmul.f32 %v7912, %v7852
      %v7953 = vmul.f32 %v7915, %v7852
      %v7954 = vmul.f32 %v7918, %v7852
      %v7955 = vmul.f32 %v7921, %v7852
      %v7956 = vmul.f32 %v7924, %v7852
      %v7957 = vmul.f32 %v7927, %v7852
      %v7958 = vmul.f32 %v7930, %v7852
      %v7959 = vmul.f32 %v7933, %v7852
      %v7960 = vmul.f32 %v7936, %v7852
      %v7961 = vmul.f32 %v7939, %v7852
      %v7962 = vmul.f32 %v7942, %v7852
      %v7963 = vmul.f32 %v7945, %v7852
      %v7964 = vmul.f32 %v7948, %v7852
      %v7965 = vadd.f32 %v7949, 1e-05
      %v7966 = vadd.f32 %v7950, 1e-05
      %v7967 = vadd.f32 %v7951, 1e-05
      %v7968 = vadd.f32 %v7952, 1e-05
      %v7969 = vadd.f32 %v7953, 1e-05
      %v7970 = vadd.f32 %v7954, 1e-05
      %v7971 = vadd.f32 %v7955, 1e-05
      %v7972 = vadd.f32 %v7956, 1e-05
      %v7973 = vadd.f32 %v7957, 1e-05
      %v7974 = vadd.f32 %v7958, 1e-05
      %v7975 = vadd.f32 %v7959, 1e-05
      %v7976 = vadd.f32 %v7960, 1e-05
      %v7977 = vadd.f32 %v7961, 1e-05
      %v7978 = vadd.f32 %v7962, 1e-05
      %v7979 = vadd.f32 %v7963, 1e-05
      %v7980 = vadd.f32 %v7964, 1e-05
      %v7981 = vrsqrt.pop %v7965
      %v7982 = vrsqrt.pop %v7966
      %v7983 = vrsqrt.pop %v7967
      %v7984 = vrsqrt.pop %v7968
      %v7985 = vrsqrt.pop %v7969
      %v7986 = vrsqrt.pop %v7970
      %v7987 = vrsqrt.pop %v7971
      %v7988 = vrsqrt.pop %v7972
      %v7989 = vrsqrt.pop %v7973
      %v7990 = vrsqrt.pop %v7974
      %v7991 = vrsqrt.pop %v7975
      %v7992 = vrsqrt.pop %v7976
      %v7993 = vrsqrt.pop %v7977
      %v7994 = vrsqrt.pop %v7978
      %v7995 = vrsqrt.pop %v7979
      %v7996 = vrsqrt.pop %v7980
      %v7997 = vmul.f32 %v7869, %v7981
      %v7998 = vmul.f32 %v7870, %v7982
      %v7999 = vmul.f32 %v7871, %v7983
      %v8000 = vmul.f32 %v7872, %v7984
      %v8001 = vmul.f32 %v7873, %v7985
      %v8002 = vmul.f32 %v7874, %v7986
      %v8003 = vmul.f32 %v7875, %v7987
      %v8004 = vmul.f32 %v7876, %v7988
      %v8005 = vmul.f32 %v7877, %v7989
      %v8006 = vmul.f32 %v7878, %v7990
      %v8007 = vmul.f32 %v7879, %v7991
      %v8008 = vmul.f32 %v7880, %v7992
      %v8009 = vmul.f32 %v7881, %v7993
      %v8010 = vmul.f32 %v7882, %v7994
      %v8011 = vmul.f32 %v7883, %v7995
      %v8012 = vmul.f32 %v7884, %v7996
      %v8014 = vlaneseq
      %v8015 = vshrl.u32 %v8014, 7
      %v8016 = vsub.s32 0, %v8015
      %v8017 = vrot.slane %v7801, %v8016
      %v8019 = vmul.f32 %v7997, %v8017
      %v8020 = vmul.f32 %v7998, %v8017
      %v8021 = vmul.f32 %v7999, %v8017
      %v8022 = vmul.f32 %v8000, %v8017
      %v8023 = vmul.f32 %v8001, %v8017
      %v8024 = vmul.f32 %v8002, %v8017
      %v8025 = vmul.f32 %v8003, %v8017
      %v8026 = vmul.f32 %v8004, %v8017
      %v8027 = vmul.f32 %v8005, %v8017
      %v8028 = vmul.f32 %v8006, %v8017
      %v8029 = vmul.f32 %v8007, %v8017
      %v8030 = vmul.f32 %v8008, %v8017
      %v8031 = vmul.f32 %v8009, %v8017
      %v8032 = vmul.f32 %v8010, %v8017
      %v8033 = vmul.f32 %v8011, %v8017
      %v8034 = vmul.f32 %v8012, %v8017
      %v8036 = vlaneseq
      %v8037 = vshrl.u32 %v8036, 7
      %v8038 = vsub.s32 0, %v8037
      %v8039 = vrot.slane %v7802, %v8038
      %v8041 = vadd.f32 %v8019, %v8039
      %v8042 = vadd.f32 %v8020, %v8039
      %v8043 = vadd.f32 %v8021, %v8039
      %v8044 = vadd.f32 %v8022, %v8039
      %v8045 = vadd.f32 %v8023, %v8039
      %v8046 = vadd.f32 %v8024, %v8039
      %v8047 = vadd.f32 %v8025, %v8039
      %v8048 = vadd.f32 %v8026, %v8039
      %v8049 = vadd.f32 %v8027, %v8039
      %v8050 = vadd.f32 %v8028, %v8039
      %v8051 = vadd.f32 %v8029, %v8039
      %v8052 = vadd.f32 %v8030, %v8039
      %v8053 = vadd.f32 %v8031, %v8039
      %v8054 = vadd.f32 %v8032, %v8039
      %v8055 = vadd.f32 %v8033, %v8039
      %v8056 = vadd.f32 %v8034, %v8039
      %v8057 = vsub.f32 0.0, %v8041
      %v8058 = vsub.f32 0.0, %v8042
      %v8059 = vsub.f32 0.0, %v8043
      %v8060 = vsub.f32 0.0, %v8044
      %v8061 = vsub.f32 0.0, %v8045
      %v8062 = vsub.f32 0.0, %v8046
      %v8063 = vsub.f32 0.0, %v8047
      %v8064 = vsub.f32 0.0, %v8048
      %v8065 = vsub.f32 0.0, %v8049
      %v8066 = vsub.f32 0.0, %v8050
      %v8067 = vsub.f32 0.0, %v8051
      %v8068 = vsub.f32 0.0, %v8052
      %v8069 = vsub.f32 0.0, %v8053
      %v8070 = vsub.f32 0.0, %v8054
      %v8071 = vsub.f32 0.0, %v8055
      %v8072 = vsub.f32 0.0, %v8056
      %v8073 = vmul.f32 %v8057, 1.442695
      %v8074 = vpow.pop %v8073
      %v8075 = vmul.f32 %v8058, 1.442695
      %v8076 = vpow.pop %v8075
      %v8077 = vmul.f32 %v8059, 1.442695
      %v8078 = vpow.pop %v8077
      %v8079 = vmul.f32 %v8060, 1.442695
      %v8080 = vpow.pop %v8079
      %v8081 = vmul.f32 %v8061, 1.442695
      %v8082 = vpow.pop %v8081
      %v8083 = vmul.f32 %v8062, 1.442695
      %v8084 = vpow.pop %v8083
      %v8085 = vmul.f32 %v8063, 1.442695
      %v8086 = vpow.pop %v8085
      %v8087 = vmul.f32 %v8064, 1.442695
      %v8088 = vpow.pop %v8087
      %v8089 = vmul.f32 %v8065, 1.442695
      %v8090 = vpow.pop %v8089
      %v8091 = vmul.f32 %v8066, 1.442695
      %v8092 = vpow.pop %v8091
      %v8093 = vmul.f32 %v8067, 1.442695
      %v8094 = vpow.pop %v8093
      %v8095 = vmul.f32 %v8068, 1.442695
      %v8096 = vpow.pop %v8095
      %v8097 = vmul.f32 %v8069, 1.442695
      %v8098 = vpow.pop %v8097
      %v8099 = vmul.f32 %v8070, 1.442695
      %v8100 = vpow.pop %v8099
      %v8101 = vmul.f32 %v8071, 1.442695
      %v8102 = vpow.pop %v8101
      %v8103 = vmul.f32 %v8072, 1.442695
      %v8104 = vpow.pop %v8103
      %v8105 = vadd.f32 %v8074, 1.0
      %v8106 = vadd.f32 %v8076, 1.0
      %v8107 = vadd.f32 %v8078, 1.0
      %v8108 = vadd.f32 %v8080, 1.0
      %v8109 = vadd.f32 %v8082, 1.0
      %v8110 = vadd.f32 %v8084, 1.0
      %v8111 = vadd.f32 %v8086, 1.0
      %v8112 = vadd.f32 %v8088, 1.0
      %v8113 = vadd.f32 %v8090, 1.0
      %v8114 = vadd.f32 %v8092, 1.0
      %v8115 = vadd.f32 %v8094, 1.0
      %v8116 = vadd.f32 %v8096, 1.0
      %v8117 = vadd.f32 %v8098, 1.0
      %v8118 = vadd.f32 %v8100, 1.0
      %v8119 = vadd.f32 %v8102, 1.0
      %v8120 = vadd.f32 %v8104, 1.0
      %v8121 = vrcp.pop %v8105
      %v8122 = vrcp.pop %v8106
      %v8123 = vrcp.pop %v8107
      %v8124 = vrcp.pop %v8108
      %v8125 = vrcp.pop %v8109
      %v8126 = vrcp.pop %v8110
      %v8127 = vrcp.pop %v8111
      %v8128 = vrcp.pop %v8112
      %v8129 = vrcp.pop %v8113
      %v8130 = vrcp.pop %v8114
      %v8131 = vrcp.pop %v8115
      %v8132 = vrcp.pop %v8116
      %v8133 = vrcp.pop %v8117
      %v8134 = vrcp.pop %v8118
      %v8135 = vrcp.pop %v8119
      %v8136 = vrcp.pop %v8120
      %v8137 = vmul.f32 %v8041, %v8121
      %v8138 = vmul.f32 %v8042, %v8122
      %v8139 = vmul.f32 %v8043, %v8123
      %v8140 = vmul.f32 %v8044, %v8124
      %v8141 = vmul.f32 %v8045, %v8125
      %v8142 = vmul.f32 %v8046, %v8126
      %v8143 = vmul.f32 %v8047, %v8127
      %v8144 = vmul.f32 %v8048, %v8128
      %v8145 = vmul.f32 %v8049, %v8129
      %v8146 = vmul.f32 %v8050, %v8130
      %v8147 = vmul.f32 %v8051, %v8131
      %v8148 = vmul.f32 %v8052, %v8132
      %v8149 = vmul.f32 %v8053, %v8133
      %v8150 = vmul.f32 %v8054, %v8134
      %v8151 = vmul.f32 %v8055, %v8135
      %v8152 = vmul.f32 %v8056, %v8136
      %v8153 = vpack.c.bf16 %v8138, %v8137
      %v8154 = vpack.c.bf16 %v8140, %v8139
      %v8155 = vpack.c.bf16 %v8142, %v8141
      %v8156 = vpack.c.bf16 %v8144, %v8143
      %v8157 = vpack.c.bf16 %v8146, %v8145
      %v8158 = vpack.c.bf16 %v8148, %v8147
      %v8159 = vpack.c.bf16 %v8150, %v8149
      %v8160 = vpack.c.bf16 %v8152, %v8151
      %v8161 = vld [vmem:[%s6] sm:$0xf]
      %v8162 = vld [vmem:[%s6 + $0x4] sm:$0xf]
      %v8163 = vld [vmem:[%s6 + $0x8] sm:$0xf]
      %v8164 = vld [vmem:[%s6 + $0xc] sm:$0xf]
      %v8165 = vld [vmem:[%s6 + $0x10] sm:$0xf]
      %v8166 = vld [vmem:[%s6 + $0x14] sm:$0xf]
      %v8167 = vld [vmem:[%s6 + $0x18] sm:$0xf]
      %v8168 = vld [vmem:[%s6 + $0x1c] sm:$0xf]
      %v8169 = vld [vmem:[%s7] sm:$0x1]
      %v8171 = vlaneseq
      %v8172 = vshrl.u32 %v8171, 7
      %v8173 = vsub.s32 0, %v8172
      %v8174 = vrot.slane %v8169, %v8173
      %v8184 = vunpack.c.l.b16 %v8161
      %v8185 = vunpack.c.l.b16 %v8162
      %v8186 = vunpack.c.l.b16 %v8163
      %v8187 = vunpack.c.l.b16 %v8164
      %v8188 = vunpack.c.l.b16 %v8165
      %v8189 = vunpack.c.l.b16 %v8166
      %v8190 = vunpack.c.l.b16 %v8167
      %v8191 = vunpack.c.l.b16 %v8168
      %v8192 = vpack.c.b16 %v8185, %v8184
      %v8193 = vpack.c.b16 %v8187, %v8186
      %v8194 = vpack.c.b16 %v8189, %v8188
      %v8195 = vpack.c.b16 %v8191, %v8190
      %v8201 = vsel %vm7803, %v8153, 0
      %v8204 = vsel %vm7803, %v8154, 0
      %v8207 = vsel %vm7803, %v8155, 0
      %v8210 = vsel %vm7803, %v8156, 0
      %v8213 = vsel %vm7803, %v8157, 0
      %v8216 = vsel %vm7803, %v8158, 0
      %v8219 = vsel %vm7803, %v8159, 0
      %v8222 = vsel %vm7803, %v8160, 0
      %8224 = vmatprep.subr.bf16.mxu0 0
      %8225 = vmatpush1.bf16.msra.mxu0 %v8192
      %8226 = vmatprep.subr.bf16.mxu0 0
      %8227 = vmatpush1.bf16.msra.mxu0 %v8193
      %8228 = vmatprep.subr.bf16.mxu0 0
      %8229 = vmatpush1.bf16.msra.mxu0 %v8194
      %8230 = vmatprep.subr.bf16.mxu0 0
      %8231 = vmatpush1.bf16.msra.mxu0 %v8195
      %8232 = vmatprep.subr.bf16.mxu0 0
      %8233 = vmatpush1.bf16.msra.mxu0 0
      %8234 = vmatprep.subr.bf16.mxu0 0
      %8235 = vmatpush1.bf16.msra.mxu0 0
      %8236 = vmatprep.subr.bf16.mxu0 0
      %8237 = vmatpush1.bf16.msra.mxu0 0
      %8238 = vmatprep.subr.bf16.mxu0 0
      %8239 = vmatpush1.bf16.msra.mxu0 0
      %8240 = vmatprep.subr.bf16.mxu0 0
      %8241 = vmatpush1.bf16.msra.mxu0 0
      %8242 = vmatprep.subr.bf16.mxu0 0
      %8243 = vmatpush1.bf16.msra.mxu0 0
      %8244 = vmatprep.subr.bf16.mxu0 0
      %8245 = vmatpush1.bf16.msra.mxu0 0
      %8246 = vmatprep.subr.bf16.mxu0 0
      %8247 = vmatpush1.bf16.msra.mxu0 0
      %8248 = vmatprep.subr.bf16.mxu0 0
      %8249 = vmatpush1.bf16.msra.mxu0 0
      %8250 = vmatprep.subr.bf16.mxu0 0
      %8251 = vmatpush1.bf16.msra.mxu0 0
      %8252 = vmatprep.subr.bf16.mxu0 0
      %8253 = vmatpush1.bf16.msra.mxu0 0
      %8254 = vmatprep.subr.bf16.mxu0 0
      %8255 = vmatpush1.bf16.msra.mxu0 0
      %8256 = vmatprep.mubr.bf16.mxu0 0
      %8257 = vmatmul.mubr.bf16.gmra.mrb[0].mxu0 %v8201
      %v8258 = vpop.f32.mrb[0].mxu0
      %v8259 = vadd.f32 %v8174, %v8258
      %v8260 = vpop.f32.mrb[0].mxu0
      %v8261 = vpop.f32.mrb[0].mxu0
      %v8262 = vadd.f32 %v8174, %v8261
      %v8263 = vpop.f32.mrb[0].mxu0
      %8264 = vmatprep.mubr.bf16.mxu0 0
      %8265 = vmatmul.mubr.bf16.gmra.mrb[0].mxu0 %v8204
      %v8266 = vpop.f32.mrb[0].mxu0
      %v8267 = vadd.f32 %v8174, %v8266
      %v8268 = vpop.f32.mrb[0].mxu0
      %v8269 = vpop.f32.mrb[0].mxu0
      %v8270 = vadd.f32 %v8174, %v8269
      %v8271 = vpop.f32.mrb[0].mxu0
      %8272 = vmatprep.mubr.bf16.mxu0 0
      %8273 = vmatmul.mubr.bf16.gmra.mrb[0].mxu0 %v8207
      %v8274 = vpop.f32.mrb[0].mxu0
      %v8275 = vadd.f32 %v8174, %v8274
      %v8276 = vpop.f32.mrb[0].mxu0
      %v8277 = vpop.f32.mrb[0].mxu0
      %v8278 = vadd.f32 %v8174, %v8277
      %v8279 = vpop.f32.mrb[0].mxu0
      %8280 = vmatprep.mubr.bf16.mxu0 0
      %8281 = vmatmul.mubr.bf16.gmra.mrb[0].mxu0 %v8210
      %v8282 = vpop.f32.mrb[0].mxu0
      %v8283 = vadd.f32 %v8174, %v8282
      %v8284 = vpop.f32.mrb[0].mxu0
      %v8285 = vpop.f32.mrb[0].mxu0
      %v8286 = vadd.f32 %v8174, %v8285
      %v8287 = vpop.f32.mrb[0].mxu0
      %8288 = vmatprep.mubr.bf16.mxu0 0
      %8289 = vmatmul.mubr.bf16.gmra.mrb[0].mxu0 %v8213
      %v8290 = vpop.f32.mrb[0].mxu0
      %v8291 = vadd.f32 %v8174, %v8290
      %v8292 = vpop.f32.mrb[0].mxu0
      %v8293 = vpop.f32.mrb[0].mxu0
      %v8294 = vadd.f32 %v8174, %v8293
      %v8295 = vpop.f32.mrb[0].mxu0
      %8296 = vmatprep.mubr.bf16.mxu0 0
      %8297 = vmatmul.mubr.bf16.gmra.mrb[0].mxu0 %v8216
      %v8298 = vpop.f32.mrb[0].mxu0
      %v8299 = vadd.f32 %v8174, %v8298
      %v8300 = vpop.f32.mrb[0].mxu0
      %v8301 = vpop.f32.mrb[0].mxu0
      %v8302 = vadd.f32 %v8174, %v8301
      %v8303 = vpop.f32.mrb[0].mxu0
      %8304 = vmatprep.mubr.bf16.mxu0 0
      %8305 = vmatmul.mubr.bf16.gmra.mrb[0].mxu0 %v8219
      %v8306 = vpop.f32.mrb[0].mxu0
      %v8307 = vadd.f32 %v8174, %v8306
      %v8308 = vpop.f32.mrb[0].mxu0
      %v8309 = vpop.f32.mrb[0].mxu0
      %v8310 = vadd.f32 %v8174, %v8309
      %v8311 = vpop.f32.mrb[0].mxu0
      %8312 = vmatprep.mubr.bf16.mxu0 0
      %8313 = vmatmul.mubr.bf16.gmra.mrb[0].mxu0 %v8222
      %v8314 = vpop.f32.mrb[0].mxu0
      %v8315 = vadd.f32 %v8174, %v8314
      %v8316 = vpop.f32.mrb[0].mxu0
      %v8317 = vpop.f32.mrb[0].mxu0
      %v8318 = vadd.f32 %v8174, %v8317
      %v8319 = vpop.f32.mrb[0].mxu0
      %8320 = vdwg.mxu0
      %v8321 = vld [vmem:[%s8] sm:$0x1]
      %v8322 = vld [vmem:[%s9] sm:$0x1]
      %v8323 = vsel %vm7803, %v8259, 0.0
      %8324 = vadd.xlane.f32.xlu0 %v8323
      %v8325 = vpop.xlane.xlu0 %8324
      %v8326 = vsel %vm7803, %v8262, 0.0
      %8327 = vadd.xlane.f32.xlu0 %v8326
      %v8328 = vpop.xlane.xlu0 %8327
      %v8329 = vsel %vm7803, %v8267, 0.0
      %8330 = vadd.xlane.f32.xlu0 %v8329
      %v8331 = vpop.xlane.xlu0 %8330
      %v8332 = vsel %vm7803, %v8270, 0.0
      %8333 = vadd.xlane.f32.xlu0 %v8332
      %v8334 = vpop.xlane.xlu0 %8333
      %v8335 = vsel %vm7803, %v8275, 0.0
      %8336 = vadd.xlane.f32.xlu0 %v8335
      %v8337 = vpop.xlane.xlu0 %8336
      %v8338 = vsel %vm7803, %v8278, 0.0
      %8339 = vadd.xlane.f32.xlu0 %v8338
      %v8340 = vpop.xlane.xlu0 %8339
      %v8341 = vsel %vm7803, %v8283, 0.0
      %8342 = vadd.xlane.f32.xlu0 %v8341
      %v8343 = vpop.xlane.xlu0 %8342
      %v8344 = vsel %vm7803, %v8286, 0.0
      %8345 = vadd.xlane.f32.xlu0 %v8344
      %v8346 = vpop.xlane.xlu0 %8345
      %v8347 = vsel %vm7803, %v8291, 0.0
      %8348 = vadd.xlane.f32.xlu0 %v8347
      %v8349 = vpop.xlane.xlu0 %8348
      %v8350 = vsel %vm7803, %v8294, 0.0
      %8351 = vadd.xlane.f32.xlu0 %v8350
      %v8352 = vpop.xlane.xlu0 %8351
      %v8353 = vsel %vm7803, %v8299, 0.0
      %8354 = vadd.xlane.f32.xlu0 %v8353
      %v8355 = vpop.xlane.xlu0 %8354
      %v8356 = vsel %vm7803, %v8302, 0.0
      %8357 = vadd.xlane.f32.xlu0 %v8356
      %v8358 = vpop.xlane.xlu0 %8357
      %v8359 = vsel %vm7803, %v8307, 0.0
      %8360 = vadd.xlane.f32.xlu0 %v8359
      %v8361 = vpop.xlane.xlu0 %8360
      %v8362 = vsel %vm7803, %v8310, 0.0
      %8363 = vadd.xlane.f32.xlu0 %v8362
      %v8364 = vpop.xlane.xlu0 %8363
      %v8365 = vsel %vm7803, %v8315, 0.0
      %8366 = vadd.xlane.f32.xlu0 %v8365
      %v8367 = vpop.xlane.xlu0 %8366
      %v8368 = vsel %vm7803, %v8318, 0.0
      %8369 = vadd.xlane.f32.xlu0 %v8368
      %v8370 = vpop.xlane.xlu0 %8369
      %v8371 = vmul.f32 %v8325, %v7852
      %v8372 = vmul.f32 %v8328, %v7852
      %v8373 = vmul.f32 %v8331, %v7852
      %v8374 = vmul.f32 %v8334, %v7852
      %v8375 = vmul.f32 %v8337, %v7852
      %v8376 = vmul.f32 %v8340, %v7852
      %v8377 = vmul.f32 %v8343, %v7852
      %v8378 = vmul.f32 %v8346, %v7852
      %v8379 = vmul.f32 %v8349, %v7852
      %v8380 = vmul.f32 %v8352, %v7852
      %v8381 = vmul.f32 %v8355, %v7852
      %v8382 = vmul.f32 %v8358, %v7852
      %v8383 = vmul.f32 %v8361, %v7852
      %v8384 = vmul.f32 %v8364, %v7852
      %v8385 = vmul.f32 %v8367, %v7852
      %v8386 = vmul.f32 %v8370, %v7852
      %v8387 = vsub.f32 %v8259, %v8371
      %v8388 = vsub.f32 %v8262, %v8372
      %v8389 = vsub.f32 %v8267, %v8373
      %v8390 = vsub.f32 %v8270, %v8374
      %v8391 = vsub.f32 %v8275, %v8375
      %v8392 = vsub.f32 %v8278, %v8376
      %v8393 = vsub.f32 %v8283, %v8377
      %v8394 = vsub.f32 %v8286, %v8378
      %v8395 = vsub.f32 %v8291, %v8379
      %v8396 = vsub.f32 %v8294, %v8380
      %v8397 = vsub.f32 %v8299, %v8381
      %v8398 = vsub.f32 %v8302, %v8382
      %v8399 = vsub.f32 %v8307, %v8383
      %v8400 = vsub.f32 %v8310, %v8384
      %v8401 = vsub.f32 %v8315, %v8385
      %v8402 = vsub.f32 %v8318, %v8386
      %v8403 = vmul.f32 %v8387, %v8387
      %v8404 = vmul.f32 %v8388, %v8388
      %v8405 = vmul.f32 %v8389, %v8389
      %v8406 = vmul.f32 %v8390, %v8390
      %v8407 = vmul.f32 %v8391, %v8391
      %v8408 = vmul.f32 %v8392, %v8392
      %v8409 = vmul.f32 %v8393, %v8393
      %v8410 = vmul.f32 %v8394, %v8394
      %v8411 = vmul.f32 %v8395, %v8395
      %v8412 = vmul.f32 %v8396, %v8396
      %v8413 = vmul.f32 %v8397, %v8397
      %v8414 = vmul.f32 %v8398, %v8398
      %v8415 = vmul.f32 %v8399, %v8399
      %v8416 = vmul.f32 %v8400, %v8400
      %v8417 = vmul.f32 %v8401, %v8401
      %v8418 = vmul.f32 %v8402, %v8402
      %v8419 = vsel %vm7803, %v8403, 0.0
      %8420 = vadd.xlane.f32.xlu0 %v8419
      %v8421 = vpop.xlane.xlu0 %8420
      %v8422 = vsel %vm7803, %v8404, 0.0
      %8423 = vadd.xlane.f32.xlu0 %v8422
      %v8424 = vpop.xlane.xlu0 %8423
      %v8425 = vsel %vm7803, %v8405, 0.0
      %8426 = vadd.xlane.f32.xlu0 %v8425
      %v8427 = vpop.xlane.xlu0 %8426
      %v8428 = vsel %vm7803, %v8406, 0.0
      %8429 = vadd.xlane.f32.xlu0 %v8428
      %v8430 = vpop.xlane.xlu0 %8429
      %v8431 = vsel %vm7803, %v8407, 0.0
      %8432 = vadd.xlane.f32.xlu0 %v8431
      %v8433 = vpop.xlane.xlu0 %8432
      %v8434 = vsel %vm7803, %v8408, 0.0
      %8435 = vadd.xlane.f32.xlu0 %v8434
      %v8436 = vpop.xlane.xlu0 %8435
      %v8437 = vsel %vm7803, %v8409, 0.0
      %8438 = vadd.xlane.f32.xlu0 %v8437
      %v8439 = vpop.xlane.xlu0 %8438
      %v8440 = vsel %vm7803, %v8410, 0.0
      %8441 = vadd.xlane.f32.xlu0 %v8440
      %v8442 = vpop.xlane.xlu0 %8441
      %v8443 = vsel %vm7803, %v8411, 0.0
      %8444 = vadd.xlane.f32.xlu0 %v8443
      %v8445 = vpop.xlane.xlu0 %8444
      %v8446 = vsel %vm7803, %v8412, 0.0
      %8447 = vadd.xlane.f32.xlu0 %v8446
      %v8448 = vpop.xlane.xlu0 %8447
      %v8449 = vsel %vm7803, %v8413, 0.0
      %8450 = vadd.xlane.f32.xlu0 %v8449
      %v8451 = vpop.xlane.xlu0 %8450
      %v8452 = vsel %vm7803, %v8414, 0.0
      %8453 = vadd.xlane.f32.xlu0 %v8452
      %v8454 = vpop.xlane.xlu0 %8453
      %v8455 = vsel %vm7803, %v8415, 0.0
      %8456 = vadd.xlane.f32.xlu0 %v8455
      %v8457 = vpop.xlane.xlu0 %8456
      %v8458 = vsel %vm7803, %v8416, 0.0
      %8459 = vadd.xlane.f32.xlu0 %v8458
      %v8460 = vpop.xlane.xlu0 %8459
      %v8461 = vsel %vm7803, %v8417, 0.0
      %8462 = vadd.xlane.f32.xlu0 %v8461
      %v8463 = vpop.xlane.xlu0 %8462
      %v8464 = vsel %vm7803, %v8418, 0.0
      %8465 = vadd.xlane.f32.xlu0 %v8464
      %v8466 = vpop.xlane.xlu0 %8465
      %v8467 = vmul.f32 %v8421, %v7852
      %v8468 = vmul.f32 %v8424, %v7852
      %v8469 = vmul.f32 %v8427, %v7852
      %v8470 = vmul.f32 %v8430, %v7852
      %v8471 = vmul.f32 %v8433, %v7852
      %v8472 = vmul.f32 %v8436, %v7852
      %v8473 = vmul.f32 %v8439, %v7852
      %v8474 = vmul.f32 %v8442, %v7852
      %v8475 = vmul.f32 %v8445, %v7852
      %v8476 = vmul.f32 %v8448, %v7852
      %v8477 = vmul.f32 %v8451, %v7852
      %v8478 = vmul.f32 %v8454, %v7852
      %v8479 = vmul.f32 %v8457, %v7852
      %v8480 = vmul.f32 %v8460, %v7852
      %v8481 = vmul.f32 %v8463, %v7852
      %v8482 = vmul.f32 %v8466, %v7852
      %v8483 = vadd.f32 %v8467, 1e-05
      %v8484 = vadd.f32 %v8468, 1e-05
      %v8485 = vadd.f32 %v8469, 1e-05
      %v8486 = vadd.f32 %v8470, 1e-05
      %v8487 = vadd.f32 %v8471, 1e-05
      %v8488 = vadd.f32 %v8472, 1e-05
      %v8489 = vadd.f32 %v8473, 1e-05
      %v8490 = vadd.f32 %v8474, 1e-05
      %v8491 = vadd.f32 %v8475, 1e-05
      %v8492 = vadd.f32 %v8476, 1e-05
      %v8493 = vadd.f32 %v8477, 1e-05
      %v8494 = vadd.f32 %v8478, 1e-05
      %v8495 = vadd.f32 %v8479, 1e-05
      %v8496 = vadd.f32 %v8480, 1e-05
      %v8497 = vadd.f32 %v8481, 1e-05
      %v8498 = vadd.f32 %v8482, 1e-05
      %v8499 = vrsqrt.pop %v8483
      %v8500 = vrsqrt.pop %v8484
      %v8501 = vrsqrt.pop %v8485
      %v8502 = vrsqrt.pop %v8486
      %v8503 = vrsqrt.pop %v8487
      %v8504 = vrsqrt.pop %v8488
      %v8505 = vrsqrt.pop %v8489
      %v8506 = vrsqrt.pop %v8490
      %v8507 = vrsqrt.pop %v8491
      %v8508 = vrsqrt.pop %v8492
      %v8509 = vrsqrt.pop %v8493
      %v8510 = vrsqrt.pop %v8494
      %v8511 = vrsqrt.pop %v8495
      %v8512 = vrsqrt.pop %v8496
      %v8513 = vrsqrt.pop %v8497
      %v8514 = vrsqrt.pop %v8498
      %v8515 = vmul.f32 %v8387, %v8499
      %v8516 = vmul.f32 %v8388, %v8500
      %v8517 = vmul.f32 %v8389, %v8501
      %v8518 = vmul.f32 %v8390, %v8502
      %v8519 = vmul.f32 %v8391, %v8503
      %v8520 = vmul.f32 %v8392, %v8504
      %v8521 = vmul.f32 %v8393, %v8505
      %v8522 = vmul.f32 %v8394, %v8506
      %v8523 = vmul.f32 %v8395, %v8507
      %v8524 = vmul.f32 %v8396, %v8508
      %v8525 = vmul.f32 %v8397, %v8509
      %v8526 = vmul.f32 %v8398, %v8510
      %v8527 = vmul.f32 %v8399, %v8511
      %v8528 = vmul.f32 %v8400, %v8512
      %v8529 = vmul.f32 %v8401, %v8513
      %v8530 = vmul.f32 %v8402, %v8514
      %v8532 = vlaneseq
      %v8533 = vshrl.u32 %v8532, 7
      %v8534 = vsub.s32 0, %v8533
      %v8535 = vrot.slane %v8321, %v8534
      %v8537 = vmul.f32 %v8515, %v8535
      %v8538 = vmul.f32 %v8516, %v8535
      %v8539 = vmul.f32 %v8517, %v8535
      %v8540 = vmul.f32 %v8518, %v8535
      %v8541 = vmul.f32 %v8519, %v8535
      %v8542 = vmul.f32 %v8520, %v8535
      %v8543 = vmul.f32 %v8521, %v8535
      %v8544 = vmul.f32 %v8522, %v8535
      %v8545 = vmul.f32 %v8523, %v8535
      %v8546 = vmul.f32 %v8524, %v8535
      %v8547 = vmul.f32 %v8525, %v8535
      %v8548 = vmul.f32 %v8526, %v8535
      %v8549 = vmul.f32 %v8527, %v8535
      %v8550 = vmul.f32 %v8528, %v8535
      %v8551 = vmul.f32 %v8529, %v8535
      %v8552 = vmul.f32 %v8530, %v8535
      %v8554 = vlaneseq
      %v8555 = vshrl.u32 %v8554, 7
      %v8556 = vsub.s32 0, %v8555
      %v8557 = vrot.slane %v8322, %v8556
      %v8559 = vadd.f32 %v8537, %v8557
      %v8560 = vadd.f32 %v8538, %v8557
      %v8561 = vadd.f32 %v8539, %v8557
      %v8562 = vadd.f32 %v8540, %v8557
      %v8563 = vadd.f32 %v8541, %v8557
      %v8564 = vadd.f32 %v8542, %v8557
      %v8565 = vadd.f32 %v8543, %v8557
      %v8566 = vadd.f32 %v8544, %v8557
      %v8567 = vadd.f32 %v8545, %v8557
      %v8568 = vadd.f32 %v8546, %v8557
      %v8569 = vadd.f32 %v8547, %v8557
      %v8570 = vadd.f32 %v8548, %v8557
      %v8571 = vadd.f32 %v8549, %v8557
      %v8572 = vadd.f32 %v8550, %v8557
      %v8573 = vadd.f32 %v8551, %v8557
      %v8574 = vadd.f32 %v8552, %v8557
      %v8575 = vsub.f32 0.0, %v8559
      %v8576 = vsub.f32 0.0, %v8560
      %v8577 = vsub.f32 0.0, %v8561
      %v8578 = vsub.f32 0.0, %v8562
      %v8579 = vsub.f32 0.0, %v8563
      %v8580 = vsub.f32 0.0, %v8564
      %v8581 = vsub.f32 0.0, %v8565
      %v8582 = vsub.f32 0.0, %v8566
      %v8583 = vsub.f32 0.0, %v8567
      %v8584 = vsub.f32 0.0, %v8568
      %v8585 = vsub.f32 0.0, %v8569
      %v8586 = vsub.f32 0.0, %v8570
      %v8587 = vsub.f32 0.0, %v8571
      %v8588 = vsub.f32 0.0, %v8572
      %v8589 = vsub.f32 0.0, %v8573
      %v8590 = vsub.f32 0.0, %v8574
      %v8591 = vmul.f32 %v8575, 1.442695
      %v8592 = vpow.pop %v8591
      %v8593 = vmul.f32 %v8576, 1.442695
      %v8594 = vpow.pop %v8593
      %v8595 = vmul.f32 %v8577, 1.442695
      %v8596 = vpow.pop %v8595
      %v8597 = vmul.f32 %v8578, 1.442695
      %v8598 = vpow.pop %v8597
      %v8599 = vmul.f32 %v8579, 1.442695
      %v8600 = vpow.pop %v8599
      %v8601 = vmul.f32 %v8580, 1.442695
      %v8602 = vpow.pop %v8601
      %v8603 = vmul.f32 %v8581, 1.442695
      %v8604 = vpow.pop %v8603
      %v8605 = vmul.f32 %v8582, 1.442695
      %v8606 = vpow.pop %v8605
      %v8607 = vmul.f32 %v8583, 1.442695
      %v8608 = vpow.pop %v8607
      %v8609 = vmul.f32 %v8584, 1.442695
      %v8610 = vpow.pop %v8609
      %v8611 = vmul.f32 %v8585, 1.442695
      %v8612 = vpow.pop %v8611
      %v8613 = vmul.f32 %v8586, 1.442695
      %v8614 = vpow.pop %v8613
      %v8615 = vmul.f32 %v8587, 1.442695
      %v8616 = vpow.pop %v8615
      %v8617 = vmul.f32 %v8588, 1.442695
      %v8618 = vpow.pop %v8617
      %v8619 = vmul.f32 %v8589, 1.442695
      %v8620 = vpow.pop %v8619
      %v8621 = vmul.f32 %v8590, 1.442695
      %v8622 = vpow.pop %v8621
      %v8623 = vadd.f32 %v8592, 1.0
      %v8624 = vadd.f32 %v8594, 1.0
      %v8625 = vadd.f32 %v8596, 1.0
      %v8626 = vadd.f32 %v8598, 1.0
      %v8627 = vadd.f32 %v8600, 1.0
      %v8628 = vadd.f32 %v8602, 1.0
      %v8629 = vadd.f32 %v8604, 1.0
      %v8630 = vadd.f32 %v8606, 1.0
      %v8631 = vadd.f32 %v8608, 1.0
      %v8632 = vadd.f32 %v8610, 1.0
      %v8633 = vadd.f32 %v8612, 1.0
      %v8634 = vadd.f32 %v8614, 1.0
      %v8635 = vadd.f32 %v8616, 1.0
      %v8636 = vadd.f32 %v8618, 1.0
      %v8637 = vadd.f32 %v8620, 1.0
      %v8638 = vadd.f32 %v8622, 1.0
      %v8639 = vrcp.pop %v8623
      %v8640 = vrcp.pop %v8624
      %v8641 = vrcp.pop %v8625
      %v8642 = vrcp.pop %v8626
      %v8643 = vrcp.pop %v8627
      %v8644 = vrcp.pop %v8628
      %v8645 = vrcp.pop %v8629
      %v8646 = vrcp.pop %v8630
      %v8647 = vrcp.pop %v8631
      %v8648 = vrcp.pop %v8632
      %v8649 = vrcp.pop %v8633
      %v8650 = vrcp.pop %v8634
      %v8651 = vrcp.pop %v8635
      %v8652 = vrcp.pop %v8636
      %v8653 = vrcp.pop %v8637
      %v8654 = vrcp.pop %v8638
      %v8655 = vmul.f32 %v8559, %v8639
      %v8656 = vmul.f32 %v8560, %v8640
      %v8657 = vmul.f32 %v8561, %v8641
      %v8658 = vmul.f32 %v8562, %v8642
      %v8659 = vmul.f32 %v8563, %v8643
      %v8660 = vmul.f32 %v8564, %v8644
      %v8661 = vmul.f32 %v8565, %v8645
      %v8662 = vmul.f32 %v8566, %v8646
      %v8663 = vmul.f32 %v8567, %v8647
      %v8664 = vmul.f32 %v8568, %v8648
      %v8665 = vmul.f32 %v8569, %v8649
      %v8666 = vmul.f32 %v8570, %v8650
      %v8667 = vmul.f32 %v8571, %v8651
      %v8668 = vmul.f32 %v8572, %v8652
      %v8669 = vmul.f32 %v8573, %v8653
      %v8670 = vmul.f32 %v8574, %v8654
      %v8671 = vpack.c.bf16 %v8656, %v8655
      %v8672 = vpack.c.bf16 %v8658, %v8657
      %v8673 = vpack.c.bf16 %v8660, %v8659
      %v8674 = vpack.c.bf16 %v8662, %v8661
      %v8675 = vpack.c.bf16 %v8664, %v8663
      %v8676 = vpack.c.bf16 %v8666, %v8665
      %v8677 = vpack.c.bf16 %v8668, %v8667
      %v8678 = vpack.c.bf16 %v8670, %v8669
      %v8679 = vld [vmem:[%s10] sm:$0xff]
      %v8680 = vld [vmem:[%s10 + $0x8] sm:$0xff]
      %v8681 = vld [vmem:[%s10 + $0x10] sm:$0xf]
      %v8682 = vld [vmem:[%s10 + $0x14] sm:$0xff]
      %v8683 = vld [vmem:[%s10 + $0x1c] sm:$0xff]
      %v8684 = vld [vmem:[%s10 + $0x24] sm:$0xf]
      %v8685 = vld [vmem:[%s10 + $0x28] sm:$0xff]
      %v8686 = vld [vmem:[%s10 + $0x30] sm:$0xff]
      %v8687 = vld [vmem:[%s10 + $0x38] sm:$0xf]
      %v8688 = vld [vmem:[%s10 + $0x3c] sm:$0xff]
      %v8689 = vld [vmem:[%s10 + $0x44] sm:$0xff]
      %v8690 = vld [vmem:[%s10 + $0x4c] sm:$0xf]
      %v8691 = vld [vmem:[%s10 + $0x50] sm:$0xff]
      %v8692 = vld [vmem:[%s10 + $0x58] sm:$0xff]
      %v8693 = vld [vmem:[%s10 + $0x60] sm:$0xf]
      %v8694 = vld [vmem:[%s10 + $0x64] sm:$0xff]
      %v8695 = vld [vmem:[%s10 + $0x6c] sm:$0xff]
      %v8696 = vld [vmem:[%s10 + $0x74] sm:$0xf]
      %v8697 = vld [vmem:[%s10 + $0x78] sm:$0xff]
      %v8698 = vld [vmem:[%s10 + $0x80] sm:$0xff]
      %v8699 = vld [vmem:[%s10 + $0x88] sm:$0xf]
      %v8700 = vld [vmem:[%s10 + $0x8c] sm:$0xff]
      %v8701 = vld [vmem:[%s10 + $0x94] sm:$0xff]
      %v8702 = vld [vmem:[%s10 + $0x9c] sm:$0xf]
      %v8703 = vld [vmem:[%s11] sm:$0x1f]
      %v8705 = vlaneseq
      %v8706 = vshrl.u32 %v8705, 7
      %v8707 = vsub.s32 0, %v8706
      %v8708 = vrot.slane %v8703, %v8707
      %v8709 = vlaneseq
      %v8710 = vshrl.u32 %v8709, 7
      %v8711 = vsub.s32 1, %v8710
      %v8712 = vrot.slane %v8703, %v8711
      %v8713 = vlaneseq
      %v8714 = vshrl.u32 %v8713, 7
      %v8715 = vsub.s32 2, %v8714
      %v8716 = vrot.slane %v8703, %v8715
      %v8717 = vlaneseq
      %v8718 = vshrl.u32 %v8717, 7
      %v8719 = vsub.s32 3, %v8718
      %v8720 = vrot.slane %v8703, %v8719
      %v8721 = vlaneseq
      %v8722 = vshrl.u32 %v8721, 7
      %v8723 = vsub.s32 4, %v8722
      %v8724 = vrot.slane %v8703, %v8723
      %v8754 = vunpack.c.l.b16 %v8679
      %v8755 = vunpack.c.h.b16 %v8679
      %v8756 = vunpack.c.l.b16 %v8680
      %v8757 = vunpack.c.h.b16 %v8680
      %v8758 = vunpack.c.l.b16 %v8681
      %v8759 = vunpack.c.l.b16 %v8682
      %v8760 = vunpack.c.h.b16 %v8682
      %v8761 = vunpack.c.l.b16 %v8683
      %v8762 = vunpack.c.h.b16 %v8683
      %v8763 = vunpack.c.l.b16 %v8684
      %v8764 = vunpack.c.l.b16 %v8685
      %v8765 = vunpack.c.h.b16 %v8685
      %v8766 = vunpack.c.l.b16 %v8686
      %v8767 = vunpack.c.h.b16 %v8686
      %v8768 = vunpack.c.l.b16 %v8687
      %v8769 = vunpack.c.l.b16 %v8688
      %v8770 = vunpack.c.h.b16 %v8688
      %v8771 = vunpack.c.l.b16 %v8689
      %v8772 = vunpack.c.h.b16 %v8689
      %v8773 = vunpack.c.l.b16 %v8690
      %v8774 = vunpack.c.l.b16 %v8691
      %v8775 = vunpack.c.h.b16 %v8691
      %v8776 = vunpack.c.l.b16 %v8692
      %v8777 = vunpack.c.h.b16 %v8692
      %v8778 = vunpack.c.l.b16 %v8693
      %v8779 = vunpack.c.l.b16 %v8694
      %v8780 = vunpack.c.h.b16 %v8694
      %v8781 = vunpack.c.l.b16 %v8695
      %v8782 = vunpack.c.h.b16 %v8695
      %v8783 = vunpack.c.l.b16 %v8696
      %v8784 = vunpack.c.l.b16 %v8697
      %v8785 = vunpack.c.h.b16 %v8697
      %v8786 = vunpack.c.l.b16 %v8698
      %v8787 = vunpack.c.h.b16 %v8698
      %v8788 = vunpack.c.l.b16 %v8699
      %v8789 = vunpack.c.l.b16 %v8700
      %v8790 = vunpack.c.h.b16 %v8700
      %v8791 = vunpack.c.l.b16 %v8701
      %v8792 = vunpack.c.h.b16 %v8701
      %v8793 = vunpack.c.l.b16 %v8702
      %v8794 = vpack.c.b16 %v8759, %v8754
      %v8795 = vpack.c.b16 %v8760, %v8755
      %v8796 = vpack.c.b16 %v8761, %v8756
      %v8797 = vpack.c.b16 %v8762, %v8757
      %v8798 = vpack.c.b16 %v8763, %v8758
      %v8799 = vpack.c.b16 %v8769, %v8764
      %v8800 = vpack.c.b16 %v8770, %v8765
      %v8801 = vpack.c.b16 %v8771, %v8766
      %v8802 = vpack.c.b16 %v8772, %v8767
      %v8803 = vpack.c.b16 %v8773, %v8768
      %v8804 = vpack.c.b16 %v8779, %v8774
      %v8805 = vpack.c.b16 %v8780, %v8775
      %v8806 = vpack.c.b16 %v8781, %v8776
      %v8807 = vpack.c.b16 %v8782, %v8777
      %v8808 = vpack.c.b16 %v8783, %v8778
      %v8809 = vpack.c.b16 %v8789, %v8784
      %v8810 = vpack.c.b16 %v8790, %v8785
      %v8811 = vpack.c.b16 %v8791, %v8786
      %v8812 = vpack.c.b16 %v8792, %v8787
      %v8813 = vpack.c.b16 %v8793, %v8788
      %v8835 = vsel %vm7803, %v8671, 0
      %v8838 = vsel %vm7803, %v8672, 0
      %v8841 = vsel %vm7803, %v8673, 0
      %v8844 = vsel %vm7803, %v8674, 0
      %v8847 = vsel %vm7803, %v8675, 0
      %v8850 = vsel %vm7803, %v8676, 0
      %v8853 = vsel %vm7803, %v8677, 0
      %v8856 = vsel %vm7803, %v8678, 0
      %8858 = vmatprep.subr.bf16.mxu0 %v8795
      %8859 = vmatpush1.bf16.msra.mxu0 %v8794
      %8860 = vmatprep.subr.bf16.mxu0 %v8800
      %8861 = vmatpush1.bf16.msra.mxu0 %v8799
      %8862 = vmatprep.subr.bf16.mxu0 %v8805
      %8863 = vmatpush1.bf16.msra.mxu0 %v8804
      %8864 = vmatprep.subr.bf16.mxu0 %v8810
      %8865 = vmatpush1.bf16.msra.mxu0 %v8809
      %8866 = vmatprep.subr.bf16.mxu0 0
      %8867 = vmatpush1.bf16.msra.mxu0 0
      %8868 = vmatprep.subr.bf16.mxu0 0
      %8869 = vmatpush1.bf16.msra.mxu0 0
      %8870 = vmatprep.subr.bf16.mxu0 0
      %8871 = vmatpush1.bf16.msra.mxu0 0
      %8872 = vmatprep.subr.bf16.mxu0 0
      %8873 = vmatpush1.bf16.msra.mxu0 0
      %8874 = vmatprep.subr.bf16.mxu0 0
      %8875 = vmatpush1.bf16.msra.mxu0 0
      %8876 = vmatprep.subr.bf16.mxu0 0
      %8877 = vmatpush1.bf16.msra.mxu0 0
      %8878 = vmatprep.subr.bf16.mxu0 0
      %8879 = vmatpush1.bf16.msra.mxu0 0
      %8880 = vmatprep.subr.bf16.mxu0 0
      %8881 = vmatpush1.bf16.msra.mxu0 0
      %8882 = vmatprep.subr.bf16.mxu0 0
      %8883 = vmatpush1.bf16.msra.mxu0 0
      %8884 = vmatprep.subr.bf16.mxu0 0
      %8885 = vmatpush1.bf16.msra.mxu0 0
      %8886 = vmatprep.subr.bf16.mxu0 0
      %8887 = vmatpush1.bf16.msra.mxu0 0
      %8888 = vmatprep.subr.bf16.mxu0 0
      %8889 = vmatpush1.bf16.msra.mxu0 0
      %8890 = vmatprep.mubr.bf16.mxu0 0
      %8891 = vmatmul.mubr.bf16.gmra.mrb[0].mxu0 %v8835
      %v8892 = vpop.f32.mrb[0].mxu0
      %v8893 = vadd.f32 %v8708, %v8892
      %v8894 = vpop.f32.mrb[0].mxu0
      %v8895 = vadd.f32 %v8712, %v8894
      %v8896 = vpop.f32.mrb[0].mxu0
      %v8897 = vadd.f32 %v8708, %v8896
      %v8898 = vpop.f32.mrb[0].mxu0
      %v8899 = vadd.f32 %v8712, %v8898
      %8900 = vmatprep.mubr.bf16.mxu0 0
      %8901 = vmatmul.mubr.bf16.gmra.mrb[0].mxu0 %v8838
      %v8902 = vpop.f32.mrb[0].mxu0
      %v8903 = vadd.f32 %v8708, %v8902
      %v8904 = vpop.f32.mrb[0].mxu0
      %v8905 = vadd.f32 %v8712, %v8904
      %v8906 = vpop.f32.mrb[0].mxu0
      %v8907 = vadd.f32 %v8708, %v8906
      %v8908 = vpop.f32.mrb[0].mxu0
      %v8909 = vadd.f32 %v8712, %v8908
      %8910 = vmatprep.mubr.bf16.mxu0 0
      %8911 = vmatmul.mubr.bf16.gmra.mrb[0].mxu0 %v8841
      %v8912 = vpop.f32.mrb[0].mxu0
      %v8913 = vadd.f32 %v8708, %v8912
      %v8914 = vpop.f32.mrb[0].mxu0
      %v8915 = vadd.f32 %v8712, %v8914
      %v8916 = vpop.f32.mrb[0].mxu0
      %v8917 = vadd.f32 %v8708, %v8916
      %v8918 = vpop.f32.mrb[0].mxu0
      %v8919 = vadd.f32 %v8712, %v8918
      %8920 = vmatprep.mubr.bf16.mxu0 0
      %8921 = vmatmul.mubr.bf16.gmra.mrb[0].mxu0 %v8844
      %v8922 = vpop.f32.mrb[0].mxu0
      %v8923 = vadd.f32 %v8708, %v8922
      %v8924 = vpop.f32.mrb[0].mxu0
      %v8925 = vadd.f32 %v8712, %v8924
      %v8926 = vpop.f32.mrb[0].mxu0
      %v8927 = vadd.f32 %v8708, %v8926
      %v8928 = vpop.f32.mrb[0].mxu0
      %v8929 = vadd.f32 %v8712, %v8928
      %8930 = vmatprep.mubr.bf16.mxu0 0
      %8931 = vmatmul.mubr.bf16.gmra.mrb[0].mxu0 %v8847
      %v8932 = vpop.f32.mrb[0].mxu0
      %v8933 = vadd.f32 %v8708, %v8932
      %v8934 = vpop.f32.mrb[0].mxu0
      %v8935 = vadd.f32 %v8712, %v8934
      %v8936 = vpop.f32.mrb[0].mxu0
      %v8937 = vadd.f32 %v8708, %v8936
      %v8938 = vpop.f32.mrb[0].mxu0
      %v8939 = vadd.f32 %v8712, %v8938
      %8940 = vmatprep.mubr.bf16.mxu0 0
      %8941 = vmatmul.mubr.bf16.gmra.mrb[0].mxu0 %v8850
      %v8942 = vpop.f32.mrb[0].mxu0
      %v8943 = vadd.f32 %v8708, %v8942
      %v8944 = vpop.f32.mrb[0].mxu0
      %v8945 = vadd.f32 %v8712, %v8944
      %v8946 = vpop.f32.mrb[0].mxu0
      %v8947 = vadd.f32 %v8708, %v8946
      %v8948 = vpop.f32.mrb[0].mxu0
      %v8949 = vadd.f32 %v8712, %v8948
      %8950 = vmatprep.mubr.bf16.mxu0 0
      %8951 = vmatmul.mubr.bf16.gmra.mrb[0].mxu0 %v8853
      %v8952 = vpop.f32.mrb[0].mxu0
      %v8953 = vadd.f32 %v8708, %v8952
      %v8954 = vpop.f32.mrb[0].mxu0
      %v8955 = vadd.f32 %v8712, %v8954
      %v8956 = vpop.f32.mrb[0].mxu0
      %v8957 = vadd.f32 %v8708, %v8956
      %v8958 = vpop.f32.mrb[0].mxu0
      %v8959 = vadd.f32 %v8712, %v8958
      %8960 = vmatprep.mubr.bf16.mxu0 0
      %8961 = vmatmul.mubr.bf16.gmra.mrb[0].mxu0 %v8856
      %v8962 = vpop.f32.mrb[0].mxu0
      %v8963 = vadd.f32 %v8708, %v8962
      %v8964 = vpop.f32.mrb[0].mxu0
      %v8965 = vadd.f32 %v8712, %v8964
      %v8966 = vpop.f32.mrb[0].mxu0
      %v8967 = vadd.f32 %v8708, %v8966
      %v8968 = vpop.f32.mrb[0].mxu0
      %v8969 = vadd.f32 %v8712, %v8968
      %8970 = vdwg.mxu0
      %8971 = vmatprep.subr.bf16.mxu0 %v8797
      %8972 = vmatpush1.bf16.msra.mxu0 %v8796
      %8973 = vmatprep.subr.bf16.mxu0 %v8802
      %8974 = vmatpush1.bf16.msra.mxu0 %v8801
      %8975 = vmatprep.subr.bf16.mxu0 %v8807
      %8976 = vmatpush1.bf16.msra.mxu0 %v8806
      %8977 = vmatprep.subr.bf16.mxu0 %v8812
      %8978 = vmatpush1.bf16.msra.mxu0 %v8811
      %8979 = vmatprep.subr.bf16.mxu0 0
      %8980 = vmatpush1.bf16.msra.mxu0 0
      %8981 = vmatprep.subr.bf16.mxu0 0
      %8982 = vmatpush1.bf16.msra.mxu0 0
      %8983 = vmatprep.subr.bf16.mxu0 0
      %8984 = vmatpush1.bf16.msra.mxu0 0
      %8985 = vmatprep.subr.bf16.mxu0 0
      %8986 = vmatpush1.bf16.msra.mxu0 0
      %8987 = vmatprep.subr.bf16.mxu0 0
      %8988 = vmatpush1.bf16.msra.mxu0 0
      %8989 = vmatprep.subr.bf16.mxu0 0
      %8990 = vmatpush1.bf16.msra.mxu0 0
      %8991 = vmatprep.subr.bf16.mxu0 0
      %8992 = vmatpush1.bf16.msra.mxu0 0
      %8993 = vmatprep.subr.bf16.mxu0 0
      %8994 = vmatpush1.bf16.msra.mxu0 0
      %8995 = vmatprep.subr.bf16.mxu0 0
      %8996 = vmatpush1.bf16.msra.mxu0 0
      %8997 = vmatprep.subr.bf16.mxu0 0
      %8998 = vmatpush1.bf16.msra.mxu0 0
      %8999 = vmatprep.subr.bf16.mxu0 0
      %9000 = vmatpush1.bf16.msra.mxu0 0
      %9001 = vmatprep.subr.bf16.mxu0 0
      %9002 = vmatpush1.bf16.msra.mxu0 0
      %9003 = vmatprep.mubr.bf16.mxu0 0
      %9004 = vmatmul.mubr.bf16.gmra.mrb[0].mxu0 %v8835
      %v9005 = vpop.f32.mrb[0].mxu0
      %v9006 = vadd.f32 %v8716, %v9005
      %v9007 = vpop.f32.mrb[0].mxu0
      %v9008 = vadd.f32 %v8720, %v9007
      %v9009 = vpop.f32.mrb[0].mxu0
      %v9010 = vadd.f32 %v8716, %v9009
      %v9011 = vpop.f32.mrb[0].mxu0
      %v9012 = vadd.f32 %v8720, %v9011
      %9013 = vmatprep.mubr.bf16.mxu0 0
      %9014 = vmatmul.mubr.bf16.gmra.mrb[0].mxu0 %v8838
      %v9015 = vpop.f32.mrb[0].mxu0
      %v9016 = vadd.f32 %v8716, %v9015
      %v9017 = vpop.f32.mrb[0].mxu0
      %v9018 = vadd.f32 %v8720, %v9017
      %v9019 = vpop.f32.mrb[0].mxu0
      %v9020 = vadd.f32 %v8716, %v9019
      %v9021 = vpop.f32.mrb[0].mxu0
      %v9022 = vadd.f32 %v8720, %v9021
      %9023 = vmatprep.mubr.bf16.mxu0 0
      %9024 = vmatmul.mubr.bf16.gmra.mrb[0].mxu0 %v8841
      %v9025 = vpop.f32.mrb[0].mxu0
      %v9026 = vadd.f32 %v8716, %v9025
      %v9027 = vpop.f32.mrb[0].mxu0
      %v9028 = vadd.f32 %v8720, %v9027
      %v9029 = vpop.f32.mrb[0].mxu0
      %v9030 = vadd.f32 %v8716, %v9029
      %v9031 = vpop.f32.mrb[0].mxu0
      %v9032 = vadd.f32 %v8720, %v9031
      %9033 = vmatprep.mubr.bf16.mxu0 0
      %9034 = vmatmul.mubr.bf16.gmra.mrb[0].mxu0 %v8844
      %v9035 = vpop.f32.mrb[0].mxu0
      %v9036 = vadd.f32 %v8716, %v9035
      %v9037 = vpop.f32.mrb[0].mxu0
      %v9038 = vadd.f32 %v8720, %v9037
      %v9039 = vpop.f32.mrb[0].mxu0
      %v9040 = vadd.f32 %v8716, %v9039
      %v9041 = vpop.f32.mrb[0].mxu0
      %v9042 = vadd.f32 %v8720, %v9041
      %9043 = vmatprep.mubr.bf16.mxu0 0
      %9044 = vmatmul.mubr.bf16.gmra.mrb[0].mxu0 %v8847
      %v9045 = vpop.f32.mrb[0].mxu0
      %v9046 = vadd.f32 %v8716, %v9045
      %v9047 = vpop.f32.mrb[0].mxu0
      %v9048 = vadd.f32 %v8720, %v9047
      %v9049 = vpop.f32.mrb[0].mxu0
      %v9050 = vadd.f32 %v8716, %v9049
      %v9051 = vpop.f32.mrb[0].mxu0
      %v9052 = vadd.f32 %v8720, %v9051
      %9053 = vmatprep.mubr.bf16.mxu0 0
      %9054 = vmatmul.mubr.bf16.gmra.mrb[0].mxu0 %v8850
      %v9055 = vpop.f32.mrb[0].mxu0
      %v9056 = vadd.f32 %v8716, %v9055
      %v9057 = vpop.f32.mrb[0].mxu0
      %v9058 = vadd.f32 %v8720, %v9057
      %v9059 = vpop.f32.mrb[0].mxu0
      %v9060 = vadd.f32 %v8716, %v9059
      %v9061 = vpop.f32.mrb[0].mxu0
      %v9062 = vadd.f32 %v8720, %v9061
      %9063 = vmatprep.mubr.bf16.mxu0 0
      %9064 = vmatmul.mubr.bf16.gmra.mrb[0].mxu0 %v8853
      %v9065 = vpop.f32.mrb[0].mxu0
      %v9066 = vadd.f32 %v8716, %v9065
      %v9067 = vpop.f32.mrb[0].mxu0
      %v9068 = vadd.f32 %v8720, %v9067
      %v9069 = vpop.f32.mrb[0].mxu0
      %v9070 = vadd.f32 %v8716, %v9069
      %v9071 = vpop.f32.mrb[0].mxu0
      %v9072 = vadd.f32 %v8720, %v9071
      %9073 = vmatprep.mubr.bf16.mxu0 0
      %9074 = vmatmul.mubr.bf16.gmra.mrb[0].mxu0 %v8856
      %v9075 = vpop.f32.mrb[0].mxu0
      %v9076 = vadd.f32 %v8716, %v9075
      %v9077 = vpop.f32.mrb[0].mxu0
      %v9078 = vadd.f32 %v8720, %v9077
      %v9079 = vpop.f32.mrb[0].mxu0
      %v9080 = vadd.f32 %v8716, %v9079
      %v9081 = vpop.f32.mrb[0].mxu0
      %v9082 = vadd.f32 %v8720, %v9081
      %9083 = vdwg.mxu0
      %9084 = vmatprep.subr.bf16.mxu0 0
      %9085 = vmatpush1.bf16.msra.mxu0 %v8798
      %9086 = vmatprep.subr.bf16.mxu0 0
      %9087 = vmatpush1.bf16.msra.mxu0 %v8803
      %9088 = vmatprep.subr.bf16.mxu0 0
      %9089 = vmatpush1.bf16.msra.mxu0 %v8808
      %9090 = vmatprep.subr.bf16.mxu0 0
      %9091 = vmatpush1.bf16.msra.mxu0 %v8813
      %9092 = vmatprep.subr.bf16.mxu0 0
      %9093 = vmatpush1.bf16.msra.mxu0 0
      %9094 = vmatprep.subr.bf16.mxu0 0
      %9095 = vmatpush1.bf16.msra.mxu0 0
      %9096 = vmatprep.subr.bf16.mxu0 0
      %9097 = vmatpush1.bf16.msra.mxu0 0
      %9098 = vmatprep.subr.bf16.mxu0 0
      %9099 = vmatpush1.bf16.msra.mxu0 0
      %9100 = vmatprep.subr.bf16.mxu0 0
      %9101 = vmatpush1.bf16.msra.mxu0 0
      %9102 = vmatprep.subr.bf16.mxu0 0
      %9103 = vmatpush1.bf16.msra.mxu0 0
      %9104 = vmatprep.subr.bf16.mxu0 0
      %9105 = vmatpush1.bf16.msra.mxu0 0
      %9106 = vmatprep.subr.bf16.mxu0 0
      %9107 = vmatpush1.bf16.msra.mxu0 0
      %9108 = vmatprep.subr.bf16.mxu0 0
      %9109 = vmatpush1.bf16.msra.mxu0 0
      %9110 = vmatprep.subr.bf16.mxu0 0
      %9111 = vmatpush1.bf16.msra.mxu0 0
      %9112 = vmatprep.subr.bf16.mxu0 0
      %9113 = vmatpush1.bf16.msra.mxu0 0
      %9114 = vmatprep.subr.bf16.mxu0 0
      %9115 = vmatpush1.bf16.msra.mxu0 0
      %9116 = vmatprep.mubr.bf16.mxu0 0
      %9117 = vmatmul.mubr.bf16.gmra.mrb[0].mxu0 %v8835
      %v9118 = vpop.f32.mrb[0].mxu0
      %v9119 = vadd.f32 %v8724, %v9118
      %v9120 = vpop.f32.mrb[0].mxu0
      %v9121 = vpop.f32.mrb[0].mxu0
      %v9122 = vadd.f32 %v8724, %v9121
      %v9123 = vpop.f32.mrb[0].mxu0
      %9124 = vmatprep.mubr.bf16.mxu0 0
      %9125 = vmatmul.mubr.bf16.gmra.mrb[0].mxu0 %v8838
      %v9126 = vpop.f32.mrb[0].mxu0
      %v9127 = vadd.f32 %v8724, %v9126
      %v9128 = vpop.f32.mrb[0].mxu0
      %v9129 = vpop.f32.mrb[0].mxu0
      %v9130 = vadd.f32 %v8724, %v9129
      %v9131 = vpop.f32.mrb[0].mxu0
      %9132 = vmatprep.mubr.bf16.mxu0 0
      %9133 = vmatmul.mubr.bf16.gmra.mrb[0].mxu0 %v8841
      %v9134 = vpop.f32.mrb[0].mxu0
      %v9135 = vadd.f32 %v8724, %v9134
      %v9136 = vpop.f32.mrb[0].mxu0
      %v9137 = vpop.f32.mrb[0].mxu0
      %v9138 = vadd.f32 %v8724, %v9137
      %v9139 = vpop.f32.mrb[0].mxu0
      %9140 = vmatprep.mubr.bf16.mxu0 0
      %9141 = vmatmul.mubr.bf16.gmra.mrb[0].mxu0 %v8844
      %v9142 = vpop.f32.mrb[0].mxu0
      %v9143 = vadd.f32 %v8724, %v9142
      %v9144 = vpop.f32.mrb[0].mxu0
      %v9145 = vpop.f32.mrb[0].mxu0
      %v9146 = vadd.f32 %v8724, %v9145
      %v9147 = vpop.f32.mrb[0].mxu0
      %9148 = vmatprep.mubr.bf16.mxu0 0
      %9149 = vmatmul.mubr.bf16.gmra.mrb[0].mxu0 %v8847
      %v9150 = vpop.f32.mrb[0].mxu0
      %v9151 = vadd.f32 %v8724, %v9150
      %v9152 = vpop.f32.mrb[0].mxu0
      %v9153 = vpop.f32.mrb[0].mxu0
      %v9154 = vadd.f32 %v8724, %v9153
      %v9155 = vpop.f32.mrb[0].mxu0
      %9156 = vmatprep.mubr.bf16.mxu0 0
      %9157 = vmatmul.mubr.bf16.gmra.mrb[0].mxu0 %v8850
      %v9158 = vpop.f32.mrb[0].mxu0
      %v9159 = vadd.f32 %v8724, %v9158
      %v9160 = vpop.f32.mrb[0].mxu0
      %v9161 = vpop.f32.mrb[0].mxu0
      %v9162 = vadd.f32 %v8724, %v9161
      %v9163 = vpop.f32.mrb[0].mxu0
      %9164 = vmatprep.mubr.bf16.mxu0 0
      %9165 = vmatmul.mubr.bf16.gmra.mrb[0].mxu0 %v8853
      %v9166 = vpop.f32.mrb[0].mxu0
      %v9167 = vadd.f32 %v8724, %v9166
      %v9168 = vpop.f32.mrb[0].mxu0
      %v9169 = vpop.f32.mrb[0].mxu0
      %v9170 = vadd.f32 %v8724, %v9169
      %v9171 = vpop.f32.mrb[0].mxu0
      %9172 = vmatprep.mubr.bf16.mxu0 0
      %9173 = vmatmul.mubr.bf16.gmra.mrb[0].mxu0 %v8856
      %v9174 = vpop.f32.mrb[0].mxu0
      %v9175 = vadd.f32 %v8724, %v9174
      %v9176 = vpop.f32.mrb[0].mxu0
      %v9177 = vpop.f32.mrb[0].mxu0
      %v9178 = vadd.f32 %v8724, %v9177
      %v9179 = vpop.f32.mrb[0].mxu0
      %9180 = vdwg.mxu0
      %vm9181 = vcmask 31744
      %9182 = vst.msk [vmem:[%s451] sm:$0xff] %vm9181, %v9119
      %9183 = vst.msk [vmem:[%s451 + $0x8] sm:$0xff] %vm9181, %v9122
      %9184 = vst.msk [vmem:[%s451 + $0x10] sm:$0xff] %vm9181, %v9127
      %9185 = vst.msk [vmem:[%s451 + $0x18] sm:$0xff] %vm9181, %v9130
      %9186 = vst.msk [vmem:[%s451 + $0x20] sm:$0xff] %vm9181, %v9135
      %9187 = vst.msk [vmem:[%s451 + $0x28] sm:$0xff] %vm9181, %v9138
      %9188 = vst.msk [vmem:[%s451 + $0x30] sm:$0xff] %vm9181, %v9143
      %9189 = vst.msk [vmem:[%s451 + $0x38] sm:$0xff] %vm9181, %v9146
      %9190 = vst.msk [vmem:[%s451 + $0x40] sm:$0xff] %vm9181, %v9151
      %9191 = vst.msk [vmem:[%s451 + $0x48] sm:$0xff] %vm9181, %v9154
      %9192 = vst.msk [vmem:[%s451 + $0x50] sm:$0xff] %vm9181, %v9159
      %9193 = vst.msk [vmem:[%s451 + $0x58] sm:$0xff] %vm9181, %v9162
      %9194 = vst.msk [vmem:[%s451 + $0x60] sm:$0xff] %vm9181, %v9167
      %9195 = vst.msk [vmem:[%s451 + $0x68] sm:$0xff] %vm9181, %v9170
      %9196 = vst.msk [vmem:[%s451 + $0x70] sm:$0xff] %vm9181, %v9175
      %9197 = vst.msk [vmem:[%s451 + $0x78] sm:$0xff] %vm9181, %v9178
      %9198 = vmax.xlane.f32.xlu0 %v8893
      %v9199 = vpop.xlane.xlu0 %9198
      %9200 = vmax.xlane.f32.xlu0 %v8897
      %v9201 = vpop.xlane.xlu0 %9200
      %9202 = vmax.xlane.f32.xlu0 %v8903
      %v9203 = vpop.xlane.xlu0 %9202
      %9204 = vmax.xlane.f32.xlu0 %v8907
      %v9205 = vpop.xlane.xlu0 %9204
      %9206 = vmax.xlane.f32.xlu0 %v8913
      %v9207 = vpop.xlane.xlu0 %9206
      %9208 = vmax.xlane.f32.xlu0 %v8917
      %v9209 = vpop.xlane.xlu0 %9208
      %9210 = vmax.xlane.f32.xlu0 %v8923
      %v9211 = vpop.xlane.xlu0 %9210
      %9212 = vmax.xlane.f32.xlu0 %v8927
      %v9213 = vpop.xlane.xlu0 %9212
      %9214 = vmax.xlane.f32.xlu0 %v8933
      %v9215 = vpop.xlane.xlu0 %9214
      %9216 = vmax.xlane.f32.xlu0 %v8937
      %v9217 = vpop.xlane.xlu0 %9216
      %9218 = vmax.xlane.f32.xlu0 %v8943
      %v9219 = vpop.xlane.xlu0 %9218
      %9220 = vmax.xlane.f32.xlu0 %v8947
      %v9221 = vpop.xlane.xlu0 %9220
      %9222 = vmax.xlane.f32.xlu0 %v8953
      %v9223 = vpop.xlane.xlu0 %9222
      %9224 = vmax.xlane.f32.xlu0 %v8957
      %v9225 = vpop.xlane.xlu0 %9224
      %9226 = vmax.xlane.f32.xlu0 %v8963
      %v9227 = vpop.xlane.xlu0 %9226
      %9228 = vmax.xlane.f32.xlu0 %v8967
      %v9229 = vpop.xlane.xlu0 %9228
      %v9230 = vsub.f32 %v8893, %v9199
      %v9231 = vsub.f32 %v8897, %v9201
      %v9232 = vsub.f32 %v8903, %v9203
      %v9233 = vsub.f32 %v8907, %v9205
      %v9234 = vsub.f32 %v8913, %v9207
      %v9235 = vsub.f32 %v8917, %v9209
      %v9236 = vsub.f32 %v8923, %v9211
      %v9237 = vsub.f32 %v8927, %v9213
      %v9238 = vsub.f32 %v8933, %v9215
      %v9239 = vsub.f32 %v8937, %v9217
      %v9240 = vsub.f32 %v8943, %v9219
      %v9241 = vsub.f32 %v8947, %v9221
      %v9242 = vsub.f32 %v8953, %v9223
      %v9243 = vsub.f32 %v8957, %v9225
      %v9244 = vsub.f32 %v8963, %v9227
      %v9245 = vsub.f32 %v8967, %v9229
      %v9246 = vmul.f32 %v9230, 1.442695
      %v9247 = vpow.pop %v9246
      %v9248 = vmul.f32 %v9231, 1.442695
      %v9249 = vpow.pop %v9248
      %v9250 = vmul.f32 %v9232, 1.442695
      %v9251 = vpow.pop %v9250
      %v9252 = vmul.f32 %v9233, 1.442695
      %v9253 = vpow.pop %v9252
      %v9254 = vmul.f32 %v9234, 1.442695
      %v9255 = vpow.pop %v9254
      %v9256 = vmul.f32 %v9235, 1.442695
      %v9257 = vpow.pop %v9256
      %v9258 = vmul.f32 %v9236, 1.442695
      %v9259 = vpow.pop %v9258
      %v9260 = vmul.f32 %v9237, 1.442695
      %v9261 = vpow.pop %v9260
      %v9262 = vmul.f32 %v9238, 1.442695
      %v9263 = vpow.pop %v9262
      %v9264 = vmul.f32 %v9239, 1.442695
      %v9265 = vpow.pop %v9264
      %v9266 = vmul.f32 %v9240, 1.442695
      %v9267 = vpow.pop %v9266
      %v9268 = vmul.f32 %v9241, 1.442695
      %v9269 = vpow.pop %v9268
      %v9270 = vmul.f32 %v9242, 1.442695
      %v9271 = vpow.pop %v9270
      %v9272 = vmul.f32 %v9243, 1.442695
      %v9273 = vpow.pop %v9272
      %v9274 = vmul.f32 %v9244, 1.442695
      %v9275 = vpow.pop %v9274
      %v9276 = vmul.f32 %v9245, 1.442695
      %v9277 = vpow.pop %v9276
      %9278 = vadd.xlane.f32.xlu0 %v9247
      %v9279 = vpop.xlane.xlu0 %9278
      %9280 = vadd.xlane.f32.xlu0 %v9249
      %v9281 = vpop.xlane.xlu0 %9280
      %9282 = vadd.xlane.f32.xlu0 %v9251
      %v9283 = vpop.xlane.xlu0 %9282
      %9284 = vadd.xlane.f32.xlu0 %v9253
      %v9285 = vpop.xlane.xlu0 %9284
      %9286 = vadd.xlane.f32.xlu0 %v9255
      %v9287 = vpop.xlane.xlu0 %9286
      %9288 = vadd.xlane.f32.xlu0 %v9257
      %v9289 = vpop.xlane.xlu0 %9288
      %9290 = vadd.xlane.f32.xlu0 %v9259
      %v9291 = vpop.xlane.xlu0 %9290
      %9292 = vadd.xlane.f32.xlu0 %v9261
      %v9293 = vpop.xlane.xlu0 %9292
      %9294 = vadd.xlane.f32.xlu0 %v9263
      %v9295 = vpop.xlane.xlu0 %9294
      %9296 = vadd.xlane.f32.xlu0 %v9265
      %v9297 = vpop.xlane.xlu0 %9296
      %9298 = vadd.xlane.f32.xlu0 %v9267
      %v9299 = vpop.xlane.xlu0 %9298
      %9300 = vadd.xlane.f32.xlu0 %v9269
      %v9301 = vpop.xlane.xlu0 %9300
      %9302 = vadd.xlane.f32.xlu0 %v9271
      %v9303 = vpop.xlane.xlu0 %9302
      %9304 = vadd.xlane.f32.xlu0 %v9273
      %v9305 = vpop.xlane.xlu0 %9304
      %9306 = vadd.xlane.f32.xlu0 %v9275
      %v9307 = vpop.xlane.xlu0 %9306
      %9308 = vadd.xlane.f32.xlu0 %v9277
      %v9309 = vpop.xlane.xlu0 %9308
      %v9310 = vrcp.pop %v9279
      %v9311 = vrcp.pop %v9281
      %v9312 = vrcp.pop %v9283
      %v9313 = vrcp.pop %v9285
      %v9314 = vrcp.pop %v9287
      %v9315 = vrcp.pop %v9289
      %v9316 = vrcp.pop %v9291
      %v9317 = vrcp.pop %v9293
      %v9318 = vrcp.pop %v9295
      %v9319 = vrcp.pop %v9297
      %v9320 = vrcp.pop %v9299
      %v9321 = vrcp.pop %v9301
      %v9322 = vrcp.pop %v9303
      %v9323 = vrcp.pop %v9305
      %v9324 = vrcp.pop %v9307
      %v9325 = vrcp.pop %v9309
      %v9326 = vmul.f32 %v9247, %v9310
      %v9327 = vmul.f32 %v9249, %v9311
      %v9328 = vmul.f32 %v9251, %v9312
      %v9329 = vmul.f32 %v9253, %v9313
      %v9330 = vmul.f32 %v9255, %v9314
      %v9331 = vmul.f32 %v9257, %v9315
      %v9332 = vmul.f32 %v9259, %v9316
      %v9333 = vmul.f32 %v9261, %v9317
      %v9334 = vmul.f32 %v9263, %v9318
      %v9335 = vmul.f32 %v9265, %v9319
      %v9336 = vmul.f32 %v9267, %v9320
      %v9337 = vmul.f32 %v9269, %v9321
      %v9338 = vmul.f32 %v9271, %v9322
      %v9339 = vmul.f32 %v9273, %v9323
      %v9340 = vmul.f32 %v9275, %v9324
      %v9341 = vmul.f32 %v9277, %v9325
      %9342 = vst [vmem:[%s458] sm:$0xff] %v9326
      %9343 = vst [vmem:[%s458 + $0x20] sm:$0xff] %v9327
      %9344 = vst [vmem:[%s458 + $0x40] sm:$0xff] %v9328
      %9345 = vst [vmem:[%s458 + $0x60] sm:$0xff] %v9329
      %9346 = vst [vmem:[%s458 + $0x80] sm:$0xff] %v9330
      %9347 = vst [vmem:[%s458 + $0xa0] sm:$0xff] %v9331
      %9348 = vst [vmem:[%s458 + $0xc0] sm:$0xff] %v9332
      %9349 = vst [vmem:[%s458 + $0xe0] sm:$0xff] %v9333
      %9350 = vst [vmem:[%s458 + $0x100] sm:$0xff] %v9334
      %9351 = vst [vmem:[%s458 + $0x120] sm:$0xff] %v9335
      %9352 = vst [vmem:[%s458 + $0x140] sm:$0xff] %v9336
      %9353 = vst [vmem:[%s458 + $0x160] sm:$0xff] %v9337
      %9354 = vst [vmem:[%s458 + $0x180] sm:$0xff] %v9338
      %9355 = vst [vmem:[%s458 + $0x1a0] sm:$0xff] %v9339
      %9356 = vst [vmem:[%s458 + $0x1c0] sm:$0xff] %v9340
      %9357 = vst [vmem:[%s458 + $0x1e0] sm:$0xff] %v9341
      %9358 = vmax.xlane.f32.xlu0 %v8895
      %v9359 = vpop.xlane.xlu0 %9358
      %9360 = vmax.xlane.f32.xlu0 %v8899
      %v9361 = vpop.xlane.xlu0 %9360
      %9362 = vmax.xlane.f32.xlu0 %v8905
      %v9363 = vpop.xlane.xlu0 %9362
      %9364 = vmax.xlane.f32.xlu0 %v8909
      %v9365 = vpop.xlane.xlu0 %9364
      %9366 = vmax.xlane.f32.xlu0 %v8915
      %v9367 = vpop.xlane.xlu0 %9366
      %9368 = vmax.xlane.f32.xlu0 %v8919
      %v9369 = vpop.xlane.xlu0 %9368
      %9370 = vmax.xlane.f32.xlu0 %v8925
      %v9371 = vpop.xlane.xlu0 %9370
      %9372 = vmax.xlane.f32.xlu0 %v8929
      %v9373 = vpop.xlane.xlu0 %9372
      %9374 = vmax.xlane.f32.xlu0 %v8935
      %v9375 = vpop.xlane.xlu0 %9374
      %9376 = vmax.xlane.f32.xlu0 %v8939
      %v9377 = vpop.xlane.xlu0 %9376
      %9378 = vmax.xlane.f32.xlu0 %v8945
      %v9379 = vpop.xlane.xlu0 %9378
      %9380 = vmax.xlane.f32.xlu0 %v8949
      %v9381 = vpop.xlane.xlu0 %9380
      %9382 = vmax.xlane.f32.xlu0 %v8955
      %v9383 = vpop.xlane.xlu0 %9382
      %9384 = vmax.xlane.f32.xlu0 %v8959
      %v9385 = vpop.xlane.xlu0 %9384
      %9386 = vmax.xlane.f32.xlu0 %v8965
      %v9387 = vpop.xlane.xlu0 %9386
      %9388 = vmax.xlane.f32.xlu0 %v8969
      %v9389 = vpop.xlane.xlu0 %9388
      %v9390 = vsub.f32 %v8895, %v9359
      %v9391 = vsub.f32 %v8899, %v9361
      %v9392 = vsub.f32 %v8905, %v9363
      %v9393 = vsub.f32 %v8909, %v9365
      %v9394 = vsub.f32 %v8915, %v9367
      %v9395 = vsub.f32 %v8919, %v9369
      %v9396 = vsub.f32 %v8925, %v9371
      %v9397 = vsub.f32 %v8929, %v9373
      %v9398 = vsub.f32 %v8935, %v9375
      %v9399 = vsub.f32 %v8939, %v9377
      %v9400 = vsub.f32 %v8945, %v9379
      %v9401 = vsub.f32 %v8949, %v9381
      %v9402 = vsub.f32 %v8955, %v9383
      %v9403 = vsub.f32 %v8959, %v9385
      %v9404 = vsub.f32 %v8965, %v9387
      %v9405 = vsub.f32 %v8969, %v9389
      %v9406 = vmul.f32 %v9390, 1.442695
      %v9407 = vpow.pop %v9406
      %v9408 = vmul.f32 %v9391, 1.442695
      %v9409 = vpow.pop %v9408
      %v9410 = vmul.f32 %v9392, 1.442695
      %v9411 = vpow.pop %v9410
      %v9412 = vmul.f32 %v9393, 1.442695
      %v9413 = vpow.pop %v9412
      %v9414 = vmul.f32 %v9394, 1.442695
      %v9415 = vpow.pop %v9414
      %v9416 = vmul.f32 %v9395, 1.442695
      %v9417 = vpow.pop %v9416
      %v9418 = vmul.f32 %v9396, 1.442695
      %v9419 = vpow.pop %v9418
      %v9420 = vmul.f32 %v9397, 1.442695
      %v9421 = vpow.pop %v9420
      %v9422 = vmul.f32 %v9398, 1.442695
      %v9423 = vpow.pop %v9422
      %v9424 = vmul.f32 %v9399, 1.442695
      %v9425 = vpow.pop %v9424
      %v9426 = vmul.f32 %v9400, 1.442695
      %v9427 = vpow.pop %v9426
      %v9428 = vmul.f32 %v9401, 1.442695
      %v9429 = vpow.pop %v9428
      %v9430 = vmul.f32 %v9402, 1.442695
      %v9431 = vpow.pop %v9430
      %v9432 = vmul.f32 %v9403, 1.442695
      %v9433 = vpow.pop %v9432
      %v9434 = vmul.f32 %v9404, 1.442695
      %v9435 = vpow.pop %v9434
      %v9436 = vmul.f32 %v9405, 1.442695
      %v9437 = vpow.pop %v9436
      %9438 = vadd.xlane.f32.xlu0 %v9407
      %v9439 = vpop.xlane.xlu0 %9438
      %9440 = vadd.xlane.f32.xlu0 %v9409
      %v9441 = vpop.xlane.xlu0 %9440
      %9442 = vadd.xlane.f32.xlu0 %v9411
      %v9443 = vpop.xlane.xlu0 %9442
      %9444 = vadd.xlane.f32.xlu0 %v9413
      %v9445 = vpop.xlane.xlu0 %9444
      %9446 = vadd.xlane.f32.xlu0 %v9415
      %v9447 = vpop.xlane.xlu0 %9446
      %9448 = vadd.xlane.f32.xlu0 %v9417
      %v9449 = vpop.xlane.xlu0 %9448
      %9450 = vadd.xlane.f32.xlu0 %v9419
      %v9451 = vpop.xlane.xlu0 %9450
      %9452 = vadd.xlane.f32.xlu0 %v9421
      %v9453 = vpop.xlane.xlu0 %9452
      %9454 = vadd.xlane.f32.xlu0 %v9423
      %v9455 = vpop.xlane.xlu0 %9454
      %9456 = vadd.xlane.f32.xlu0 %v9425
      %v9457 = vpop.xlane.xlu0 %9456
      %9458 = vadd.xlane.f32.xlu0 %v9427
      %v9459 = vpop.xlane.xlu0 %9458
      %9460 = vadd.xlane.f32.xlu0 %v9429
      %v9461 = vpop.xlane.xlu0 %9460
      %9462 = vadd.xlane.f32.xlu0 %v9431
      %v9463 = vpop.xlane.xlu0 %9462
      %9464 = vadd.xlane.f32.xlu0 %v9433
      %v9465 = vpop.xlane.xlu0 %9464
      %9466 = vadd.xlane.f32.xlu0 %v9435
      %v9467 = vpop.xlane.xlu0 %9466
      %9468 = vadd.xlane.f32.xlu0 %v9437
      %v9469 = vpop.xlane.xlu0 %9468
      %v9470 = vrcp.pop %v9439
      %v9471 = vrcp.pop %v9441
      %v9472 = vrcp.pop %v9443
      %v9473 = vrcp.pop %v9445
      %v9474 = vrcp.pop %v9447
      %v9475 = vrcp.pop %v9449
      %v9476 = vrcp.pop %v9451
      %v9477 = vrcp.pop %v9453
      %v9478 = vrcp.pop %v9455
      %v9479 = vrcp.pop %v9457
      %v9480 = vrcp.pop %v9459
      %v9481 = vrcp.pop %v9461
      %v9482 = vrcp.pop %v9463
      %v9483 = vrcp.pop %v9465
      %v9484 = vrcp.pop %v9467
      %v9485 = vrcp.pop %v9469
      %v9486 = vmul.f32 %v9407, %v9470
      %v9487 = vmul.f32 %v9409, %v9471
      %v9488 = vmul.f32 %v9411, %v9472
      %v9489 = vmul.f32 %v9413, %v9473
      %v9490 = vmul.f32 %v9415, %v9474
      %v9491 = vmul.f32 %v9417, %v9475
      %v9492 = vmul.f32 %v9419, %v9476
      %v9493 = vmul.f32 %v9421, %v9477
      %v9494 = vmul.f32 %v9423, %v9478
      %v9495 = vmul.f32 %v9425, %v9479
      %v9496 = vmul.f32 %v9427, %v9480
      %v9497 = vmul.f32 %v9429, %v9481
      %v9498 = vmul.f32 %v9431, %v9482
      %v9499 = vmul.f32 %v9433, %v9483
      %v9500 = vmul.f32 %v9435, %v9484
      %v9501 = vmul.f32 %v9437, %v9485
      %9502 = vst [vmem:[%s458 + $0x8] sm:$0xff] %v9486
      %9503 = vst [vmem:[%s458 + $0x28] sm:$0xff] %v9487
      %9504 = vst [vmem:[%s458 + $0x48] sm:$0xff] %v9488
      %9505 = vst [vmem:[%s458 + $0x68] sm:$0xff] %v9489
      %9506 = vst [vmem:[%s458 + $0x88] sm:$0xff] %v9490
      %9507 = vst [vmem:[%s458 + $0xa8] sm:$0xff] %v9491
      %9508 = vst [vmem:[%s458 + $0xc8] sm:$0xff] %v9492
      %9509 = vst [vmem:[%s458 + $0xe8] sm:$0xff] %v9493
      %9510 = vst [vmem:[%s458 + $0x108] sm:$0xff] %v9494
      %9511 = vst [vmem:[%s458 + $0x128] sm:$0xff] %v9495
      %9512 = vst [vmem:[%s458 + $0x148] sm:$0xff] %v9496
      %9513 = vst [vmem:[%s458 + $0x168] sm:$0xff] %v9497
      %9514 = vst [vmem:[%s458 + $0x188] sm:$0xff] %v9498
      %9515 = vst [vmem:[%s458 + $0x1a8] sm:$0xff] %v9499
      %9516 = vst [vmem:[%s458 + $0x1c8] sm:$0xff] %v9500
      %9517 = vst [vmem:[%s458 + $0x1e8] sm:$0xff] %v9501
      %9518 = vmax.xlane.f32.xlu0 %v9006
      %v9519 = vpop.xlane.xlu0 %9518
      %9520 = vmax.xlane.f32.xlu0 %v9010
      %v9521 = vpop.xlane.xlu0 %9520
      %9522 = vmax.xlane.f32.xlu0 %v9016
      %v9523 = vpop.xlane.xlu0 %9522
      %9524 = vmax.xlane.f32.xlu0 %v9020
      %v9525 = vpop.xlane.xlu0 %9524
      %9526 = vmax.xlane.f32.xlu0 %v9026
      %v9527 = vpop.xlane.xlu0 %9526
      %9528 = vmax.xlane.f32.xlu0 %v9030
      %v9529 = vpop.xlane.xlu0 %9528
      %9530 = vmax.xlane.f32.xlu0 %v9036
      %v9531 = vpop.xlane.xlu0 %9530
      %9532 = vmax.xlane.f32.xlu0 %v9040
      %v9533 = vpop.xlane.xlu0 %9532
      %9534 = vmax.xlane.f32.xlu0 %v9046
      %v9535 = vpop.xlane.xlu0 %9534
      %9536 = vmax.xlane.f32.xlu0 %v9050
      %v9537 = vpop.xlane.xlu0 %9536
      %9538 = vmax.xlane.f32.xlu0 %v9056
      %v9539 = vpop.xlane.xlu0 %9538
      %9540 = vmax.xlane.f32.xlu0 %v9060
      %v9541 = vpop.xlane.xlu0 %9540
      %9542 = vmax.xlane.f32.xlu0 %v9066
      %v9543 = vpop.xlane.xlu0 %9542
      %9544 = vmax.xlane.f32.xlu0 %v9070
      %v9545 = vpop.xlane.xlu0 %9544
      %9546 = vmax.xlane.f32.xlu0 %v9076
      %v9547 = vpop.xlane.xlu0 %9546
      %9548 = vmax.xlane.f32.xlu0 %v9080
      %v9549 = vpop.xlane.xlu0 %9548
      %v9550 = vsub.f32 %v9006, %v9519
      %v9551 = vsub.f32 %v9010, %v9521
      %v9552 = vsub.f32 %v9016, %v9523
      %v9553 = vsub.f32 %v9020, %v9525
      %v9554 = vsub.f32 %v9026, %v9527
      %v9555 = vsub.f32 %v9030, %v9529
      %v9556 = vsub.f32 %v9036, %v9531
      %v9557 = vsub.f32 %v9040, %v9533
      %v9558 = vsub.f32 %v9046, %v9535
      %v9559 = vsub.f32 %v9050, %v9537
      %v9560 = vsub.f32 %v9056, %v9539
      %v9561 = vsub.f32 %v9060, %v9541
      %v9562 = vsub.f32 %v9066, %v9543
      %v9563 = vsub.f32 %v9070, %v9545
      %v9564 = vsub.f32 %v9076, %v9547
      %v9565 = vsub.f32 %v9080, %v9549
      %v9566 = vmul.f32 %v9550, 1.442695
      %v9567 = vpow.pop %v9566
      %v9568 = vmul.f32 %v9551, 1.442695
      %v9569 = vpow.pop %v9568
      %v9570 = vmul.f32 %v9552, 1.442695
      %v9571 = vpow.pop %v9570
      %v9572 = vmul.f32 %v9553, 1.442695
      %v9573 = vpow.pop %v9572
      %v9574 = vmul.f32 %v9554, 1.442695
      %v9575 = vpow.pop %v9574
      %v9576 = vmul.f32 %v9555, 1.442695
      %v9577 = vpow.pop %v9576
      %v9578 = vmul.f32 %v9556, 1.442695
      %v9579 = vpow.pop %v9578
      %v9580 = vmul.f32 %v9557, 1.442695
      %v9581 = vpow.pop %v9580
      %v9582 = vmul.f32 %v9558, 1.442695
      %v9583 = vpow.pop %v9582
      %v9584 = vmul.f32 %v9559, 1.442695
      %v9585 = vpow.pop %v9584
      %v9586 = vmul.f32 %v9560, 1.442695
      %v9587 = vpow.pop %v9586
      %v9588 = vmul.f32 %v9561, 1.442695
      %v9589 = vpow.pop %v9588
      %v9590 = vmul.f32 %v9562, 1.442695
      %v9591 = vpow.pop %v9590
      %v9592 = vmul.f32 %v9563, 1.442695
      %v9593 = vpow.pop %v9592
      %v9594 = vmul.f32 %v9564, 1.442695
      %v9595 = vpow.pop %v9594
      %v9596 = vmul.f32 %v9565, 1.442695
      %v9597 = vpow.pop %v9596
      %9598 = vadd.xlane.f32.xlu0 %v9567
      %v9599 = vpop.xlane.xlu0 %9598
      %9600 = vadd.xlane.f32.xlu0 %v9569
      %v9601 = vpop.xlane.xlu0 %9600
      %9602 = vadd.xlane.f32.xlu0 %v9571
      %v9603 = vpop.xlane.xlu0 %9602
      %9604 = vadd.xlane.f32.xlu0 %v9573
      %v9605 = vpop.xlane.xlu0 %9604
      %9606 = vadd.xlane.f32.xlu0 %v9575
      %v9607 = vpop.xlane.xlu0 %9606
      %9608 = vadd.xlane.f32.xlu0 %v9577
      %v9609 = vpop.xlane.xlu0 %9608
      %9610 = vadd.xlane.f32.xlu0 %v9579
      %v9611 = vpop.xlane.xlu0 %9610
      %9612 = vadd.xlane.f32.xlu0 %v9581
      %v9613 = vpop.xlane.xlu0 %9612
      %9614 = vadd.xlane.f32.xlu0 %v9583
      %v9615 = vpop.xlane.xlu0 %9614
      %9616 = vadd.xlane.f32.xlu0 %v9585
      %v9617 = vpop.xlane.xlu0 %9616
      %9618 = vadd.xlane.f32.xlu0 %v9587
      %v9619 = vpop.xlane.xlu0 %9618
      %9620 = vadd.xlane.f32.xlu0 %v9589
      %v9621 = vpop.xlane.xlu0 %9620
      %9622 = vadd.xlane.f32.xlu0 %v9591
      %v9623 = vpop.xlane.xlu0 %9622
      %9624 = vadd.xlane.f32.xlu0 %v9593
      %v9625 = vpop.xlane.xlu0 %9624
      %9626 = vadd.xlane.f32.xlu0 %v9595
      %v9627 = vpop.xlane.xlu0 %9626
      %9628 = vadd.xlane.f32.xlu0 %v9597
      %v9629 = vpop.xlane.xlu0 %9628
      %v9630 = vrcp.pop %v9599
      %v9631 = vrcp.pop %v9601
      %v9632 = vrcp.pop %v9603
      %v9633 = vrcp.pop %v9605
      %v9634 = vrcp.pop %v9607
      %v9635 = vrcp.pop %v9609
      %v9636 = vrcp.pop %v9611
      %v9637 = vrcp.pop %v9613
      %v9638 = vrcp.pop %v9615
      %v9639 = vrcp.pop %v9617
      %v9640 = vrcp.pop %v9619
      %v9641 = vrcp.pop %v9621
      %v9642 = vrcp.pop %v9623
      %v9643 = vrcp.pop %v9625
      %v9644 = vrcp.pop %v9627
      %v9645 = vrcp.pop %v9629
      %v9646 = vmul.f32 %v9567, %v9630
      %v9647 = vmul.f32 %v9569, %v9631
      %v9648 = vmul.f32 %v9571, %v9632
      %v9649 = vmul.f32 %v9573, %v9633
      %v9650 = vmul.f32 %v9575, %v9634
      %v9651 = vmul.f32 %v9577, %v9635
      %v9652 = vmul.f32 %v9579, %v9636
      %v9653 = vmul.f32 %v9581, %v9637
      %v9654 = vmul.f32 %v9583, %v9638
      %v9655 = vmul.f32 %v9585, %v9639
      %v9656 = vmul.f32 %v9587, %v9640
      %v9657 = vmul.f32 %v9589, %v9641
      %v9658 = vmul.f32 %v9591, %v9642
      %v9659 = vmul.f32 %v9593, %v9643
      %v9660 = vmul.f32 %v9595, %v9644
      %v9661 = vmul.f32 %v9597, %v9645
      %9662 = vst [vmem:[%s458 + $0x10] sm:$0xff] %v9646
      %9663 = vst [vmem:[%s458 + $0x30] sm:$0xff] %v9647
      %9664 = vst [vmem:[%s458 + $0x50] sm:$0xff] %v9648
      %9665 = vst [vmem:[%s458 + $0x70] sm:$0xff] %v9649
      %9666 = vst [vmem:[%s458 + $0x90] sm:$0xff] %v9650
      %9667 = vst [vmem:[%s458 + $0xb0] sm:$0xff] %v9651
      %9668 = vst [vmem:[%s458 + $0xd0] sm:$0xff] %v9652
      %9669 = vst [vmem:[%s458 + $0xf0] sm:$0xff] %v9653
      %9670 = vst [vmem:[%s458 + $0x110] sm:$0xff] %v9654
      %9671 = vst [vmem:[%s458 + $0x130] sm:$0xff] %v9655
      %9672 = vst [vmem:[%s458 + $0x150] sm:$0xff] %v9656
      %9673 = vst [vmem:[%s458 + $0x170] sm:$0xff] %v9657
      %9674 = vst [vmem:[%s458 + $0x190] sm:$0xff] %v9658
      %9675 = vst [vmem:[%s458 + $0x1b0] sm:$0xff] %v9659
      %9676 = vst [vmem:[%s458 + $0x1d0] sm:$0xff] %v9660
      %9677 = vst [vmem:[%s458 + $0x1f0] sm:$0xff] %v9661
      %9678 = vmax.xlane.f32.xlu0 %v9008
      %v9679 = vpop.xlane.xlu0 %9678
      %9680 = vmax.xlane.f32.xlu0 %v9012
      %v9681 = vpop.xlane.xlu0 %9680
      %9682 = vmax.xlane.f32.xlu0 %v9018
      %v9683 = vpop.xlane.xlu0 %9682
      %9684 = vmax.xlane.f32.xlu0 %v9022
      %v9685 = vpop.xlane.xlu0 %9684
      %9686 = vmax.xlane.f32.xlu0 %v9028
      %v9687 = vpop.xlane.xlu0 %9686
      %9688 = vmax.xlane.f32.xlu0 %v9032
      %v9689 = vpop.xlane.xlu0 %9688
      %9690 = vmax.xlane.f32.xlu0 %v9038
      %v9691 = vpop.xlane.xlu0 %9690
      %9692 = vmax.xlane.f32.xlu0 %v9042
      %v9693 = vpop.xlane.xlu0 %9692
      %9694 = vmax.xlane.f32.xlu0 %v9048
      %v9695 = vpop.xlane.xlu0 %9694
      %9696 = vmax.xlane.f32.xlu0 %v9052
      %v9697 = vpop.xlane.xlu0 %9696
      %9698 = vmax.xlane.f32.xlu0 %v9058
      %v9699 = vpop.xlane.xlu0 %9698
      %9700 = vmax.xlane.f32.xlu0 %v9062
      %v9701 = vpop.xlane.xlu0 %9700
      %9702 = vmax.xlane.f32.xlu0 %v9068
      %v9703 = vpop.xlane.xlu0 %9702
      %9704 = vmax.xlane.f32.xlu0 %v9072
      %v9705 = vpop.xlane.xlu0 %9704
      %9706 = vmax.xlane.f32.xlu0 %v9078
      %v9707 = vpop.xlane.xlu0 %9706
      %9708 = vmax.xlane.f32.xlu0 %v9082
      %v9709 = vpop.xlane.xlu0 %9708
      %v9710 = vsub.f32 %v9008, %v9679
      %v9711 = vsub.f32 %v9012, %v9681
      %v9712 = vsub.f32 %v9018, %v9683
      %v9713 = vsub.f32 %v9022, %v9685
      %v9714 = vsub.f32 %v9028, %v9687
      %v9715 = vsub.f32 %v9032, %v9689
      %v9716 = vsub.f32 %v9038, %v9691
      %v9717 = vsub.f32 %v9042, %v9693
      %v9718 = vsub.f32 %v9048, %v9695
      %v9719 = vsub.f32 %v9052, %v9697
      %v9720 = vsub.f32 %v9058, %v9699
      %v9721 = vsub.f32 %v9062, %v9701
      %v9722 = vsub.f32 %v9068, %v9703
      %v9723 = vsub.f32 %v9072, %v9705
      %v9724 = vsub.f32 %v9078, %v9707
      %v9725 = vsub.f32 %v9082, %v9709
      %v9726 = vmul.f32 %v9710, 1.442695
      %v9727 = vpow.pop %v9726
      %v9728 = vmul.f32 %v9711, 1.442695
      %v9729 = vpow.pop %v9728
      %v9730 = vmul.f32 %v9712, 1.442695
      %v9731 = vpow.pop %v9730
      %v9732 = vmul.f32 %v9713, 1.442695
      %v9733 = vpow.pop %v9732
      %v9734 = vmul.f32 %v9714, 1.442695
      %v9735 = vpow.pop %v9734
      %v9736 = vmul.f32 %v9715, 1.442695
      %v9737 = vpow.pop %v9736
      %v9738 = vmul.f32 %v9716, 1.442695
      %v9739 = vpow.pop %v9738
      %v9740 = vmul.f32 %v9717, 1.442695
      %v9741 = vpow.pop %v9740
      %v9742 = vmul.f32 %v9718, 1.442695
      %v9743 = vpow.pop %v9742
      %v9744 = vmul.f32 %v9719, 1.442695
      %v9745 = vpow.pop %v9744
      %v9746 = vmul.f32 %v9720, 1.442695
      %v9747 = vpow.pop %v9746
      %v9748 = vmul.f32 %v9721, 1.442695
      %v9749 = vpow.pop %v9748
      %v9750 = vmul.f32 %v9722, 1.442695
      %v9751 = vpow.pop %v9750
      %v9752 = vmul.f32 %v9723, 1.442695
      %v9753 = vpow.pop %v9752
      %v9754 = vmul.f32 %v9724, 1.442695
      %v9755 = vpow.pop %v9754
      %v9756 = vmul.f32 %v9725, 1.442695
      %v9757 = vpow.pop %v9756
      %9758 = vadd.xlane.f32.xlu0 %v9727
      %v9759 = vpop.xlane.xlu0 %9758
      %9760 = vadd.xlane.f32.xlu0 %v9729
      %v9761 = vpop.xlane.xlu0 %9760
      %9762 = vadd.xlane.f32.xlu0 %v9731
      %v9763 = vpop.xlane.xlu0 %9762
      %9764 = vadd.xlane.f32.xlu0 %v9733
      %v9765 = vpop.xlane.xlu0 %9764
      %9766 = vadd.xlane.f32.xlu0 %v9735
      %v9767 = vpop.xlane.xlu0 %9766
      %9768 = vadd.xlane.f32.xlu0 %v9737
      %v9769 = vpop.xlane.xlu0 %9768
      %9770 = vadd.xlane.f32.xlu0 %v9739
      %v9771 = vpop.xlane.xlu0 %9770
      %9772 = vadd.xlane.f32.xlu0 %v9741
      %v9773 = vpop.xlane.xlu0 %9772
      %9774 = vadd.xlane.f32.xlu0 %v9743
      %v9775 = vpop.xlane.xlu0 %9774
      %9776 = vadd.xlane.f32.xlu0 %v9745
      %v9777 = vpop.xlane.xlu0 %9776
      %9778 = vadd.xlane.f32.xlu0 %v9747
      %v9779 = vpop.xlane.xlu0 %9778
      %9780 = vadd.xlane.f32.xlu0 %v9749
      %v9781 = vpop.xlane.xlu0 %9780
      %9782 = vadd.xlane.f32.xlu0 %v9751
      %v9783 = vpop.xlane.xlu0 %9782
      %9784 = vadd.xlane.f32.xlu0 %v9753
      %v9785 = vpop.xlane.xlu0 %9784
      %9786 = vadd.xlane.f32.xlu0 %v9755
      %v9787 = vpop.xlane.xlu0 %9786
      %9788 = vadd.xlane.f32.xlu0 %v9757
      %v9789 = vpop.xlane.xlu0 %9788
      %v9790 = vrcp.pop %v9759
      %v9791 = vrcp.pop %v9761
      %v9792 = vrcp.pop %v9763
      %v9793 = vrcp.pop %v9765
      %v9794 = vrcp.pop %v9767
      %v9795 = vrcp.pop %v9769
      %v9796 = vrcp.pop %v9771
      %v9797 = vrcp.pop %v9773
      %v9798 = vrcp.pop %v9775
      %v9799 = vrcp.pop %v9777
      %v9800 = vrcp.pop %v9779
      %v9801 = vrcp.pop %v9781
      %v9802 = vrcp.pop %v9783
      %v9803 = vrcp.pop %v9785
      %v9804 = vrcp.pop %v9787
      %v9805 = vrcp.pop %v9789
      %v9806 = vmul.f32 %v9727, %v9790
      %v9807 = vmul.f32 %v9729, %v9791
      %v9808 = vmul.f32 %v9731, %v9792
      %v9809 = vmul.f32 %v9733, %v9793
      %v9810 = vmul.f32 %v9735, %v9794
      %v9811 = vmul.f32 %v9737, %v9795
      %v9812 = vmul.f32 %v9739, %v9796
      %v9813 = vmul.f32 %v9741, %v9797
      %v9814 = vmul.f32 %v9743, %v9798
      %v9815 = vmul.f32 %v9745, %v9799
      %v9816 = vmul.f32 %v9747, %v9800
      %v9817 = vmul.f32 %v9749, %v9801
      %v9818 = vmul.f32 %v9751, %v9802
      %v9819 = vmul.f32 %v9753, %v9803
      %v9820 = vmul.f32 %v9755, %v9804
      %v9821 = vmul.f32 %v9757, %v9805
      %9822 = vst [vmem:[%s458 + $0x18] sm:$0xff] %v9806
      %9823 = vst [vmem:[%s458 + $0x38] sm:$0xff] %v9807
      %9824 = vst [vmem:[%s458 + $0x58] sm:$0xff] %v9808
      %9825 = vst [vmem:[%s458 + $0x78] sm:$0xff] %v9809
      %9826 = vst [vmem:[%s458 + $0x98] sm:$0xff] %v9810
      %9827 = vst [vmem:[%s458 + $0xb8] sm:$0xff] %v9811
      %9828 = vst [vmem:[%s458 + $0xd8] sm:$0xff] %v9812
      %9829 = vst [vmem:[%s458 + $0xf8] sm:$0xff] %v9813
      %9830 = vst [vmem:[%s458 + $0x118] sm:$0xff] %v9814
      %9831 = vst [vmem:[%s458 + $0x138] sm:$0xff] %v9815
      %9832 = vst [vmem:[%s458 + $0x158] sm:$0xff] %v9816
      %9833 = vst [vmem:[%s458 + $0x178] sm:$0xff] %v9817
      %9834 = vst [vmem:[%s458 + $0x198] sm:$0xff] %v9818
      %9835 = vst [vmem:[%s458 + $0x1b8] sm:$0xff] %v9819
      %9836 = vst [vmem:[%s458 + $0x1d8] sm:$0xff] %v9820
      %9837 = vst [vmem:[%s458 + $0x1f8] sm:$0xff] %v9821
      %s9838 = smul.u32 16, %s25
      %p9839 = scmp.lt.s32.totalorder %s9838, 31
      %s9840 = scalar_select %p9839, %s9838, 31
      %s9841 = smul.addr %s9840, 8
      %s9842 = scalar_lea.vmem %s12, %s9841
      %s9843 = smul.u32 16, %s25
      %p9844 = scmp.lt.s32.totalorder %s9843, 31
      %s9845 = scalar_select %p9844, %s9843, 31
      %s9846 = smul.addr %s9845, 4
      %s9847 = smul.addr %s9846, 8
      %s9848 = scalar_lea.vmem %s13, %s9847
      // Predicated region
      $region69: #{cgn_forward.1} parent=67 // pred_check
        %p9849 = pneg %p300
      $region70: #{cgn_forward.1} parent=67 // pred_check_branch
        %9851 = sbr.rel (%p9849) target = $region72
      $region71: #{cgn_forward.1} parent=67 // pred_region
        %s9852 = smul.u32 16, %s25
      $region72: #{cgn_forward.1} parent=67 // pred_fallthru
        _
      // Predicated region
      $region73: #{cgn_forward.1} parent=67 // pred_check
        %p9853 = pneg %p326
      $region74: #{cgn_forward.1} parent=67 // pred_check_branch
        %9855 = sbr.rel (%p9853) target = $region76
      $region75: #{cgn_forward.1} parent=67 // pred_region
        %s9856 = smul.u32 16, %s25
      $region76: #{cgn_forward.1} parent=67 // pred_fallthru
        _
    $region68: #{cgn_forward.1} parent=5 // pred_fallthru
      _
    %p9857 = scmp.le.s32.totalorder 2, %s20
    // Predicated region
    $region77: #{cgn_forward.1} parent=5 // pred_check
      %p9858 = pneg %p9857
    $region78: #{cgn_forward.1} parent=5 // pred_check_branch
      %9860 = sbr.rel (%p9858) target = $region80
    $region79: #{cgn_forward.1} parent=5 // pred_region
      %s9861 = ssub.s32 %s20, 2
      // Predicated region
      $region81: #{cgn_forward.1} parent=79 // pred_check
        %p9862 = pneg %p306
      $region82: #{cgn_forward.1} parent=79 // pred_check_branch
        %9864 = sbr.rel (%p9862) target = $region84
      $region83: #{cgn_forward.1} parent=79 // pred_region
        %s9865 = smul.u32 16, %s26
        %p9866 = scmp.lt.s32.totalorder %s9865, 31
        %s9867 = scalar_select %p9866, %s9865, 31
        %s9868 = smul.addr %s9867, 8
        %s9869 = scalar_lea.vmem %s12, %s9868
      $region84: #{cgn_forward.1} parent=79 // pred_fallthru
        _
      // Predicated region
      $region85: #{cgn_forward.1} parent=79 // pred_check
        %p9870 = pneg %p332
      $region86: #{cgn_forward.1} parent=79 // pred_check_branch
        %9872 = sbr.rel (%p9870) target = $region88
      $region87: #{cgn_forward.1} parent=79 // pred_region
        %s9873 = smul.u32 16, %s26
        %p9874 = scmp.lt.s32.totalorder %s9873, 31
        %s9875 = scalar_select %p9874, %s9873, 31
        %s9876 = smul.addr %s9875, 4
        %s9877 = smul.addr %s9876, 8
        %s9878 = scalar_lea.vmem %s13, %s9877
      $region88: #{cgn_forward.1} parent=79 // pred_fallthru
        _
    $region80: #{cgn_forward.1} parent=5 // pred_fallthru
      _
  $region6: #{cgn_forward.1} parent=0 // loop_footer
    %s24 = sadd.s32 1, %s20
  $region7: #{cgn_forward.1} parent=0 // loop_footer_branch
    %19 = sbr.rel target = $region3
  $region8: #{cgn_forward.1} parent=0 // loop_exit
    _

</llo_original>
